<compile_context>
chip_gen: v5e
topology: v5e:2x2
jax: 0.10.0
libtpu: 0.0.40
codegen_flags: <defaults>
</compile_context>

<pallas_src>
import functools

import jax
import jax.numpy as jnp
from jax import lax
from jax.experimental import pallas as pl
from jax.experimental.pallas import tpu as pltpu


# Order in which each encoder layer's tensors are passed to the kernel.
_ENC_KERNEL_KEYS = ('wqkv', 'bqkv', 'wo', 'bo', 'w1', 'w2', 'b1', 'b2',
                    'ln1w', 'ln1b', 'ln2w', 'ln2b')


def _layer_norm(z, w, b):
    # Single-pass LN: one reduction sweep (E[x], E[x^2]) instead of two.
    mu = jnp.mean(z, axis=-1, keepdims=True)
    ms = jnp.mean(z * z, axis=-1, keepdims=True)
    var = ms - mu * mu
    return (z - mu) * lax.rsqrt(var + 1e-5) * w + b


# ----------------------------------------------------------------------------
# Fused forward kernel (no grid: everything is one VMEM-resident block).
# ----------------------------------------------------------------------------
def _fused_kernel(*refs, num_heads, num_att_layers, num_lstm_layers,
                  batch, frames, d_model, hidden):
    it = iter(refs)
    x_ref = next(it)                         # (S, 8)  object-0 tokens, rows (b, f)
    wb_ref = next(it)                        # (8, D)
    enc = []
    for _ in range(num_att_layers):
        enc.append({k: next(it) for k in _ENC_KERNEL_KEYS})
    lstm = [(next(it), next(it)) for _ in range(num_lstm_layers)]
    wpred_ref = next(it)                     # (hidden, 4)
    out_ref = next(it)                       # (B, F, 4)
    ffn_bufs = [next(it) for _ in range(2 * num_att_layers)]   # VMEM scratch
    dma_sem = next(it)                       # DMA sems, shape (2 * layers,)
    assert next(it, None) is None

    dh = d_model // num_heads

    # ---- kick off FFN-weight DMAs (HBM -> VMEM) so they overlap attention ---
    copies = []
    idx = 0
    for li in range(num_att_layers):
        for w_hbm in (enc[li]['w1'], enc[li]['w2']):
            cp = pltpu.make_async_copy(w_hbm, ffn_bufs[idx], dma_sem.at[idx])
            cp.start()
            copies.append(cp)
            idx += 1

    # ---- boxes linear (bias=False) + ReLU -----------------------------------
    tok = jnp.maximum(
        jnp.dot(x_ref[...], wb_ref[...], preferred_element_type=jnp.float32),
        0.0)                                                       # (S, D)

    # ---- transformer encoder layers (post-norm, ReLU FFN, eval mode) --------
    for li in range(num_att_layers):
        lp = enc[li]

        # fused QKV projection; 1/sqrt(dh) already folded into the Q columns
        qkv = jnp.dot(tok, lp['wqkv'][...],
                      preferred_element_type=jnp.float32) + lp['bqkv'][...]
        q = qkv[:, 0 * d_model:1 * d_model]
        k = qkv[:, 1 * d_model:2 * d_model]
        v = qkv[:, 2 * d_model:3 * d_model]

        ctxs = []
        for h in range(num_heads):           # static unroll, 16-token sequence
            sl = slice(h * dh, (h + 1) * dh)
            qh, kh, vh = q[:, sl], k[:, sl], v[:, sl]
            sc = lax.dot_general(qh, kh, (((1,), (1,)), ((), ())),
                                 preferred_element_type=jnp.float32)   # (S, S)
            sc = sc - jnp.max(sc, axis=-1, keepdims=True)
            p = jnp.exp(sc)
            # approx reciprocal: rows sum to 1 +- ~1e-3 (documented deviation)
            p = p * pl.reciprocal(jnp.sum(p, axis=-1, keepdims=True),
                                  approx=True)
            ctxs.append(jnp.dot(p, vh, preferred_element_type=jnp.float32))
        ctx = jnp.concatenate(ctxs, axis=-1)                       # (S, D)
        attn = jnp.dot(ctx, lp['wo'][...],
                       preferred_element_type=jnp.float32) + lp['bo'][...]

        tok = _layer_norm(tok + attn, lp['ln1w'][...], lp['ln1b'][...])

        # FFN: bf16 weights on the MXU, f32 accumulation / element-wise math.
        copies[2 * li].wait()
        copies[2 * li + 1].wait()
        w1 = ffn_bufs[2 * li][...]
        w2 = ffn_bufs[2 * li + 1][...]
        ff = jnp.dot(tok.astype(w1.dtype), w1,
                     preferred_element_type=jnp.float32) + lp['b1'][...]
        ff = jnp.maximum(ff, 0.0)
        ff = jnp.dot(ff.astype(w2.dtype), w2,
                     preferred_element_type=jnp.float32) + lp['b2'][...]

        tok = _layer_norm(tok + ff, lp['ln2w'][...], lp['ln2b'][...])

    # ---- multi-layer unidirectional LSTM (bias=False) -----------------------
    # Gate columns were permuted at wrapper time to (i, f, o, g): one sigmoid
    # over [:, :3H] and one tanh over [:, 3H:] per step.
    w_ih = [lstm[l][0][...] for l in range(num_lstm_layers)]
    w_hh = [lstm[l][1][...] for l in range(num_lstm_layers)]
    w_pred = wpred_ref[...]

    # layer-0 input projection hoisted out of the recurrence
    gx0 = jnp.dot(tok, w_ih[0], preferred_element_type=jnp.float32)  # (S, 4H)
    gx0 = gx0.reshape(batch, frames, 4 * hidden)

    h = [jnp.zeros((batch, hidden), jnp.float32) for _ in range(num_lstm_layers)]
    c = [jnp.zeros((batch, hidden), jnp.float32) for _ in range(num_lstm_layers)]

    for t in range(frames):                  # fully unrolled recurrence
        for l in range(num_lstm_layers):     # layers interleaved per timestep
            if l == 0:
                g = gx0[:, t, :] + jnp.dot(h[0], w_hh[0],
                                           preferred_element_type=jnp.float32)
            else:
                g = (jnp.dot(h[l - 1], w_ih[l],
                             preferred_element_type=jnp.float32)
                     + jnp.dot(h[l], w_hh[l],
                               preferred_element_type=jnp.float32))
            sig = jax.nn.sigmoid(g[:, :3 * hidden])
            i_g = sig[:, 0 * hidden:1 * hidden]
            f_g = sig[:, 1 * hidden:2 * hidden]
            o_g = sig[:, 2 * hidden:3 * hidden]
            g_g = jnp.tanh(g[:, 3 * hidden:])
            c[l] = f_g * c[l] + i_g * g_g
            h[l] = o_g * jnp.tanh(c[l])
        # prediction linear (bias=False), written straight to the output block
        out_ref[:, t, :] = jnp.dot(h[-1], w_pred,
                                   preferred_element_type=jnp.float32)


# ----------------------------------------------------------------------------
# Wrapper
# ----------------------------------------------------------------------------
def _reorder_lstm_gates(w):
    # reference/PyTorch gate order (i, f, g, o) -> kernel order (i, f, o, g)
    i, f, g, o = jnp.split(w, 4, axis=1)
    return jnp.concatenate([i, f, o, g], axis=1)


def transformer_lstm_forward(x, params, config):
    batch, frames, objects, feat = x.shape
    d_model = config['boxes_features_dim']
    hidden = config['lstm_hidden_dim']
    num_heads = config['num_attention_heads']
    num_att_layers = len(params['encoder_layers'])
    num_lstm_layers = len(params['lstm_w_ih'])
    dh = d_model // num_heads
    scale = 1.0 / float(dh) ** 0.5

    # Dead-work pruning: only object 0's tokens reach the output (see header).
    x0 = x[:, :, 0, :].reshape(batch * frames, feat)
    # Pad the tiny feature dim to a sublane-aligned contraction (zeros: no-op).
    feat_p = ((feat + 7) // 8) * 8
    x0 = jnp.pad(x0, ((0, 0), (0, feat_p - feat)))
    w_boxes = jnp.pad(params['w_boxes'], ((0, feat_p - feat), (0, 0)))

    vmem = pl.BlockSpec(memory_space=pltpu.MemorySpace.VMEM)
    hbm = pl.BlockSpec(memory_space=pl.ANY)

    args = [x0, w_boxes]
    in_specs = [vmem, vmem]
    ffn_weights = []
    for lp in params['encoder_layers']:
        # fuse Q/K/V; fold the attention scale into the Q columns / bias
        wqkv = jnp.concatenate([lp['wq'] * scale, lp['wk'], lp['wv']], axis=1)
        bqkv = jnp.concatenate([lp['bq'] * scale, lp['bk'], lp['bv']], axis=1)
        args += [wqkv, bqkv, lp['wo'], lp['bo'], lp['w1'], lp['w2'],
                 lp['b1'], lp['b2'], lp['ln1w'], lp['ln1b'],
                 lp['ln2w'], lp['ln2b']]
        in_specs += [vmem, vmem, vmem, vmem, hbm, hbm,
                     vmem, vmem, vmem, vmem, vmem, vmem]
        ffn_weights += [lp['w1'], lp['w2']]
    for w_ih, w_hh in zip(params['lstm_w_ih'], params['lstm_w_hh']):
        args += [_reorder_lstm_gates(w_ih), _reorder_lstm_gates(w_hh)]
        in_specs += [vmem, vmem]
    args.append(params['w_pred'])
    in_specs.append(vmem)

    scratch_shapes = [pltpu.VMEM(w.shape, w.dtype) for w in ffn_weights]
    scratch_shapes.append(pltpu.SemaphoreType.DMA((len(ffn_weights),)))

    kernel = functools.partial(
        _fused_kernel,
        num_heads=num_heads, num_att_layers=num_att_layers,
        num_lstm_layers=num_lstm_layers, batch=batch, frames=frames,
        d_model=d_model, hidden=hidden)

    return pl.pallas_call(
        kernel,
        out_shape=jax.ShapeDtypeStruct((batch, frames, 4), jnp.float32),
        in_specs=in_specs,
        scratch_shapes=scratch_shapes,
        compiler_params=pltpu.CompilerParams(
            vmem_limit_bytes=32 * 1024 * 1024),
    )(*args)


# ----------------------------------------------------------------------------
# Pure-JAX reference (mirrors the PyTorch module, batch_first=False semantics).
# ----------------------------------------------------------------------------
def _layer_norm_ref(z, w, b):
    mu = jnp.mean(z, axis=-1, keepdims=True)
    var = jnp.mean((z - mu) ** 2, axis=-1, keepdims=True)
    return (z - mu) * lax.rsqrt(var + 1e-5) * w + b


def _reference_forward(x, params, config):
    B, F_, O, _ = x.shape
    D = config['boxes_features_dim']
    H = config['num_attention_heads']
    hid = config['lstm_hidden_dim']
    dh = D // H
    scale = 1.0 / float(dh) ** 0.5

    boxes = jax.nn.relu(x @ params['w_boxes'])                    # (B, F, O, D)
    src = boxes.reshape(B * F_, O, D)                             # (S, N, D)

    for p in params['encoder_layers']:
        q = src @ p['wq'] + p['bq']
        k = src @ p['wk'] + p['bk']
        v = src @ p['wv'] + p['bv']
        qh = q.reshape(B * F_, O, H, dh)
        kh = k.reshape(B * F_, O, H, dh)
        vh = v.reshape(B * F_, O, H, dh)
        sc = jnp.einsum('snhd,tnhd->nhst', qh, kh) * scale
        w = jax.nn.softmax(sc, axis=-1)
        ctx = jnp.einsum('nhst,tnhd->snhd', w, vh).reshape(B * F_, O, D)
        attn = ctx @ p['wo'] + p['bo']
        src = _layer_norm_ref(src + attn, p['ln1w'], p['ln1b'])
        ff = jax.nn.relu(src @ p['w1'].astype(jnp.float32) + p['b1'])
        ff = ff @ p['w2'].astype(jnp.float32) + p['b2']
        src = _layer_norm_ref(src + ff, p['ln2w'], p['ln2b'])

    seq = src[:, 0, :].reshape(B, F_, D)                          # (B, F, D)
    for w_ih, w_hh in zip(params['lstm_w_ih'], params['lstm_w_hh']):
        h = jnp.zeros((B, hid), jnp.float32)
        c = jnp.zeros((B, hid), jnp.float32)
        outs = []
        for t in range(F_):
            g = seq[:, t, :] @ w_ih + h @ w_hh
            i = jax.nn.sigmoid(g[:, :hid])
            f = jax.nn.sigmoid(g[:, hid:2 * hid])
            gg = jnp.tanh(g[:, 2 * hid:3 * hid])
            o = jax.nn.sigmoid(g[:, 3 * hid:])
            c = f * c + i * gg
            h = o * jnp.tanh(c)
            outs.append(h)
        seq = jnp.stack(outs, axis=1)
    return seq @ params['w_pred']


# ----------------------------------------------------------------------------
# Deterministic synthetic parameter init (shapes follow the module __init__).
# ----------------------------------------------------------------------------
def init_params(key, config, dff):
    d_model = config['boxes_features_dim']
    hidden = config['lstm_hidden_dim']
    n_att = config['num_attention_layers']
    n_lstm = config['num_lstm_layers']

    keys = iter(jax.random.split(key, 128))

    def rnd(shape, scale, dtype=jnp.float32):
        return (jax.random.normal(next(keys), shape, jnp.float32)
                * scale).astype(dtype)

    params = {}
    params['w_boxes'] = rnd((5, d_model), 0.3)          # Linear(5 -> D, bias=False)^T

    enc_layers = []
    for _ in range(n_att):
        enc_layers.append(dict(
            wq=rnd((d_model, d_model), 0.1), wk=rnd((d_model, d_model), 0.1),
            wv=rnd((d_model, d_model), 0.1),
            bq=rnd((1, d_model), 0.02), bk=rnd((1, d_model), 0.02),
            bv=rnd((1, d_model), 0.02),
            wo=rnd((d_model, d_model), 0.1), bo=rnd((1, d_model), 0.02),
            # FFN weights in bf16 (MXU-native; f32 accumulation in-kernel)
            w1=rnd((d_model, dff), 0.05, jnp.bfloat16), b1=rnd((1, dff), 0.02),
            w2=rnd((dff, d_model), 0.02, jnp.bfloat16), b2=rnd((1, d_model), 0.02),
            ln1w=jnp.ones((1, d_model), jnp.float32),
            ln1b=jnp.zeros((1, d_model), jnp.float32),
            ln2w=jnp.ones((1, d_model), jnp.float32),
            ln2b=jnp.zeros((1, d_model), jnp.float32),
        ))
    params['encoder_layers'] = enc_layers

    w_ihs, w_hhs = [], []
    for li in range(n_lstm):
        in_dim = d_model if li == 0 else hidden
        w_ihs.append(rnd((in_dim, 4 * hidden), 0.1))    # weight_ih_l{k}^T  (i,f,g,o)
        w_hhs.append(rnd((hidden, 4 * hidden), 0.1))    # weight_hh_l{k}^T  (i,f,g,o)
    params['lstm_w_ih'] = w_ihs
    params['lstm_w_hh'] = w_hhs

    params['w_pred'] = rnd((hidden, 4), 0.1)            # Linear(H -> 4, bias=False)^T
    return params


if __name__ == "__main__":
    config = dict(
        boxes_features_dim=32,
        num_attention_heads=4,
        num_attention_layers=2,
        num_lstm_layers=2,
        lstm_hidden_dim=32,
    )
    DFF = 2048  # nn.TransformerEncoderLayer default dim_feedforward

    B, FRAMES, OBJECTS, FEAT = 2, 8, 15, 5  # bb_in_dim = 5, max 15 objects/frame

    key = jax.random.PRNGKey(0)
    k_params, k_x = jax.random.split(key)
    params = init_params(k_params, config, DFF)
    x = jax.random.normal(k_x, (B, FRAMES, OBJECTS, FEAT), jnp.float32)

    fwd = jax.jit(lambda inp, p: transformer_lstm_forward(inp, p, config))
    y = jax.block_until_ready(fwd(x, params))

    assert y.shape == (B, FRAMES, 4), y.shape
    assert bool(jnp.all(jnp.isfinite(y)))

    # Loose-tolerance check vs a plain-JAX reference (bf16 MXU passes + approx
    # reciprocal make bit-exactness impossible; structural bugs give O(1) diffs).
    y_ref = _reference_forward(x, params, config)
    err = float(jnp.max(jnp.abs(y - y_ref)))
    assert err < 1e-1, f"max |kernel - reference| = {err}"

    print("KERNEL_OK")
</pallas_src>

<mosaic_0001>
module attributes {stable_mosaic.version = 11 : i64} {
  func.func @_fused_kernel(%arg0: memref<16x8xf32, #tpu.memory_space<vmem>>, %arg1: memref<8x32xf32, #tpu.memory_space<vmem>>, %arg2: memref<32x96xf32, #tpu.memory_space<vmem>>, %arg3: memref<1x96xf32, #tpu.memory_space<vmem>>, %arg4: memref<32x32xf32, #tpu.memory_space<vmem>>, %arg5: memref<1x32xf32, #tpu.memory_space<vmem>>, %arg6: memref<32x2048xbf16, #tpu.memory_space<any>>, %arg7: memref<2048x32xbf16, #tpu.memory_space<any>>, %arg8: memref<1x2048xf32, #tpu.memory_space<vmem>>, %arg9: memref<1x32xf32, #tpu.memory_space<vmem>>, %arg10: memref<1x32xf32, #tpu.memory_space<vmem>>, %arg11: memref<1x32xf32, #tpu.memory_space<vmem>>, %arg12: memref<1x32xf32, #tpu.memory_space<vmem>>, %arg13: memref<1x32xf32, #tpu.memory_space<vmem>>, %arg14: memref<32x96xf32, #tpu.memory_space<vmem>>, %arg15: memref<1x96xf32, #tpu.memory_space<vmem>>, %arg16: memref<32x32xf32, #tpu.memory_space<vmem>>, %arg17: memref<1x32xf32, #tpu.memory_space<vmem>>, %arg18: memref<32x2048xbf16, #tpu.memory_space<any>>, %arg19: memref<2048x32xbf16, #tpu.memory_space<any>>, %arg20: memref<1x2048xf32, #tpu.memory_space<vmem>>, %arg21: memref<1x32xf32, #tpu.memory_space<vmem>>, %arg22: memref<1x32xf32, #tpu.memory_space<vmem>>, %arg23: memref<1x32xf32, #tpu.memory_space<vmem>>, %arg24: memref<1x32xf32, #tpu.memory_space<vmem>>, %arg25: memref<1x32xf32, #tpu.memory_space<vmem>>, %arg26: memref<32x128xf32, #tpu.memory_space<vmem>>, %arg27: memref<32x128xf32, #tpu.memory_space<vmem>>, %arg28: memref<32x128xf32, #tpu.memory_space<vmem>>, %arg29: memref<32x128xf32, #tpu.memory_space<vmem>>, %arg30: memref<32x4xf32, #tpu.memory_space<vmem>>, %arg31: memref<2x8x4xf32, #tpu.memory_space<vmem>>, %arg32: memref<32x2048xbf16, #tpu.memory_space<vmem>>, %arg33: memref<2048x32xbf16, #tpu.memory_space<vmem>>, %arg34: memref<32x2048xbf16, #tpu.memory_space<vmem>>, %arg35: memref<2048x32xbf16, #tpu.memory_space<vmem>>, %arg36: memref<4x!tpu.dma_semaphore, #tpu.memory_space<semaphore_mem>>) attributes {dimension_semantics = [], scalar_prefetch = 0 : i64, scratch_operands = 5 : i64, tpu.core_type = #tpu.core_type<tc>} {
    %c0_i32 = arith.constant 0 : i32
    %0 = tpu.memref_slice %arg36[%c0_i32] : memref<4x!tpu.dma_semaphore, #tpu.memory_space<semaphore_mem>> -> memref<1x!tpu.dma_semaphore, #tpu.memory_space<semaphore_mem>>
    %1 = tpu.memref_squeeze %0 : memref<1x!tpu.dma_semaphore, #tpu.memory_space<semaphore_mem>> -> memref<!tpu.dma_semaphore, #tpu.memory_space<semaphore_mem>>
    tpu.enqueue_dma source(%arg6 : memref<32x2048xbf16, #tpu.memory_space<any>>) target(%arg32 : memref<32x2048xbf16, #tpu.memory_space<vmem>>) target_semaphore(%1 : memref<!tpu.dma_semaphore, #tpu.memory_space<semaphore_mem>>)
    %c1_i32 = arith.constant 1 : i32
    %2 = tpu.memref_slice %arg36[%c1_i32] : memref<4x!tpu.dma_semaphore, #tpu.memory_space<semaphore_mem>> -> memref<1x!tpu.dma_semaphore, #tpu.memory_space<semaphore_mem>>
    %3 = tpu.memref_squeeze %2 : memref<1x!tpu.dma_semaphore, #tpu.memory_space<semaphore_mem>> -> memref<!tpu.dma_semaphore, #tpu.memory_space<semaphore_mem>>
    tpu.enqueue_dma source(%arg7 : memref<2048x32xbf16, #tpu.memory_space<any>>) target(%arg33 : memref<2048x32xbf16, #tpu.memory_space<vmem>>) target_semaphore(%3 : memref<!tpu.dma_semaphore, #tpu.memory_space<semaphore_mem>>)
    %c2_i32 = arith.constant 2 : i32
    %4 = tpu.memref_slice %arg36[%c2_i32] : memref<4x!tpu.dma_semaphore, #tpu.memory_space<semaphore_mem>> -> memref<1x!tpu.dma_semaphore, #tpu.memory_space<semaphore_mem>>
    %5 = tpu.memref_squeeze %4 : memref<1x!tpu.dma_semaphore, #tpu.memory_space<semaphore_mem>> -> memref<!tpu.dma_semaphore, #tpu.memory_space<semaphore_mem>>
    tpu.enqueue_dma source(%arg18 : memref<32x2048xbf16, #tpu.memory_space<any>>) target(%arg34 : memref<32x2048xbf16, #tpu.memory_space<vmem>>) target_semaphore(%5 : memref<!tpu.dma_semaphore, #tpu.memory_space<semaphore_mem>>)
    %c3_i32 = arith.constant 3 : i32
    %6 = tpu.memref_slice %arg36[%c3_i32] : memref<4x!tpu.dma_semaphore, #tpu.memory_space<semaphore_mem>> -> memref<1x!tpu.dma_semaphore, #tpu.memory_space<semaphore_mem>>
    %7 = tpu.memref_squeeze %6 : memref<1x!tpu.dma_semaphore, #tpu.memory_space<semaphore_mem>> -> memref<!tpu.dma_semaphore, #tpu.memory_space<semaphore_mem>>
    tpu.enqueue_dma source(%arg19 : memref<2048x32xbf16, #tpu.memory_space<any>>) target(%arg35 : memref<2048x32xbf16, #tpu.memory_space<vmem>>) target_semaphore(%7 : memref<!tpu.dma_semaphore, #tpu.memory_space<semaphore_mem>>)
    %c0 = arith.constant 0 : index
    %c0_0 = arith.constant 0 : index
    %8 = vector.load %arg0[%c0, %c0_0] : memref<16x8xf32, #tpu.memory_space<vmem>>, vector<16x8xf32>
    %c0_1 = arith.constant 0 : index
    %c0_2 = arith.constant 0 : index
    %9 = vector.load %arg1[%c0_1, %c0_2] : memref<8x32xf32, #tpu.memory_space<vmem>>, vector<8x32xf32>
    %cst = arith.constant dense<0.000000e+00> : vector<16x32xf32>
    %10 = tpu.matmul %8, %9, %cst {dimension_numbers = #tpu.dot_dimension_numbers<[1], [0], [0], [1], [0, 0, 1, 1], [], []>} : vector<16x8xf32>, vector<8x32xf32>, vector<16x32xf32> -> vector<16x32xf32>
    %cst_3 = arith.constant 0.000000e+00 : f32
    %11 = vector.broadcast %cst_3 : f32 to vector<16x32xf32>
    %12 = arith.maximumf %10, %11 : vector<16x32xf32>
    %c0_4 = arith.constant 0 : index
    %c0_5 = arith.constant 0 : index
    %13 = vector.load %arg2[%c0_4, %c0_5] : memref<32x96xf32, #tpu.memory_space<vmem>>, vector<32x96xf32>
    %cst_6 = arith.constant dense<0.000000e+00> : vector<16x96xf32>
    %14 = tpu.matmul %12, %13, %cst_6 {dimension_numbers = #tpu.dot_dimension_numbers<[1], [0], [0], [1], [0, 0, 1, 1], [], []>} : vector<16x32xf32>, vector<32x96xf32>, vector<16x96xf32> -> vector<16x96xf32>
    %c0_7 = arith.constant 0 : index
    %c0_8 = arith.constant 0 : index
    %15 = vector.load %arg3[%c0_7, %c0_8] : memref<1x96xf32, #tpu.memory_space<vmem>>, vector<1x96xf32>
    %16 = vector.broadcast %15 : vector<1x96xf32> to vector<16x96xf32>
    %17 = arith.addf %14, %16 : vector<16x96xf32>
    %18 = vector.extract_strided_slice %17 {offsets = [0, 0], sizes = [16, 32], strides = [1, 1]} : vector<16x96xf32> to vector<16x32xf32>
    %19 = vector.extract_strided_slice %17 {offsets = [0, 32], sizes = [16, 32], strides = [1, 1]} : vector<16x96xf32> to vector<16x32xf32>
    %20 = vector.extract_strided_slice %17 {offsets = [0, 64], sizes = [16, 32], strides = [1, 1]} : vector<16x96xf32> to vector<16x32xf32>
    %21 = vector.extract_strided_slice %18 {offsets = [0, 0], sizes = [16, 8], strides = [1, 1]} : vector<16x32xf32> to vector<16x8xf32>
    %22 = vector.extract_strided_slice %19 {offsets = [0, 0], sizes = [16, 8], strides = [1, 1]} : vector<16x32xf32> to vector<16x8xf32>
    %23 = vector.extract_strided_slice %20 {offsets = [0, 0], sizes = [16, 8], strides = [1, 1]} : vector<16x32xf32> to vector<16x8xf32>
    %cst_9 = arith.constant dense<0.000000e+00> : vector<16x16xf32>
    %24 = tpu.matmul %21, %22, %cst_9 {dimension_numbers = #tpu.dot_dimension_numbers<[1], [1], [0], [0], [0, 0, 1, 0], [], []>} : vector<16x8xf32>, vector<16x8xf32>, vector<16x16xf32> -> vector<16x16xf32>
    %cst_10 = arith.constant dense<0xFF800000> : vector<16xf32>
    %25 = vector.multi_reduction <maximumf>, %24, %cst_10 [1] : vector<16x16xf32> to vector<16xf32>
    %26 = vector.shape_cast %25 : vector<16xf32> to vector<16x1xf32>
    %27 = vector.broadcast %26 : vector<16x1xf32> to vector<16x16xf32>
    %28 = arith.subf %24, %27 : vector<16x16xf32>
    %29 = math.exp %28 : vector<16x16xf32>
    %cst_11 = arith.constant dense<0.000000e+00> : vector<16xf32>
    %30 = vector.multi_reduction <add>, %29, %cst_11 [1] : vector<16x16xf32> to vector<16xf32>
    %31 = vector.shape_cast %30 : vector<16xf32> to vector<16x1xf32>
    %32 = tpu.reciprocal %31 {approx = true} : vector<16x1xf32> -> vector<16x1xf32>
    %33 = vector.broadcast %32 : vector<16x1xf32> to vector<16x16xf32>
    %34 = arith.mulf %29, %33 : vector<16x16xf32>
    %cst_12 = arith.constant dense<0.000000e+00> : vector<16x8xf32>
    %35 = tpu.matmul %34, %23, %cst_12 {dimension_numbers = #tpu.dot_dimension_numbers<[1], [0], [0], [1], [0, 0, 1, 1], [], []>} : vector<16x16xf32>, vector<16x8xf32>, vector<16x8xf32> -> vector<16x8xf32>
    %36 = vector.extract_strided_slice %18 {offsets = [0, 8], sizes = [16, 8], strides = [1, 1]} : vector<16x32xf32> to vector<16x8xf32>
    %37 = vector.extract_strided_slice %19 {offsets = [0, 8], sizes = [16, 8], strides = [1, 1]} : vector<16x32xf32> to vector<16x8xf32>
    %38 = vector.extract_strided_slice %20 {offsets = [0, 8], sizes = [16, 8], strides = [1, 1]} : vector<16x32xf32> to vector<16x8xf32>
    %cst_13 = arith.constant dense<0.000000e+00> : vector<16x16xf32>
    %39 = tpu.matmul %36, %37, %cst_13 {dimension_numbers = #tpu.dot_dimension_numbers<[1], [1], [0], [0], [0, 0, 1, 0], [], []>} : vector<16x8xf32>, vector<16x8xf32>, vector<16x16xf32> -> vector<16x16xf32>
    %cst_14 = arith.constant dense<0xFF800000> : vector<16xf32>
    %40 = vector.multi_reduction <maximumf>, %39, %cst_14 [1] : vector<16x16xf32> to vector<16xf32>
    %41 = vector.shape_cast %40 : vector<16xf32> to vector<16x1xf32>
    %42 = vector.broadcast %41 : vector<16x1xf32> to vector<16x16xf32>
    %43 = arith.subf %39, %42 : vector<16x16xf32>
    %44 = math.exp %43 : vector<16x16xf32>
    %cst_15 = arith.constant dense<0.000000e+00> : vector<16xf32>
    %45 = vector.multi_reduction <add>, %44, %cst_15 [1] : vector<16x16xf32> to vector<16xf32>
    %46 = vector.shape_cast %45 : vector<16xf32> to vector<16x1xf32>
    %47 = tpu.reciprocal %46 {approx = true} : vector<16x1xf32> -> vector<16x1xf32>
    %48 = vector.broadcast %47 : vector<16x1xf32> to vector<16x16xf32>
    %49 = arith.mulf %44, %48 : vector<16x16xf32>
    %cst_16 = arith.constant dense<0.000000e+00> : vector<16x8xf32>
    %50 = tpu.matmul %49, %38, %cst_16 {dimension_numbers = #tpu.dot_dimension_numbers<[1], [0], [0], [1], [0, 0, 1, 1], [], []>} : vector<16x16xf32>, vector<16x8xf32>, vector<16x8xf32> -> vector<16x8xf32>
    %51 = vector.extract_strided_slice %18 {offsets = [0, 16], sizes = [16, 8], strides = [1, 1]} : vector<16x32xf32> to vector<16x8xf32>
    %52 = vector.extract_strided_slice %19 {offsets = [0, 16], sizes = [16, 8], strides = [1, 1]} : vector<16x32xf32> to vector<16x8xf32>
    %53 = vector.extract_strided_slice %20 {offsets = [0, 16], sizes = [16, 8], strides = [1, 1]} : vector<16x32xf32> to vector<16x8xf32>
    %cst_17 = arith.constant dense<0.000000e+00> : vector<16x16xf32>
    %54 = tpu.matmul %51, %52, %cst_17 {dimension_numbers = #tpu.dot_dimension_numbers<[1], [1], [0], [0], [0, 0, 1, 0], [], []>} : vector<16x8xf32>, vector<16x8xf32>, vector<16x16xf32> -> vector<16x16xf32>
    %cst_18 = arith.constant dense<0xFF800000> : vector<16xf32>
    %55 = vector.multi_reduction <maximumf>, %54, %cst_18 [1] : vector<16x16xf32> to vector<16xf32>
    %56 = vector.shape_cast %55 : vector<16xf32> to vector<16x1xf32>
    %57 = vector.broadcast %56 : vector<16x1xf32> to vector<16x16xf32>
    %58 = arith.subf %54, %57 : vector<16x16xf32>
    %59 = math.exp %58 : vector<16x16xf32>
    %cst_19 = arith.constant dense<0.000000e+00> : vector<16xf32>
    %60 = vector.multi_reduction <add>, %59, %cst_19 [1] : vector<16x16xf32> to vector<16xf32>
    %61 = vector.shape_cast %60 : vector<16xf32> to vector<16x1xf32>
    %62 = tpu.reciprocal %61 {approx = true} : vector<16x1xf32> -> vector<16x1xf32>
    %63 = vector.broadcast %62 : vector<16x1xf32> to vector<16x16xf32>
    %64 = arith.mulf %59, %63 : vector<16x16xf32>
    %cst_20 = arith.constant dense<0.000000e+00> : vector<16x8xf32>
    %65 = tpu.matmul %64, %53, %cst_20 {dimension_numbers = #tpu.dot_dimension_numbers<[1], [0], [0], [1], [0, 0, 1, 1], [], []>} : vector<16x16xf32>, vector<16x8xf32>, vector<16x8xf32> -> vector<16x8xf32>
    %66 = vector.extract_strided_slice %18 {offsets = [0, 24], sizes = [16, 8], strides = [1, 1]} : vector<16x32xf32> to vector<16x8xf32>
    %67 = vector.extract_strided_slice %19 {offsets = [0, 24], sizes = [16, 8], strides = [1, 1]} : vector<16x32xf32> to vector<16x8xf32>
    %68 = vector.extract_strided_slice %20 {offsets = [0, 24], sizes = [16, 8], strides = [1, 1]} : vector<16x32xf32> to vector<16x8xf32>
    %cst_21 = arith.constant dense<0.000000e+00> : vector<16x16xf32>
    %69 = tpu.matmul %66, %67, %cst_21 {dimension_numbers = #tpu.dot_dimension_numbers<[1], [1], [0], [0], [0, 0, 1, 0], [], []>} : vector<16x8xf32>, vector<16x8xf32>, vector<16x16xf32> -> vector<16x16xf32>
    %cst_22 = arith.constant dense<0xFF800000> : vector<16xf32>
    %70 = vector.multi_reduction <maximumf>, %69, %cst_22 [1] : vector<16x16xf32> to vector<16xf32>
    %71 = vector.shape_cast %70 : vector<16xf32> to vector<16x1xf32>
    %72 = vector.broadcast %71 : vector<16x1xf32> to vector<16x16xf32>
    %73 = arith.subf %69, %72 : vector<16x16xf32>
    %74 = math.exp %73 : vector<16x16xf32>
    %cst_23 = arith.constant dense<0.000000e+00> : vector<16xf32>
    %75 = vector.multi_reduction <add>, %74, %cst_23 [1] : vector<16x16xf32> to vector<16xf32>
    %76 = vector.shape_cast %75 : vector<16xf32> to vector<16x1xf32>
    %77 = tpu.reciprocal %76 {approx = true} : vector<16x1xf32> -> vector<16x1xf32>
    %78 = vector.broadcast %77 : vector<16x1xf32> to vector<16x16xf32>
    %79 = arith.mulf %74, %78 : vector<16x16xf32>
    %cst_24 = arith.constant dense<0.000000e+00> : vector<16x8xf32>
    %80 = tpu.matmul %79, %68, %cst_24 {dimension_numbers = #tpu.dot_dimension_numbers<[1], [0], [0], [1], [0, 0, 1, 1], [], []>} : vector<16x16xf32>, vector<16x8xf32>, vector<16x8xf32> -> vector<16x8xf32>
    %81 = tpu.concatenate %35, %50, %65, %80 in 1 : vector<16x8xf32>, vector<16x8xf32>, vector<16x8xf32>, vector<16x8xf32> -> vector<16x32xf32>
    %c0_25 = arith.constant 0 : index
    %c0_26 = arith.constant 0 : index
    %82 = vector.load %arg4[%c0_25, %c0_26] : memref<32x32xf32, #tpu.memory_space<vmem>>, vector<32x32xf32>
    %cst_27 = arith.constant dense<0.000000e+00> : vector<16x32xf32>
    %83 = tpu.matmul %81, %82, %cst_27 {dimension_numbers = #tpu.dot_dimension_numbers<[1], [0], [0], [1], [0, 0, 1, 1], [], []>} : vector<16x32xf32>, vector<32x32xf32>, vector<16x32xf32> -> vector<16x32xf32>
    %c0_28 = arith.constant 0 : index
    %c0_29 = arith.constant 0 : index
    %84 = vector.load %arg5[%c0_28, %c0_29] : memref<1x32xf32, #tpu.memory_space<vmem>>, vector<1x32xf32>
    %85 = vector.broadcast %84 : vector<1x32xf32> to vector<16x32xf32>
    %86 = arith.addf %83, %85 : vector<16x32xf32>
    %87 = arith.addf %12, %86 : vector<16x32xf32>
    %c0_30 = arith.constant 0 : index
    %c0_31 = arith.constant 0 : index
    %88 = vector.load %arg10[%c0_30, %c0_31] : memref<1x32xf32, #tpu.memory_space<vmem>>, vector<1x32xf32>
    %c0_32 = arith.constant 0 : index
    %c0_33 = arith.constant 0 : index
    %89 = vector.load %arg11[%c0_32, %c0_33] : memref<1x32xf32, #tpu.memory_space<vmem>>, vector<1x32xf32>
    %cst_34 = arith.constant dense<0.000000e+00> : vector<16xf32>
    %90 = vector.multi_reduction <add>, %87, %cst_34 [1] : vector<16x32xf32> to vector<16xf32>
    %91 = vector.shape_cast %90 : vector<16xf32> to vector<16x1xf32>
    %cst_35 = arith.constant 3.200000e+01 : f32
    %92 = vector.broadcast %cst_35 : f32 to vector<16x1xf32>
    %93 = arith.divf %91, %92 : vector<16x1xf32>
    %94 = arith.mulf %87, %87 : vector<16x32xf32>
    %cst_36 = arith.constant dense<0.000000e+00> : vector<16xf32>
    %95 = vector.multi_reduction <add>, %94, %cst_36 [1] : vector<16x32xf32> to vector<16xf32>
    %96 = vector.shape_cast %95 : vector<16xf32> to vector<16x1xf32>
    %cst_37 = arith.constant 3.200000e+01 : f32
    %97 = vector.broadcast %cst_37 : f32 to vector<16x1xf32>
    %98 = arith.divf %96, %97 : vector<16x1xf32>
    %99 = arith.mulf %93, %93 : vector<16x1xf32>
    %100 = arith.subf %98, %99 : vector<16x1xf32>
    %101 = vector.broadcast %93 : vector<16x1xf32> to vector<16x32xf32>
    %102 = arith.subf %87, %101 : vector<16x32xf32>
    %cst_38 = arith.constant 9.99999974E-6 : f32
    %103 = vector.broadcast %cst_38 : f32 to vector<16x1xf32>
    %104 = arith.addf %100, %103 : vector<16x1xf32>
    %105 = math.rsqrt %104 : vector<16x1xf32>
    %106 = vector.broadcast %105 : vector<16x1xf32> to vector<16x32xf32>
    %107 = arith.mulf %102, %106 : vector<16x32xf32>
    %108 = vector.broadcast %88 : vector<1x32xf32> to vector<16x32xf32>
    %109 = arith.mulf %107, %108 : vector<16x32xf32>
    %110 = vector.broadcast %89 : vector<1x32xf32> to vector<16x32xf32>
    %111 = arith.addf %109, %110 : vector<16x32xf32>
    %c0_i32_39 = arith.constant 0 : i32
    %112 = tpu.memref_slice %arg36[%c0_i32_39] : memref<4x!tpu.dma_semaphore, #tpu.memory_space<semaphore_mem>> -> memref<1x!tpu.dma_semaphore, #tpu.memory_space<semaphore_mem>>
    %113 = tpu.memref_squeeze %112 : memref<1x!tpu.dma_semaphore, #tpu.memory_space<semaphore_mem>> -> memref<!tpu.dma_semaphore, #tpu.memory_space<semaphore_mem>>
    tpu.wait_dma2 semaphore(%113 : memref<!tpu.dma_semaphore, #tpu.memory_space<semaphore_mem>>) src(%arg6 : memref<32x2048xbf16, #tpu.memory_space<any>>) dst(%arg32 : memref<32x2048xbf16, #tpu.memory_space<vmem>>)
    %c1_i32_40 = arith.constant 1 : i32
    %114 = tpu.memref_slice %arg36[%c1_i32_40] : memref<4x!tpu.dma_semaphore, #tpu.memory_space<semaphore_mem>> -> memref<1x!tpu.dma_semaphore, #tpu.memory_space<semaphore_mem>>
    %115 = tpu.memref_squeeze %114 : memref<1x!tpu.dma_semaphore, #tpu.memory_space<semaphore_mem>> -> memref<!tpu.dma_semaphore, #tpu.memory_space<semaphore_mem>>
    tpu.wait_dma2 semaphore(%115 : memref<!tpu.dma_semaphore, #tpu.memory_space<semaphore_mem>>) src(%arg7 : memref<2048x32xbf16, #tpu.memory_space<any>>) dst(%arg33 : memref<2048x32xbf16, #tpu.memory_space<vmem>>)
    %c0_41 = arith.constant 0 : index
    %c0_42 = arith.constant 0 : index
    %116 = vector.load %arg32[%c0_41, %c0_42] : memref<32x2048xbf16, #tpu.memory_space<vmem>>, vector<32x2048xbf16>
    %c0_43 = arith.constant 0 : index
    %c0_44 = arith.constant 0 : index
    %117 = vector.load %arg33[%c0_43, %c0_44] : memref<2048x32xbf16, #tpu.memory_space<vmem>>, vector<2048x32xbf16>
    %118 = arith.truncf %111 : vector<16x32xf32> to vector<16x32xbf16>
    %cst_45 = arith.constant dense<0.000000e+00> : vector<16x2048xf32>
    %119 = tpu.matmul %118, %116, %cst_45 {dimension_numbers = #tpu.dot_dimension_numbers<[1], [0], [0], [1], [0, 0, 1, 1], [], []>} : vector<16x32xbf16>, vector<32x2048xbf16>, vector<16x2048xf32> -> vector<16x2048xf32>
    %c0_46 = arith.constant 0 : index
    %c0_47 = arith.constant 0 : index
    %120 = vector.load %arg8[%c0_46, %c0_47] : memref<1x2048xf32, #tpu.memory_space<vmem>>, vector<1x2048xf32>
    %121 = vector.broadcast %120 : vector<1x2048xf32> to vector<16x2048xf32>
    %122 = arith.addf %119, %121 : vector<16x2048xf32>
    %cst_48 = arith.constant 0.000000e+00 : f32
    %123 = vector.broadcast %cst_48 : f32 to vector<16x2048xf32>
    %124 = arith.maximumf %122, %123 : vector<16x2048xf32>
    %125 = arith.truncf %124 : vector<16x2048xf32> to vector<16x2048xbf16>
    %cst_49 = arith.constant dense<0.000000e+00> : vector<16x32xf32>
    %126 = tpu.matmul %125, %117, %cst_49 {dimension_numbers = #tpu.dot_dimension_numbers<[1], [0], [0], [1], [0, 0, 1, 1], [], []>} : vector<16x2048xbf16>, vector<2048x32xbf16>, vector<16x32xf32> -> vector<16x32xf32>
    %c0_50 = arith.constant 0 : index
    %c0_51 = arith.constant 0 : index
    %127 = vector.load %arg9[%c0_50, %c0_51] : memref<1x32xf32, #tpu.memory_space<vmem>>, vector<1x32xf32>
    %128 = vector.broadcast %127 : vector<1x32xf32> to vector<16x32xf32>
    %129 = arith.addf %126, %128 : vector<16x32xf32>
    %130 = arith.addf %111, %129 : vector<16x32xf32>
    %c0_52 = arith.constant 0 : index
    %c0_53 = arith.constant 0 : index
    %131 = vector.load %arg12[%c0_52, %c0_53] : memref<1x32xf32, #tpu.memory_space<vmem>>, vector<1x32xf32>
    %c0_54 = arith.constant 0 : index
    %c0_55 = arith.constant 0 : index
    %132 = vector.load %arg13[%c0_54, %c0_55] : memref<1x32xf32, #tpu.memory_space<vmem>>, vector<1x32xf32>
    %cst_56 = arith.constant dense<0.000000e+00> : vector<16xf32>
    %133 = vector.multi_reduction <add>, %130, %cst_56 [1] : vector<16x32xf32> to vector<16xf32>
    %134 = vector.shape_cast %133 : vector<16xf32> to vector<16x1xf32>
    %cst_57 = arith.constant 3.200000e+01 : f32
    %135 = vector.broadcast %cst_57 : f32 to vector<16x1xf32>
    %136 = arith.divf %134, %135 : vector<16x1xf32>
    %137 = arith.mulf %130, %130 : vector<16x32xf32>
    %cst_58 = arith.constant dense<0.000000e+00> : vector<16xf32>
    %138 = vector.multi_reduction <add>, %137, %cst_58 [1] : vector<16x32xf32> to vector<16xf32>
    %139 = vector.shape_cast %138 : vector<16xf32> to vector<16x1xf32>
    %cst_59 = arith.constant 3.200000e+01 : f32
    %140 = vector.broadcast %cst_59 : f32 to vector<16x1xf32>
    %141 = arith.divf %139, %140 : vector<16x1xf32>
    %142 = arith.mulf %136, %136 : vector<16x1xf32>
    %143 = arith.subf %141, %142 : vector<16x1xf32>
    %144 = vector.broadcast %136 : vector<16x1xf32> to vector<16x32xf32>
    %145 = arith.subf %130, %144 : vector<16x32xf32>
    %cst_60 = arith.constant 9.99999974E-6 : f32
    %146 = vector.broadcast %cst_60 : f32 to vector<16x1xf32>
    %147 = arith.addf %143, %146 : vector<16x1xf32>
    %148 = math.rsqrt %147 : vector<16x1xf32>
    %149 = vector.broadcast %148 : vector<16x1xf32> to vector<16x32xf32>
    %150 = arith.mulf %145, %149 : vector<16x32xf32>
    %151 = vector.broadcast %131 : vector<1x32xf32> to vector<16x32xf32>
    %152 = arith.mulf %150, %151 : vector<16x32xf32>
    %153 = vector.broadcast %132 : vector<1x32xf32> to vector<16x32xf32>
    %154 = arith.addf %152, %153 : vector<16x32xf32>
    %c0_61 = arith.constant 0 : index
    %c0_62 = arith.constant 0 : index
    %155 = vector.load %arg14[%c0_61, %c0_62] : memref<32x96xf32, #tpu.memory_space<vmem>>, vector<32x96xf32>
    %cst_63 = arith.constant dense<0.000000e+00> : vector<16x96xf32>
    %156 = tpu.matmul %154, %155, %cst_63 {dimension_numbers = #tpu.dot_dimension_numbers<[1], [0], [0], [1], [0, 0, 1, 1], [], []>} : vector<16x32xf32>, vector<32x96xf32>, vector<16x96xf32> -> vector<16x96xf32>
    %c0_64 = arith.constant 0 : index
    %c0_65 = arith.constant 0 : index
    %157 = vector.load %arg15[%c0_64, %c0_65] : memref<1x96xf32, #tpu.memory_space<vmem>>, vector<1x96xf32>
    %158 = vector.broadcast %157 : vector<1x96xf32> to vector<16x96xf32>
    %159 = arith.addf %156, %158 : vector<16x96xf32>
    %160 = vector.extract_strided_slice %159 {offsets = [0, 0], sizes = [16, 32], strides = [1, 1]} : vector<16x96xf32> to vector<16x32xf32>
    %161 = vector.extract_strided_slice %159 {offsets = [0, 32], sizes = [16, 32], strides = [1, 1]} : vector<16x96xf32> to vector<16x32xf32>
    %162 = vector.extract_strided_slice %159 {offsets = [0, 64], sizes = [16, 32], strides = [1, 1]} : vector<16x96xf32> to vector<16x32xf32>
    %163 = vector.extract_strided_slice %160 {offsets = [0, 0], sizes = [16, 8], strides = [1, 1]} : vector<16x32xf32> to vector<16x8xf32>
    %164 = vector.extract_strided_slice %161 {offsets = [0, 0], sizes = [16, 8], strides = [1, 1]} : vector<16x32xf32> to vector<16x8xf32>
    %165 = vector.extract_strided_slice %162 {offsets = [0, 0], sizes = [16, 8], strides = [1, 1]} : vector<16x32xf32> to vector<16x8xf32>
    %cst_66 = arith.constant dense<0.000000e+00> : vector<16x16xf32>
    %166 = tpu.matmul %163, %164, %cst_66 {dimension_numbers = #tpu.dot_dimension_numbers<[1], [1], [0], [0], [0, 0, 1, 0], [], []>} : vector<16x8xf32>, vector<16x8xf32>, vector<16x16xf32> -> vector<16x16xf32>
    %cst_67 = arith.constant dense<0xFF800000> : vector<16xf32>
    %167 = vector.multi_reduction <maximumf>, %166, %cst_67 [1] : vector<16x16xf32> to vector<16xf32>
    %168 = vector.shape_cast %167 : vector<16xf32> to vector<16x1xf32>
    %169 = vector.broadcast %168 : vector<16x1xf32> to vector<16x16xf32>
    %170 = arith.subf %166, %169 : vector<16x16xf32>
    %171 = math.exp %170 : vector<16x16xf32>
    %cst_68 = arith.constant dense<0.000000e+00> : vector<16xf32>
    %172 = vector.multi_reduction <add>, %171, %cst_68 [1] : vector<16x16xf32> to vector<16xf32>
    %173 = vector.shape_cast %172 : vector<16xf32> to vector<16x1xf32>
    %174 = tpu.reciprocal %173 {approx = true} : vector<16x1xf32> -> vector<16x1xf32>
    %175 = vector.broadcast %174 : vector<16x1xf32> to vector<16x16xf32>
    %176 = arith.mulf %171, %175 : vector<16x16xf32>
    %cst_69 = arith.constant dense<0.000000e+00> : vector<16x8xf32>
    %177 = tpu.matmul %176, %165, %cst_69 {dimension_numbers = #tpu.dot_dimension_numbers<[1], [0], [0], [1], [0, 0, 1, 1], [], []>} : vector<16x16xf32>, vector<16x8xf32>, vector<16x8xf32> -> vector<16x8xf32>
    %178 = vector.extract_strided_slice %160 {offsets = [0, 8], sizes = [16, 8], strides = [1, 1]} : vector<16x32xf32> to vector<16x8xf32>
    %179 = vector.extract_strided_slice %161 {offsets = [0, 8], sizes = [16, 8], strides = [1, 1]} : vector<16x32xf32> to vector<16x8xf32>
    %180 = vector.extract_strided_slice %162 {offsets = [0, 8], sizes = [16, 8], strides = [1, 1]} : vector<16x32xf32> to vector<16x8xf32>
    %cst_70 = arith.constant dense<0.000000e+00> : vector<16x16xf32>
    %181 = tpu.matmul %178, %179, %cst_70 {dimension_numbers = #tpu.dot_dimension_numbers<[1], [1], [0], [0], [0, 0, 1, 0], [], []>} : vector<16x8xf32>, vector<16x8xf32>, vector<16x16xf32> -> vector<16x16xf32>
    %cst_71 = arith.constant dense<0xFF800000> : vector<16xf32>
    %182 = vector.multi_reduction <maximumf>, %181, %cst_71 [1] : vector<16x16xf32> to vector<16xf32>
    %183 = vector.shape_cast %182 : vector<16xf32> to vector<16x1xf32>
    %184 = vector.broadcast %183 : vector<16x1xf32> to vector<16x16xf32>
    %185 = arith.subf %181, %184 : vector<16x16xf32>
    %186 = math.exp %185 : vector<16x16xf32>
    %cst_72 = arith.constant dense<0.000000e+00> : vector<16xf32>
    %187 = vector.multi_reduction <add>, %186, %cst_72 [1] : vector<16x16xf32> to vector<16xf32>
    %188 = vector.shape_cast %187 : vector<16xf32> to vector<16x1xf32>
    %189 = tpu.reciprocal %188 {approx = true} : vector<16x1xf32> -> vector<16x1xf32>
    %190 = vector.broadcast %189 : vector<16x1xf32> to vector<16x16xf32>
    %191 = arith.mulf %186, %190 : vector<16x16xf32>
    %cst_73 = arith.constant dense<0.000000e+00> : vector<16x8xf32>
    %192 = tpu.matmul %191, %180, %cst_73 {dimension_numbers = #tpu.dot_dimension_numbers<[1], [0], [0], [1], [0, 0, 1, 1], [], []>} : vector<16x16xf32>, vector<16x8xf32>, vector<16x8xf32> -> vector<16x8xf32>
    %193 = vector.extract_strided_slice %160 {offsets = [0, 16], sizes = [16, 8], strides = [1, 1]} : vector<16x32xf32> to vector<16x8xf32>
    %194 = vector.extract_strided_slice %161 {offsets = [0, 16], sizes = [16, 8], strides = [1, 1]} : vector<16x32xf32> to vector<16x8xf32>
    %195 = vector.extract_strided_slice %162 {offsets = [0, 16], sizes = [16, 8], strides = [1, 1]} : vector<16x32xf32> to vector<16x8xf32>
    %cst_74 = arith.constant dense<0.000000e+00> : vector<16x16xf32>
    %196 = tpu.matmul %193, %194, %cst_74 {dimension_numbers = #tpu.dot_dimension_numbers<[1], [1], [0], [0], [0, 0, 1, 0], [], []>} : vector<16x8xf32>, vector<16x8xf32>, vector<16x16xf32> -> vector<16x16xf32>
    %cst_75 = arith.constant dense<0xFF800000> : vector<16xf32>
    %197 = vector.multi_reduction <maximumf>, %196, %cst_75 [1] : vector<16x16xf32> to vector<16xf32>
    %198 = vector.shape_cast %197 : vector<16xf32> to vector<16x1xf32>
    %199 = vector.broadcast %198 : vector<16x1xf32> to vector<16x16xf32>
    %200 = arith.subf %196, %199 : vector<16x16xf32>
    %201 = math.exp %200 : vector<16x16xf32>
    %cst_76 = arith.constant dense<0.000000e+00> : vector<16xf32>
    %202 = vector.multi_reduction <add>, %201, %cst_76 [1] : vector<16x16xf32> to vector<16xf32>
    %203 = vector.shape_cast %202 : vector<16xf32> to vector<16x1xf32>
    %204 = tpu.reciprocal %203 {approx = true} : vector<16x1xf32> -> vector<16x1xf32>
    %205 = vector.broadcast %204 : vector<16x1xf32> to vector<16x16xf32>
    %206 = arith.mulf %201, %205 : vector<16x16xf32>
    %cst_77 = arith.constant dense<0.000000e+00> : vector<16x8xf32>
    %207 = tpu.matmul %206, %195, %cst_77 {dimension_numbers = #tpu.dot_dimension_numbers<[1], [0], [0], [1], [0, 0, 1, 1], [], []>} : vector<16x16xf32>, vector<16x8xf32>, vector<16x8xf32> -> vector<16x8xf32>
    %208 = vector.extract_strided_slice %160 {offsets = [0, 24], sizes = [16, 8], strides = [1, 1]} : vector<16x32xf32> to vector<16x8xf32>
    %209 = vector.extract_strided_slice %161 {offsets = [0, 24], sizes = [16, 8], strides = [1, 1]} : vector<16x32xf32> to vector<16x8xf32>
    %210 = vector.extract_strided_slice %162 {offsets = [0, 24], sizes = [16, 8], strides = [1, 1]} : vector<16x32xf32> to vector<16x8xf32>
    %cst_78 = arith.constant dense<0.000000e+00> : vector<16x16xf32>
    %211 = tpu.matmul %208, %209, %cst_78 {dimension_numbers = #tpu.dot_dimension_numbers<[1], [1], [0], [0], [0, 0, 1, 0], [], []>} : vector<16x8xf32>, vector<16x8xf32>, vector<16x16xf32> -> vector<16x16xf32>
    %cst_79 = arith.constant dense<0xFF800000> : vector<16xf32>
    %212 = vector.multi_reduction <maximumf>, %211, %cst_79 [1] : vector<16x16xf32> to vector<16xf32>
    %213 = vector.shape_cast %212 : vector<16xf32> to vector<16x1xf32>
    %214 = vector.broadcast %213 : vector<16x1xf32> to vector<16x16xf32>
    %215 = arith.subf %211, %214 : vector<16x16xf32>
    %216 = math.exp %215 : vector<16x16xf32>
    %cst_80 = arith.constant dense<0.000000e+00> : vector<16xf32>
    %217 = vector.multi_reduction <add>, %216, %cst_80 [1] : vector<16x16xf32> to vector<16xf32>
    %218 = vector.shape_cast %217 : vector<16xf32> to vector<16x1xf32>
    %219 = tpu.reciprocal %218 {approx = true} : vector<16x1xf32> -> vector<16x1xf32>
    %220 = vector.broadcast %219 : vector<16x1xf32> to vector<16x16xf32>
    %221 = arith.mulf %216, %220 : vector<16x16xf32>
    %cst_81 = arith.constant dense<0.000000e+00> : vector<16x8xf32>
    %222 = tpu.matmul %221, %210, %cst_81 {dimension_numbers = #tpu.dot_dimension_numbers<[1], [0], [0], [1], [0, 0, 1, 1], [], []>} : vector<16x16xf32>, vector<16x8xf32>, vector<16x8xf32> -> vector<16x8xf32>
    %223 = tpu.concatenate %177, %192, %207, %222 in 1 : vector<16x8xf32>, vector<16x8xf32>, vector<16x8xf32>, vector<16x8xf32> -> vector<16x32xf32>
    %c0_82 = arith.constant 0 : index
    %c0_83 = arith.constant 0 : index
    %224 = vector.load %arg16[%c0_82, %c0_83] : memref<32x32xf32, #tpu.memory_space<vmem>>, vector<32x32xf32>
    %cst_84 = arith.constant dense<0.000000e+00> : vector<16x32xf32>
    %225 = tpu.matmul %223, %224, %cst_84 {dimension_numbers = #tpu.dot_dimension_numbers<[1], [0], [0], [1], [0, 0, 1, 1], [], []>} : vector<16x32xf32>, vector<32x32xf32>, vector<16x32xf32> -> vector<16x32xf32>
    %c0_85 = arith.constant 0 : index
    %c0_86 = arith.constant 0 : index
    %226 = vector.load %arg17[%c0_85, %c0_86] : memref<1x32xf32, #tpu.memory_space<vmem>>, vector<1x32xf32>
    %227 = vector.broadcast %226 : vector<1x32xf32> to vector<16x32xf32>
    %228 = arith.addf %225, %227 : vector<16x32xf32>
    %229 = arith.addf %154, %228 : vector<16x32xf32>
    %c0_87 = arith.constant 0 : index
    %c0_88 = arith.constant 0 : index
    %230 = vector.load %arg22[%c0_87, %c0_88] : memref<1x32xf32, #tpu.memory_space<vmem>>, vector<1x32xf32>
    %c0_89 = arith.constant 0 : index
    %c0_90 = arith.constant 0 : index
    %231 = vector.load %arg23[%c0_89, %c0_90] : memref<1x32xf32, #tpu.memory_space<vmem>>, vector<1x32xf32>
    %cst_91 = arith.constant dense<0.000000e+00> : vector<16xf32>
    %232 = vector.multi_reduction <add>, %229, %cst_91 [1] : vector<16x32xf32> to vector<16xf32>
    %233 = vector.shape_cast %232 : vector<16xf32> to vector<16x1xf32>
    %cst_92 = arith.constant 3.200000e+01 : f32
    %234 = vector.broadcast %cst_92 : f32 to vector<16x1xf32>
    %235 = arith.divf %233, %234 : vector<16x1xf32>
    %236 = arith.mulf %229, %229 : vector<16x32xf32>
    %cst_93 = arith.constant dense<0.000000e+00> : vector<16xf32>
    %237 = vector.multi_reduction <add>, %236, %cst_93 [1] : vector<16x32xf32> to vector<16xf32>
    %238 = vector.shape_cast %237 : vector<16xf32> to vector<16x1xf32>
    %cst_94 = arith.constant 3.200000e+01 : f32
    %239 = vector.broadcast %cst_94 : f32 to vector<16x1xf32>
    %240 = arith.divf %238, %239 : vector<16x1xf32>
    %241 = arith.mulf %235, %235 : vector<16x1xf32>
    %242 = arith.subf %240, %241 : vector<16x1xf32>
    %243 = vector.broadcast %235 : vector<16x1xf32> to vector<16x32xf32>
    %244 = arith.subf %229, %243 : vector<16x32xf32>
    %cst_95 = arith.constant 9.99999974E-6 : f32
    %245 = vector.broadcast %cst_95 : f32 to vector<16x1xf32>
    %246 = arith.addf %242, %245 : vector<16x1xf32>
    %247 = math.rsqrt %246 : vector<16x1xf32>
    %248 = vector.broadcast %247 : vector<16x1xf32> to vector<16x32xf32>
    %249 = arith.mulf %244, %248 : vector<16x32xf32>
    %250 = vector.broadcast %230 : vector<1x32xf32> to vector<16x32xf32>
    %251 = arith.mulf %249, %250 : vector<16x32xf32>
    %252 = vector.broadcast %231 : vector<1x32xf32> to vector<16x32xf32>
    %253 = arith.addf %251, %252 : vector<16x32xf32>
    %c2_i32_96 = arith.constant 2 : i32
    %254 = tpu.memref_slice %arg36[%c2_i32_96] : memref<4x!tpu.dma_semaphore, #tpu.memory_space<semaphore_mem>> -> memref<1x!tpu.dma_semaphore, #tpu.memory_space<semaphore_mem>>
    %255 = tpu.memref_squeeze %254 : memref<1x!tpu.dma_semaphore, #tpu.memory_space<semaphore_mem>> -> memref<!tpu.dma_semaphore, #tpu.memory_space<semaphore_mem>>
    tpu.wait_dma2 semaphore(%255 : memref<!tpu.dma_semaphore, #tpu.memory_space<semaphore_mem>>) src(%arg18 : memref<32x2048xbf16, #tpu.memory_space<any>>) dst(%arg34 : memref<32x2048xbf16, #tpu.memory_space<vmem>>)
    %c3_i32_97 = arith.constant 3 : i32
    %256 = tpu.memref_slice %arg36[%c3_i32_97] : memref<4x!tpu.dma_semaphore, #tpu.memory_space<semaphore_mem>> -> memref<1x!tpu.dma_semaphore, #tpu.memory_space<semaphore_mem>>
    %257 = tpu.memref_squeeze %256 : memref<1x!tpu.dma_semaphore, #tpu.memory_space<semaphore_mem>> -> memref<!tpu.dma_semaphore, #tpu.memory_space<semaphore_mem>>
    tpu.wait_dma2 semaphore(%257 : memref<!tpu.dma_semaphore, #tpu.memory_space<semaphore_mem>>) src(%arg19 : memref<2048x32xbf16, #tpu.memory_space<any>>) dst(%arg35 : memref<2048x32xbf16, #tpu.memory_space<vmem>>)
    %c0_98 = arith.constant 0 : index
    %c0_99 = arith.constant 0 : index
    %258 = vector.load %arg34[%c0_98, %c0_99] : memref<32x2048xbf16, #tpu.memory_space<vmem>>, vector<32x2048xbf16>
    %c0_100 = arith.constant 0 : index
    %c0_101 = arith.constant 0 : index
    %259 = vector.load %arg35[%c0_100, %c0_101] : memref<2048x32xbf16, #tpu.memory_space<vmem>>, vector<2048x32xbf16>
    %260 = arith.truncf %253 : vector<16x32xf32> to vector<16x32xbf16>
    %cst_102 = arith.constant dense<0.000000e+00> : vector<16x2048xf32>
    %261 = tpu.matmul %260, %258, %cst_102 {dimension_numbers = #tpu.dot_dimension_numbers<[1], [0], [0], [1], [0, 0, 1, 1], [], []>} : vector<16x32xbf16>, vector<32x2048xbf16>, vector<16x2048xf32> -> vector<16x2048xf32>
    %c0_103 = arith.constant 0 : index
    %c0_104 = arith.constant 0 : index
    %262 = vector.load %arg20[%c0_103, %c0_104] : memref<1x2048xf32, #tpu.memory_space<vmem>>, vector<1x2048xf32>
    %263 = vector.broadcast %262 : vector<1x2048xf32> to vector<16x2048xf32>
    %264 = arith.addf %261, %263 : vector<16x2048xf32>
    %cst_105 = arith.constant 0.000000e+00 : f32
    %265 = vector.broadcast %cst_105 : f32 to vector<16x2048xf32>
    %266 = arith.maximumf %264, %265 : vector<16x2048xf32>
    %267 = arith.truncf %266 : vector<16x2048xf32> to vector<16x2048xbf16>
    %cst_106 = arith.constant dense<0.000000e+00> : vector<16x32xf32>
    %268 = tpu.matmul %267, %259, %cst_106 {dimension_numbers = #tpu.dot_dimension_numbers<[1], [0], [0], [1], [0, 0, 1, 1], [], []>} : vector<16x2048xbf16>, vector<2048x32xbf16>, vector<16x32xf32> -> vector<16x32xf32>
    %c0_107 = arith.constant 0 : index
    %c0_108 = arith.constant 0 : index
    %269 = vector.load %arg21[%c0_107, %c0_108] : memref<1x32xf32, #tpu.memory_space<vmem>>, vector<1x32xf32>
    %270 = vector.broadcast %269 : vector<1x32xf32> to vector<16x32xf32>
    %271 = arith.addf %268, %270 : vector<16x32xf32>
    %272 = arith.addf %253, %271 : vector<16x32xf32>
    %c0_109 = arith.constant 0 : index
    %c0_110 = arith.constant 0 : index
    %273 = vector.load %arg24[%c0_109, %c0_110] : memref<1x32xf32, #tpu.memory_space<vmem>>, vector<1x32xf32>
    %c0_111 = arith.constant 0 : index
    %c0_112 = arith.constant 0 : index
    %274 = vector.load %arg25[%c0_111, %c0_112] : memref<1x32xf32, #tpu.memory_space<vmem>>, vector<1x32xf32>
    %cst_113 = arith.constant dense<0.000000e+00> : vector<16xf32>
    %275 = vector.multi_reduction <add>, %272, %cst_113 [1] : vector<16x32xf32> to vector<16xf32>
    %276 = vector.shape_cast %275 : vector<16xf32> to vector<16x1xf32>
    %cst_114 = arith.constant 3.200000e+01 : f32
    %277 = vector.broadcast %cst_114 : f32 to vector<16x1xf32>
    %278 = arith.divf %276, %277 : vector<16x1xf32>
    %279 = arith.mulf %272, %272 : vector<16x32xf32>
    %cst_115 = arith.constant dense<0.000000e+00> : vector<16xf32>
    %280 = vector.multi_reduction <add>, %279, %cst_115 [1] : vector<16x32xf32> to vector<16xf32>
    %281 = vector.shape_cast %280 : vector<16xf32> to vector<16x1xf32>
    %cst_116 = arith.constant 3.200000e+01 : f32
    %282 = vector.broadcast %cst_116 : f32 to vector<16x1xf32>
    %283 = arith.divf %281, %282 : vector<16x1xf32>
    %284 = arith.mulf %278, %278 : vector<16x1xf32>
    %285 = arith.subf %283, %284 : vector<16x1xf32>
    %286 = vector.broadcast %278 : vector<16x1xf32> to vector<16x32xf32>
    %287 = arith.subf %272, %286 : vector<16x32xf32>
    %cst_117 = arith.constant 9.99999974E-6 : f32
    %288 = vector.broadcast %cst_117 : f32 to vector<16x1xf32>
    %289 = arith.addf %285, %288 : vector<16x1xf32>
    %290 = math.rsqrt %289 : vector<16x1xf32>
    %291 = vector.broadcast %290 : vector<16x1xf32> to vector<16x32xf32>
    %292 = arith.mulf %287, %291 : vector<16x32xf32>
    %293 = vector.broadcast %273 : vector<1x32xf32> to vector<16x32xf32>
    %294 = arith.mulf %292, %293 : vector<16x32xf32>
    %295 = vector.broadcast %274 : vector<1x32xf32> to vector<16x32xf32>
    %296 = arith.addf %294, %295 : vector<16x32xf32>
    %c0_118 = arith.constant 0 : index
    %c0_119 = arith.constant 0 : index
    %297 = vector.load %arg26[%c0_118, %c0_119] : memref<32x128xf32, #tpu.memory_space<vmem>>, vector<32x128xf32>
    %c0_120 = arith.constant 0 : index
    %c0_121 = arith.constant 0 : index
    %298 = vector.load %arg28[%c0_120, %c0_121] : memref<32x128xf32, #tpu.memory_space<vmem>>, vector<32x128xf32>
    %c0_122 = arith.constant 0 : index
    %c0_123 = arith.constant 0 : index
    %299 = vector.load %arg27[%c0_122, %c0_123] : memref<32x128xf32, #tpu.memory_space<vmem>>, vector<32x128xf32>
    %c0_124 = arith.constant 0 : index
    %c0_125 = arith.constant 0 : index
    %300 = vector.load %arg29[%c0_124, %c0_125] : memref<32x128xf32, #tpu.memory_space<vmem>>, vector<32x128xf32>
    %c0_126 = arith.constant 0 : index
    %c0_127 = arith.constant 0 : index
    %301 = vector.load %arg30[%c0_126, %c0_127] : memref<32x4xf32, #tpu.memory_space<vmem>>, vector<32x4xf32>
    %cst_128 = arith.constant dense<0.000000e+00> : vector<16x128xf32>
    %302 = tpu.matmul %296, %297, %cst_128 {dimension_numbers = #tpu.dot_dimension_numbers<[1], [0], [0], [1], [0, 0, 1, 1], [], []>} : vector<16x32xf32>, vector<32x128xf32>, vector<16x128xf32> -> vector<16x128xf32>
    %303 = vector.shape_cast %302 : vector<16x128xf32> to vector<2x8x128xf32>
    %cst_129 = arith.constant 0.000000e+00 : f32
    %304 = vector.broadcast %cst_129 : f32 to vector<2x32xf32>
    %cst_130 = arith.constant 0.000000e+00 : f32
    %305 = vector.broadcast %cst_130 : f32 to vector<2x32xf32>
    %cst_131 = arith.constant 0.000000e+00 : f32
    %306 = vector.broadcast %cst_131 : f32 to vector<2x32xf32>
    %cst_132 = arith.constant 0.000000e+00 : f32
    %307 = vector.broadcast %cst_132 : f32 to vector<2x32xf32>
    %308 = vector.extract_strided_slice %303 {offsets = [0, 0, 0], sizes = [2, 1, 128], strides = [1, 1, 1]} : vector<2x8x128xf32> to vector<2x1x128xf32>
    %309 = vector.shape_cast %308 : vector<2x1x128xf32> to vector<2x128xf32>
    %cst_133 = arith.constant dense<0.000000e+00> : vector<2x128xf32>
    %310 = tpu.matmul %304, %299, %cst_133 {dimension_numbers = #tpu.dot_dimension_numbers<[1], [0], [0], [1], [0, 0, 1, 1], [], []>} : vector<2x32xf32>, vector<32x128xf32>, vector<2x128xf32> -> vector<2x128xf32>
    %311 = arith.addf %309, %310 : vector<2x128xf32>
    %312 = vector.extract_strided_slice %311 {offsets = [0, 0], sizes = [2, 96], strides = [1, 1]} : vector<2x128xf32> to vector<2x96xf32>
    %313 = arith.negf %312 : vector<2x96xf32>
    %314 = math.exp %313 : vector<2x96xf32>
    %cst_134 = arith.constant 1.000000e+00 : f32
    %315 = vector.broadcast %cst_134 : f32 to vector<2x96xf32>
    %316 = arith.addf %315, %314 : vector<2x96xf32>
    %317 = arith.divf %315, %316 : vector<2x96xf32>
    %318 = vector.extract_strided_slice %317 {offsets = [0, 0], sizes = [2, 32], strides = [1, 1]} : vector<2x96xf32> to vector<2x32xf32>
    %319 = vector.extract_strided_slice %317 {offsets = [0, 32], sizes = [2, 32], strides = [1, 1]} : vector<2x96xf32> to vector<2x32xf32>
    %320 = vector.extract_strided_slice %317 {offsets = [0, 64], sizes = [2, 32], strides = [1, 1]} : vector<2x96xf32> to vector<2x32xf32>
    %321 = vector.extract_strided_slice %311 {offsets = [0, 96], sizes = [2, 32], strides = [1, 1]} : vector<2x128xf32> to vector<2x32xf32>
    %322 = math.tanh %321 : vector<2x32xf32>
    %323 = arith.mulf %319, %306 : vector<2x32xf32>
    %324 = arith.mulf %318, %322 : vector<2x32xf32>
    %325 = arith.addf %323, %324 : vector<2x32xf32>
    %326 = math.tanh %325 : vector<2x32xf32>
    %327 = arith.mulf %320, %326 : vector<2x32xf32>
    %cst_135 = arith.constant dense<0.000000e+00> : vector<2x128xf32>
    %328 = tpu.matmul %327, %298, %cst_135 {dimension_numbers = #tpu.dot_dimension_numbers<[1], [0], [0], [1], [0, 0, 1, 1], [], []>} : vector<2x32xf32>, vector<32x128xf32>, vector<2x128xf32> -> vector<2x128xf32>
    %cst_136 = arith.constant dense<0.000000e+00> : vector<2x128xf32>
    %329 = tpu.matmul %305, %300, %cst_136 {dimension_numbers = #tpu.dot_dimension_numbers<[1], [0], [0], [1], [0, 0, 1, 1], [], []>} : vector<2x32xf32>, vector<32x128xf32>, vector<2x128xf32> -> vector<2x128xf32>
    %330 = arith.addf %328, %329 : vector<2x128xf32>
    %331 = vector.extract_strided_slice %330 {offsets = [0, 0], sizes = [2, 96], strides = [1, 1]} : vector<2x128xf32> to vector<2x96xf32>
    %332 = arith.negf %331 : vector<2x96xf32>
    %333 = math.exp %332 : vector<2x96xf32>
    %cst_137 = arith.constant 1.000000e+00 : f32
    %334 = vector.broadcast %cst_137 : f32 to vector<2x96xf32>
    %335 = arith.addf %334, %333 : vector<2x96xf32>
    %336 = arith.divf %334, %335 : vector<2x96xf32>
    %337 = vector.extract_strided_slice %336 {offsets = [0, 0], sizes = [2, 32], strides = [1, 1]} : vector<2x96xf32> to vector<2x32xf32>
    %338 = vector.extract_strided_slice %336 {offsets = [0, 32], sizes = [2, 32], strides = [1, 1]} : vector<2x96xf32> to vector<2x32xf32>
    %339 = vector.extract_strided_slice %336 {offsets = [0, 64], sizes = [2, 32], strides = [1, 1]} : vector<2x96xf32> to vector<2x32xf32>
    %340 = vector.extract_strided_slice %330 {offsets = [0, 96], sizes = [2, 32], strides = [1, 1]} : vector<2x128xf32> to vector<2x32xf32>
    %341 = math.tanh %340 : vector<2x32xf32>
    %342 = arith.mulf %338, %307 : vector<2x32xf32>
    %343 = arith.mulf %337, %341 : vector<2x32xf32>
    %344 = arith.addf %342, %343 : vector<2x32xf32>
    %345 = math.tanh %344 : vector<2x32xf32>
    %346 = arith.mulf %339, %345 : vector<2x32xf32>
    %cst_138 = arith.constant dense<0.000000e+00> : vector<2x4xf32>
    %347 = tpu.matmul %346, %301, %cst_138 {dimension_numbers = #tpu.dot_dimension_numbers<[1], [0], [0], [1], [0, 0, 1, 1], [], []>} : vector<2x32xf32>, vector<32x4xf32>, vector<2x4xf32> -> vector<2x4xf32>
    %c0_139 = arith.constant 0 : index
    %c0_140 = arith.constant 0 : index
    %c0_141 = arith.constant 0 : index
    %348 = vector.load %arg31[%c0_139, %c0_140, %c0_141] : memref<2x8x4xf32, #tpu.memory_space<vmem>>, vector<2x1x4xf32>
    %349 = vector.shape_cast %348 : vector<2x1x4xf32> to vector<2x4xf32>
    %350 = vector.shape_cast %347 : vector<2x4xf32> to vector<2x1x4xf32>
    tpu.vector_store %arg31[%c0_139, %c0_140, %c0_141], %350 {strides = array<i32>} : memref<2x8x4xf32, #tpu.memory_space<vmem>>, vector<2x1x4xf32>,
    %351 = vector.extract_strided_slice %303 {offsets = [0, 1, 0], sizes = [2, 1, 128], strides = [1, 1, 1]} : vector<2x8x128xf32> to vector<2x1x128xf32>
    %352 = vector.shape_cast %351 : vector<2x1x128xf32> to vector<2x128xf32>
    %cst_142 = arith.constant dense<0.000000e+00> : vector<2x128xf32>
    %353 = tpu.matmul %327, %299, %cst_142 {dimension_numbers = #tpu.dot_dimension_numbers<[1], [0], [0], [1], [0, 0, 1, 1], [], []>} : vector<2x32xf32>, vector<32x128xf32>, vector<2x128xf32> -> vector<2x128xf32>
    %354 = arith.addf %352, %353 : vector<2x128xf32>
    %355 = vector.extract_strided_slice %354 {offsets = [0, 0], sizes = [2, 96], strides = [1, 1]} : vector<2x128xf32> to vector<2x96xf32>
    %356 = arith.negf %355 : vector<2x96xf32>
    %357 = math.exp %356 : vector<2x96xf32>
    %cst_143 = arith.constant 1.000000e+00 : f32
    %358 = vector.broadcast %cst_143 : f32 to vector<2x96xf32>
    %359 = arith.addf %358, %357 : vector<2x96xf32>
    %360 = arith.divf %358, %359 : vector<2x96xf32>
    %361 = vector.extract_strided_slice %360 {offsets = [0, 0], sizes = [2, 32], strides = [1, 1]} : vector<2x96xf32> to vector<2x32xf32>
    %362 = vector.extract_strided_slice %360 {offsets = [0, 32], sizes = [2, 32], strides = [1, 1]} : vector<2x96xf32> to vector<2x32xf32>
    %363 = vector.extract_strided_slice %360 {offsets = [0, 64], sizes = [2, 32], strides = [1, 1]} : vector<2x96xf32> to vector<2x32xf32>
    %364 = vector.extract_strided_slice %354 {offsets = [0, 96], sizes = [2, 32], strides = [1, 1]} : vector<2x128xf32> to vector<2x32xf32>
    %365 = math.tanh %364 : vector<2x32xf32>
    %366 = arith.mulf %362, %325 : vector<2x32xf32>
    %367 = arith.mulf %361, %365 : vector<2x32xf32>
    %368 = arith.addf %366, %367 : vector<2x32xf32>
    %369 = math.tanh %368 : vector<2x32xf32>
    %370 = arith.mulf %363, %369 : vector<2x32xf32>
    %cst_144 = arith.constant dense<0.000000e+00> : vector<2x128xf32>
    %371 = tpu.matmul %370, %298, %cst_144 {dimension_numbers = #tpu.dot_dimension_numbers<[1], [0], [0], [1], [0, 0, 1, 1], [], []>} : vector<2x32xf32>, vector<32x128xf32>, vector<2x128xf32> -> vector<2x128xf32>
    %cst_145 = arith.constant dense<0.000000e+00> : vector<2x128xf32>
    %372 = tpu.matmul %346, %300, %cst_145 {dimension_numbers = #tpu.dot_dimension_numbers<[1], [0], [0], [1], [0, 0, 1, 1], [], []>} : vector<2x32xf32>, vector<32x128xf32>, vector<2x128xf32> -> vector<2x128xf32>
    %373 = arith.addf %371, %372 : vector<2x128xf32>
    %374 = vector.extract_strided_slice %373 {offsets = [0, 0], sizes = [2, 96], strides = [1, 1]} : vector<2x128xf32> to vector<2x96xf32>
    %375 = arith.negf %374 : vector<2x96xf32>
    %376 = math.exp %375 : vector<2x96xf32>
    %cst_146 = arith.constant 1.000000e+00 : f32
    %377 = vector.broadcast %cst_146 : f32 to vector<2x96xf32>
    %378 = arith.addf %377, %376 : vector<2x96xf32>
    %379 = arith.divf %377, %378 : vector<2x96xf32>
    %380 = vector.extract_strided_slice %379 {offsets = [0, 0], sizes = [2, 32], strides = [1, 1]} : vector<2x96xf32> to vector<2x32xf32>
    %381 = vector.extract_strided_slice %379 {offsets = [0, 32], sizes = [2, 32], strides = [1, 1]} : vector<2x96xf32> to vector<2x32xf32>
    %382 = vector.extract_strided_slice %379 {offsets = [0, 64], sizes = [2, 32], strides = [1, 1]} : vector<2x96xf32> to vector<2x32xf32>
    %383 = vector.extract_strided_slice %373 {offsets = [0, 96], sizes = [2, 32], strides = [1, 1]} : vector<2x128xf32> to vector<2x32xf32>
    %384 = math.tanh %383 : vector<2x32xf32>
    %385 = arith.mulf %381, %344 : vector<2x32xf32>
    %386 = arith.mulf %380, %384 : vector<2x32xf32>
    %387 = arith.addf %385, %386 : vector<2x32xf32>
    %388 = math.tanh %387 : vector<2x32xf32>
    %389 = arith.mulf %382, %388 : vector<2x32xf32>
    %cst_147 = arith.constant dense<0.000000e+00> : vector<2x4xf32>
    %390 = tpu.matmul %389, %301, %cst_147 {dimension_numbers = #tpu.dot_dimension_numbers<[1], [0], [0], [1], [0, 0, 1, 1], [], []>} : vector<2x32xf32>, vector<32x4xf32>, vector<2x4xf32> -> vector<2x4xf32>
    %c0_148 = arith.constant 0 : index
    %c1 = arith.constant 1 : index
    %c0_149 = arith.constant 0 : index
    %391 = vector.load %arg31[%c0_148, %c1, %c0_149] : memref<2x8x4xf32, #tpu.memory_space<vmem>>, vector<2x1x4xf32>
    %392 = vector.shape_cast %391 : vector<2x1x4xf32> to vector<2x4xf32>
    %393 = vector.shape_cast %390 : vector<2x4xf32> to vector<2x1x4xf32>
    tpu.vector_store %arg31[%c0_148, %c1, %c0_149], %393 {strides = array<i32>} : memref<2x8x4xf32, #tpu.memory_space<vmem>>, vector<2x1x4xf32>,
    %394 = vector.extract_strided_slice %303 {offsets = [0, 2, 0], sizes = [2, 1, 128], strides = [1, 1, 1]} : vector<2x8x128xf32> to vector<2x1x128xf32>
    %395 = vector.shape_cast %394 : vector<2x1x128xf32> to vector<2x128xf32>
    %cst_150 = arith.constant dense<0.000000e+00> : vector<2x128xf32>
    %396 = tpu.matmul %370, %299, %cst_150 {dimension_numbers = #tpu.dot_dimension_numbers<[1], [0], [0], [1], [0, 0, 1, 1], [], []>} : vector<2x32xf32>, vector<32x128xf32>, vector<2x128xf32> -> vector<2x128xf32>
    %397 = arith.addf %395, %396 : vector<2x128xf32>
    %398 = vector.extract_strided_slice %397 {offsets = [0, 0], sizes = [2, 96], strides = [1, 1]} : vector<2x128xf32> to vector<2x96xf32>
    %399 = arith.negf %398 : vector<2x96xf32>
    %400 = math.exp %399 : vector<2x96xf32>
    %cst_151 = arith.constant 1.000000e+00 : f32
    %401 = vector.broadcast %cst_151 : f32 to vector<2x96xf32>
    %402 = arith.addf %401, %400 : vector<2x96xf32>
    %403 = arith.divf %401, %402 : vector<2x96xf32>
    %404 = vector.extract_strided_slice %403 {offsets = [0, 0], sizes = [2, 32], strides = [1, 1]} : vector<2x96xf32> to vector<2x32xf32>
    %405 = vector.extract_strided_slice %403 {offsets = [0, 32], sizes = [2, 32], strides = [1, 1]} : vector<2x96xf32> to vector<2x32xf32>
    %406 = vector.extract_strided_slice %403 {offsets = [0, 64], sizes = [2, 32], strides = [1, 1]} : vector<2x96xf32> to vector<2x32xf32>
    %407 = vector.extract_strided_slice %397 {offsets = [0, 96], sizes = [2, 32], strides = [1, 1]} : vector<2x128xf32> to vector<2x32xf32>
    %408 = math.tanh %407 : vector<2x32xf32>
    %409 = arith.mulf %405, %368 : vector<2x32xf32>
    %410 = arith.mulf %404, %408 : vector<2x32xf32>
    %411 = arith.addf %409, %410 : vector<2x32xf32>
    %412 = math.tanh %411 : vector<2x32xf32>
    %413 = arith.mulf %406, %412 : vector<2x32xf32>
    %cst_152 = arith.constant dense<0.000000e+00> : vector<2x128xf32>
    %414 = tpu.matmul %413, %298, %cst_152 {dimension_numbers = #tpu.dot_dimension_numbers<[1], [0], [0], [1], [0, 0, 1, 1], [], []>} : vector<2x32xf32>, vector<32x128xf32>, vector<2x128xf32> -> vector<2x128xf32>
    %cst_153 = arith.constant dense<0.000000e+00> : vector<2x128xf32>
    %415 = tpu.matmul %389, %300, %cst_153 {dimension_numbers = #tpu.dot_dimension_numbers<[1], [0], [0], [1], [0, 0, 1, 1], [], []>} : vector<2x32xf32>, vector<32x128xf32>, vector<2x128xf32> -> vector<2x128xf32>
    %416 = arith.addf %414, %415 : vector<2x128xf32>
    %417 = vector.extract_strided_slice %416 {offsets = [0, 0], sizes = [2, 96], strides = [1, 1]} : vector<2x128xf32> to vector<2x96xf32>
    %418 = arith.negf %417 : vector<2x96xf32>
    %419 = math.exp %418 : vector<2x96xf32>
    %cst_154 = arith.constant 1.000000e+00 : f32
    %420 = vector.broadcast %cst_154 : f32 to vector<2x96xf32>
    %421 = arith.addf %420, %419 : vector<2x96xf32>
    %422 = arith.divf %420, %421 : vector<2x96xf32>
    %423 = vector.extract_strided_slice %422 {offsets = [0, 0], sizes = [2, 32], strides = [1, 1]} : vector<2x96xf32> to vector<2x32xf32>
    %424 = vector.extract_strided_slice %422 {offsets = [0, 32], sizes = [2, 32], strides = [1, 1]} : vector<2x96xf32> to vector<2x32xf32>
    %425 = vector.extract_strided_slice %422 {offsets = [0, 64], sizes = [2, 32], strides = [1, 1]} : vector<2x96xf32> to vector<2x32xf32>
    %426 = vector.extract_strided_slice %416 {offsets = [0, 96], sizes = [2, 32], strides = [1, 1]} : vector<2x128xf32> to vector<2x32xf32>
    %427 = math.tanh %426 : vector<2x32xf32>
    %428 = arith.mulf %424, %387 : vector<2x32xf32>
    %429 = arith.mulf %423, %427 : vector<2x32xf32>
    %430 = arith.addf %428, %429 : vector<2x32xf32>
    %431 = math.tanh %430 : vector<2x32xf32>
    %432 = arith.mulf %425, %431 : vector<2x32xf32>
    %cst_155 = arith.constant dense<0.000000e+00> : vector<2x4xf32>
    %433 = tpu.matmul %432, %301, %cst_155 {dimension_numbers = #tpu.dot_dimension_numbers<[1], [0], [0], [1], [0, 0, 1, 1], [], []>} : vector<2x32xf32>, vector<32x4xf32>, vector<2x4xf32> -> vector<2x4xf32>
    %c0_156 = arith.constant 0 : index
    %c2 = arith.constant 2 : index
    %c0_157 = arith.constant 0 : index
    %434 = vector.load %arg31[%c0_156, %c2, %c0_157] : memref<2x8x4xf32, #tpu.memory_space<vmem>>, vector<2x1x4xf32>
    %435 = vector.shape_cast %434 : vector<2x1x4xf32> to vector<2x4xf32>
    %436 = vector.shape_cast %433 : vector<2x4xf32> to vector<2x1x4xf32>
    tpu.vector_store %arg31[%c0_156, %c2, %c0_157], %436 {strides = array<i32>} : memref<2x8x4xf32, #tpu.memory_space<vmem>>, vector<2x1x4xf32>,
    %437 = vector.extract_strided_slice %303 {offsets = [0, 3, 0], sizes = [2, 1, 128], strides = [1, 1, 1]} : vector<2x8x128xf32> to vector<2x1x128xf32>
    %438 = vector.shape_cast %437 : vector<2x1x128xf32> to vector<2x128xf32>
    %cst_158 = arith.constant dense<0.000000e+00> : vector<2x128xf32>
    %439 = tpu.matmul %413, %299, %cst_158 {dimension_numbers = #tpu.dot_dimension_numbers<[1], [0], [0], [1], [0, 0, 1, 1], [], []>} : vector<2x32xf32>, vector<32x128xf32>, vector<2x128xf32> -> vector<2x128xf32>
    %440 = arith.addf %438, %439 : vector<2x128xf32>
    %441 = vector.extract_strided_slice %440 {offsets = [0, 0], sizes = [2, 96], strides = [1, 1]} : vector<2x128xf32> to vector<2x96xf32>
    %442 = arith.negf %441 : vector<2x96xf32>
    %443 = math.exp %442 : vector<2x96xf32>
    %cst_159 = arith.constant 1.000000e+00 : f32
    %444 = vector.broadcast %cst_159 : f32 to vector<2x96xf32>
    %445 = arith.addf %444, %443 : vector<2x96xf32>
    %446 = arith.divf %444, %445 : vector<2x96xf32>
    %447 = vector.extract_strided_slice %446 {offsets = [0, 0], sizes = [2, 32], strides = [1, 1]} : vector<2x96xf32> to vector<2x32xf32>
    %448 = vector.extract_strided_slice %446 {offsets = [0, 32], sizes = [2, 32], strides = [1, 1]} : vector<2x96xf32> to vector<2x32xf32>
    %449 = vector.extract_strided_slice %446 {offsets = [0, 64], sizes = [2, 32], strides = [1, 1]} : vector<2x96xf32> to vector<2x32xf32>
    %450 = vector.extract_strided_slice %440 {offsets = [0, 96], sizes = [2, 32], strides = [1, 1]} : vector<2x128xf32> to vector<2x32xf32>
    %451 = math.tanh %450 : vector<2x32xf32>
    %452 = arith.mulf %448, %411 : vector<2x32xf32>
    %453 = arith.mulf %447, %451 : vector<2x32xf32>
    %454 = arith.addf %452, %453 : vector<2x32xf32>
    %455 = math.tanh %454 : vector<2x32xf32>
    %456 = arith.mulf %449, %455 : vector<2x32xf32>
    %cst_160 = arith.constant dense<0.000000e+00> : vector<2x128xf32>
    %457 = tpu.matmul %456, %298, %cst_160 {dimension_numbers = #tpu.dot_dimension_numbers<[1], [0], [0], [1], [0, 0, 1, 1], [], []>} : vector<2x32xf32>, vector<32x128xf32>, vector<2x128xf32> -> vector<2x128xf32>
    %cst_161 = arith.constant dense<0.000000e+00> : vector<2x128xf32>
    %458 = tpu.matmul %432, %300, %cst_161 {dimension_numbers = #tpu.dot_dimension_numbers<[1], [0], [0], [1], [0, 0, 1, 1], [], []>} : vector<2x32xf32>, vector<32x128xf32>, vector<2x128xf32> -> vector<2x128xf32>
    %459 = arith.addf %457, %458 : vector<2x128xf32>
    %460 = vector.extract_strided_slice %459 {offsets = [0, 0], sizes = [2, 96], strides = [1, 1]} : vector<2x128xf32> to vector<2x96xf32>
    %461 = arith.negf %460 : vector<2x96xf32>
    %462 = math.exp %461 : vector<2x96xf32>
    %cst_162 = arith.constant 1.000000e+00 : f32
    %463 = vector.broadcast %cst_162 : f32 to vector<2x96xf32>
    %464 = arith.addf %463, %462 : vector<2x96xf32>
    %465 = arith.divf %463, %464 : vector<2x96xf32>
    %466 = vector.extract_strided_slice %465 {offsets = [0, 0], sizes = [2, 32], strides = [1, 1]} : vector<2x96xf32> to vector<2x32xf32>
    %467 = vector.extract_strided_slice %465 {offsets = [0, 32], sizes = [2, 32], strides = [1, 1]} : vector<2x96xf32> to vector<2x32xf32>
    %468 = vector.extract_strided_slice %465 {offsets = [0, 64], sizes = [2, 32], strides = [1, 1]} : vector<2x96xf32> to vector<2x32xf32>
    %469 = vector.extract_strided_slice %459 {offsets = [0, 96], sizes = [2, 32], strides = [1, 1]} : vector<2x128xf32> to vector<2x32xf32>
    %470 = math.tanh %469 : vector<2x32xf32>
    %471 = arith.mulf %467, %430 : vector<2x32xf32>
    %472 = arith.mulf %466, %470 : vector<2x32xf32>
    %473 = arith.addf %471, %472 : vector<2x32xf32>
    %474 = math.tanh %473 : vector<2x32xf32>
    %475 = arith.mulf %468, %474 : vector<2x32xf32>
    %cst_163 = arith.constant dense<0.000000e+00> : vector<2x4xf32>
    %476 = tpu.matmul %475, %301, %cst_163 {dimension_numbers = #tpu.dot_dimension_numbers<[1], [0], [0], [1], [0, 0, 1, 1], [], []>} : vector<2x32xf32>, vector<32x4xf32>, vector<2x4xf32> -> vector<2x4xf32>
    %c0_164 = arith.constant 0 : index
    %c3 = arith.constant 3 : index
    %c0_165 = arith.constant 0 : index
    %477 = vector.load %arg31[%c0_164, %c3, %c0_165] : memref<2x8x4xf32, #tpu.memory_space<vmem>>, vector<2x1x4xf32>
    %478 = vector.shape_cast %477 : vector<2x1x4xf32> to vector<2x4xf32>
    %479 = vector.shape_cast %476 : vector<2x4xf32> to vector<2x1x4xf32>
    tpu.vector_store %arg31[%c0_164, %c3, %c0_165], %479 {strides = array<i32>} : memref<2x8x4xf32, #tpu.memory_space<vmem>>, vector<2x1x4xf32>,
    %480 = vector.extract_strided_slice %303 {offsets = [0, 4, 0], sizes = [2, 1, 128], strides = [1, 1, 1]} : vector<2x8x128xf32> to vector<2x1x128xf32>
    %481 = vector.shape_cast %480 : vector<2x1x128xf32> to vector<2x128xf32>
    %cst_166 = arith.constant dense<0.000000e+00> : vector<2x128xf32>
    %482 = tpu.matmul %456, %299, %cst_166 {dimension_numbers = #tpu.dot_dimension_numbers<[1], [0], [0], [1], [0, 0, 1, 1], [], []>} : vector<2x32xf32>, vector<32x128xf32>, vector<2x128xf32> -> vector<2x128xf32>
    %483 = arith.addf %481, %482 : vector<2x128xf32>
    %484 = vector.extract_strided_slice %483 {offsets = [0, 0], sizes = [2, 96], strides = [1, 1]} : vector<2x128xf32> to vector<2x96xf32>
    %485 = arith.negf %484 : vector<2x96xf32>
    %486 = math.exp %485 : vector<2x96xf32>
    %cst_167 = arith.constant 1.000000e+00 : f32
    %487 = vector.broadcast %cst_167 : f32 to vector<2x96xf32>
    %488 = arith.addf %487, %486 : vector<2x96xf32>
    %489 = arith.divf %487, %488 : vector<2x96xf32>
    %490 = vector.extract_strided_slice %489 {offsets = [0, 0], sizes = [2, 32], strides = [1, 1]} : vector<2x96xf32> to vector<2x32xf32>
    %491 = vector.extract_strided_slice %489 {offsets = [0, 32], sizes = [2, 32], strides = [1, 1]} : vector<2x96xf32> to vector<2x32xf32>
    %492 = vector.extract_strided_slice %489 {offsets = [0, 64], sizes = [2, 32], strides = [1, 1]} : vector<2x96xf32> to vector<2x32xf32>
    %493 = vector.extract_strided_slice %483 {offsets = [0, 96], sizes = [2, 32], strides = [1, 1]} : vector<2x128xf32> to vector<2x32xf32>
    %494 = math.tanh %493 : vector<2x32xf32>
    %495 = arith.mulf %491, %454 : vector<2x32xf32>
    %496 = arith.mulf %490, %494 : vector<2x32xf32>
    %497 = arith.addf %495, %496 : vector<2x32xf32>
    %498 = math.tanh %497 : vector<2x32xf32>
    %499 = arith.mulf %492, %498 : vector<2x32xf32>
    %cst_168 = arith.constant dense<0.000000e+00> : vector<2x128xf32>
    %500 = tpu.matmul %499, %298, %cst_168 {dimension_numbers = #tpu.dot_dimension_numbers<[1], [0], [0], [1], [0, 0, 1, 1], [], []>} : vector<2x32xf32>, vector<32x128xf32>, vector<2x128xf32> -> vector<2x128xf32>
    %cst_169 = arith.constant dense<0.000000e+00> : vector<2x128xf32>
    %501 = tpu.matmul %475, %300, %cst_169 {dimension_numbers = #tpu.dot_dimension_numbers<[1], [0], [0], [1], [0, 0, 1, 1], [], []>} : vector<2x32xf32>, vector<32x128xf32>, vector<2x128xf32> -> vector<2x128xf32>
    %502 = arith.addf %500, %501 : vector<2x128xf32>
    %503 = vector.extract_strided_slice %502 {offsets = [0, 0], sizes = [2, 96], strides = [1, 1]} : vector<2x128xf32> to vector<2x96xf32>
    %504 = arith.negf %503 : vector<2x96xf32>
    %505 = math.exp %504 : vector<2x96xf32>
    %cst_170 = arith.constant 1.000000e+00 : f32
    %506 = vector.broadcast %cst_170 : f32 to vector<2x96xf32>
    %507 = arith.addf %506, %505 : vector<2x96xf32>
    %508 = arith.divf %506, %507 : vector<2x96xf32>
    %509 = vector.extract_strided_slice %508 {offsets = [0, 0], sizes = [2, 32], strides = [1, 1]} : vector<2x96xf32> to vector<2x32xf32>
    %510 = vector.extract_strided_slice %508 {offsets = [0, 32], sizes = [2, 32], strides = [1, 1]} : vector<2x96xf32> to vector<2x32xf32>
    %511 = vector.extract_strided_slice %508 {offsets = [0, 64], sizes = [2, 32], strides = [1, 1]} : vector<2x96xf32> to vector<2x32xf32>
    %512 = vector.extract_strided_slice %502 {offsets = [0, 96], sizes = [2, 32], strides = [1, 1]} : vector<2x128xf32> to vector<2x32xf32>
    %513 = math.tanh %512 : vector<2x32xf32>
    %514 = arith.mulf %510, %473 : vector<2x32xf32>
    %515 = arith.mulf %509, %513 : vector<2x32xf32>
    %516 = arith.addf %514, %515 : vector<2x32xf32>
    %517 = math.tanh %516 : vector<2x32xf32>
    %518 = arith.mulf %511, %517 : vector<2x32xf32>
    %cst_171 = arith.constant dense<0.000000e+00> : vector<2x4xf32>
    %519 = tpu.matmul %518, %301, %cst_171 {dimension_numbers = #tpu.dot_dimension_numbers<[1], [0], [0], [1], [0, 0, 1, 1], [], []>} : vector<2x32xf32>, vector<32x4xf32>, vector<2x4xf32> -> vector<2x4xf32>
    %c0_172 = arith.constant 0 : index
    %c4 = arith.constant 4 : index
    %c0_173 = arith.constant 0 : index
    %520 = vector.load %arg31[%c0_172, %c4, %c0_173] : memref<2x8x4xf32, #tpu.memory_space<vmem>>, vector<2x1x4xf32>
    %521 = vector.shape_cast %520 : vector<2x1x4xf32> to vector<2x4xf32>
    %522 = vector.shape_cast %519 : vector<2x4xf32> to vector<2x1x4xf32>
    tpu.vector_store %arg31[%c0_172, %c4, %c0_173], %522 {strides = array<i32>} : memref<2x8x4xf32, #tpu.memory_space<vmem>>, vector<2x1x4xf32>,
    %523 = vector.extract_strided_slice %303 {offsets = [0, 5, 0], sizes = [2, 1, 128], strides = [1, 1, 1]} : vector<2x8x128xf32> to vector<2x1x128xf32>
    %524 = vector.shape_cast %523 : vector<2x1x128xf32> to vector<2x128xf32>
    %cst_174 = arith.constant dense<0.000000e+00> : vector<2x128xf32>
    %525 = tpu.matmul %499, %299, %cst_174 {dimension_numbers = #tpu.dot_dimension_numbers<[1], [0], [0], [1], [0, 0, 1, 1], [], []>} : vector<2x32xf32>, vector<32x128xf32>, vector<2x128xf32> -> vector<2x128xf32>
    %526 = arith.addf %524, %525 : vector<2x128xf32>
    %527 = vector.extract_strided_slice %526 {offsets = [0, 0], sizes = [2, 96], strides = [1, 1]} : vector<2x128xf32> to vector<2x96xf32>
    %528 = arith.negf %527 : vector<2x96xf32>
    %529 = math.exp %528 : vector<2x96xf32>
    %cst_175 = arith.constant 1.000000e+00 : f32
    %530 = vector.broadcast %cst_175 : f32 to vector<2x96xf32>
    %531 = arith.addf %530, %529 : vector<2x96xf32>
    %532 = arith.divf %530, %531 : vector<2x96xf32>
    %533 = vector.extract_strided_slice %532 {offsets = [0, 0], sizes = [2, 32], strides = [1, 1]} : vector<2x96xf32> to vector<2x32xf32>
    %534 = vector.extract_strided_slice %532 {offsets = [0, 32], sizes = [2, 32], strides = [1, 1]} : vector<2x96xf32> to vector<2x32xf32>
    %535 = vector.extract_strided_slice %532 {offsets = [0, 64], sizes = [2, 32], strides = [1, 1]} : vector<2x96xf32> to vector<2x32xf32>
    %536 = vector.extract_strided_slice %526 {offsets = [0, 96], sizes = [2, 32], strides = [1, 1]} : vector<2x128xf32> to vector<2x32xf32>
    %537 = math.tanh %536 : vector<2x32xf32>
    %538 = arith.mulf %534, %497 : vector<2x32xf32>
    %539 = arith.mulf %533, %537 : vector<2x32xf32>
    %540 = arith.addf %538, %539 : vector<2x32xf32>
    %541 = math.tanh %540 : vector<2x32xf32>
    %542 = arith.mulf %535, %541 : vector<2x32xf32>
    %cst_176 = arith.constant dense<0.000000e+00> : vector<2x128xf32>
    %543 = tpu.matmul %542, %298, %cst_176 {dimension_numbers = #tpu.dot_dimension_numbers<[1], [0], [0], [1], [0, 0, 1, 1], [], []>} : vector<2x32xf32>, vector<32x128xf32>, vector<2x128xf32> -> vector<2x128xf32>
    %cst_177 = arith.constant dense<0.000000e+00> : vector<2x128xf32>
    %544 = tpu.matmul %518, %300, %cst_177 {dimension_numbers = #tpu.dot_dimension_numbers<[1], [0], [0], [1], [0, 0, 1, 1], [], []>} : vector<2x32xf32>, vector<32x128xf32>, vector<2x128xf32> -> vector<2x128xf32>
    %545 = arith.addf %543, %544 : vector<2x128xf32>
    %546 = vector.extract_strided_slice %545 {offsets = [0, 0], sizes = [2, 96], strides = [1, 1]} : vector<2x128xf32> to vector<2x96xf32>
    %547 = arith.negf %546 : vector<2x96xf32>
    %548 = math.exp %547 : vector<2x96xf32>
    %cst_178 = arith.constant 1.000000e+00 : f32
    %549 = vector.broadcast %cst_178 : f32 to vector<2x96xf32>
    %550 = arith.addf %549, %548 : vector<2x96xf32>
    %551 = arith.divf %549, %550 : vector<2x96xf32>
    %552 = vector.extract_strided_slice %551 {offsets = [0, 0], sizes = [2, 32], strides = [1, 1]} : vector<2x96xf32> to vector<2x32xf32>
    %553 = vector.extract_strided_slice %551 {offsets = [0, 32], sizes = [2, 32], strides = [1, 1]} : vector<2x96xf32> to vector<2x32xf32>
    %554 = vector.extract_strided_slice %551 {offsets = [0, 64], sizes = [2, 32], strides = [1, 1]} : vector<2x96xf32> to vector<2x32xf32>
    %555 = vector.extract_strided_slice %545 {offsets = [0, 96], sizes = [2, 32], strides = [1, 1]} : vector<2x128xf32> to vector<2x32xf32>
    %556 = math.tanh %555 : vector<2x32xf32>
    %557 = arith.mulf %553, %516 : vector<2x32xf32>
    %558 = arith.mulf %552, %556 : vector<2x32xf32>
    %559 = arith.addf %557, %558 : vector<2x32xf32>
    %560 = math.tanh %559 : vector<2x32xf32>
    %561 = arith.mulf %554, %560 : vector<2x32xf32>
    %cst_179 = arith.constant dense<0.000000e+00> : vector<2x4xf32>
    %562 = tpu.matmul %561, %301, %cst_179 {dimension_numbers = #tpu.dot_dimension_numbers<[1], [0], [0], [1], [0, 0, 1, 1], [], []>} : vector<2x32xf32>, vector<32x4xf32>, vector<2x4xf32> -> vector<2x4xf32>
    %c0_180 = arith.constant 0 : index
    %c5 = arith.constant 5 : index
    %c0_181 = arith.constant 0 : index
    %563 = vector.load %arg31[%c0_180, %c5, %c0_181] : memref<2x8x4xf32, #tpu.memory_space<vmem>>, vector<2x1x4xf32>
    %564 = vector.shape_cast %563 : vector<2x1x4xf32> to vector<2x4xf32>
    %565 = vector.shape_cast %562 : vector<2x4xf32> to vector<2x1x4xf32>
    tpu.vector_store %arg31[%c0_180, %c5, %c0_181], %565 {strides = array<i32>} : memref<2x8x4xf32, #tpu.memory_space<vmem>>, vector<2x1x4xf32>,
    %566 = vector.extract_strided_slice %303 {offsets = [0, 6, 0], sizes = [2, 1, 128], strides = [1, 1, 1]} : vector<2x8x128xf32> to vector<2x1x128xf32>
    %567 = vector.shape_cast %566 : vector<2x1x128xf32> to vector<2x128xf32>
    %cst_182 = arith.constant dense<0.000000e+00> : vector<2x128xf32>
    %568 = tpu.matmul %542, %299, %cst_182 {dimension_numbers = #tpu.dot_dimension_numbers<[1], [0], [0], [1], [0, 0, 1, 1], [], []>} : vector<2x32xf32>, vector<32x128xf32>, vector<2x128xf32> -> vector<2x128xf32>
    %569 = arith.addf %567, %568 : vector<2x128xf32>
    %570 = vector.extract_strided_slice %569 {offsets = [0, 0], sizes = [2, 96], strides = [1, 1]} : vector<2x128xf32> to vector<2x96xf32>
    %571 = arith.negf %570 : vector<2x96xf32>
    %572 = math.exp %571 : vector<2x96xf32>
    %cst_183 = arith.constant 1.000000e+00 : f32
    %573 = vector.broadcast %cst_183 : f32 to vector<2x96xf32>
    %574 = arith.addf %573, %572 : vector<2x96xf32>
    %575 = arith.divf %573, %574 : vector<2x96xf32>
    %576 = vector.extract_strided_slice %575 {offsets = [0, 0], sizes = [2, 32], strides = [1, 1]} : vector<2x96xf32> to vector<2x32xf32>
    %577 = vector.extract_strided_slice %575 {offsets = [0, 32], sizes = [2, 32], strides = [1, 1]} : vector<2x96xf32> to vector<2x32xf32>
    %578 = vector.extract_strided_slice %575 {offsets = [0, 64], sizes = [2, 32], strides = [1, 1]} : vector<2x96xf32> to vector<2x32xf32>
    %579 = vector.extract_strided_slice %569 {offsets = [0, 96], sizes = [2, 32], strides = [1, 1]} : vector<2x128xf32> to vector<2x32xf32>
    %580 = math.tanh %579 : vector<2x32xf32>
    %581 = arith.mulf %577, %540 : vector<2x32xf32>
    %582 = arith.mulf %576, %580 : vector<2x32xf32>
    %583 = arith.addf %581, %582 : vector<2x32xf32>
    %584 = math.tanh %583 : vector<2x32xf32>
    %585 = arith.mulf %578, %584 : vector<2x32xf32>
    %cst_184 = arith.constant dense<0.000000e+00> : vector<2x128xf32>
    %586 = tpu.matmul %585, %298, %cst_184 {dimension_numbers = #tpu.dot_dimension_numbers<[1], [0], [0], [1], [0, 0, 1, 1], [], []>} : vector<2x32xf32>, vector<32x128xf32>, vector<2x128xf32> -> vector<2x128xf32>
    %cst_185 = arith.constant dense<0.000000e+00> : vector<2x128xf32>
    %587 = tpu.matmul %561, %300, %cst_185 {dimension_numbers = #tpu.dot_dimension_numbers<[1], [0], [0], [1], [0, 0, 1, 1], [], []>} : vector<2x32xf32>, vector<32x128xf32>, vector<2x128xf32> -> vector<2x128xf32>
    %588 = arith.addf %586, %587 : vector<2x128xf32>
    %589 = vector.extract_strided_slice %588 {offsets = [0, 0], sizes = [2, 96], strides = [1, 1]} : vector<2x128xf32> to vector<2x96xf32>
    %590 = arith.negf %589 : vector<2x96xf32>
    %591 = math.exp %590 : vector<2x96xf32>
    %cst_186 = arith.constant 1.000000e+00 : f32
    %592 = vector.broadcast %cst_186 : f32 to vector<2x96xf32>
    %593 = arith.addf %592, %591 : vector<2x96xf32>
    %594 = arith.divf %592, %593 : vector<2x96xf32>
    %595 = vector.extract_strided_slice %594 {offsets = [0, 0], sizes = [2, 32], strides = [1, 1]} : vector<2x96xf32> to vector<2x32xf32>
    %596 = vector.extract_strided_slice %594 {offsets = [0, 32], sizes = [2, 32], strides = [1, 1]} : vector<2x96xf32> to vector<2x32xf32>
    %597 = vector.extract_strided_slice %594 {offsets = [0, 64], sizes = [2, 32], strides = [1, 1]} : vector<2x96xf32> to vector<2x32xf32>
    %598 = vector.extract_strided_slice %588 {offsets = [0, 96], sizes = [2, 32], strides = [1, 1]} : vector<2x128xf32> to vector<2x32xf32>
    %599 = math.tanh %598 : vector<2x32xf32>
    %600 = arith.mulf %596, %559 : vector<2x32xf32>
    %601 = arith.mulf %595, %599 : vector<2x32xf32>
    %602 = arith.addf %600, %601 : vector<2x32xf32>
    %603 = math.tanh %602 : vector<2x32xf32>
    %604 = arith.mulf %597, %603 : vector<2x32xf32>
    %cst_187 = arith.constant dense<0.000000e+00> : vector<2x4xf32>
    %605 = tpu.matmul %604, %301, %cst_187 {dimension_numbers = #tpu.dot_dimension_numbers<[1], [0], [0], [1], [0, 0, 1, 1], [], []>} : vector<2x32xf32>, vector<32x4xf32>, vector<2x4xf32> -> vector<2x4xf32>
    %c0_188 = arith.constant 0 : index
    %c6 = arith.constant 6 : index
    %c0_189 = arith.constant 0 : index
    %606 = vector.load %arg31[%c0_188, %c6, %c0_189] : memref<2x8x4xf32, #tpu.memory_space<vmem>>, vector<2x1x4xf32>
    %607 = vector.shape_cast %606 : vector<2x1x4xf32> to vector<2x4xf32>
    %608 = vector.shape_cast %605 : vector<2x4xf32> to vector<2x1x4xf32>
    tpu.vector_store %arg31[%c0_188, %c6, %c0_189], %608 {strides = array<i32>} : memref<2x8x4xf32, #tpu.memory_space<vmem>>, vector<2x1x4xf32>,
    %609 = vector.extract_strided_slice %303 {offsets = [0, 7, 0], sizes = [2, 1, 128], strides = [1, 1, 1]} : vector<2x8x128xf32> to vector<2x1x128xf32>
    %610 = vector.shape_cast %609 : vector<2x1x128xf32> to vector<2x128xf32>
    %cst_190 = arith.constant dense<0.000000e+00> : vector<2x128xf32>
    %611 = tpu.matmul %585, %299, %cst_190 {dimension_numbers = #tpu.dot_dimension_numbers<[1], [0], [0], [1], [0, 0, 1, 1], [], []>} : vector<2x32xf32>, vector<32x128xf32>, vector<2x128xf32> -> vector<2x128xf32>
    %612 = arith.addf %610, %611 : vector<2x128xf32>
    %613 = vector.extract_strided_slice %612 {offsets = [0, 0], sizes = [2, 96], strides = [1, 1]} : vector<2x128xf32> to vector<2x96xf32>
    %614 = arith.negf %613 : vector<2x96xf32>
    %615 = math.exp %614 : vector<2x96xf32>
    %cst_191 = arith.constant 1.000000e+00 : f32
    %616 = vector.broadcast %cst_191 : f32 to vector<2x96xf32>
    %617 = arith.addf %616, %615 : vector<2x96xf32>
    %618 = arith.divf %616, %617 : vector<2x96xf32>
    %619 = vector.extract_strided_slice %618 {offsets = [0, 0], sizes = [2, 32], strides = [1, 1]} : vector<2x96xf32> to vector<2x32xf32>
    %620 = vector.extract_strided_slice %618 {offsets = [0, 32], sizes = [2, 32], strides = [1, 1]} : vector<2x96xf32> to vector<2x32xf32>
    %621 = vector.extract_strided_slice %618 {offsets = [0, 64], sizes = [2, 32], strides = [1, 1]} : vector<2x96xf32> to vector<2x32xf32>
    %622 = vector.extract_strided_slice %612 {offsets = [0, 96], sizes = [2, 32], strides = [1, 1]} : vector<2x128xf32> to vector<2x32xf32>
    %623 = math.tanh %622 : vector<2x32xf32>
    %624 = arith.mulf %620, %583 : vector<2x32xf32>
    %625 = arith.mulf %619, %623 : vector<2x32xf32>
    %626 = arith.addf %624, %625 : vector<2x32xf32>
    %627 = math.tanh %626 : vector<2x32xf32>
    %628 = arith.mulf %621, %627 : vector<2x32xf32>
    %cst_192 = arith.constant dense<0.000000e+00> : vector<2x128xf32>
    %629 = tpu.matmul %628, %298, %cst_192 {dimension_numbers = #tpu.dot_dimension_numbers<[1], [0], [0], [1], [0, 0, 1, 1], [], []>} : vector<2x32xf32>, vector<32x128xf32>, vector<2x128xf32> -> vector<2x128xf32>
    %cst_193 = arith.constant dense<0.000000e+00> : vector<2x128xf32>
    %630 = tpu.matmul %604, %300, %cst_193 {dimension_numbers = #tpu.dot_dimension_numbers<[1], [0], [0], [1], [0, 0, 1, 1], [], []>} : vector<2x32xf32>, vector<32x128xf32>, vector<2x128xf32> -> vector<2x128xf32>
    %631 = arith.addf %629, %630 : vector<2x128xf32>
    %632 = vector.extract_strided_slice %631 {offsets = [0, 0], sizes = [2, 96], strides = [1, 1]} : vector<2x128xf32> to vector<2x96xf32>
    %633 = arith.negf %632 : vector<2x96xf32>
    %634 = math.exp %633 : vector<2x96xf32>
    %cst_194 = arith.constant 1.000000e+00 : f32
    %635 = vector.broadcast %cst_194 : f32 to vector<2x96xf32>
    %636 = arith.addf %635, %634 : vector<2x96xf32>
    %637 = arith.divf %635, %636 : vector<2x96xf32>
    %638 = vector.extract_strided_slice %637 {offsets = [0, 0], sizes = [2, 32], strides = [1, 1]} : vector<2x96xf32> to vector<2x32xf32>
    %639 = vector.extract_strided_slice %637 {offsets = [0, 32], sizes = [2, 32], strides = [1, 1]} : vector<2x96xf32> to vector<2x32xf32>
    %640 = vector.extract_strided_slice %637 {offsets = [0, 64], sizes = [2, 32], strides = [1, 1]} : vector<2x96xf32> to vector<2x32xf32>
    %641 = vector.extract_strided_slice %631 {offsets = [0, 96], sizes = [2, 32], strides = [1, 1]} : vector<2x128xf32> to vector<2x32xf32>
    %642 = math.tanh %641 : vector<2x32xf32>
    %643 = arith.mulf %639, %602 : vector<2x32xf32>
    %644 = arith.mulf %638, %642 : vector<2x32xf32>
    %645 = arith.addf %643, %644 : vector<2x32xf32>
    %646 = math.tanh %645 : vector<2x32xf32>
    %647 = arith.mulf %640, %646 : vector<2x32xf32>
    %cst_195 = arith.constant dense<0.000000e+00> : vector<2x4xf32>
    %648 = tpu.matmul %647, %301, %cst_195 {dimension_numbers = #tpu.dot_dimension_numbers<[1], [0], [0], [1], [0, 0, 1, 1], [], []>} : vector<2x32xf32>, vector<32x4xf32>, vector<2x4xf32> -> vector<2x4xf32>
    %c0_196 = arith.constant 0 : index
    %c7 = arith.constant 7 : index
    %c0_197 = arith.constant 0 : index
    %649 = vector.load %arg31[%c0_196, %c7, %c0_197] : memref<2x8x4xf32, #tpu.memory_space<vmem>>, vector<2x1x4xf32>
    %650 = vector.shape_cast %649 : vector<2x1x4xf32> to vector<2x4xf32>
    %651 = vector.shape_cast %648 : vector<2x4xf32> to vector<2x1x4xf32>
    tpu.vector_store %arg31[%c0_196, %c7, %c0_197], %651 {strides = array<i32>} : memref<2x8x4xf32, #tpu.memory_space<vmem>>, vector<2x1x4xf32>,
    return
  }
}

</mosaic_0001>

<llo_original>
// kernel: _lambda_.1
$region0: #{_lambda_.1}
  #allocation0 [shape = 'u32[]', space=smem, size = 0x4, offset = 0x4, fixed_abs, tag = 'smem constant byte address 0x4 - core index']
  #allocation1 [shape = 'u32[72,128]{1,0:T(1,128)}', space=vmem, size = 0x9000, scoped, tag = 'internal scratch']
  #allocation2 [shape = 'bf16[32,2048]{1,0:T(8,128)(2,1)}', space=vmem, size = 0x20000, scoped, tag = 'scratch operand']
  #allocation3 [shape = 'bf16[2048,32]{1,0:T(8,128)(2,1)}', space=vmem, size = 0x80000, scoped, tag = 'scratch operand']
  #allocation4 [shape = 'bf16[32,2048]{1,0:T(8,128)(2,1)}', space=vmem, size = 0x20000, scoped, tag = 'scratch operand']
  #allocation5 [shape = 'bf16[2048,32]{1,0:T(8,128)(2,1)}', space=vmem, size = 0x80000, scoped, tag = 'scratch operand']
  #allocation6 [shape = 's32[4]{0}', space=sflag, size = 0x10, scoped, tag = 'scratch operand']
  #allocation7 [shape = 's32[]', space=sflag, size = 0x4, offset = 0, fixed_abs, tag = 'sflag constant byte address 0x0 - dummy sync flag']
  #allocation8 [shape = 's32[]', space=sflag, size = 0x4, offset = 0, fixed_abs, tag = 'sflag constant byte address 0x0 - dummy sync flag']
  #allocation9 [shape = 's32[]', space=sflag, size = 0x4, offset = 0, fixed_abs, tag = 'sflag constant byte address 0x0 - dummy sync flag']
  #allocation10 [shape = 's32[]', space=sflag, size = 0x4, offset = 0, fixed_abs, tag = 'sflag constant byte address 0x0 - dummy sync flag']
  %s0 = inlined_call_operand.smem [shape: u32[32], index: -1, kind: input, shape index: {}]
  %s1 = sld [smem:[%s0]]
  %s2 = scalar_lea.smem %s0, 1
  %s3 = sld [smem:[%s2]]
  %s4 = scalar_lea.smem %s0, 2
  %s5 = sld [smem:[%s4]]
  %s6 = scalar_lea.smem %s0, 3
  %s7 = sld [smem:[%s6]]
  %s8 = scalar_lea.smem %s0, 4
  %s9 = sld [smem:[%s8]]
  %s10 = scalar_lea.smem %s0, 5
  %s11 = sld [smem:[%s10]]
  %s12 = scalar_lea.smem %s0, 6
  %s13 = sld [smem:[%s12]]
  %s14 = scalar_lea.smem %s0, 7
  %s15 = sld [smem:[%s14]]
  %s16 = scalar_lea.smem %s0, 8
  %s17 = sld [smem:[%s16]]
  %s18 = scalar_lea.smem %s0, 9
  %s19 = sld [smem:[%s18]]
  %s20 = scalar_lea.smem %s0, 10
  %s21 = sld [smem:[%s20]]
  %s22 = scalar_lea.smem %s0, 11
  %s23 = sld [smem:[%s22]]
  %s24 = scalar_lea.smem %s0, 12
  %s25 = sld [smem:[%s24]]
  %s26 = scalar_lea.smem %s0, 13
  %s27 = sld [smem:[%s26]]
  %s28 = scalar_lea.smem %s0, 14
  %s29 = sld [smem:[%s28]]
  %s30 = scalar_lea.smem %s0, 15
  %s31 = sld [smem:[%s30]]
  %s32 = scalar_lea.smem %s0, 16
  %s33 = sld [smem:[%s32]]
  %s34 = scalar_lea.smem %s0, 17
  %s35 = sld [smem:[%s34]]
  %s36 = scalar_lea.smem %s0, 18
  %s37 = sld [smem:[%s36]]
  %s38 = scalar_lea.smem %s0, 19
  %s39 = sld [smem:[%s38]]
  %s40 = scalar_lea.smem %s0, 20
  %s41 = sld [smem:[%s40]]
  %s42 = scalar_lea.smem %s0, 21
  %s43 = sld [smem:[%s42]]
  %s44 = scalar_lea.smem %s0, 22
  %s45 = sld [smem:[%s44]]
  %s46 = scalar_lea.smem %s0, 23
  %s47 = sld [smem:[%s46]]
  %s48 = scalar_lea.smem %s0, 24
  %s49 = sld [smem:[%s48]]
  %s50 = scalar_lea.smem %s0, 25
  %s51 = sld [smem:[%s50]]
  %s52 = scalar_lea.smem %s0, 26
  %s53 = sld [smem:[%s52]]
  %s54 = scalar_lea.smem %s0, 27
  %s55 = sld [smem:[%s54]]
  %s56 = scalar_lea.smem %s0, 28
  %s57 = sld [smem:[%s56]]
  %s58 = scalar_lea.smem %s0, 29
  %s59 = sld [smem:[%s58]]
  %s60 = scalar_lea.smem %s0, 30
  %s61 = sld [smem:[%s60]]
  %s62 = scalar_lea.smem %s0, 31
  %s63 = sld [smem:[%s62]]
  %s64 = sld [smem:[#allocation0]]
  $region194: #{_lambda_.1} parent=0
    _
  %s66 = ssub.s32 1, %s64
  %s67 = scalar_select 0, %s66, %s64
  // Predicated region
  $region2: #{_lambda_.1} parent=0 // pred_check
    _
  $region3: #{_lambda_.1} parent=0 // pred_check_branch
    %69 = sbr.rel (0) target = $region5
  $region4: #{_lambda_.1} parent=0 // pred_region
    _
  $region5: #{_lambda_.1} parent=0 // pred_fallthru
    _
  // Predicated region
  $region6: #{_lambda_.1} parent=0 // pred_check
    _
  $region7: #{_lambda_.1} parent=0 // pred_check_branch
    %71 = sbr.rel (0) target = $region9
  $region8: #{_lambda_.1} parent=0 // pred_region
    _
  $region9: #{_lambda_.1} parent=0 // pred_fallthru
    _
  // Predicated region
  $region10: #{_lambda_.1} parent=0 // pred_check
    _
  $region11: #{_lambda_.1} parent=0 // pred_check_branch
    %73 = sbr.rel (0) target = $region13
  $region12: #{_lambda_.1} parent=0 // pred_region
    _
  $region13: #{_lambda_.1} parent=0 // pred_fallthru
    _
  // Predicated region
  $region14: #{_lambda_.1} parent=0 // pred_check
    _
  $region15: #{_lambda_.1} parent=0 // pred_check_branch
    %75 = sbr.rel (0) target = $region17
  $region16: #{_lambda_.1} parent=0 // pred_region
    _
  $region17: #{_lambda_.1} parent=0 // pred_fallthru
    _
  // Predicated region
  $region18: #{_lambda_.1} parent=0 // pred_check
    _
  $region19: #{_lambda_.1} parent=0 // pred_check_branch
    %77 = sbr.rel (0) target = $region21
  $region20: #{_lambda_.1} parent=0 // pred_region
    _
  $region21: #{_lambda_.1} parent=0 // pred_fallthru
    _
  // Predicated region
  $region22: #{_lambda_.1} parent=0 // pred_check
    _
  $region23: #{_lambda_.1} parent=0 // pred_check_branch
    %79 = sbr.rel (0) target = $region25
  $region24: #{_lambda_.1} parent=0 // pred_region
    _
  $region25: #{_lambda_.1} parent=0 // pred_fallthru
    _
  // Predicated region
  $region26: #{_lambda_.1} parent=0 // pred_check
    _
  $region27: #{_lambda_.1} parent=0 // pred_check_branch
    %81 = sbr.rel (0) target = $region29
  $region28: #{_lambda_.1} parent=0 // pred_region
    _
  $region29: #{_lambda_.1} parent=0 // pred_fallthru
    _
  // Predicated region
  $region30: #{_lambda_.1} parent=0 // pred_check
    _
  $region31: #{_lambda_.1} parent=0 // pred_check_branch
    %83 = sbr.rel (0) target = $region33
  $region32: #{_lambda_.1} parent=0 // pred_region
    _
  $region33: #{_lambda_.1} parent=0 // pred_fallthru
    _
  // Predicated region
  $region34: #{_lambda_.1} parent=0 // pred_check
    _
  $region35: #{_lambda_.1} parent=0 // pred_check_branch
    %85 = sbr.rel (0) target = $region37
  $region36: #{_lambda_.1} parent=0 // pred_region
    _
  $region37: #{_lambda_.1} parent=0 // pred_fallthru
    _
  // Predicated region
  $region38: #{_lambda_.1} parent=0 // pred_check
    _
  $region39: #{_lambda_.1} parent=0 // pred_check_branch
    %87 = sbr.rel (0) target = $region41
  $region40: #{_lambda_.1} parent=0 // pred_region
    _
  $region41: #{_lambda_.1} parent=0 // pred_fallthru
    _
  // Predicated region
  $region42: #{_lambda_.1} parent=0 // pred_check
    _
  $region43: #{_lambda_.1} parent=0 // pred_check_branch
    %89 = sbr.rel (0) target = $region45
  $region44: #{_lambda_.1} parent=0 // pred_region
    _
  $region45: #{_lambda_.1} parent=0 // pred_fallthru
    _
  // Predicated region
  $region46: #{_lambda_.1} parent=0 // pred_check
    _
  $region47: #{_lambda_.1} parent=0 // pred_check_branch
    %91 = sbr.rel (0) target = $region49
  $region48: #{_lambda_.1} parent=0 // pred_region
    _
  $region49: #{_lambda_.1} parent=0 // pred_fallthru
    _
  // Predicated region
  $region50: #{_lambda_.1} parent=0 // pred_check
    _
  $region51: #{_lambda_.1} parent=0 // pred_check_branch
    %93 = sbr.rel (0) target = $region53
  $region52: #{_lambda_.1} parent=0 // pred_region
    _
  $region53: #{_lambda_.1} parent=0 // pred_fallthru
    _
  // Predicated region
  $region54: #{_lambda_.1} parent=0 // pred_check
    _
  $region55: #{_lambda_.1} parent=0 // pred_check_branch
    %95 = sbr.rel (0) target = $region57
  $region56: #{_lambda_.1} parent=0 // pred_region
    _
  $region57: #{_lambda_.1} parent=0 // pred_fallthru
    _
  // Predicated region
  $region58: #{_lambda_.1} parent=0 // pred_check
    _
  $region59: #{_lambda_.1} parent=0 // pred_check_branch
    %97 = sbr.rel (0) target = $region61
  $region60: #{_lambda_.1} parent=0 // pred_region
    _
  $region61: #{_lambda_.1} parent=0 // pred_fallthru
    _
  // Predicated region
  $region62: #{_lambda_.1} parent=0 // pred_check
    _
  $region63: #{_lambda_.1} parent=0 // pred_check_branch
    %99 = sbr.rel (0) target = $region65
  $region64: #{_lambda_.1} parent=0 // pred_region
    _
  $region65: #{_lambda_.1} parent=0 // pred_fallthru
    _
  // Predicated region
  $region66: #{_lambda_.1} parent=0 // pred_check
    _
  $region67: #{_lambda_.1} parent=0 // pred_check_branch
    %101 = sbr.rel (0) target = $region69
  $region68: #{_lambda_.1} parent=0 // pred_region
    _
  $region69: #{_lambda_.1} parent=0 // pred_fallthru
    _
  // Predicated region
  $region70: #{_lambda_.1} parent=0 // pred_check
    _
  $region71: #{_lambda_.1} parent=0 // pred_check_branch
    %103 = sbr.rel (0) target = $region73
  $region72: #{_lambda_.1} parent=0 // pred_region
    _
  $region73: #{_lambda_.1} parent=0 // pred_fallthru
    _
  // Predicated region
  $region74: #{_lambda_.1} parent=0 // pred_check
    _
  $region75: #{_lambda_.1} parent=0 // pred_check_branch
    %105 = sbr.rel (0) target = $region77
  $region76: #{_lambda_.1} parent=0 // pred_region
    _
  $region77: #{_lambda_.1} parent=0 // pred_fallthru
    _
  // Predicated region
  $region78: #{_lambda_.1} parent=0 // pred_check
    _
  $region79: #{_lambda_.1} parent=0 // pred_check_branch
    %107 = sbr.rel (0) target = $region81
  $region80: #{_lambda_.1} parent=0 // pred_region
    _
  $region81: #{_lambda_.1} parent=0 // pred_fallthru
    _
  // Predicated region
  $region82: #{_lambda_.1} parent=0 // pred_check
    _
  $region83: #{_lambda_.1} parent=0 // pred_check_branch
    %109 = sbr.rel (0) target = $region85
  $region84: #{_lambda_.1} parent=0 // pred_region
    _
  $region85: #{_lambda_.1} parent=0 // pred_fallthru
    _
  // Predicated region
  $region86: #{_lambda_.1} parent=0 // pred_check
    _
  $region87: #{_lambda_.1} parent=0 // pred_check_branch
    %111 = sbr.rel (0) target = $region89
  $region88: #{_lambda_.1} parent=0 // pred_region
    _
  $region89: #{_lambda_.1} parent=0 // pred_fallthru
    _
  // Predicated region
  $region90: #{_lambda_.1} parent=0 // pred_check
    _
  $region91: #{_lambda_.1} parent=0 // pred_check_branch
    %113 = sbr.rel (0) target = $region93
  $region92: #{_lambda_.1} parent=0 // pred_region
    _
  $region93: #{_lambda_.1} parent=0 // pred_fallthru
    _
  // Predicated region
  $region94: #{_lambda_.1} parent=0 // pred_check
    _
  $region95: #{_lambda_.1} parent=0 // pred_check_branch
    %115 = sbr.rel (0) target = $region97
  $region96: #{_lambda_.1} parent=0 // pred_region
    _
  $region97: #{_lambda_.1} parent=0 // pred_fallthru
    _
  // Predicated region
  $region98: #{_lambda_.1} parent=0 // pred_check
    _
  $region99: #{_lambda_.1} parent=0 // pred_check_branch
    %117 = sbr.rel (0) target = $region101
  $region100: #{_lambda_.1} parent=0 // pred_region
    _
  $region101: #{_lambda_.1} parent=0 // pred_fallthru
    _
  // Predicated region
  $region102: #{_lambda_.1} parent=0 // pred_check
    _
  $region103: #{_lambda_.1} parent=0 // pred_check_branch
    %119 = sbr.rel (0) target = $region105
  $region104: #{_lambda_.1} parent=0 // pred_region
    _
  $region105: #{_lambda_.1} parent=0 // pred_fallthru
    _
  // Predicated region
  $region106: #{_lambda_.1} parent=0 // pred_check
    _
  $region107: #{_lambda_.1} parent=0 // pred_check_branch
    %121 = sbr.rel (0) target = $region109
  $region108: #{_lambda_.1} parent=0 // pred_region
    _
  $region109: #{_lambda_.1} parent=0 // pred_fallthru
    _
  // Predicated region
  $region110: #{_lambda_.1} parent=0 // pred_check
    _
  $region111: #{_lambda_.1} parent=0 // pred_check_branch
    %124 = sbr.rel (0) target = $region113
  $region112: #{_lambda_.1} parent=0 // pred_region
    loop: start=0, step=1, limit=1
    $region114: #{_lambda_.1} parent=112 // loop_pre_header
      _
    $region115: #{_lambda_.1} parent=112 // loop_header
      %s126 = sphi 0, %s130
      %p127 = scmp.ge.s32.totalorder %s126, 1
      %s131 = sphi %s13, %s13
      %s132 = sphi [#allocation2], [#allocation2]
    $region116: #{_lambda_.1} parent=112 // loop_header_branch
      %129 = sbr.rel (%p127) target = $region120
    $region117: #{_lambda_.1} parent=112 // loop_body
      %v133 = vld [vmem:[%s131] sm:$0xff]
      %134 = vst [vmem:[%s132] sm:$0xff] %v133
      %v135 = vld [vmem:[%s131 + $0x8] sm:$0xff]
      %136 = vst [vmem:[%s132 + $0x8] sm:$0xff] %v135
      %v137 = vld [vmem:[%s131 + $0x10] sm:$0xff]
      %138 = vst [vmem:[%s132 + $0x10] sm:$0xff] %v137
      %v139 = vld [vmem:[%s131 + $0x18] sm:$0xff]
      %140 = vst [vmem:[%s132 + $0x18] sm:$0xff] %v139
      %v141 = vld [vmem:[%s131 + $0x20] sm:$0xff]
      %142 = vst [vmem:[%s132 + $0x20] sm:$0xff] %v141
      %v143 = vld [vmem:[%s131 + $0x28] sm:$0xff]
      %144 = vst [vmem:[%s132 + $0x28] sm:$0xff] %v143
      %v145 = vld [vmem:[%s131 + $0x30] sm:$0xff]
      %146 = vst [vmem:[%s132 + $0x30] sm:$0xff] %v145
      %v147 = vld [vmem:[%s131 + $0x38] sm:$0xff]
      %148 = vst [vmem:[%s132 + $0x38] sm:$0xff] %v147
      %v149 = vld [vmem:[%s131 + $0x40] sm:$0xff]
      %150 = vst [vmem:[%s132 + $0x40] sm:$0xff] %v149
      %v151 = vld [vmem:[%s131 + $0x48] sm:$0xff]
      %152 = vst [vmem:[%s132 + $0x48] sm:$0xff] %v151
      %v153 = vld [vmem:[%s131 + $0x50] sm:$0xff]
      %154 = vst [vmem:[%s132 + $0x50] sm:$0xff] %v153
      %v155 = vld [vmem:[%s131 + $0x58] sm:$0xff]
      %156 = vst [vmem:[%s132 + $0x58] sm:$0xff] %v155
      %v157 = vld [vmem:[%s131 + $0x60] sm:$0xff]
      %158 = vst [vmem:[%s132 + $0x60] sm:$0xff] %v157
      %v159 = vld [vmem:[%s131 + $0x68] sm:$0xff]
      %160 = vst [vmem:[%s132 + $0x68] sm:$0xff] %v159
      %v161 = vld [vmem:[%s131 + $0x70] sm:$0xff]
      %162 = vst [vmem:[%s132 + $0x70] sm:$0xff] %v161
      %v163 = vld [vmem:[%s131 + $0x78] sm:$0xff]
      %164 = vst [vmem:[%s132 + $0x78] sm:$0xff] %v163
      %v165 = vld [vmem:[%s131 + $0x80] sm:$0xff]
      %166 = vst [vmem:[%s132 + $0x80] sm:$0xff] %v165
      %v167 = vld [vmem:[%s131 + $0x88] sm:$0xff]
      %168 = vst [vmem:[%s132 + $0x88] sm:$0xff] %v167
      %v169 = vld [vmem:[%s131 + $0x90] sm:$0xff]
      %170 = vst [vmem:[%s132 + $0x90] sm:$0xff] %v169
      %v171 = vld [vmem:[%s131 + $0x98] sm:$0xff]
      %172 = vst [vmem:[%s132 + $0x98] sm:$0xff] %v171
      %v173 = vld [vmem:[%s131 + $0xa0] sm:$0xff]
      %174 = vst [vmem:[%s132 + $0xa0] sm:$0xff] %v173
      %v175 = vld [vmem:[%s131 + $0xa8] sm:$0xff]
      %176 = vst [vmem:[%s132 + $0xa8] sm:$0xff] %v175
      %v177 = vld [vmem:[%s131 + $0xb0] sm:$0xff]
      %178 = vst [vmem:[%s132 + $0xb0] sm:$0xff] %v177
      %v179 = vld [vmem:[%s131 + $0xb8] sm:$0xff]
      %180 = vst [vmem:[%s132 + $0xb8] sm:$0xff] %v179
      %v181 = vld [vmem:[%s131 + $0xc0] sm:$0xff]
      %182 = vst [vmem:[%s132 + $0xc0] sm:$0xff] %v181
      %v183 = vld [vmem:[%s131 + $0xc8] sm:$0xff]
      %184 = vst [vmem:[%s132 + $0xc8] sm:$0xff] %v183
      %v185 = vld [vmem:[%s131 + $0xd0] sm:$0xff]
      %186 = vst [vmem:[%s132 + $0xd0] sm:$0xff] %v185
      %v187 = vld [vmem:[%s131 + $0xd8] sm:$0xff]
      %188 = vst [vmem:[%s132 + $0xd8] sm:$0xff] %v187
      %v189 = vld [vmem:[%s131 + $0xe0] sm:$0xff]
      %190 = vst [vmem:[%s132 + $0xe0] sm:$0xff] %v189
      %v191 = vld [vmem:[%s131 + $0xe8] sm:$0xff]
      %192 = vst [vmem:[%s132 + $0xe8] sm:$0xff] %v191
      %v193 = vld [vmem:[%s131 + $0xf0] sm:$0xff]
      %194 = vst [vmem:[%s132 + $0xf0] sm:$0xff] %v193
      %v195 = vld [vmem:[%s131 + $0xf8] sm:$0xff]
      %196 = vst [vmem:[%s132 + $0xf8] sm:$0xff] %v195
    $region118: #{_lambda_.1} parent=112 // loop_footer
      %s130 = sadd.s32 1, %s126
    $region119: #{_lambda_.1} parent=112 // loop_footer_branch
      %125 = sbr.rel target = $region115
    $region120: #{_lambda_.1} parent=112 // loop_exit
      _
  $region113: #{_lambda_.1} parent=0 // pred_fallthru
    _
  // Predicated region
  $region121: #{_lambda_.1} parent=0 // pred_check
    _
  $region122: #{_lambda_.1} parent=0 // pred_check_branch
    %198 = sbr.rel target = $region124
  $region123: #{_lambda_.1} parent=0 // pred_region
    _
  $region124: #{_lambda_.1} parent=0 // pred_fallthru
    _
  // Predicated region
  $region125: #{_lambda_.1} parent=0 // pred_check
    _
  $region126: #{_lambda_.1} parent=0 // pred_check_branch
    %201 = sbr.rel (0) target = $region128
  $region127: #{_lambda_.1} parent=0 // pred_region
    %202 = vsyncadd [#allocation6], 4096
  $region128: #{_lambda_.1} parent=0 // pred_fallthru
    _
  %s203 = scalar_lea.sflag [#allocation6], 1
  // Predicated region
  $region129: #{_lambda_.1} parent=0 // pred_check
    _
  $region130: #{_lambda_.1} parent=0 // pred_check_branch
    %205 = sbr.rel (0) target = $region132
  $region131: #{_lambda_.1} parent=0 // pred_region
    loop: start=0, step=1, limit=1
    $region133: #{_lambda_.1} parent=131 // loop_pre_header
      _
    $region134: #{_lambda_.1} parent=131 // loop_header
      %s207 = sphi 0, %s211
      %p208 = scmp.ge.s32.totalorder %s207, 1
      %s212 = sphi %s15, %s15
      %s213 = sphi [#allocation3], [#allocation3]
    $region135: #{_lambda_.1} parent=131 // loop_header_branch
      %210 = sbr.rel (%p208) target = $region139
    $region136: #{_lambda_.1} parent=131 // loop_body
      %v214 = vld [vmem:[%s212] sm:$0xff]
      %215 = vst [vmem:[%s213] sm:$0xff] %v214
      %v216 = vld [vmem:[%s212 + $0x8] sm:$0xff]
      %217 = vst [vmem:[%s213 + $0x8] sm:$0xff] %v216
      %v218 = vld [vmem:[%s212 + $0x10] sm:$0xff]
      %219 = vst [vmem:[%s213 + $0x10] sm:$0xff] %v218
      %v220 = vld [vmem:[%s212 + $0x18] sm:$0xff]
      %221 = vst [vmem:[%s213 + $0x18] sm:$0xff] %v220
      %v222 = vld [vmem:[%s212 + $0x20] sm:$0xff]
      %223 = vst [vmem:[%s213 + $0x20] sm:$0xff] %v222
      %v224 = vld [vmem:[%s212 + $0x28] sm:$0xff]
      %225 = vst [vmem:[%s213 + $0x28] sm:$0xff] %v224
      %v226 = vld [vmem:[%s212 + $0x30] sm:$0xff]
      %227 = vst [vmem:[%s213 + $0x30] sm:$0xff] %v226
      %v228 = vld [vmem:[%s212 + $0x38] sm:$0xff]
      %229 = vst [vmem:[%s213 + $0x38] sm:$0xff] %v228
      %v230 = vld [vmem:[%s212 + $0x40] sm:$0xff]
      %231 = vst [vmem:[%s213 + $0x40] sm:$0xff] %v230
      %v232 = vld [vmem:[%s212 + $0x48] sm:$0xff]
      %233 = vst [vmem:[%s213 + $0x48] sm:$0xff] %v232
      %v234 = vld [vmem:[%s212 + $0x50] sm:$0xff]
      %235 = vst [vmem:[%s213 + $0x50] sm:$0xff] %v234
      %v236 = vld [vmem:[%s212 + $0x58] sm:$0xff]
      %237 = vst [vmem:[%s213 + $0x58] sm:$0xff] %v236
      %v238 = vld [vmem:[%s212 + $0x60] sm:$0xff]
      %239 = vst [vmem:[%s213 + $0x60] sm:$0xff] %v238
      %v240 = vld [vmem:[%s212 + $0x68] sm:$0xff]
      %241 = vst [vmem:[%s213 + $0x68] sm:$0xff] %v240
      %v242 = vld [vmem:[%s212 + $0x70] sm:$0xff]
      %243 = vst [vmem:[%s213 + $0x70] sm:$0xff] %v242
      %v244 = vld [vmem:[%s212 + $0x78] sm:$0xff]
      %245 = vst [vmem:[%s213 + $0x78] sm:$0xff] %v244
      %v246 = vld [vmem:[%s212 + $0x80] sm:$0xff]
      %247 = vst [vmem:[%s213 + $0x80] sm:$0xff] %v246
      %v248 = vld [vmem:[%s212 + $0x88] sm:$0xff]
      %249 = vst [vmem:[%s213 + $0x88] sm:$0xff] %v248
      %v250 = vld [vmem:[%s212 + $0x90] sm:$0xff]
      %251 = vst [vmem:[%s213 + $0x90] sm:$0xff] %v250
      %v252 = vld [vmem:[%s212 + $0x98] sm:$0xff]
      %253 = vst [vmem:[%s213 + $0x98] sm:$0xff] %v252
      %v254 = vld [vmem:[%s212 + $0xa0] sm:$0xff]
      %255 = vst [vmem:[%s213 + $0xa0] sm:$0xff] %v254
      %v256 = vld [vmem:[%s212 + $0xa8] sm:$0xff]
      %257 = vst [vmem:[%s213 + $0xa8] sm:$0xff] %v256
      %v258 = vld [vmem:[%s212 + $0xb0] sm:$0xff]
      %259 = vst [vmem:[%s213 + $0xb0] sm:$0xff] %v258
      %v260 = vld [vmem:[%s212 + $0xb8] sm:$0xff]
      %261 = vst [vmem:[%s213 + $0xb8] sm:$0xff] %v260
      %v262 = vld [vmem:[%s212 + $0xc0] sm:$0xff]
      %263 = vst [vmem:[%s213 + $0xc0] sm:$0xff] %v262
      %v264 = vld [vmem:[%s212 + $0xc8] sm:$0xff]
      %265 = vst [vmem:[%s213 + $0xc8] sm:$0xff] %v264
      %v266 = vld [vmem:[%s212 + $0xd0] sm:$0xff]
      %267 = vst [vmem:[%s213 + $0xd0] sm:$0xff] %v266
      %v268 = vld [vmem:[%s212 + $0xd8] sm:$0xff]
      %269 = vst [vmem:[%s213 + $0xd8] sm:$0xff] %v268
      %v270 = vld [vmem:[%s212 + $0xe0] sm:$0xff]
      %271 = vst [vmem:[%s213 + $0xe0] sm:$0xff] %v270
      %v272 = vld [vmem:[%s212 + $0xe8] sm:$0xff]
      %273 = vst [vmem:[%s213 + $0xe8] sm:$0xff] %v272
      %v274 = vld [vmem:[%s212 + $0xf0] sm:$0xff]
      %275 = vst [vmem:[%s213 + $0xf0] sm:$0xff] %v274
      %v276 = vld [vmem:[%s212 + $0xf8] sm:$0xff]
      %277 = vst [vmem:[%s213 + $0xf8] sm:$0xff] %v276
      %v278 = vld [vmem:[%s212 + $0x100] sm:$0xff]
      %279 = vst [vmem:[%s213 + $0x100] sm:$0xff] %v278
      %v280 = vld [vmem:[%s212 + $0x108] sm:$0xff]
      %281 = vst [vmem:[%s213 + $0x108] sm:$0xff] %v280
      %v282 = vld [vmem:[%s212 + $0x110] sm:$0xff]
      %283 = vst [vmem:[%s213 + $0x110] sm:$0xff] %v282
      %v284 = vld [vmem:[%s212 + $0x118] sm:$0xff]
      %285 = vst [vmem:[%s213 + $0x118] sm:$0xff] %v284
      %v286 = vld [vmem:[%s212 + $0x120] sm:$0xff]
      %287 = vst [vmem:[%s213 + $0x120] sm:$0xff] %v286
      %v288 = vld [vmem:[%s212 + $0x128] sm:$0xff]
      %289 = vst [vmem:[%s213 + $0x128] sm:$0xff] %v288
      %v290 = vld [vmem:[%s212 + $0x130] sm:$0xff]
      %291 = vst [vmem:[%s213 + $0x130] sm:$0xff] %v290
      %v292 = vld [vmem:[%s212 + $0x138] sm:$0xff]
      %293 = vst [vmem:[%s213 + $0x138] sm:$0xff] %v292
      %v294 = vld [vmem:[%s212 + $0x140] sm:$0xff]
      %295 = vst [vmem:[%s213 + $0x140] sm:$0xff] %v294
      %v296 = vld [vmem:[%s212 + $0x148] sm:$0xff]
      %297 = vst [vmem:[%s213 + $0x148] sm:$0xff] %v296
      %v298 = vld [vmem:[%s212 + $0x150] sm:$0xff]
      %299 = vst [vmem:[%s213 + $0x150] sm:$0xff] %v298
      %v300 = vld [vmem:[%s212 + $0x158] sm:$0xff]
      %301 = vst [vmem:[%s213 + $0x158] sm:$0xff] %v300
      %v302 = vld [vmem:[%s212 + $0x160] sm:$0xff]
      %303 = vst [vmem:[%s213 + $0x160] sm:$0xff] %v302
      %v304 = vld [vmem:[%s212 + $0x168] sm:$0xff]
      %305 = vst [vmem:[%s213 + $0x168] sm:$0xff] %v304
      %v306 = vld [vmem:[%s212 + $0x170] sm:$0xff]
      %307 = vst [vmem:[%s213 + $0x170] sm:$0xff] %v306
      %v308 = vld [vmem:[%s212 + $0x178] sm:$0xff]
      %309 = vst [vmem:[%s213 + $0x178] sm:$0xff] %v308
      %v310 = vld [vmem:[%s212 + $0x180] sm:$0xff]
      %311 = vst [vmem:[%s213 + $0x180] sm:$0xff] %v310
      %v312 = vld [vmem:[%s212 + $0x188] sm:$0xff]
      %313 = vst [vmem:[%s213 + $0x188] sm:$0xff] %v312
      %v314 = vld [vmem:[%s212 + $0x190] sm:$0xff]
      %315 = vst [vmem:[%s213 + $0x190] sm:$0xff] %v314
      %v316 = vld [vmem:[%s212 + $0x198] sm:$0xff]
      %317 = vst [vmem:[%s213 + $0x198] sm:$0xff] %v316
      %v318 = vld [vmem:[%s212 + $0x1a0] sm:$0xff]
      %319 = vst [vmem:[%s213 + $0x1a0] sm:$0xff] %v318
      %v320 = vld [vmem:[%s212 + $0x1a8] sm:$0xff]
      %321 = vst [vmem:[%s213 + $0x1a8] sm:$0xff] %v320
      %v322 = vld [vmem:[%s212 + $0x1b0] sm:$0xff]
      %323 = vst [vmem:[%s213 + $0x1b0] sm:$0xff] %v322
      %v324 = vld [vmem:[%s212 + $0x1b8] sm:$0xff]
      %325 = vst [vmem:[%s213 + $0x1b8] sm:$0xff] %v324
      %v326 = vld [vmem:[%s212 + $0x1c0] sm:$0xff]
      %327 = vst [vmem:[%s213 + $0x1c0] sm:$0xff] %v326
      %v328 = vld [vmem:[%s212 + $0x1c8] sm:$0xff]
      %329 = vst [vmem:[%s213 + $0x1c8] sm:$0xff] %v328
      %v330 = vld [vmem:[%s212 + $0x1d0] sm:$0xff]
      %331 = vst [vmem:[%s213 + $0x1d0] sm:$0xff] %v330
      %v332 = vld [vmem:[%s212 + $0x1d8] sm:$0xff]
      %333 = vst [vmem:[%s213 + $0x1d8] sm:$0xff] %v332
      %v334 = vld [vmem:[%s212 + $0x1e0] sm:$0xff]
      %335 = vst [vmem:[%s213 + $0x1e0] sm:$0xff] %v334
      %v336 = vld [vmem:[%s212 + $0x1e8] sm:$0xff]
      %337 = vst [vmem:[%s213 + $0x1e8] sm:$0xff] %v336
      %v338 = vld [vmem:[%s212 + $0x1f0] sm:$0xff]
      %339 = vst [vmem:[%s213 + $0x1f0] sm:$0xff] %v338
      %v340 = vld [vmem:[%s212 + $0x1f8] sm:$0xff]
      %341 = vst [vmem:[%s213 + $0x1f8] sm:$0xff] %v340
      %v342 = vld [vmem:[%s212 + $0x200] sm:$0xff]
      %343 = vst [vmem:[%s213 + $0x200] sm:$0xff] %v342
      %v344 = vld [vmem:[%s212 + $0x208] sm:$0xff]
      %345 = vst [vmem:[%s213 + $0x208] sm:$0xff] %v344
      %v346 = vld [vmem:[%s212 + $0x210] sm:$0xff]
      %347 = vst [vmem:[%s213 + $0x210] sm:$0xff] %v346
      %v348 = vld [vmem:[%s212 + $0x218] sm:$0xff]
      %349 = vst [vmem:[%s213 + $0x218] sm:$0xff] %v348
      %v350 = vld [vmem:[%s212 + $0x220] sm:$0xff]
      %351 = vst [vmem:[%s213 + $0x220] sm:$0xff] %v350
      %v352 = vld [vmem:[%s212 + $0x228] sm:$0xff]
      %353 = vst [vmem:[%s213 + $0x228] sm:$0xff] %v352
      %v354 = vld [vmem:[%s212 + $0x230] sm:$0xff]
      %355 = vst [vmem:[%s213 + $0x230] sm:$0xff] %v354
      %v356 = vld [vmem:[%s212 + $0x238] sm:$0xff]
      %357 = vst [vmem:[%s213 + $0x238] sm:$0xff] %v356
      %v358 = vld [vmem:[%s212 + $0x240] sm:$0xff]
      %359 = vst [vmem:[%s213 + $0x240] sm:$0xff] %v358
      %v360 = vld [vmem:[%s212 + $0x248] sm:$0xff]
      %361 = vst [vmem:[%s213 + $0x248] sm:$0xff] %v360
      %v362 = vld [vmem:[%s212 + $0x250] sm:$0xff]
      %363 = vst [vmem:[%s213 + $0x250] sm:$0xff] %v362
      %v364 = vld [vmem:[%s212 + $0x258] sm:$0xff]
      %365 = vst [vmem:[%s213 + $0x258] sm:$0xff] %v364
      %v366 = vld [vmem:[%s212 + $0x260] sm:$0xff]
      %367 = vst [vmem:[%s213 + $0x260] sm:$0xff] %v366
      %v368 = vld [vmem:[%s212 + $0x268] sm:$0xff]
      %369 = vst [vmem:[%s213 + $0x268] sm:$0xff] %v368
      %v370 = vld [vmem:[%s212 + $0x270] sm:$0xff]
      %371 = vst [vmem:[%s213 + $0x270] sm:$0xff] %v370
      %v372 = vld [vmem:[%s212 + $0x278] sm:$0xff]
      %373 = vst [vmem:[%s213 + $0x278] sm:$0xff] %v372
      %v374 = vld [vmem:[%s212 + $0x280] sm:$0xff]
      %375 = vst [vmem:[%s213 + $0x280] sm:$0xff] %v374
      %v376 = vld [vmem:[%s212 + $0x288] sm:$0xff]
      %377 = vst [vmem:[%s213 + $0x288] sm:$0xff] %v376
      %v378 = vld [vmem:[%s212 + $0x290] sm:$0xff]
      %379 = vst [vmem:[%s213 + $0x290] sm:$0xff] %v378
      %v380 = vld [vmem:[%s212 + $0x298] sm:$0xff]
      %381 = vst [vmem:[%s213 + $0x298] sm:$0xff] %v380
      %v382 = vld [vmem:[%s212 + $0x2a0] sm:$0xff]
      %383 = vst [vmem:[%s213 + $0x2a0] sm:$0xff] %v382
      %v384 = vld [vmem:[%s212 + $0x2a8] sm:$0xff]
      %385 = vst [vmem:[%s213 + $0x2a8] sm:$0xff] %v384
      %v386 = vld [vmem:[%s212 + $0x2b0] sm:$0xff]
      %387 = vst [vmem:[%s213 + $0x2b0] sm:$0xff] %v386
      %v388 = vld [vmem:[%s212 + $0x2b8] sm:$0xff]
      %389 = vst [vmem:[%s213 + $0x2b8] sm:$0xff] %v388
      %v390 = vld [vmem:[%s212 + $0x2c0] sm:$0xff]
      %391 = vst [vmem:[%s213 + $0x2c0] sm:$0xff] %v390
      %v392 = vld [vmem:[%s212 + $0x2c8] sm:$0xff]
      %393 = vst [vmem:[%s213 + $0x2c8] sm:$0xff] %v392
      %v394 = vld [vmem:[%s212 + $0x2d0] sm:$0xff]
      %395 = vst [vmem:[%s213 + $0x2d0] sm:$0xff] %v394
      %v396 = vld [vmem:[%s212 + $0x2d8] sm:$0xff]
      %397 = vst [vmem:[%s213 + $0x2d8] sm:$0xff] %v396
      %v398 = vld [vmem:[%s212 + $0x2e0] sm:$0xff]
      %399 = vst [vmem:[%s213 + $0x2e0] sm:$0xff] %v398
      %v400 = vld [vmem:[%s212 + $0x2e8] sm:$0xff]
      %401 = vst [vmem:[%s213 + $0x2e8] sm:$0xff] %v400
      %v402 = vld [vmem:[%s212 + $0x2f0] sm:$0xff]
      %403 = vst [vmem:[%s213 + $0x2f0] sm:$0xff] %v402
      %v404 = vld [vmem:[%s212 + $0x2f8] sm:$0xff]
      %405 = vst [vmem:[%s213 + $0x2f8] sm:$0xff] %v404
      %v406 = vld [vmem:[%s212 + $0x300] sm:$0xff]
      %407 = vst [vmem:[%s213 + $0x300] sm:$0xff] %v406
      %v408 = vld [vmem:[%s212 + $0x308] sm:$0xff]
      %409 = vst [vmem:[%s213 + $0x308] sm:$0xff] %v408
      %v410 = vld [vmem:[%s212 + $0x310] sm:$0xff]
      %411 = vst [vmem:[%s213 + $0x310] sm:$0xff] %v410
      %v412 = vld [vmem:[%s212 + $0x318] sm:$0xff]
      %413 = vst [vmem:[%s213 + $0x318] sm:$0xff] %v412
      %v414 = vld [vmem:[%s212 + $0x320] sm:$0xff]
      %415 = vst [vmem:[%s213 + $0x320] sm:$0xff] %v414
      %v416 = vld [vmem:[%s212 + $0x328] sm:$0xff]
      %417 = vst [vmem:[%s213 + $0x328] sm:$0xff] %v416
      %v418 = vld [vmem:[%s212 + $0x330] sm:$0xff]
      %419 = vst [vmem:[%s213 + $0x330] sm:$0xff] %v418
      %v420 = vld [vmem:[%s212 + $0x338] sm:$0xff]
      %421 = vst [vmem:[%s213 + $0x338] sm:$0xff] %v420
      %v422 = vld [vmem:[%s212 + $0x340] sm:$0xff]
      %423 = vst [vmem:[%s213 + $0x340] sm:$0xff] %v422
      %v424 = vld [vmem:[%s212 + $0x348] sm:$0xff]
      %425 = vst [vmem:[%s213 + $0x348] sm:$0xff] %v424
      %v426 = vld [vmem:[%s212 + $0x350] sm:$0xff]
      %427 = vst [vmem:[%s213 + $0x350] sm:$0xff] %v426
      %v428 = vld [vmem:[%s212 + $0x358] sm:$0xff]
      %429 = vst [vmem:[%s213 + $0x358] sm:$0xff] %v428
      %v430 = vld [vmem:[%s212 + $0x360] sm:$0xff]
      %431 = vst [vmem:[%s213 + $0x360] sm:$0xff] %v430
      %v432 = vld [vmem:[%s212 + $0x368] sm:$0xff]
      %433 = vst [vmem:[%s213 + $0x368] sm:$0xff] %v432
      %v434 = vld [vmem:[%s212 + $0x370] sm:$0xff]
      %435 = vst [vmem:[%s213 + $0x370] sm:$0xff] %v434
      %v436 = vld [vmem:[%s212 + $0x378] sm:$0xff]
      %437 = vst [vmem:[%s213 + $0x378] sm:$0xff] %v436
      %v438 = vld [vmem:[%s212 + $0x380] sm:$0xff]
      %439 = vst [vmem:[%s213 + $0x380] sm:$0xff] %v438
      %v440 = vld [vmem:[%s212 + $0x388] sm:$0xff]
      %441 = vst [vmem:[%s213 + $0x388] sm:$0xff] %v440
      %v442 = vld [vmem:[%s212 + $0x390] sm:$0xff]
      %443 = vst [vmem:[%s213 + $0x390] sm:$0xff] %v442
      %v444 = vld [vmem:[%s212 + $0x398] sm:$0xff]
      %445 = vst [vmem:[%s213 + $0x398] sm:$0xff] %v444
      %v446 = vld [vmem:[%s212 + $0x3a0] sm:$0xff]
      %447 = vst [vmem:[%s213 + $0x3a0] sm:$0xff] %v446
      %v448 = vld [vmem:[%s212 + $0x3a8] sm:$0xff]
      %449 = vst [vmem:[%s213 + $0x3a8] sm:$0xff] %v448
      %v450 = vld [vmem:[%s212 + $0x3b0] sm:$0xff]
      %451 = vst [vmem:[%s213 + $0x3b0] sm:$0xff] %v450
      %v452 = vld [vmem:[%s212 + $0x3b8] sm:$0xff]
      %453 = vst [vmem:[%s213 + $0x3b8] sm:$0xff] %v452
      %v454 = vld [vmem:[%s212 + $0x3c0] sm:$0xff]
      %455 = vst [vmem:[%s213 + $0x3c0] sm:$0xff] %v454
      %v456 = vld [vmem:[%s212 + $0x3c8] sm:$0xff]
      %457 = vst [vmem:[%s213 + $0x3c8] sm:$0xff] %v456
      %v458 = vld [vmem:[%s212 + $0x3d0] sm:$0xff]
      %459 = vst [vmem:[%s213 + $0x3d0] sm:$0xff] %v458
      %v460 = vld [vmem:[%s212 + $0x3d8] sm:$0xff]
      %461 = vst [vmem:[%s213 + $0x3d8] sm:$0xff] %v460
      %v462 = vld [vmem:[%s212 + $0x3e0] sm:$0xff]
      %463 = vst [vmem:[%s213 + $0x3e0] sm:$0xff] %v462
      %v464 = vld [vmem:[%s212 + $0x3e8] sm:$0xff]
      %465 = vst [vmem:[%s213 + $0x3e8] sm:$0xff] %v464
      %v466 = vld [vmem:[%s212 + $0x3f0] sm:$0xff]
      %467 = vst [vmem:[%s213 + $0x3f0] sm:$0xff] %v466
      %v468 = vld [vmem:[%s212 + $0x3f8] sm:$0xff]
      %469 = vst [vmem:[%s213 + $0x3f8] sm:$0xff] %v468
    $region137: #{_lambda_.1} parent=131 // loop_footer
      %s211 = sadd.s32 1, %s207
    $region138: #{_lambda_.1} parent=131 // loop_footer_branch
      %206 = sbr.rel target = $region134
    $region139: #{_lambda_.1} parent=131 // loop_exit
      _
  $region132: #{_lambda_.1} parent=0 // pred_fallthru
    _
  // Predicated region
  $region140: #{_lambda_.1} parent=0 // pred_check
    _
  $region141: #{_lambda_.1} parent=0 // pred_check_branch
    %471 = sbr.rel target = $region143
  $region142: #{_lambda_.1} parent=0 // pred_region
    _
  $region143: #{_lambda_.1} parent=0 // pred_fallthru
    _
  // Predicated region
  $region144: #{_lambda_.1} parent=0 // pred_check
    _
  $region145: #{_lambda_.1} parent=0 // pred_check_branch
    %474 = sbr.rel (0) target = $region147
  $region146: #{_lambda_.1} parent=0 // pred_region
    %475 = vsyncadd %s203, 16384
  $region147: #{_lambda_.1} parent=0 // pred_fallthru
    _
  %s476 = scalar_lea.sflag [#allocation6], 2
  // Predicated region
  $region148: #{_lambda_.1} parent=0 // pred_check
    _
  $region149: #{_lambda_.1} parent=0 // pred_check_branch
    %478 = sbr.rel (0) target = $region151
  $region150: #{_lambda_.1} parent=0 // pred_region
    loop: start=0, step=1, limit=1
    $region152: #{_lambda_.1} parent=150 // loop_pre_header
      _
    $region153: #{_lambda_.1} parent=150 // loop_header
      %s480 = sphi 0, %s484
      %p481 = scmp.ge.s32.totalorder %s480, 1
      %s485 = sphi %s37, %s37
      %s486 = sphi [#allocation4], [#allocation4]
    $region154: #{_lambda_.1} parent=150 // loop_header_branch
      %483 = sbr.rel (%p481) target = $region158
    $region155: #{_lambda_.1} parent=150 // loop_body
      %v487 = vld [vmem:[%s485] sm:$0xff]
      %488 = vst [vmem:[%s486] sm:$0xff] %v487
      %v489 = vld [vmem:[%s485 + $0x8] sm:$0xff]
      %490 = vst [vmem:[%s486 + $0x8] sm:$0xff] %v489
      %v491 = vld [vmem:[%s485 + $0x10] sm:$0xff]
      %492 = vst [vmem:[%s486 + $0x10] sm:$0xff] %v491
      %v493 = vld [vmem:[%s485 + $0x18] sm:$0xff]
      %494 = vst [vmem:[%s486 + $0x18] sm:$0xff] %v493
      %v495 = vld [vmem:[%s485 + $0x20] sm:$0xff]
      %496 = vst [vmem:[%s486 + $0x20] sm:$0xff] %v495
      %v497 = vld [vmem:[%s485 + $0x28] sm:$0xff]
      %498 = vst [vmem:[%s486 + $0x28] sm:$0xff] %v497
      %v499 = vld [vmem:[%s485 + $0x30] sm:$0xff]
      %500 = vst [vmem:[%s486 + $0x30] sm:$0xff] %v499
      %v501 = vld [vmem:[%s485 + $0x38] sm:$0xff]
      %502 = vst [vmem:[%s486 + $0x38] sm:$0xff] %v501
      %v503 = vld [vmem:[%s485 + $0x40] sm:$0xff]
      %504 = vst [vmem:[%s486 + $0x40] sm:$0xff] %v503
      %v505 = vld [vmem:[%s485 + $0x48] sm:$0xff]
      %506 = vst [vmem:[%s486 + $0x48] sm:$0xff] %v505
      %v507 = vld [vmem:[%s485 + $0x50] sm:$0xff]
      %508 = vst [vmem:[%s486 + $0x50] sm:$0xff] %v507
      %v509 = vld [vmem:[%s485 + $0x58] sm:$0xff]
      %510 = vst [vmem:[%s486 + $0x58] sm:$0xff] %v509
      %v511 = vld [vmem:[%s485 + $0x60] sm:$0xff]
      %512 = vst [vmem:[%s486 + $0x60] sm:$0xff] %v511
      %v513 = vld [vmem:[%s485 + $0x68] sm:$0xff]
      %514 = vst [vmem:[%s486 + $0x68] sm:$0xff] %v513
      %v515 = vld [vmem:[%s485 + $0x70] sm:$0xff]
      %516 = vst [vmem:[%s486 + $0x70] sm:$0xff] %v515
      %v517 = vld [vmem:[%s485 + $0x78] sm:$0xff]
      %518 = vst [vmem:[%s486 + $0x78] sm:$0xff] %v517
      %v519 = vld [vmem:[%s485 + $0x80] sm:$0xff]
      %520 = vst [vmem:[%s486 + $0x80] sm:$0xff] %v519
      %v521 = vld [vmem:[%s485 + $0x88] sm:$0xff]
      %522 = vst [vmem:[%s486 + $0x88] sm:$0xff] %v521
      %v523 = vld [vmem:[%s485 + $0x90] sm:$0xff]
      %524 = vst [vmem:[%s486 + $0x90] sm:$0xff] %v523
      %v525 = vld [vmem:[%s485 + $0x98] sm:$0xff]
      %526 = vst [vmem:[%s486 + $0x98] sm:$0xff] %v525
      %v527 = vld [vmem:[%s485 + $0xa0] sm:$0xff]
      %528 = vst [vmem:[%s486 + $0xa0] sm:$0xff] %v527
      %v529 = vld [vmem:[%s485 + $0xa8] sm:$0xff]
      %530 = vst [vmem:[%s486 + $0xa8] sm:$0xff] %v529
      %v531 = vld [vmem:[%s485 + $0xb0] sm:$0xff]
      %532 = vst [vmem:[%s486 + $0xb0] sm:$0xff] %v531
      %v533 = vld [vmem:[%s485 + $0xb8] sm:$0xff]
      %534 = vst [vmem:[%s486 + $0xb8] sm:$0xff] %v533
      %v535 = vld [vmem:[%s485 + $0xc0] sm:$0xff]
      %536 = vst [vmem:[%s486 + $0xc0] sm:$0xff] %v535
      %v537 = vld [vmem:[%s485 + $0xc8] sm:$0xff]
      %538 = vst [vmem:[%s486 + $0xc8] sm:$0xff] %v537
      %v539 = vld [vmem:[%s485 + $0xd0] sm:$0xff]
      %540 = vst [vmem:[%s486 + $0xd0] sm:$0xff] %v539
      %v541 = vld [vmem:[%s485 + $0xd8] sm:$0xff]
      %542 = vst [vmem:[%s486 + $0xd8] sm:$0xff] %v541
      %v543 = vld [vmem:[%s485 + $0xe0] sm:$0xff]
      %544 = vst [vmem:[%s486 + $0xe0] sm:$0xff] %v543
      %v545 = vld [vmem:[%s485 + $0xe8] sm:$0xff]
      %546 = vst [vmem:[%s486 + $0xe8] sm:$0xff] %v545
      %v547 = vld [vmem:[%s485 + $0xf0] sm:$0xff]
      %548 = vst [vmem:[%s486 + $0xf0] sm:$0xff] %v547
      %v549 = vld [vmem:[%s485 + $0xf8] sm:$0xff]
      %550 = vst [vmem:[%s486 + $0xf8] sm:$0xff] %v549
    $region156: #{_lambda_.1} parent=150 // loop_footer
      %s484 = sadd.s32 1, %s480
    $region157: #{_lambda_.1} parent=150 // loop_footer_branch
      %479 = sbr.rel target = $region153
    $region158: #{_lambda_.1} parent=150 // loop_exit
      _
  $region151: #{_lambda_.1} parent=0 // pred_fallthru
    _
  // Predicated region
  $region159: #{_lambda_.1} parent=0 // pred_check
    _
  $region160: #{_lambda_.1} parent=0 // pred_check_branch
    %552 = sbr.rel target = $region162
  $region161: #{_lambda_.1} parent=0 // pred_region
    _
  $region162: #{_lambda_.1} parent=0 // pred_fallthru
    _
  // Predicated region
  $region163: #{_lambda_.1} parent=0 // pred_check
    _
  $region164: #{_lambda_.1} parent=0 // pred_check_branch
    %555 = sbr.rel (0) target = $region166
  $region165: #{_lambda_.1} parent=0 // pred_region
    %556 = vsyncadd %s476, 4096
  $region166: #{_lambda_.1} parent=0 // pred_fallthru
    _
  %s557 = scalar_lea.sflag [#allocation6], 3
  // Predicated region
  $region167: #{_lambda_.1} parent=0 // pred_check
    _
  $region168: #{_lambda_.1} parent=0 // pred_check_branch
    %559 = sbr.rel (0) target = $region170
  $region169: #{_lambda_.1} parent=0 // pred_region
    loop: start=0, step=1, limit=1
    $region171: #{_lambda_.1} parent=169 // loop_pre_header
      _
    $region172: #{_lambda_.1} parent=169 // loop_header
      %s561 = sphi 0, %s565
      %p562 = scmp.ge.s32.totalorder %s561, 1
      %s566 = sphi %s39, %s39
      %s567 = sphi [#allocation5], [#allocation5]
    $region173: #{_lambda_.1} parent=169 // loop_header_branch
      %564 = sbr.rel (%p562) target = $region177
    $region174: #{_lambda_.1} parent=169 // loop_body
      %v568 = vld [vmem:[%s566] sm:$0xff]
      %569 = vst [vmem:[%s567] sm:$0xff] %v568
      %v570 = vld [vmem:[%s566 + $0x8] sm:$0xff]
      %571 = vst [vmem:[%s567 + $0x8] sm:$0xff] %v570
      %v572 = vld [vmem:[%s566 + $0x10] sm:$0xff]
      %573 = vst [vmem:[%s567 + $0x10] sm:$0xff] %v572
      %v574 = vld [vmem:[%s566 + $0x18] sm:$0xff]
      %575 = vst [vmem:[%s567 + $0x18] sm:$0xff] %v574
      %v576 = vld [vmem:[%s566 + $0x20] sm:$0xff]
      %577 = vst [vmem:[%s567 + $0x20] sm:$0xff] %v576
      %v578 = vld [vmem:[%s566 + $0x28] sm:$0xff]
      %579 = vst [vmem:[%s567 + $0x28] sm:$0xff] %v578
      %v580 = vld [vmem:[%s566 + $0x30] sm:$0xff]
      %581 = vst [vmem:[%s567 + $0x30] sm:$0xff] %v580
      %v582 = vld [vmem:[%s566 + $0x38] sm:$0xff]
      %583 = vst [vmem:[%s567 + $0x38] sm:$0xff] %v582
      %v584 = vld [vmem:[%s566 + $0x40] sm:$0xff]
      %585 = vst [vmem:[%s567 + $0x40] sm:$0xff] %v584
      %v586 = vld [vmem:[%s566 + $0x48] sm:$0xff]
      %587 = vst [vmem:[%s567 + $0x48] sm:$0xff] %v586
      %v588 = vld [vmem:[%s566 + $0x50] sm:$0xff]
      %589 = vst [vmem:[%s567 + $0x50] sm:$0xff] %v588
      %v590 = vld [vmem:[%s566 + $0x58] sm:$0xff]
      %591 = vst [vmem:[%s567 + $0x58] sm:$0xff] %v590
      %v592 = vld [vmem:[%s566 + $0x60] sm:$0xff]
      %593 = vst [vmem:[%s567 + $0x60] sm:$0xff] %v592
      %v594 = vld [vmem:[%s566 + $0x68] sm:$0xff]
      %595 = vst [vmem:[%s567 + $0x68] sm:$0xff] %v594
      %v596 = vld [vmem:[%s566 + $0x70] sm:$0xff]
      %597 = vst [vmem:[%s567 + $0x70] sm:$0xff] %v596
      %v598 = vld [vmem:[%s566 + $0x78] sm:$0xff]
      %599 = vst [vmem:[%s567 + $0x78] sm:$0xff] %v598
      %v600 = vld [vmem:[%s566 + $0x80] sm:$0xff]
      %601 = vst [vmem:[%s567 + $0x80] sm:$0xff] %v600
      %v602 = vld [vmem:[%s566 + $0x88] sm:$0xff]
      %603 = vst [vmem:[%s567 + $0x88] sm:$0xff] %v602
      %v604 = vld [vmem:[%s566 + $0x90] sm:$0xff]
      %605 = vst [vmem:[%s567 + $0x90] sm:$0xff] %v604
      %v606 = vld [vmem:[%s566 + $0x98] sm:$0xff]
      %607 = vst [vmem:[%s567 + $0x98] sm:$0xff] %v606
      %v608 = vld [vmem:[%s566 + $0xa0] sm:$0xff]
      %609 = vst [vmem:[%s567 + $0xa0] sm:$0xff] %v608
      %v610 = vld [vmem:[%s566 + $0xa8] sm:$0xff]
      %611 = vst [vmem:[%s567 + $0xa8] sm:$0xff] %v610
      %v612 = vld [vmem:[%s566 + $0xb0] sm:$0xff]
      %613 = vst [vmem:[%s567 + $0xb0] sm:$0xff] %v612
      %v614 = vld [vmem:[%s566 + $0xb8] sm:$0xff]
      %615 = vst [vmem:[%s567 + $0xb8] sm:$0xff] %v614
      %v616 = vld [vmem:[%s566 + $0xc0] sm:$0xff]
      %617 = vst [vmem:[%s567 + $0xc0] sm:$0xff] %v616
      %v618 = vld [vmem:[%s566 + $0xc8] sm:$0xff]
      %619 = vst [vmem:[%s567 + $0xc8] sm:$0xff] %v618
      %v620 = vld [vmem:[%s566 + $0xd0] sm:$0xff]
      %621 = vst [vmem:[%s567 + $0xd0] sm:$0xff] %v620
      %v622 = vld [vmem:[%s566 + $0xd8] sm:$0xff]
      %623 = vst [vmem:[%s567 + $0xd8] sm:$0xff] %v622
      %v624 = vld [vmem:[%s566 + $0xe0] sm:$0xff]
      %625 = vst [vmem:[%s567 + $0xe0] sm:$0xff] %v624
      %v626 = vld [vmem:[%s566 + $0xe8] sm:$0xff]
      %627 = vst [vmem:[%s567 + $0xe8] sm:$0xff] %v626
      %v628 = vld [vmem:[%s566 + $0xf0] sm:$0xff]
      %629 = vst [vmem:[%s567 + $0xf0] sm:$0xff] %v628
      %v630 = vld [vmem:[%s566 + $0xf8] sm:$0xff]
      %631 = vst [vmem:[%s567 + $0xf8] sm:$0xff] %v630
      %v632 = vld [vmem:[%s566 + $0x100] sm:$0xff]
      %633 = vst [vmem:[%s567 + $0x100] sm:$0xff] %v632
      %v634 = vld [vmem:[%s566 + $0x108] sm:$0xff]
      %635 = vst [vmem:[%s567 + $0x108] sm:$0xff] %v634
      %v636 = vld [vmem:[%s566 + $0x110] sm:$0xff]
      %637 = vst [vmem:[%s567 + $0x110] sm:$0xff] %v636
      %v638 = vld [vmem:[%s566 + $0x118] sm:$0xff]
      %639 = vst [vmem:[%s567 + $0x118] sm:$0xff] %v638
      %v640 = vld [vmem:[%s566 + $0x120] sm:$0xff]
      %641 = vst [vmem:[%s567 + $0x120] sm:$0xff] %v640
      %v642 = vld [vmem:[%s566 + $0x128] sm:$0xff]
      %643 = vst [vmem:[%s567 + $0x128] sm:$0xff] %v642
      %v644 = vld [vmem:[%s566 + $0x130] sm:$0xff]
      %645 = vst [vmem:[%s567 + $0x130] sm:$0xff] %v644
      %v646 = vld [vmem:[%s566 + $0x138] sm:$0xff]
      %647 = vst [vmem:[%s567 + $0x138] sm:$0xff] %v646
      %v648 = vld [vmem:[%s566 + $0x140] sm:$0xff]
      %649 = vst [vmem:[%s567 + $0x140] sm:$0xff] %v648
      %v650 = vld [vmem:[%s566 + $0x148] sm:$0xff]
      %651 = vst [vmem:[%s567 + $0x148] sm:$0xff] %v650
      %v652 = vld [vmem:[%s566 + $0x150] sm:$0xff]
      %653 = vst [vmem:[%s567 + $0x150] sm:$0xff] %v652
      %v654 = vld [vmem:[%s566 + $0x158] sm:$0xff]
      %655 = vst [vmem:[%s567 + $0x158] sm:$0xff] %v654
      %v656 = vld [vmem:[%s566 + $0x160] sm:$0xff]
      %657 = vst [vmem:[%s567 + $0x160] sm:$0xff] %v656
      %v658 = vld [vmem:[%s566 + $0x168] sm:$0xff]
      %659 = vst [vmem:[%s567 + $0x168] sm:$0xff] %v658
      %v660 = vld [vmem:[%s566 + $0x170] sm:$0xff]
      %661 = vst [vmem:[%s567 + $0x170] sm:$0xff] %v660
      %v662 = vld [vmem:[%s566 + $0x178] sm:$0xff]
      %663 = vst [vmem:[%s567 + $0x178] sm:$0xff] %v662
      %v664 = vld [vmem:[%s566 + $0x180] sm:$0xff]
      %665 = vst [vmem:[%s567 + $0x180] sm:$0xff] %v664
      %v666 = vld [vmem:[%s566 + $0x188] sm:$0xff]
      %667 = vst [vmem:[%s567 + $0x188] sm:$0xff] %v666
      %v668 = vld [vmem:[%s566 + $0x190] sm:$0xff]
      %669 = vst [vmem:[%s567 + $0x190] sm:$0xff] %v668
      %v670 = vld [vmem:[%s566 + $0x198] sm:$0xff]
      %671 = vst [vmem:[%s567 + $0x198] sm:$0xff] %v670
      %v672 = vld [vmem:[%s566 + $0x1a0] sm:$0xff]
      %673 = vst [vmem:[%s567 + $0x1a0] sm:$0xff] %v672
      %v674 = vld [vmem:[%s566 + $0x1a8] sm:$0xff]
      %675 = vst [vmem:[%s567 + $0x1a8] sm:$0xff] %v674
      %v676 = vld [vmem:[%s566 + $0x1b0] sm:$0xff]
      %677 = vst [vmem:[%s567 + $0x1b0] sm:$0xff] %v676
      %v678 = vld [vmem:[%s566 + $0x1b8] sm:$0xff]
      %679 = vst [vmem:[%s567 + $0x1b8] sm:$0xff] %v678
      %v680 = vld [vmem:[%s566 + $0x1c0] sm:$0xff]
      %681 = vst [vmem:[%s567 + $0x1c0] sm:$0xff] %v680
      %v682 = vld [vmem:[%s566 + $0x1c8] sm:$0xff]
      %683 = vst [vmem:[%s567 + $0x1c8] sm:$0xff] %v682
      %v684 = vld [vmem:[%s566 + $0x1d0] sm:$0xff]
      %685 = vst [vmem:[%s567 + $0x1d0] sm:$0xff] %v684
      %v686 = vld [vmem:[%s566 + $0x1d8] sm:$0xff]
      %687 = vst [vmem:[%s567 + $0x1d8] sm:$0xff] %v686
      %v688 = vld [vmem:[%s566 + $0x1e0] sm:$0xff]
      %689 = vst [vmem:[%s567 + $0x1e0] sm:$0xff] %v688
      %v690 = vld [vmem:[%s566 + $0x1e8] sm:$0xff]
      %691 = vst [vmem:[%s567 + $0x1e8] sm:$0xff] %v690
      %v692 = vld [vmem:[%s566 + $0x1f0] sm:$0xff]
      %693 = vst [vmem:[%s567 + $0x1f0] sm:$0xff] %v692
      %v694 = vld [vmem:[%s566 + $0x1f8] sm:$0xff]
      %695 = vst [vmem:[%s567 + $0x1f8] sm:$0xff] %v694
      %v696 = vld [vmem:[%s566 + $0x200] sm:$0xff]
      %697 = vst [vmem:[%s567 + $0x200] sm:$0xff] %v696
      %v698 = vld [vmem:[%s566 + $0x208] sm:$0xff]
      %699 = vst [vmem:[%s567 + $0x208] sm:$0xff] %v698
      %v700 = vld [vmem:[%s566 + $0x210] sm:$0xff]
      %701 = vst [vmem:[%s567 + $0x210] sm:$0xff] %v700
      %v702 = vld [vmem:[%s566 + $0x218] sm:$0xff]
      %703 = vst [vmem:[%s567 + $0x218] sm:$0xff] %v702
      %v704 = vld [vmem:[%s566 + $0x220] sm:$0xff]
      %705 = vst [vmem:[%s567 + $0x220] sm:$0xff] %v704
      %v706 = vld [vmem:[%s566 + $0x228] sm:$0xff]
      %707 = vst [vmem:[%s567 + $0x228] sm:$0xff] %v706
      %v708 = vld [vmem:[%s566 + $0x230] sm:$0xff]
      %709 = vst [vmem:[%s567 + $0x230] sm:$0xff] %v708
      %v710 = vld [vmem:[%s566 + $0x238] sm:$0xff]
      %711 = vst [vmem:[%s567 + $0x238] sm:$0xff] %v710
      %v712 = vld [vmem:[%s566 + $0x240] sm:$0xff]
      %713 = vst [vmem:[%s567 + $0x240] sm:$0xff] %v712
      %v714 = vld [vmem:[%s566 + $0x248] sm:$0xff]
      %715 = vst [vmem:[%s567 + $0x248] sm:$0xff] %v714
      %v716 = vld [vmem:[%s566 + $0x250] sm:$0xff]
      %717 = vst [vmem:[%s567 + $0x250] sm:$0xff] %v716
      %v718 = vld [vmem:[%s566 + $0x258] sm:$0xff]
      %719 = vst [vmem:[%s567 + $0x258] sm:$0xff] %v718
      %v720 = vld [vmem:[%s566 + $0x260] sm:$0xff]
      %721 = vst [vmem:[%s567 + $0x260] sm:$0xff] %v720
      %v722 = vld [vmem:[%s566 + $0x268] sm:$0xff]
      %723 = vst [vmem:[%s567 + $0x268] sm:$0xff] %v722
      %v724 = vld [vmem:[%s566 + $0x270] sm:$0xff]
      %725 = vst [vmem:[%s567 + $0x270] sm:$0xff] %v724
      %v726 = vld [vmem:[%s566 + $0x278] sm:$0xff]
      %727 = vst [vmem:[%s567 + $0x278] sm:$0xff] %v726
      %v728 = vld [vmem:[%s566 + $0x280] sm:$0xff]
      %729 = vst [vmem:[%s567 + $0x280] sm:$0xff] %v728
      %v730 = vld [vmem:[%s566 + $0x288] sm:$0xff]
      %731 = vst [vmem:[%s567 + $0x288] sm:$0xff] %v730
      %v732 = vld [vmem:[%s566 + $0x290] sm:$0xff]
      %733 = vst [vmem:[%s567 + $0x290] sm:$0xff] %v732
      %v734 = vld [vmem:[%s566 + $0x298] sm:$0xff]
      %735 = vst [vmem:[%s567 + $0x298] sm:$0xff] %v734
      %v736 = vld [vmem:[%s566 + $0x2a0] sm:$0xff]
      %737 = vst [vmem:[%s567 + $0x2a0] sm:$0xff] %v736
      %v738 = vld [vmem:[%s566 + $0x2a8] sm:$0xff]
      %739 = vst [vmem:[%s567 + $0x2a8] sm:$0xff] %v738
      %v740 = vld [vmem:[%s566 + $0x2b0] sm:$0xff]
      %741 = vst [vmem:[%s567 + $0x2b0] sm:$0xff] %v740
      %v742 = vld [vmem:[%s566 + $0x2b8] sm:$0xff]
      %743 = vst [vmem:[%s567 + $0x2b8] sm:$0xff] %v742
      %v744 = vld [vmem:[%s566 + $0x2c0] sm:$0xff]
      %745 = vst [vmem:[%s567 + $0x2c0] sm:$0xff] %v744
      %v746 = vld [vmem:[%s566 + $0x2c8] sm:$0xff]
      %747 = vst [vmem:[%s567 + $0x2c8] sm:$0xff] %v746
      %v748 = vld [vmem:[%s566 + $0x2d0] sm:$0xff]
      %749 = vst [vmem:[%s567 + $0x2d0] sm:$0xff] %v748
      %v750 = vld [vmem:[%s566 + $0x2d8] sm:$0xff]
      %751 = vst [vmem:[%s567 + $0x2d8] sm:$0xff] %v750
      %v752 = vld [vmem:[%s566 + $0x2e0] sm:$0xff]
      %753 = vst [vmem:[%s567 + $0x2e0] sm:$0xff] %v752
      %v754 = vld [vmem:[%s566 + $0x2e8] sm:$0xff]
      %755 = vst [vmem:[%s567 + $0x2e8] sm:$0xff] %v754
      %v756 = vld [vmem:[%s566 + $0x2f0] sm:$0xff]
      %757 = vst [vmem:[%s567 + $0x2f0] sm:$0xff] %v756
      %v758 = vld [vmem:[%s566 + $0x2f8] sm:$0xff]
      %759 = vst [vmem:[%s567 + $0x2f8] sm:$0xff] %v758
      %v760 = vld [vmem:[%s566 + $0x300] sm:$0xff]
      %761 = vst [vmem:[%s567 + $0x300] sm:$0xff] %v760
      %v762 = vld [vmem:[%s566 + $0x308] sm:$0xff]
      %763 = vst [vmem:[%s567 + $0x308] sm:$0xff] %v762
      %v764 = vld [vmem:[%s566 + $0x310] sm:$0xff]
      %765 = vst [vmem:[%s567 + $0x310] sm:$0xff] %v764
      %v766 = vld [vmem:[%s566 + $0x318] sm:$0xff]
      %767 = vst [vmem:[%s567 + $0x318] sm:$0xff] %v766
      %v768 = vld [vmem:[%s566 + $0x320] sm:$0xff]
      %769 = vst [vmem:[%s567 + $0x320] sm:$0xff] %v768
      %v770 = vld [vmem:[%s566 + $0x328] sm:$0xff]
      %771 = vst [vmem:[%s567 + $0x328] sm:$0xff] %v770
      %v772 = vld [vmem:[%s566 + $0x330] sm:$0xff]
      %773 = vst [vmem:[%s567 + $0x330] sm:$0xff] %v772
      %v774 = vld [vmem:[%s566 + $0x338] sm:$0xff]
      %775 = vst [vmem:[%s567 + $0x338] sm:$0xff] %v774
      %v776 = vld [vmem:[%s566 + $0x340] sm:$0xff]
      %777 = vst [vmem:[%s567 + $0x340] sm:$0xff] %v776
      %v778 = vld [vmem:[%s566 + $0x348] sm:$0xff]
      %779 = vst [vmem:[%s567 + $0x348] sm:$0xff] %v778
      %v780 = vld [vmem:[%s566 + $0x350] sm:$0xff]
      %781 = vst [vmem:[%s567 + $0x350] sm:$0xff] %v780
      %v782 = vld [vmem:[%s566 + $0x358] sm:$0xff]
      %783 = vst [vmem:[%s567 + $0x358] sm:$0xff] %v782
      %v784 = vld [vmem:[%s566 + $0x360] sm:$0xff]
      %785 = vst [vmem:[%s567 + $0x360] sm:$0xff] %v784
      %v786 = vld [vmem:[%s566 + $0x368] sm:$0xff]
      %787 = vst [vmem:[%s567 + $0x368] sm:$0xff] %v786
      %v788 = vld [vmem:[%s566 + $0x370] sm:$0xff]
      %789 = vst [vmem:[%s567 + $0x370] sm:$0xff] %v788
      %v790 = vld [vmem:[%s566 + $0x378] sm:$0xff]
      %791 = vst [vmem:[%s567 + $0x378] sm:$0xff] %v790
      %v792 = vld [vmem:[%s566 + $0x380] sm:$0xff]
      %793 = vst [vmem:[%s567 + $0x380] sm:$0xff] %v792
      %v794 = vld [vmem:[%s566 + $0x388] sm:$0xff]
      %795 = vst [vmem:[%s567 + $0x388] sm:$0xff] %v794
      %v796 = vld [vmem:[%s566 + $0x390] sm:$0xff]
      %797 = vst [vmem:[%s567 + $0x390] sm:$0xff] %v796
      %v798 = vld [vmem:[%s566 + $0x398] sm:$0xff]
      %799 = vst [vmem:[%s567 + $0x398] sm:$0xff] %v798
      %v800 = vld [vmem:[%s566 + $0x3a0] sm:$0xff]
      %801 = vst [vmem:[%s567 + $0x3a0] sm:$0xff] %v800
      %v802 = vld [vmem:[%s566 + $0x3a8] sm:$0xff]
      %803 = vst [vmem:[%s567 + $0x3a8] sm:$0xff] %v802
      %v804 = vld [vmem:[%s566 + $0x3b0] sm:$0xff]
      %805 = vst [vmem:[%s567 + $0x3b0] sm:$0xff] %v804
      %v806 = vld [vmem:[%s566 + $0x3b8] sm:$0xff]
      %807 = vst [vmem:[%s567 + $0x3b8] sm:$0xff] %v806
      %v808 = vld [vmem:[%s566 + $0x3c0] sm:$0xff]
      %809 = vst [vmem:[%s567 + $0x3c0] sm:$0xff] %v808
      %v810 = vld [vmem:[%s566 + $0x3c8] sm:$0xff]
      %811 = vst [vmem:[%s567 + $0x3c8] sm:$0xff] %v810
      %v812 = vld [vmem:[%s566 + $0x3d0] sm:$0xff]
      %813 = vst [vmem:[%s567 + $0x3d0] sm:$0xff] %v812
      %v814 = vld [vmem:[%s566 + $0x3d8] sm:$0xff]
      %815 = vst [vmem:[%s567 + $0x3d8] sm:$0xff] %v814
      %v816 = vld [vmem:[%s566 + $0x3e0] sm:$0xff]
      %817 = vst [vmem:[%s567 + $0x3e0] sm:$0xff] %v816
      %v818 = vld [vmem:[%s566 + $0x3e8] sm:$0xff]
      %819 = vst [vmem:[%s567 + $0x3e8] sm:$0xff] %v818
      %v820 = vld [vmem:[%s566 + $0x3f0] sm:$0xff]
      %821 = vst [vmem:[%s567 + $0x3f0] sm:$0xff] %v820
      %v822 = vld [vmem:[%s566 + $0x3f8] sm:$0xff]
      %823 = vst [vmem:[%s567 + $0x3f8] sm:$0xff] %v822
    $region175: #{_lambda_.1} parent=169 // loop_footer
      %s565 = sadd.s32 1, %s561
    $region176: #{_lambda_.1} parent=169 // loop_footer_branch
      %560 = sbr.rel target = $region172
    $region177: #{_lambda_.1} parent=169 // loop_exit
      _
  $region170: #{_lambda_.1} parent=0 // pred_fallthru
    _
  // Predicated region
  $region178: #{_lambda_.1} parent=0 // pred_check
    _
  $region179: #{_lambda_.1} parent=0 // pred_check_branch
    %825 = sbr.rel target = $region181
  $region180: #{_lambda_.1} parent=0 // pred_region
    _
  $region181: #{_lambda_.1} parent=0 // pred_fallthru
    _
  // Predicated region
  $region182: #{_lambda_.1} parent=0 // pred_check
    _
  $region183: #{_lambda_.1} parent=0 // pred_check_branch
    %828 = sbr.rel (0) target = $region185
  $region184: #{_lambda_.1} parent=0 // pred_region
    %829 = vsyncadd %s557, 16384
  $region185: #{_lambda_.1} parent=0 // pred_fallthru
    _
  %v830 = vld [vmem:[%s1] sm:$0xff]
  %v831 = vld [vmem:[%s1 + $0x8] sm:$0xff]
  %v832 = vld [vmem:[%s3] sm:$0xff]
  %vm833 = vcmask 64512
  %v835 = vsel %vm833, %v830, 0
  %v838 = vsel %vm833, %v831, 0
  %840 = vmatpush.msra.mxu0 0.0
  %841 = vmatpush.msra.mxu0 0.0
  %842 = vmatpush.msra.mxu0 0.0
  %843 = vmatpush.msra.mxu0 0.0
  %844 = vmatpush.msra.mxu0 0.0
  %845 = vmatpush.msra.mxu0 0.0
  %846 = vmatpush.msra.mxu0 0.0
  %847 = vmatpush.msra.mxu0 0.0
  %848 = vmatpush.msra.mxu0 0.0
  %849 = vmatpush.msra.mxu0 0.0
  %850 = vmatpush.msra.mxu0 0.0
  %851 = vmatpush.msra.mxu0 0.0
  %852 = vmatpush.msra.mxu0 0.0
  %853 = vmatpush.msra.mxu0 0.0
  %854 = vmatpush.msra.mxu0 0.0
  %855 = vmatpush.msra.mxu0 %v832
  %856 = vmatmul.f32.gmra.mxu0 %v835
  %v857 = vpop.f32.mrf.mxu0
  %v858 = vadd.f32 0.0, %v857
  %859 = vmatmul.f32.gmra.mxu0 %v838
  %v860 = vpop.f32.mrf.mxu0
  %v861 = vadd.f32 0.0, %v860
  %862 = vdwg.mxu0
  %v863 = vmax.f32 %v858, 0.0
  %v864 = vmax.f32 %v861, 0.0
  %v865 = vld [vmem:[%s5] sm:$0xff]
  %v866 = vld [vmem:[%s5 + $0x8] sm:$0xff]
  %v867 = vld [vmem:[%s5 + $0x10] sm:$0xff]
  %v868 = vld [vmem:[%s5 + $0x18] sm:$0xff]
  %v869 = vld [vmem:[%s7] sm:$0x1]
  %v871 = vperm.slane %v869, 0
  %vm873 = vcmask 261120
  %v875 = vsel %vm873, %v863, 0
  %v878 = vsel %vm873, %v864, 0
  %880 = vmatpush.msra.mxu0 0.0
  %881 = vmatpush.msra.mxu0 0.0
  %882 = vmatpush.msra.mxu0 0.0
  %883 = vmatpush.msra.mxu0 0.0
  %884 = vmatpush.msra.mxu0 0.0
  %885 = vmatpush.msra.mxu0 0.0
  %886 = vmatpush.msra.mxu0 0.0
  %887 = vmatpush.msra.mxu0 0.0
  %888 = vmatpush.msra.mxu0 0.0
  %889 = vmatpush.msra.mxu0 0.0
  %890 = vmatpush.msra.mxu0 0.0
  %891 = vmatpush.msra.mxu0 0.0
  %892 = vmatpush.msra.mxu0 %v868
  %893 = vmatpush.msra.mxu0 %v867
  %894 = vmatpush.msra.mxu0 %v866
  %895 = vmatpush.msra.mxu0 %v865
  %896 = vmatmul.f32.gmra.mxu0 %v875
  %v897 = vpop.f32.mrf.mxu0
  %v898 = vadd.f32 %v871, %v897
  %899 = vmatmul.f32.gmra.mxu0 %v878
  %v900 = vpop.f32.mrf.mxu0
  %v901 = vadd.f32 %v871, %v900
  %902 = vdwg.mxu0
  %905 = vrot.lane.b32.xlu0 %v898, 96
  %v906 = vpop.permute.xlu0 %905
  %907 = vrot.lane.b32.xlu0 %v901, 96
  %v908 = vpop.permute.xlu0 %907
  %v909 = vsel %vm833, %v898, 0
  %v911 = vsel %vm833, %v901, 0
  %v913 = vsel %vm833, %v906, 0
  %v915 = vsel %vm833, %v908, 0
  %917 = vmatpush.xpose.msra.mxu0 0.0
  %918 = vmatpush.xpose.msra.mxu0 0.0
  %919 = vmatpush.xpose.msra.mxu0 0.0
  %920 = vmatpush.xpose.msra.mxu0 0.0
  %921 = vmatpush.xpose.msra.mxu0 0.0
  %922 = vmatpush.xpose.msra.mxu0 0.0
  %923 = vmatpush.xpose.msra.mxu0 0.0
  %924 = vmatpush.xpose.msra.mxu0 0.0
  %925 = vmatpush.xpose.msra.mxu0 0.0
  %926 = vmatpush.xpose.msra.mxu0 0.0
  %927 = vmatpush.xpose.msra.mxu0 0.0
  %928 = vmatpush.xpose.msra.mxu0 0.0
  %929 = vmatpush.xpose.msra.mxu0 0.0
  %930 = vmatpush.xpose.msra.mxu0 0.0
  %931 = vmatpush.xpose.msra.mxu0 %v915
  %932 = vmatpush.xpose.msra.mxu0 %v913
  %933 = vmatmul.f32.gmra.mxu0 %v909
  %v934 = vpop.f32.mrf.mxu0
  %v935 = vadd.f32 0.0, %v934
  %936 = vmatmul.f32.gmra.mxu0 %v911
  %v937 = vpop.f32.mrf.mxu0
  %v938 = vadd.f32 0.0, %v937
  %939 = vdwg.mxu0
  %vm940 = vcmask 130048
  %v941 = vsel %vm940, %v935, -inf
  %942 = vmax.xlane.f32.xlu0 %v941
  %v943 = vpop.xlane.xlu0 %942
  %v944 = vsel %vm940, %v938, -inf
  %945 = vmax.xlane.f32.xlu0 %v944
  %v946 = vpop.xlane.xlu0 %945
  %v947 = vsub.f32 %v935, %v943
  %v948 = vsub.f32 %v938, %v946
  %v949 = vmul.f32 %v947, 1.442695
  %v950 = vpow.pop %v949
  %v951 = vmul.f32 %v948, 1.442695
  %v952 = vpow.pop %v951
  %v953 = vsel %vm940, %v950, 0.0
  %954 = vadd.xlane.f32.xlu0 %v953
  %v955 = vpop.xlane.xlu0 %954
  %v956 = vsel %vm940, %v952, 0.0
  %957 = vadd.xlane.f32.xlu0 %v956
  %v958 = vpop.xlane.xlu0 %957
  %v959 = vrcp.pop %v955
  %v960 = vrcp.pop %v958
  %v961 = vmul.f32 %v950, %v959
  %v962 = vmul.f32 %v952, %v960
  %963 = vrot.lane.b32.xlu0 %v898, 64
  %v964 = vpop.permute.xlu0 %963
  %965 = vrot.lane.b32.xlu0 %v901, 64
  %v966 = vpop.permute.xlu0 %965
  %v970 = vsel %vm940, %v961, 0
  %v973 = vsel %vm940, %v962, 0
  %975 = vmatpush.msra.mxu0 0.0
  %976 = vmatpush.msra.mxu0 0.0
  %977 = vmatpush.msra.mxu0 0.0
  %978 = vmatpush.msra.mxu0 0.0
  %979 = vmatpush.msra.mxu0 0.0
  %980 = vmatpush.msra.mxu0 0.0
  %981 = vmatpush.msra.mxu0 0.0
  %982 = vmatpush.msra.mxu0 0.0
  %983 = vmatpush.msra.mxu0 0.0
  %984 = vmatpush.msra.mxu0 0.0
  %985 = vmatpush.msra.mxu0 0.0
  %986 = vmatpush.msra.mxu0 0.0
  %987 = vmatpush.msra.mxu0 0.0
  %988 = vmatpush.msra.mxu0 0.0
  %989 = vmatpush.msra.mxu0 %v966
  %990 = vmatpush.msra.mxu0 %v964
  %991 = vmatmul.f32.gmra.mxu0 %v970
  %v992 = vpop.f32.mrf.mxu0
  %v993 = vadd.f32 0.0, %v992
  %994 = vmatmul.f32.gmra.mxu0 %v973
  %v995 = vpop.f32.mrf.mxu0
  %v996 = vadd.f32 0.0, %v995
  %997 = vdwg.mxu0
  %998 = vrot.lane.b32.xlu0 %v898, 120
  %v999 = vpop.permute.xlu0 %998
  %1000 = vrot.lane.b32.xlu0 %v901, 120
  %v1001 = vpop.permute.xlu0 %1000
  %1002 = vrot.lane.b32.xlu0 %v898, 88
  %v1003 = vpop.permute.xlu0 %1002
  %1004 = vrot.lane.b32.xlu0 %v901, 88
  %v1005 = vpop.permute.xlu0 %1004
  %v1006 = vsel %vm833, %v999, 0
  %v1008 = vsel %vm833, %v1001, 0
  %v1010 = vsel %vm833, %v1003, 0
  %v1012 = vsel %vm833, %v1005, 0
  %1014 = vmatpush.xpose.msra.mxu0 0.0
  %1015 = vmatpush.xpose.msra.mxu0 0.0
  %1016 = vmatpush.xpose.msra.mxu0 0.0
  %1017 = vmatpush.xpose.msra.mxu0 0.0
  %1018 = vmatpush.xpose.msra.mxu0 0.0
  %1019 = vmatpush.xpose.msra.mxu0 0.0
  %1020 = vmatpush.xpose.msra.mxu0 0.0
  %1021 = vmatpush.xpose.msra.mxu0 0.0
  %1022 = vmatpush.xpose.msra.mxu0 0.0
  %1023 = vmatpush.xpose.msra.mxu0 0.0
  %1024 = vmatpush.xpose.msra.mxu0 0.0
  %1025 = vmatpush.xpose.msra.mxu0 0.0
  %1026 = vmatpush.xpose.msra.mxu0 0.0
  %1027 = vmatpush.xpose.msra.mxu0 0.0
  %1028 = vmatpush.xpose.msra.mxu0 %v1012
  %1029 = vmatpush.xpose.msra.mxu0 %v1010
  %1030 = vmatmul.f32.gmra.mxu0 %v1006
  %v1031 = vpop.f32.mrf.mxu0
  %v1032 = vadd.f32 0.0, %v1031
  %1033 = vmatmul.f32.gmra.mxu0 %v1008
  %v1034 = vpop.f32.mrf.mxu0
  %v1035 = vadd.f32 0.0, %v1034
  %1036 = vdwg.mxu0
  %v1037 = vsel %vm940, %v1032, -inf
  %1038 = vmax.xlane.f32.xlu0 %v1037
  %v1039 = vpop.xlane.xlu0 %1038
  %v1040 = vsel %vm940, %v1035, -inf
  %1041 = vmax.xlane.f32.xlu0 %v1040
  %v1042 = vpop.xlane.xlu0 %1041
  %v1043 = vsub.f32 %v1032, %v1039
  %v1044 = vsub.f32 %v1035, %v1042
  %v1045 = vmul.f32 %v1043, 1.442695
  %v1046 = vpow.pop %v1045
  %v1047 = vmul.f32 %v1044, 1.442695
  %v1048 = vpow.pop %v1047
  %v1049 = vsel %vm940, %v1046, 0.0
  %1050 = vadd.xlane.f32.xlu0 %v1049
  %v1051 = vpop.xlane.xlu0 %1050
  %v1052 = vsel %vm940, %v1048, 0.0
  %1053 = vadd.xlane.f32.xlu0 %v1052
  %v1054 = vpop.xlane.xlu0 %1053
  %v1055 = vrcp.pop %v1051
  %v1056 = vrcp.pop %v1054
  %v1057 = vmul.f32 %v1046, %v1055
  %v1058 = vmul.f32 %v1048, %v1056
  %1059 = vrot.lane.b32.xlu0 %v898, 56
  %v1060 = vpop.permute.xlu0 %1059
  %1061 = vrot.lane.b32.xlu0 %v901, 56
  %v1062 = vpop.permute.xlu0 %1061
  %v1066 = vsel %vm940, %v1057, 0
  %v1069 = vsel %vm940, %v1058, 0
  %1071 = vmatpush.msra.mxu0 0.0
  %1072 = vmatpush.msra.mxu0 0.0
  %1073 = vmatpush.msra.mxu0 0.0
  %1074 = vmatpush.msra.mxu0 0.0
  %1075 = vmatpush.msra.mxu0 0.0
  %1076 = vmatpush.msra.mxu0 0.0
  %1077 = vmatpush.msra.mxu0 0.0
  %1078 = vmatpush.msra.mxu0 0.0
  %1079 = vmatpush.msra.mxu0 0.0
  %1080 = vmatpush.msra.mxu0 0.0
  %1081 = vmatpush.msra.mxu0 0.0
  %1082 = vmatpush.msra.mxu0 0.0
  %1083 = vmatpush.msra.mxu0 0.0
  %1084 = vmatpush.msra.mxu0 0.0
  %1085 = vmatpush.msra.mxu0 %v1062
  %1086 = vmatpush.msra.mxu0 %v1060
  %1087 = vmatmul.f32.gmra.mxu0 %v1066
  %v1088 = vpop.f32.mrf.mxu0
  %v1089 = vadd.f32 0.0, %v1088
  %1090 = vmatmul.f32.gmra.mxu0 %v1069
  %v1091 = vpop.f32.mrf.mxu0
  %v1092 = vadd.f32 0.0, %v1091
  %1093 = vdwg.mxu0
  %1094 = vrot.lane.b32.xlu0 %v898, 112
  %v1095 = vpop.permute.xlu0 %1094
  %1096 = vrot.lane.b32.xlu0 %v901, 112
  %v1097 = vpop.permute.xlu0 %1096
  %1098 = vrot.lane.b32.xlu0 %v898, 80
  %v1099 = vpop.permute.xlu0 %1098
  %1100 = vrot.lane.b32.xlu0 %v901, 80
  %v1101 = vpop.permute.xlu0 %1100
  %v1102 = vsel %vm833, %v1095, 0
  %v1104 = vsel %vm833, %v1097, 0
  %v1106 = vsel %vm833, %v1099, 0
  %v1108 = vsel %vm833, %v1101, 0
  %1110 = vmatpush.xpose.msra.mxu0 0.0
  %1111 = vmatpush.xpose.msra.mxu0 0.0
  %1112 = vmatpush.xpose.msra.mxu0 0.0
  %1113 = vmatpush.xpose.msra.mxu0 0.0
  %1114 = vmatpush.xpose.msra.mxu0 0.0
  %1115 = vmatpush.xpose.msra.mxu0 0.0
  %1116 = vmatpush.xpose.msra.mxu0 0.0
  %1117 = vmatpush.xpose.msra.mxu0 0.0
  %1118 = vmatpush.xpose.msra.mxu0 0.0
  %1119 = vmatpush.xpose.msra.mxu0 0.0
  %1120 = vmatpush.xpose.msra.mxu0 0.0
  %1121 = vmatpush.xpose.msra.mxu0 0.0
  %1122 = vmatpush.xpose.msra.mxu0 0.0
  %1123 = vmatpush.xpose.msra.mxu0 0.0
  %1124 = vmatpush.xpose.msra.mxu0 %v1108
  %1125 = vmatpush.xpose.msra.mxu0 %v1106
  %1126 = vmatmul.f32.gmra.mxu0 %v1102
  %v1127 = vpop.f32.mrf.mxu0
  %v1128 = vadd.f32 0.0, %v1127
  %1129 = vmatmul.f32.gmra.mxu0 %v1104
  %v1130 = vpop.f32.mrf.mxu0
  %v1131 = vadd.f32 0.0, %v1130
  %1132 = vdwg.mxu0
  %v1133 = vsel %vm940, %v1128, -inf
  %1134 = vmax.xlane.f32.xlu0 %v1133
  %v1135 = vpop.xlane.xlu0 %1134
  %v1136 = vsel %vm940, %v1131, -inf
  %1137 = vmax.xlane.f32.xlu0 %v1136
  %v1138 = vpop.xlane.xlu0 %1137
  %v1139 = vsub.f32 %v1128, %v1135
  %v1140 = vsub.f32 %v1131, %v1138
  %v1141 = vmul.f32 %v1139, 1.442695
  %v1142 = vpow.pop %v1141
  %v1143 = vmul.f32 %v1140, 1.442695
  %v1144 = vpow.pop %v1143
  %v1145 = vsel %vm940, %v1142, 0.0
  %1146 = vadd.xlane.f32.xlu0 %v1145
  %v1147 = vpop.xlane.xlu0 %1146
  %v1148 = vsel %vm940, %v1144, 0.0
  %1149 = vadd.xlane.f32.xlu0 %v1148
  %v1150 = vpop.xlane.xlu0 %1149
  %v1151 = vrcp.pop %v1147
  %v1152 = vrcp.pop %v1150
  %v1153 = vmul.f32 %v1142, %v1151
  %v1154 = vmul.f32 %v1144, %v1152
  %1155 = vrot.lane.b32.xlu0 %v898, 48
  %v1156 = vpop.permute.xlu0 %1155
  %1157 = vrot.lane.b32.xlu0 %v901, 48
  %v1158 = vpop.permute.xlu0 %1157
  %v1162 = vsel %vm940, %v1153, 0
  %v1165 = vsel %vm940, %v1154, 0
  %1167 = vmatpush.msra.mxu0 0.0
  %1168 = vmatpush.msra.mxu0 0.0
  %1169 = vmatpush.msra.mxu0 0.0
  %1170 = vmatpush.msra.mxu0 0.0
  %1171 = vmatpush.msra.mxu0 0.0
  %1172 = vmatpush.msra.mxu0 0.0
  %1173 = vmatpush.msra.mxu0 0.0
  %1174 = vmatpush.msra.mxu0 0.0
  %1175 = vmatpush.msra.mxu0 0.0
  %1176 = vmatpush.msra.mxu0 0.0
  %1177 = vmatpush.msra.mxu0 0.0
  %1178 = vmatpush.msra.mxu0 0.0
  %1179 = vmatpush.msra.mxu0 0.0
  %1180 = vmatpush.msra.mxu0 0.0
  %1181 = vmatpush.msra.mxu0 %v1158
  %1182 = vmatpush.msra.mxu0 %v1156
  %1183 = vmatmul.f32.gmra.mxu0 %v1162
  %v1184 = vpop.f32.mrf.mxu0
  %v1185 = vadd.f32 0.0, %v1184
  %1186 = vmatmul.f32.gmra.mxu0 %v1165
  %v1187 = vpop.f32.mrf.mxu0
  %v1188 = vadd.f32 0.0, %v1187
  %1189 = vdwg.mxu0
  %1190 = vrot.lane.b32.xlu0 %v898, 104
  %v1191 = vpop.permute.xlu0 %1190
  %1192 = vrot.lane.b32.xlu0 %v901, 104
  %v1193 = vpop.permute.xlu0 %1192
  %1194 = vrot.lane.b32.xlu0 %v898, 72
  %v1195 = vpop.permute.xlu0 %1194
  %1196 = vrot.lane.b32.xlu0 %v901, 72
  %v1197 = vpop.permute.xlu0 %1196
  %v1198 = vsel %vm833, %v1191, 0
  %v1200 = vsel %vm833, %v1193, 0
  %v1202 = vsel %vm833, %v1195, 0
  %v1204 = vsel %vm833, %v1197, 0
  %1206 = vmatpush.xpose.msra.mxu0 0.0
  %1207 = vmatpush.xpose.msra.mxu0 0.0
  %1208 = vmatpush.xpose.msra.mxu0 0.0
  %1209 = vmatpush.xpose.msra.mxu0 0.0
  %1210 = vmatpush.xpose.msra.mxu0 0.0
  %1211 = vmatpush.xpose.msra.mxu0 0.0
  %1212 = vmatpush.xpose.msra.mxu0 0.0
  %1213 = vmatpush.xpose.msra.mxu0 0.0
  %1214 = vmatpush.xpose.msra.mxu0 0.0
  %1215 = vmatpush.xpose.msra.mxu0 0.0
  %1216 = vmatpush.xpose.msra.mxu0 0.0
  %1217 = vmatpush.xpose.msra.mxu0 0.0
  %1218 = vmatpush.xpose.msra.mxu0 0.0
  %1219 = vmatpush.xpose.msra.mxu0 0.0
  %1220 = vmatpush.xpose.msra.mxu0 %v1204
  %1221 = vmatpush.xpose.msra.mxu0 %v1202
  %1222 = vmatmul.f32.gmra.mxu0 %v1198
  %v1223 = vpop.f32.mrf.mxu0
  %v1224 = vadd.f32 0.0, %v1223
  %1225 = vmatmul.f32.gmra.mxu0 %v1200
  %v1226 = vpop.f32.mrf.mxu0
  %v1227 = vadd.f32 0.0, %v1226
  %1228 = vdwg.mxu0
  %v1229 = vsel %vm940, %v1224, -inf
  %1230 = vmax.xlane.f32.xlu0 %v1229
  %v1231 = vpop.xlane.xlu0 %1230
  %v1232 = vsel %vm940, %v1227, -inf
  %1233 = vmax.xlane.f32.xlu0 %v1232
  %v1234 = vpop.xlane.xlu0 %1233
  %v1235 = vsub.f32 %v1224, %v1231
  %v1236 = vsub.f32 %v1227, %v1234
  %v1237 = vmul.f32 %v1235, 1.442695
  %v1238 = vpow.pop %v1237
  %v1239 = vmul.f32 %v1236, 1.442695
  %v1240 = vpow.pop %v1239
  %v1241 = vsel %vm940, %v1238, 0.0
  %1242 = vadd.xlane.f32.xlu0 %v1241
  %v1243 = vpop.xlane.xlu0 %1242
  %v1244 = vsel %vm940, %v1240, 0.0
  %1245 = vadd.xlane.f32.xlu0 %v1244
  %v1246 = vpop.xlane.xlu0 %1245
  %v1247 = vrcp.pop %v1243
  %v1248 = vrcp.pop %v1246
  %v1249 = vmul.f32 %v1238, %v1247
  %v1250 = vmul.f32 %v1240, %v1248
  %1251 = vrot.lane.b32.xlu0 %v898, 40
  %v1252 = vpop.permute.xlu0 %1251
  %1253 = vrot.lane.b32.xlu0 %v901, 40
  %v1254 = vpop.permute.xlu0 %1253
  %v1258 = vsel %vm940, %v1249, 0
  %v1261 = vsel %vm940, %v1250, 0
  %1263 = vmatpush.msra.mxu0 0.0
  %1264 = vmatpush.msra.mxu0 0.0
  %1265 = vmatpush.msra.mxu0 0.0
  %1266 = vmatpush.msra.mxu0 0.0
  %1267 = vmatpush.msra.mxu0 0.0
  %1268 = vmatpush.msra.mxu0 0.0
  %1269 = vmatpush.msra.mxu0 0.0
  %1270 = vmatpush.msra.mxu0 0.0
  %1271 = vmatpush.msra.mxu0 0.0
  %1272 = vmatpush.msra.mxu0 0.0
  %1273 = vmatpush.msra.mxu0 0.0
  %1274 = vmatpush.msra.mxu0 0.0
  %1275 = vmatpush.msra.mxu0 0.0
  %1276 = vmatpush.msra.mxu0 0.0
  %1277 = vmatpush.msra.mxu0 %v1254
  %1278 = vmatpush.msra.mxu0 %v1252
  %1279 = vmatmul.f32.gmra.mxu0 %v1258
  %v1280 = vpop.f32.mrf.mxu0
  %v1281 = vadd.f32 0.0, %v1280
  %1282 = vmatmul.f32.gmra.mxu0 %v1261
  %v1283 = vpop.f32.mrf.mxu0
  %v1284 = vadd.f32 0.0, %v1283
  %1285 = vdwg.mxu0
  %1288 = vrot.lane.b32.xlu0 %v1089, 8
  %v1289 = vpop.permute.xlu0 %1288
  %1290 = vrot.lane.b32.xlu0 %v1092, 8
  %v1291 = vpop.permute.xlu0 %1290
  %1296 = vrot.lane.b32.xlu0 %v1185, 16
  %v1297 = vpop.permute.xlu0 %1296
  %1298 = vrot.lane.b32.xlu0 %v1188, 16
  %v1299 = vpop.permute.xlu0 %1298
  %1304 = vrot.lane.b32.xlu0 %v1281, 24
  %v1305 = vpop.permute.xlu0 %1304
  %1306 = vrot.lane.b32.xlu0 %v1284, 24
  %v1307 = vpop.permute.xlu0 %1306
  %v1310 = vsel %vm833, %v993, %v1289
  %v1311 = vsel %vm833, %v996, %v1291
  %v1312 = vsel %vm940, %v1310, %v1297
  %v1313 = vsel %vm940, %v1311, %v1299
  %vm1314 = vcmask 195584
  %v1315 = vsel %vm1314, %v1312, %v1305
  %v1316 = vsel %vm1314, %v1313, %v1307
  %v1317 = vld [vmem:[%s9] sm:$0xff]
  %v1318 = vld [vmem:[%s9 + $0x8] sm:$0xff]
  %v1319 = vld [vmem:[%s9 + $0x10] sm:$0xff]
  %v1320 = vld [vmem:[%s9 + $0x18] sm:$0xff]
  %v1321 = vld [vmem:[%s11] sm:$0x1]
  %v1323 = vperm.slane %v1321, 0
  %v1326 = vsel %vm873, %v1315, 0
  %v1329 = vsel %vm873, %v1316, 0
  %1331 = vmatpush.msra.mxu0 0.0
  %1332 = vmatpush.msra.mxu0 0.0
  %1333 = vmatpush.msra.mxu0 0.0
  %1334 = vmatpush.msra.mxu0 0.0
  %1335 = vmatpush.msra.mxu0 0.0
  %1336 = vmatpush.msra.mxu0 0.0
  %1337 = vmatpush.msra.mxu0 0.0
  %1338 = vmatpush.msra.mxu0 0.0
  %1339 = vmatpush.msra.mxu0 0.0
  %1340 = vmatpush.msra.mxu0 0.0
  %1341 = vmatpush.msra.mxu0 0.0
  %1342 = vmatpush.msra.mxu0 0.0
  %1343 = vmatpush.msra.mxu0 %v1320
  %1344 = vmatpush.msra.mxu0 %v1319
  %1345 = vmatpush.msra.mxu0 %v1318
  %1346 = vmatpush.msra.mxu0 %v1317
  %1347 = vmatmul.f32.gmra.mxu0 %v1326
  %v1348 = vpop.f32.mrf.mxu0
  %v1349 = vadd.f32 %v1323, %v1348
  %1350 = vmatmul.f32.gmra.mxu0 %v1329
  %v1351 = vpop.f32.mrf.mxu0
  %v1352 = vadd.f32 %v1323, %v1351
  %1353 = vdwg.mxu0
  %v1354 = vadd.f32 %v863, %v1349
  %v1355 = vadd.f32 %v864, %v1352
  %v1356 = vld [vmem:[%s21] sm:$0x1]
  %v1357 = vld [vmem:[%s23] sm:$0x1]
  %v1358 = vsel %vm873, %v1354, 0.0
  %1359 = vadd.xlane.f32.xlu0 %v1358
  %v1360 = vpop.xlane.xlu0 %1359
  %v1361 = vsel %vm873, %v1355, 0.0
  %1362 = vadd.xlane.f32.xlu0 %v1361
  %v1363 = vpop.xlane.xlu0 %1362
  %v1364 = vrcp.pop 32.0
  %v1365 = vmul.f32 32.0, %v1364
  %v1366 = vsub.f32 1.0, %v1365
  %v1367 = vmul.f32 %v1364, %v1366
  %v1368 = vadd.f32 %v1364, %v1367
  %vm1369 = vweird.f32 %v1364
  %v1370 = vsel %vm1369, %v1364, %v1368
  %v1371 = vmul.f32 %v1360, %v1370
  %v1372 = vmul.f32 %v1363, %v1370
  %v1373 = vmul.f32 %v1354, %v1354
  %v1374 = vmul.f32 %v1355, %v1355
  %v1375 = vsel %vm873, %v1373, 0.0
  %1376 = vadd.xlane.f32.xlu0 %v1375
  %v1377 = vpop.xlane.xlu0 %1376
  %v1378 = vsel %vm873, %v1374, 0.0
  %1379 = vadd.xlane.f32.xlu0 %v1378
  %v1380 = vpop.xlane.xlu0 %1379
  %v1381 = vmul.f32 %v1377, %v1370
  %v1382 = vmul.f32 %v1380, %v1370
  %v1383 = vmul.f32 %v1371, %v1371
  %v1384 = vmul.f32 %v1372, %v1372
  %v1385 = vsub.f32 %v1381, %v1383
  %v1386 = vsub.f32 %v1382, %v1384
  %v1387 = vsub.f32 %v1354, %v1371
  %v1388 = vsub.f32 %v1355, %v1372
  %v1389 = vadd.f32 %v1385, 1e-05
  %v1390 = vadd.f32 %v1386, 1e-05
  %v1391 = vrsqrt.pop %v1389
  %v1392 = vmul.f32 %v1391, %v1389
  %v1393 = vmul.f32 %v1392, %v1391
  %v1394 = vmul.f32 0.5, %v1393
  %v1395 = vsub.f32 1.5, %v1394
  %v1396 = vmul.f32 %v1391, %v1395
  %vm1397 = vweird.f32 %v1389
  %vm1398 = vweird.f32 %v1391
  %vm1399 = vmor %vm1397, %vm1398
  %v1400 = vsel %vm1399, %v1391, %v1396
  %v1401 = vrsqrt.pop %v1390
  %v1402 = vmul.f32 %v1401, %v1390
  %v1403 = vmul.f32 %v1402, %v1401
  %v1404 = vmul.f32 0.5, %v1403
  %v1405 = vsub.f32 1.5, %v1404
  %v1406 = vmul.f32 %v1401, %v1405
  %vm1407 = vweird.f32 %v1390
  %vm1408 = vweird.f32 %v1401
  %vm1409 = vmor %vm1407, %vm1408
  %v1410 = vsel %vm1409, %v1401, %v1406
  %v1411 = vmul.f32 %v1387, %v1400
  %v1412 = vmul.f32 %v1388, %v1410
  %v1414 = vperm.slane %v1356, 0
  %v1416 = vmul.f32 %v1411, %v1414
  %v1417 = vmul.f32 %v1412, %v1414
  %v1419 = vperm.slane %v1357, 0
  %v1421 = vadd.f32 %v1416, %v1419
  %v1422 = vadd.f32 %v1417, %v1419
  %s1423 = smul.u32 4, 4
  %s1424 = smul.u32 %s1423, 16
  %s1425 = sshll.u32 %s1424, 4
  %1426 = dma.done [#allocation6], %s1425
  %s1427 = smul.u32 4, 256
  %s1428 = smul.u32 %s1427, 1
  %s1429 = sshll.u32 %s1428, 4
  %1430 = dma.done %s203, %s1429
  %v1431 = vld [vmem:[#allocation2] sm:$0xff]
  %v1432 = vld [vmem:[#allocation2 + $0x8] sm:$0xff]
  %v1433 = vld [vmem:[#allocation2 + $0x10] sm:$0xff]
  %v1434 = vld [vmem:[#allocation2 + $0x18] sm:$0xff]
  %v1435 = vld [vmem:[#allocation2 + $0x20] sm:$0xff]
  %v1436 = vld [vmem:[#allocation2 + $0x28] sm:$0xff]
  %v1437 = vld [vmem:[#allocation2 + $0x30] sm:$0xff]
  %v1438 = vld [vmem:[#allocation2 + $0x38] sm:$0xff]
  %v1439 = vld [vmem:[#allocation2 + $0x40] sm:$0xff]
  %v1440 = vld [vmem:[#allocation2 + $0x48] sm:$0xff]
  %v1441 = vld [vmem:[#allocation2 + $0x50] sm:$0xff]
  %v1442 = vld [vmem:[#allocation2 + $0x58] sm:$0xff]
  %v1443 = vld [vmem:[#allocation2 + $0x60] sm:$0xff]
  %v1444 = vld [vmem:[#allocation2 + $0x68] sm:$0xff]
  %v1445 = vld [vmem:[#allocation2 + $0x70] sm:$0xff]
  %v1446 = vld [vmem:[#allocation2 + $0x78] sm:$0xff]
  %v1447 = vld [vmem:[#allocation2 + $0x80] sm:$0xff]
  %v1448 = vld [vmem:[#allocation2 + $0x88] sm:$0xff]
  %v1449 = vld [vmem:[#allocation2 + $0x90] sm:$0xff]
  %v1450 = vld [vmem:[#allocation2 + $0x98] sm:$0xff]
  %v1451 = vld [vmem:[#allocation2 + $0xa0] sm:$0xff]
  %v1452 = vld [vmem:[#allocation2 + $0xa8] sm:$0xff]
  %v1453 = vld [vmem:[#allocation2 + $0xb0] sm:$0xff]
  %v1454 = vld [vmem:[#allocation2 + $0xb8] sm:$0xff]
  %v1455 = vld [vmem:[#allocation2 + $0xc0] sm:$0xff]
  %v1456 = vld [vmem:[#allocation2 + $0xc8] sm:$0xff]
  %v1457 = vld [vmem:[#allocation2 + $0xd0] sm:$0xff]
  %v1458 = vld [vmem:[#allocation2 + $0xd8] sm:$0xff]
  %v1459 = vld [vmem:[#allocation2 + $0xe0] sm:$0xff]
  %v1460 = vld [vmem:[#allocation2 + $0xe8] sm:$0xff]
  %v1461 = vld [vmem:[#allocation2 + $0xf0] sm:$0xff]
  %v1462 = vld [vmem:[#allocation2 + $0xf8] sm:$0xff]
  %v1463 = vld [vmem:[#allocation3] sm:$0xf]
  %v1464 = vld [vmem:[#allocation3 + $0x4] sm:$0xf]
  %v1465 = vld [vmem:[#allocation3 + $0x8] sm:$0xf]
  %v1466 = vld [vmem:[#allocation3 + $0xc] sm:$0xf]
  %v1467 = vld [vmem:[#allocation3 + $0x10] sm:$0xf]
  %v1468 = vld [vmem:[#allocation3 + $0x14] sm:$0xf]
  %v1469 = vld [vmem:[#allocation3 + $0x18] sm:$0xf]
  %v1470 = vld [vmem:[#allocation3 + $0x1c] sm:$0xf]
  %v1471 = vld [vmem:[#allocation3 + $0x20] sm:$0xf]
  %v1472 = vld [vmem:[#allocation3 + $0x24] sm:$0xf]
  %v1473 = vld [vmem:[#allocation3 + $0x28] sm:$0xf]
  %v1474 = vld [vmem:[#allocation3 + $0x2c] sm:$0xf]
  %v1475 = vld [vmem:[#allocation3 + $0x30] sm:$0xf]
  %v1476 = vld [vmem:[#allocation3 + $0x34] sm:$0xf]
  %v1477 = vld [vmem:[#allocation3 + $0x38] sm:$0xf]
  %v1478 = vld [vmem:[#allocation3 + $0x3c] sm:$0xf]
  %v1479 = vld [vmem:[#allocation3 + $0x40] sm:$0xf]
  %v1480 = vld [vmem:[#allocation3 + $0x44] sm:$0xf]
  %v1481 = vld [vmem:[#allocation3 + $0x48] sm:$0xf]
  %v1482 = vld [vmem:[#allocation3 + $0x4c] sm:$0xf]
  %v1483 = vld [vmem:[#allocation3 + $0x50] sm:$0xf]
  %v1484 = vld [vmem:[#allocation3 + $0x54] sm:$0xf]
  %v1485 = vld [vmem:[#allocation3 + $0x58] sm:$0xf]
  %v1486 = vld [vmem:[#allocation3 + $0x5c] sm:$0xf]
  %v1487 = vld [vmem:[#allocation3 + $0x60] sm:$0xf]
  %v1488 = vld [vmem:[#allocation3 + $0x64] sm:$0xf]
  %v1489 = vld [vmem:[#allocation3 + $0x68] sm:$0xf]
  %v1490 = vld [vmem:[#allocation3 + $0x6c] sm:$0xf]
  %v1491 = vld [vmem:[#allocation3 + $0x70] sm:$0xf]
  %v1492 = vld [vmem:[#allocation3 + $0x74] sm:$0xf]
  %v1493 = vld [vmem:[#allocation3 + $0x78] sm:$0xf]
  %v1494 = vld [vmem:[#allocation3 + $0x7c] sm:$0xf]
  %v1495 = vld [vmem:[#allocation3 + $0x80] sm:$0xf]
  %v1496 = vld [vmem:[#allocation3 + $0x84] sm:$0xf]
  %v1497 = vld [vmem:[#allocation3 + $0x88] sm:$0xf]
  %v1498 = vld [vmem:[#allocation3 + $0x8c] sm:$0xf]
  %v1499 = vld [vmem:[#allocation3 + $0x90] sm:$0xf]
  %v1500 = vld [vmem:[#allocation3 + $0x94] sm:$0xf]
  %v1501 = vld [vmem:[#allocation3 + $0x98] sm:$0xf]
  %v1502 = vld [vmem:[#allocation3 + $0x9c] sm:$0xf]
  %v1503 = vld [vmem:[#allocation3 + $0xa0] sm:$0xf]
  %v1504 = vld [vmem:[#allocation3 + $0xa4] sm:$0xf]
  %v1505 = vld [vmem:[#allocation3 + $0xa8] sm:$0xf]
  %v1506 = vld [vmem:[#allocation3 + $0xac] sm:$0xf]
  %v1507 = vld [vmem:[#allocation3 + $0xb0] sm:$0xf]
  %v1508 = vld [vmem:[#allocation3 + $0xb4] sm:$0xf]
  %v1509 = vld [vmem:[#allocation3 + $0xb8] sm:$0xf]
  %v1510 = vld [vmem:[#allocation3 + $0xbc] sm:$0xf]
  %v1511 = vld [vmem:[#allocation3 + $0xc0] sm:$0xf]
  %v1512 = vld [vmem:[#allocation3 + $0xc4] sm:$0xf]
  %v1513 = vld [vmem:[#allocation3 + $0xc8] sm:$0xf]
  %v1514 = vld [vmem:[#allocation3 + $0xcc] sm:$0xf]
  %v1515 = vld [vmem:[#allocation3 + $0xd0] sm:$0xf]
  %v1516 = vld [vmem:[#allocation3 + $0xd4] sm:$0xf]
  %v1517 = vld [vmem:[#allocation3 + $0xd8] sm:$0xf]
  %v1518 = vld [vmem:[#allocation3 + $0xdc] sm:$0xf]
  %v1519 = vld [vmem:[#allocation3 + $0xe0] sm:$0xf]
  %v1520 = vld [vmem:[#allocation3 + $0xe4] sm:$0xf]
  %v1521 = vld [vmem:[#allocation3 + $0xe8] sm:$0xf]
  %v1522 = vld [vmem:[#allocation3 + $0xec] sm:$0xf]
  %v1523 = vld [vmem:[#allocation3 + $0xf0] sm:$0xf]
  %v1524 = vld [vmem:[#allocation3 + $0xf4] sm:$0xf]
  %v1525 = vld [vmem:[#allocation3 + $0xf8] sm:$0xf]
  %v1526 = vld [vmem:[#allocation3 + $0xfc] sm:$0xf]
  %v1527 = vld [vmem:[#allocation3 + $0x100] sm:$0xf]
  %v1528 = vld [vmem:[#allocation3 + $0x104] sm:$0xf]
  %v1529 = vld [vmem:[#allocation3 + $0x108] sm:$0xf]
  %v1530 = vld [vmem:[#allocation3 + $0x10c] sm:$0xf]
  %v1531 = vld [vmem:[#allocation3 + $0x110] sm:$0xf]
  %v1532 = vld [vmem:[#allocation3 + $0x114] sm:$0xf]
  %v1533 = vld [vmem:[#allocation3 + $0x118] sm:$0xf]
  %v1534 = vld [vmem:[#allocation3 + $0x11c] sm:$0xf]
  %v1535 = vld [vmem:[#allocation3 + $0x120] sm:$0xf]
  %v1536 = vld [vmem:[#allocation3 + $0x124] sm:$0xf]
  %v1537 = vld [vmem:[#allocation3 + $0x128] sm:$0xf]
  %v1538 = vld [vmem:[#allocation3 + $0x12c] sm:$0xf]
  %v1539 = vld [vmem:[#allocation3 + $0x130] sm:$0xf]
  %v1540 = vld [vmem:[#allocation3 + $0x134] sm:$0xf]
  %v1541 = vld [vmem:[#allocation3 + $0x138] sm:$0xf]
  %v1542 = vld [vmem:[#allocation3 + $0x13c] sm:$0xf]
  %v1543 = vld [vmem:[#allocation3 + $0x140] sm:$0xf]
  %v1544 = vld [vmem:[#allocation3 + $0x144] sm:$0xf]
  %v1545 = vld [vmem:[#allocation3 + $0x148] sm:$0xf]
  %v1546 = vld [vmem:[#allocation3 + $0x14c] sm:$0xf]
  %v1547 = vld [vmem:[#allocation3 + $0x150] sm:$0xf]
  %v1548 = vld [vmem:[#allocation3 + $0x154] sm:$0xf]
  %v1549 = vld [vmem:[#allocation3 + $0x158] sm:$0xf]
  %v1550 = vld [vmem:[#allocation3 + $0x15c] sm:$0xf]
  %v1551 = vld [vmem:[#allocation3 + $0x160] sm:$0xf]
  %v1552 = vld [vmem:[#allocation3 + $0x164] sm:$0xf]
  %v1553 = vld [vmem:[#allocation3 + $0x168] sm:$0xf]
  %v1554 = vld [vmem:[#allocation3 + $0x16c] sm:$0xf]
  %v1555 = vld [vmem:[#allocation3 + $0x170] sm:$0xf]
  %v1556 = vld [vmem:[#allocation3 + $0x174] sm:$0xf]
  %v1557 = vld [vmem:[#allocation3 + $0x178] sm:$0xf]
  %v1558 = vld [vmem:[#allocation3 + $0x17c] sm:$0xf]
  %v1559 = vld [vmem:[#allocation3 + $0x180] sm:$0xf]
  %v1560 = vld [vmem:[#allocation3 + $0x184] sm:$0xf]
  %v1561 = vld [vmem:[#allocation3 + $0x188] sm:$0xf]
  %v1562 = vld [vmem:[#allocation3 + $0x18c] sm:$0xf]
  %v1563 = vld [vmem:[#allocation3 + $0x190] sm:$0xf]
  %v1564 = vld [vmem:[#allocation3 + $0x194] sm:$0xf]
  %v1565 = vld [vmem:[#allocation3 + $0x198] sm:$0xf]
  %v1566 = vld [vmem:[#allocation3 + $0x19c] sm:$0xf]
  %v1567 = vld [vmem:[#allocation3 + $0x1a0] sm:$0xf]
  %v1568 = vld [vmem:[#allocation3 + $0x1a4] sm:$0xf]
  %v1569 = vld [vmem:[#allocation3 + $0x1a8] sm:$0xf]
  %v1570 = vld [vmem:[#allocation3 + $0x1ac] sm:$0xf]
  %v1571 = vld [vmem:[#allocation3 + $0x1b0] sm:$0xf]
  %v1572 = vld [vmem:[#allocation3 + $0x1b4] sm:$0xf]
  %v1573 = vld [vmem:[#allocation3 + $0x1b8] sm:$0xf]
  %v1574 = vld [vmem:[#allocation3 + $0x1bc] sm:$0xf]
  %v1575 = vld [vmem:[#allocation3 + $0x1c0] sm:$0xf]
  %v1576 = vld [vmem:[#allocation3 + $0x1c4] sm:$0xf]
  %v1577 = vld [vmem:[#allocation3 + $0x1c8] sm:$0xf]
  %v1578 = vld [vmem:[#allocation3 + $0x1cc] sm:$0xf]
  %v1579 = vld [vmem:[#allocation3 + $0x1d0] sm:$0xf]
  %v1580 = vld [vmem:[#allocation3 + $0x1d4] sm:$0xf]
  %v1581 = vld [vmem:[#allocation3 + $0x1d8] sm:$0xf]
  %v1582 = vld [vmem:[#allocation3 + $0x1dc] sm:$0xf]
  %v1583 = vld [vmem:[#allocation3 + $0x1e0] sm:$0xf]
  %v1584 = vld [vmem:[#allocation3 + $0x1e4] sm:$0xf]
  %v1585 = vld [vmem:[#allocation3 + $0x1e8] sm:$0xf]
  %v1586 = vld [vmem:[#allocation3 + $0x1ec] sm:$0xf]
  %v1587 = vld [vmem:[#allocation3 + $0x1f0] sm:$0xf]
  %v1588 = vld [vmem:[#allocation3 + $0x1f4] sm:$0xf]
  %v1589 = vld [vmem:[#allocation3 + $0x1f8] sm:$0xf]
  %v1590 = vld [vmem:[#allocation3 + $0x1fc] sm:$0xf]
  %v1591 = vld [vmem:[#allocation3 + $0x200] sm:$0xf]
  %v1592 = vld [vmem:[#allocation3 + $0x204] sm:$0xf]
  %v1593 = vld [vmem:[#allocation3 + $0x208] sm:$0xf]
  %v1594 = vld [vmem:[#allocation3 + $0x20c] sm:$0xf]
  %v1595 = vld [vmem:[#allocation3 + $0x210] sm:$0xf]
  %v1596 = vld [vmem:[#allocation3 + $0x214] sm:$0xf]
  %v1597 = vld [vmem:[#allocation3 + $0x218] sm:$0xf]
  %v1598 = vld [vmem:[#allocation3 + $0x21c] sm:$0xf]
  %v1599 = vld [vmem:[#allocation3 + $0x220] sm:$0xf]
  %v1600 = vld [vmem:[#allocation3 + $0x224] sm:$0xf]
  %v1601 = vld [vmem:[#allocation3 + $0x228] sm:$0xf]
  %v1602 = vld [vmem:[#allocation3 + $0x22c] sm:$0xf]
  %v1603 = vld [vmem:[#allocation3 + $0x230] sm:$0xf]
  %v1604 = vld [vmem:[#allocation3 + $0x234] sm:$0xf]
  %v1605 = vld [vmem:[#allocation3 + $0x238] sm:$0xf]
  %v1606 = vld [vmem:[#allocation3 + $0x23c] sm:$0xf]
  %v1607 = vld [vmem:[#allocation3 + $0x240] sm:$0xf]
  %v1608 = vld [vmem:[#allocation3 + $0x244] sm:$0xf]
  %v1609 = vld [vmem:[#allocation3 + $0x248] sm:$0xf]
  %v1610 = vld [vmem:[#allocation3 + $0x24c] sm:$0xf]
  %v1611 = vld [vmem:[#allocation3 + $0x250] sm:$0xf]
  %v1612 = vld [vmem:[#allocation3 + $0x254] sm:$0xf]
  %v1613 = vld [vmem:[#allocation3 + $0x258] sm:$0xf]
  %v1614 = vld [vmem:[#allocation3 + $0x25c] sm:$0xf]
  %v1615 = vld [vmem:[#allocation3 + $0x260] sm:$0xf]
  %v1616 = vld [vmem:[#allocation3 + $0x264] sm:$0xf]
  %v1617 = vld [vmem:[#allocation3 + $0x268] sm:$0xf]
  %v1618 = vld [vmem:[#allocation3 + $0x26c] sm:$0xf]
  %v1619 = vld [vmem:[#allocation3 + $0x270] sm:$0xf]
  %v1620 = vld [vmem:[#allocation3 + $0x274] sm:$0xf]
  %v1621 = vld [vmem:[#allocation3 + $0x278] sm:$0xf]
  %v1622 = vld [vmem:[#allocation3 + $0x27c] sm:$0xf]
  %v1623 = vld [vmem:[#allocation3 + $0x280] sm:$0xf]
  %v1624 = vld [vmem:[#allocation3 + $0x284] sm:$0xf]
  %v1625 = vld [vmem:[#allocation3 + $0x288] sm:$0xf]
  %v1626 = vld [vmem:[#allocation3 + $0x28c] sm:$0xf]
  %v1627 = vld [vmem:[#allocation3 + $0x290] sm:$0xf]
  %v1628 = vld [vmem:[#allocation3 + $0x294] sm:$0xf]
  %v1629 = vld [vmem:[#allocation3 + $0x298] sm:$0xf]
  %v1630 = vld [vmem:[#allocation3 + $0x29c] sm:$0xf]
  %v1631 = vld [vmem:[#allocation3 + $0x2a0] sm:$0xf]
  %v1632 = vld [vmem:[#allocation3 + $0x2a4] sm:$0xf]
  %v1633 = vld [vmem:[#allocation3 + $0x2a8] sm:$0xf]
  %v1634 = vld [vmem:[#allocation3 + $0x2ac] sm:$0xf]
  %v1635 = vld [vmem:[#allocation3 + $0x2b0] sm:$0xf]
  %v1636 = vld [vmem:[#allocation3 + $0x2b4] sm:$0xf]
  %v1637 = vld [vmem:[#allocation3 + $0x2b8] sm:$0xf]
  %v1638 = vld [vmem:[#allocation3 + $0x2bc] sm:$0xf]
  %v1639 = vld [vmem:[#allocation3 + $0x2c0] sm:$0xf]
  %v1640 = vld [vmem:[#allocation3 + $0x2c4] sm:$0xf]
  %v1641 = vld [vmem:[#allocation3 + $0x2c8] sm:$0xf]
  %v1642 = vld [vmem:[#allocation3 + $0x2cc] sm:$0xf]
  %v1643 = vld [vmem:[#allocation3 + $0x2d0] sm:$0xf]
  %v1644 = vld [vmem:[#allocation3 + $0x2d4] sm:$0xf]
  %v1645 = vld [vmem:[#allocation3 + $0x2d8] sm:$0xf]
  %v1646 = vld [vmem:[#allocation3 + $0x2dc] sm:$0xf]
  %v1647 = vld [vmem:[#allocation3 + $0x2e0] sm:$0xf]
  %v1648 = vld [vmem:[#allocation3 + $0x2e4] sm:$0xf]
  %v1649 = vld [vmem:[#allocation3 + $0x2e8] sm:$0xf]
  %v1650 = vld [vmem:[#allocation3 + $0x2ec] sm:$0xf]
  %v1651 = vld [vmem:[#allocation3 + $0x2f0] sm:$0xf]
  %v1652 = vld [vmem:[#allocation3 + $0x2f4] sm:$0xf]
  %v1653 = vld [vmem:[#allocation3 + $0x2f8] sm:$0xf]
  %v1654 = vld [vmem:[#allocation3 + $0x2fc] sm:$0xf]
  %v1655 = vld [vmem:[#allocation3 + $0x300] sm:$0xf]
  %v1656 = vld [vmem:[#allocation3 + $0x304] sm:$0xf]
  %v1657 = vld [vmem:[#allocation3 + $0x308] sm:$0xf]
  %v1658 = vld [vmem:[#allocation3 + $0x30c] sm:$0xf]
  %v1659 = vld [vmem:[#allocation3 + $0x310] sm:$0xf]
  %v1660 = vld [vmem:[#allocation3 + $0x314] sm:$0xf]
  %v1661 = vld [vmem:[#allocation3 + $0x318] sm:$0xf]
  %v1662 = vld [vmem:[#allocation3 + $0x31c] sm:$0xf]
  %v1663 = vld [vmem:[#allocation3 + $0x320] sm:$0xf]
  %v1664 = vld [vmem:[#allocation3 + $0x324] sm:$0xf]
  %v1665 = vld [vmem:[#allocation3 + $0x328] sm:$0xf]
  %v1666 = vld [vmem:[#allocation3 + $0x32c] sm:$0xf]
  %v1667 = vld [vmem:[#allocation3 + $0x330] sm:$0xf]
  %v1668 = vld [vmem:[#allocation3 + $0x334] sm:$0xf]
  %v1669 = vld [vmem:[#allocation3 + $0x338] sm:$0xf]
  %v1670 = vld [vmem:[#allocation3 + $0x33c] sm:$0xf]
  %v1671 = vld [vmem:[#allocation3 + $0x340] sm:$0xf]
  %v1672 = vld [vmem:[#allocation3 + $0x344] sm:$0xf]
  %v1673 = vld [vmem:[#allocation3 + $0x348] sm:$0xf]
  %v1674 = vld [vmem:[#allocation3 + $0x34c] sm:$0xf]
  %v1675 = vld [vmem:[#allocation3 + $0x350] sm:$0xf]
  %v1676 = vld [vmem:[#allocation3 + $0x354] sm:$0xf]
  %v1677 = vld [vmem:[#allocation3 + $0x358] sm:$0xf]
  %v1678 = vld [vmem:[#allocation3 + $0x35c] sm:$0xf]
  %v1679 = vld [vmem:[#allocation3 + $0x360] sm:$0xf]
  %v1680 = vld [vmem:[#allocation3 + $0x364] sm:$0xf]
  %v1681 = vld [vmem:[#allocation3 + $0x368] sm:$0xf]
  %v1682 = vld [vmem:[#allocation3 + $0x36c] sm:$0xf]
  %v1683 = vld [vmem:[#allocation3 + $0x370] sm:$0xf]
  %v1684 = vld [vmem:[#allocation3 + $0x374] sm:$0xf]
  %v1685 = vld [vmem:[#allocation3 + $0x378] sm:$0xf]
  %v1686 = vld [vmem:[#allocation3 + $0x37c] sm:$0xf]
  %v1687 = vld [vmem:[#allocation3 + $0x380] sm:$0xf]
  %v1688 = vld [vmem:[#allocation3 + $0x384] sm:$0xf]
  %v1689 = vld [vmem:[#allocation3 + $0x388] sm:$0xf]
  %v1690 = vld [vmem:[#allocation3 + $0x38c] sm:$0xf]
  %v1691 = vld [vmem:[#allocation3 + $0x390] sm:$0xf]
  %v1692 = vld [vmem:[#allocation3 + $0x394] sm:$0xf]
  %v1693 = vld [vmem:[#allocation3 + $0x398] sm:$0xf]
  %v1694 = vld [vmem:[#allocation3 + $0x39c] sm:$0xf]
  %v1695 = vld [vmem:[#allocation3 + $0x3a0] sm:$0xf]
  %v1696 = vld [vmem:[#allocation3 + $0x3a4] sm:$0xf]
  %v1697 = vld [vmem:[#allocation3 + $0x3a8] sm:$0xf]
  %v1698 = vld [vmem:[#allocation3 + $0x3ac] sm:$0xf]
  %v1699 = vld [vmem:[#allocation3 + $0x3b0] sm:$0xf]
  %v1700 = vld [vmem:[#allocation3 + $0x3b4] sm:$0xf]
  %v1701 = vld [vmem:[#allocation3 + $0x3b8] sm:$0xf]
  %v1702 = vld [vmem:[#allocation3 + $0x3bc] sm:$0xf]
  %v1703 = vld [vmem:[#allocation3 + $0x3c0] sm:$0xf]
  %v1704 = vld [vmem:[#allocation3 + $0x3c4] sm:$0xf]
  %v1705 = vld [vmem:[#allocation3 + $0x3c8] sm:$0xf]
  %v1706 = vld [vmem:[#allocation3 + $0x3cc] sm:$0xf]
  %v1707 = vld [vmem:[#allocation3 + $0x3d0] sm:$0xf]
  %v1708 = vld [vmem:[#allocation3 + $0x3d4] sm:$0xf]
  %v1709 = vld [vmem:[#allocation3 + $0x3d8] sm:$0xf]
  %v1710 = vld [vmem:[#allocation3 + $0x3dc] sm:$0xf]
  %v1711 = vld [vmem:[#allocation3 + $0x3e0] sm:$0xf]
  %v1712 = vld [vmem:[#allocation3 + $0x3e4] sm:$0xf]
  %v1713 = vld [vmem:[#allocation3 + $0x3e8] sm:$0xf]
  %v1714 = vld [vmem:[#allocation3 + $0x3ec] sm:$0xf]
  %v1715 = vld [vmem:[#allocation3 + $0x3f0] sm:$0xf]
  %v1716 = vld [vmem:[#allocation3 + $0x3f4] sm:$0xf]
  %v1717 = vld [vmem:[#allocation3 + $0x3f8] sm:$0xf]
  %v1718 = vld [vmem:[#allocation3 + $0x3fc] sm:$0xf]
  %v1719 = vpack.c.bf16 %v1422, %v1421
  %v1720 = vld [vmem:[%s17] sm:$0xff]
  %v1721 = vld [vmem:[%s17 + $0x8] sm:$0xff]
  %v1724 = vperm.slane %v1720, 0
  %v1725 = vperm.slane %v1720, 1
  %v1726 = vperm.slane %v1720, 2
  %v1727 = vperm.slane %v1720, 3
  %v1728 = vperm.slane %v1720, 4
  %v1729 = vperm.slane %v1720, 5
  %v1730 = vperm.slane %v1720, 6
  %v1731 = vperm.slane %v1720, 7
  %v1732 = vperm.slane %v1721, 0
  %v1733 = vperm.slane %v1721, 1
  %v1734 = vperm.slane %v1721, 2
  %v1735 = vperm.slane %v1721, 3
  %v1736 = vperm.slane %v1721, 4
  %v1737 = vperm.slane %v1721, 5
  %v1738 = vperm.slane %v1721, 6
  %v1739 = vperm.slane %v1721, 7
  %v1788 = vunpack.c.l.b16 %v1431
  %v1789 = vunpack.c.h.b16 %v1431
  %v1790 = vunpack.c.l.b16 %v1432
  %v1791 = vunpack.c.h.b16 %v1432
  %v1792 = vunpack.c.l.b16 %v1433
  %v1793 = vunpack.c.h.b16 %v1433
  %v1794 = vunpack.c.l.b16 %v1434
  %v1795 = vunpack.c.h.b16 %v1434
  %v1796 = vunpack.c.l.b16 %v1435
  %v1797 = vunpack.c.h.b16 %v1435
  %v1798 = vunpack.c.l.b16 %v1436
  %v1799 = vunpack.c.h.b16 %v1436
  %v1800 = vunpack.c.l.b16 %v1437
  %v1801 = vunpack.c.h.b16 %v1437
  %v1802 = vunpack.c.l.b16 %v1438
  %v1803 = vunpack.c.h.b16 %v1438
  %v1804 = vunpack.c.l.b16 %v1439
  %v1805 = vunpack.c.h.b16 %v1439
  %v1806 = vunpack.c.l.b16 %v1440
  %v1807 = vunpack.c.h.b16 %v1440
  %v1808 = vunpack.c.l.b16 %v1441
  %v1809 = vunpack.c.h.b16 %v1441
  %v1810 = vunpack.c.l.b16 %v1442
  %v1811 = vunpack.c.h.b16 %v1442
  %v1812 = vunpack.c.l.b16 %v1443
  %v1813 = vunpack.c.h.b16 %v1443
  %v1814 = vunpack.c.l.b16 %v1444
  %v1815 = vunpack.c.h.b16 %v1444
  %v1816 = vunpack.c.l.b16 %v1445
  %v1817 = vunpack.c.h.b16 %v1445
  %v1818 = vunpack.c.l.b16 %v1446
  %v1819 = vunpack.c.h.b16 %v1446
  %v1820 = vunpack.c.l.b16 %v1447
  %v1821 = vunpack.c.h.b16 %v1447
  %v1822 = vunpack.c.l.b16 %v1448
  %v1823 = vunpack.c.h.b16 %v1448
  %v1824 = vunpack.c.l.b16 %v1449
  %v1825 = vunpack.c.h.b16 %v1449
  %v1826 = vunpack.c.l.b16 %v1450
  %v1827 = vunpack.c.h.b16 %v1450
  %v1828 = vunpack.c.l.b16 %v1451
  %v1829 = vunpack.c.h.b16 %v1451
  %v1830 = vunpack.c.l.b16 %v1452
  %v1831 = vunpack.c.h.b16 %v1452
  %v1832 = vunpack.c.l.b16 %v1453
  %v1833 = vunpack.c.h.b16 %v1453
  %v1834 = vunpack.c.l.b16 %v1454
  %v1835 = vunpack.c.h.b16 %v1454
  %v1836 = vunpack.c.l.b16 %v1455
  %v1837 = vunpack.c.h.b16 %v1455
  %v1838 = vunpack.c.l.b16 %v1456
  %v1839 = vunpack.c.h.b16 %v1456
  %v1840 = vunpack.c.l.b16 %v1457
  %v1841 = vunpack.c.h.b16 %v1457
  %v1842 = vunpack.c.l.b16 %v1458
  %v1843 = vunpack.c.h.b16 %v1458
  %v1844 = vunpack.c.l.b16 %v1459
  %v1845 = vunpack.c.h.b16 %v1459
  %v1846 = vunpack.c.l.b16 %v1460
  %v1847 = vunpack.c.h.b16 %v1460
  %v1848 = vunpack.c.l.b16 %v1461
  %v1849 = vunpack.c.h.b16 %v1461
  %v1850 = vunpack.c.l.b16 %v1462
  %v1851 = vunpack.c.h.b16 %v1462
  %v1852 = vpack.c.b16 %v1804, %v1788
  %v1853 = vpack.c.b16 %v1805, %v1789
  %v1854 = vpack.c.b16 %v1806, %v1790
  %v1855 = vpack.c.b16 %v1807, %v1791
  %v1856 = vpack.c.b16 %v1808, %v1792
  %v1857 = vpack.c.b16 %v1809, %v1793
  %v1858 = vpack.c.b16 %v1810, %v1794
  %v1859 = vpack.c.b16 %v1811, %v1795
  %v1860 = vpack.c.b16 %v1812, %v1796
  %v1861 = vpack.c.b16 %v1813, %v1797
  %v1862 = vpack.c.b16 %v1814, %v1798
  %v1863 = vpack.c.b16 %v1815, %v1799
  %v1864 = vpack.c.b16 %v1816, %v1800
  %v1865 = vpack.c.b16 %v1817, %v1801
  %v1866 = vpack.c.b16 %v1818, %v1802
  %v1867 = vpack.c.b16 %v1819, %v1803
  %v1868 = vpack.c.b16 %v1836, %v1820
  %v1869 = vpack.c.b16 %v1837, %v1821
  %v1870 = vpack.c.b16 %v1838, %v1822
  %v1871 = vpack.c.b16 %v1839, %v1823
  %v1872 = vpack.c.b16 %v1840, %v1824
  %v1873 = vpack.c.b16 %v1841, %v1825
  %v1874 = vpack.c.b16 %v1842, %v1826
  %v1875 = vpack.c.b16 %v1843, %v1827
  %v1876 = vpack.c.b16 %v1844, %v1828
  %v1877 = vpack.c.b16 %v1845, %v1829
  %v1878 = vpack.c.b16 %v1846, %v1830
  %v1879 = vpack.c.b16 %v1847, %v1831
  %v1880 = vpack.c.b16 %v1848, %v1832
  %v1881 = vpack.c.b16 %v1849, %v1833
  %v1882 = vpack.c.b16 %v1850, %v1834
  %v1883 = vpack.c.b16 %v1851, %v1835
  %v1917 = vsel %vm873, %v1719, 0
  %1919 = vmatpush.bf16.msra.mxu0 0
  %1920 = vmatpush.bf16.msra.mxu0 0
  %1921 = vmatpush.bf16.msra.mxu0 0
  %1922 = vmatpush.bf16.msra.mxu0 0
  %1923 = vmatpush.bf16.msra.mxu0 0
  %1924 = vmatpush.bf16.msra.mxu0 0
  %1925 = vmatpush.bf16.msra.mxu0 %v1868
  %1926 = vmatpush.bf16.msra.mxu0 %v1852
  %1927 = vmatmul.bf16.gmra.mxu0 %v1917
  %v1928 = vpop.f32.mrf.mxu0
  %v1929 = vadd.f32 %v1724, %v1928
  %v1930 = vpop.f32.mrf.mxu0
  %v1931 = vadd.f32 %v1724, %v1930
  %1932 = vdwg.mxu0
  %1933 = vmatpush.bf16.msra.mxu0 0
  %1934 = vmatpush.bf16.msra.mxu0 0
  %1935 = vmatpush.bf16.msra.mxu0 0
  %1936 = vmatpush.bf16.msra.mxu0 0
  %1937 = vmatpush.bf16.msra.mxu0 0
  %1938 = vmatpush.bf16.msra.mxu0 0
  %1939 = vmatpush.bf16.msra.mxu0 %v1869
  %1940 = vmatpush.bf16.msra.mxu0 %v1853
  %1941 = vmatmul.bf16.gmra.mxu0 %v1917
  %v1942 = vpop.f32.mrf.mxu0
  %v1943 = vadd.f32 %v1725, %v1942
  %v1944 = vpop.f32.mrf.mxu0
  %v1945 = vadd.f32 %v1725, %v1944
  %1946 = vdwg.mxu0
  %1947 = vmatpush.bf16.msra.mxu0 0
  %1948 = vmatpush.bf16.msra.mxu0 0
  %1949 = vmatpush.bf16.msra.mxu0 0
  %1950 = vmatpush.bf16.msra.mxu0 0
  %1951 = vmatpush.bf16.msra.mxu0 0
  %1952 = vmatpush.bf16.msra.mxu0 0
  %1953 = vmatpush.bf16.msra.mxu0 %v1870
  %1954 = vmatpush.bf16.msra.mxu0 %v1854
  %1955 = vmatmul.bf16.gmra.mxu0 %v1917
  %v1956 = vpop.f32.mrf.mxu0
  %v1957 = vadd.f32 %v1726, %v1956
  %v1958 = vpop.f32.mrf.mxu0
  %v1959 = vadd.f32 %v1726, %v1958
  %1960 = vdwg.mxu0
  %1961 = vmatpush.bf16.msra.mxu0 0
  %1962 = vmatpush.bf16.msra.mxu0 0
  %1963 = vmatpush.bf16.msra.mxu0 0
  %1964 = vmatpush.bf16.msra.mxu0 0
  %1965 = vmatpush.bf16.msra.mxu0 0
  %1966 = vmatpush.bf16.msra.mxu0 0
  %1967 = vmatpush.bf16.msra.mxu0 %v1871
  %1968 = vmatpush.bf16.msra.mxu0 %v1855
  %1969 = vmatmul.bf16.gmra.mxu0 %v1917
  %v1970 = vpop.f32.mrf.mxu0
  %v1971 = vadd.f32 %v1727, %v1970
  %v1972 = vpop.f32.mrf.mxu0
  %v1973 = vadd.f32 %v1727, %v1972
  %1974 = vdwg.mxu0
  %1975 = vmatpush.bf16.msra.mxu0 0
  %1976 = vmatpush.bf16.msra.mxu0 0
  %1977 = vmatpush.bf16.msra.mxu0 0
  %1978 = vmatpush.bf16.msra.mxu0 0
  %1979 = vmatpush.bf16.msra.mxu0 0
  %1980 = vmatpush.bf16.msra.mxu0 0
  %1981 = vmatpush.bf16.msra.mxu0 %v1872
  %1982 = vmatpush.bf16.msra.mxu0 %v1856
  %1983 = vmatmul.bf16.gmra.mxu0 %v1917
  %v1984 = vpop.f32.mrf.mxu0
  %v1985 = vadd.f32 %v1728, %v1984
  %v1986 = vpop.f32.mrf.mxu0
  %v1987 = vadd.f32 %v1728, %v1986
  %1988 = vdwg.mxu0
  %1989 = vmatpush.bf16.msra.mxu0 0
  %1990 = vmatpush.bf16.msra.mxu0 0
  %1991 = vmatpush.bf16.msra.mxu0 0
  %1992 = vmatpush.bf16.msra.mxu0 0
  %1993 = vmatpush.bf16.msra.mxu0 0
  %1994 = vmatpush.bf16.msra.mxu0 0
  %1995 = vmatpush.bf16.msra.mxu0 %v1873
  %1996 = vmatpush.bf16.msra.mxu0 %v1857
  %1997 = vmatmul.bf16.gmra.mxu0 %v1917
  %v1998 = vpop.f32.mrf.mxu0
  %v1999 = vadd.f32 %v1729, %v1998
  %v2000 = vpop.f32.mrf.mxu0
  %v2001 = vadd.f32 %v1729, %v2000
  %2002 = vdwg.mxu0
  %2003 = vmatpush.bf16.msra.mxu0 0
  %2004 = vmatpush.bf16.msra.mxu0 0
  %2005 = vmatpush.bf16.msra.mxu0 0
  %2006 = vmatpush.bf16.msra.mxu0 0
  %2007 = vmatpush.bf16.msra.mxu0 0
  %2008 = vmatpush.bf16.msra.mxu0 0
  %2009 = vmatpush.bf16.msra.mxu0 %v1874
  %2010 = vmatpush.bf16.msra.mxu0 %v1858
  %2011 = vmatmul.bf16.gmra.mxu0 %v1917
  %v2012 = vpop.f32.mrf.mxu0
  %v2013 = vadd.f32 %v1730, %v2012
  %v2014 = vpop.f32.mrf.mxu0
  %v2015 = vadd.f32 %v1730, %v2014
  %2016 = vdwg.mxu0
  %2017 = vmatpush.bf16.msra.mxu0 0
  %2018 = vmatpush.bf16.msra.mxu0 0
  %2019 = vmatpush.bf16.msra.mxu0 0
  %2020 = vmatpush.bf16.msra.mxu0 0
  %2021 = vmatpush.bf16.msra.mxu0 0
  %2022 = vmatpush.bf16.msra.mxu0 0
  %2023 = vmatpush.bf16.msra.mxu0 %v1875
  %2024 = vmatpush.bf16.msra.mxu0 %v1859
  %2025 = vmatmul.bf16.gmra.mxu0 %v1917
  %v2026 = vpop.f32.mrf.mxu0
  %v2027 = vadd.f32 %v1731, %v2026
  %v2028 = vpop.f32.mrf.mxu0
  %v2029 = vadd.f32 %v1731, %v2028
  %2030 = vdwg.mxu0
  %2031 = vmatpush.bf16.msra.mxu0 0
  %2032 = vmatpush.bf16.msra.mxu0 0
  %2033 = vmatpush.bf16.msra.mxu0 0
  %2034 = vmatpush.bf16.msra.mxu0 0
  %2035 = vmatpush.bf16.msra.mxu0 0
  %2036 = vmatpush.bf16.msra.mxu0 0
  %2037 = vmatpush.bf16.msra.mxu0 %v1876
  %2038 = vmatpush.bf16.msra.mxu0 %v1860
  %2039 = vmatmul.bf16.gmra.mxu0 %v1917
  %v2040 = vpop.f32.mrf.mxu0
  %v2041 = vadd.f32 %v1732, %v2040
  %v2042 = vpop.f32.mrf.mxu0
  %v2043 = vadd.f32 %v1732, %v2042
  %2044 = vdwg.mxu0
  %2045 = vmatpush.bf16.msra.mxu0 0
  %2046 = vmatpush.bf16.msra.mxu0 0
  %2047 = vmatpush.bf16.msra.mxu0 0
  %2048 = vmatpush.bf16.msra.mxu0 0
  %2049 = vmatpush.bf16.msra.mxu0 0
  %2050 = vmatpush.bf16.msra.mxu0 0
  %2051 = vmatpush.bf16.msra.mxu0 %v1877
  %2052 = vmatpush.bf16.msra.mxu0 %v1861
  %2053 = vmatmul.bf16.gmra.mxu0 %v1917
  %v2054 = vpop.f32.mrf.mxu0
  %v2055 = vadd.f32 %v1733, %v2054
  %v2056 = vpop.f32.mrf.mxu0
  %v2057 = vadd.f32 %v1733, %v2056
  %2058 = vdwg.mxu0
  %2059 = vmatpush.bf16.msra.mxu0 0
  %2060 = vmatpush.bf16.msra.mxu0 0
  %2061 = vmatpush.bf16.msra.mxu0 0
  %2062 = vmatpush.bf16.msra.mxu0 0
  %2063 = vmatpush.bf16.msra.mxu0 0
  %2064 = vmatpush.bf16.msra.mxu0 0
  %2065 = vmatpush.bf16.msra.mxu0 %v1878
  %2066 = vmatpush.bf16.msra.mxu0 %v1862
  %2067 = vmatmul.bf16.gmra.mxu0 %v1917
  %v2068 = vpop.f32.mrf.mxu0
  %v2069 = vadd.f32 %v1734, %v2068
  %v2070 = vpop.f32.mrf.mxu0
  %v2071 = vadd.f32 %v1734, %v2070
  %2072 = vdwg.mxu0
  %2073 = vmatpush.bf16.msra.mxu0 0
  %2074 = vmatpush.bf16.msra.mxu0 0
  %2075 = vmatpush.bf16.msra.mxu0 0
  %2076 = vmatpush.bf16.msra.mxu0 0
  %2077 = vmatpush.bf16.msra.mxu0 0
  %2078 = vmatpush.bf16.msra.mxu0 0
  %2079 = vmatpush.bf16.msra.mxu0 %v1879
  %2080 = vmatpush.bf16.msra.mxu0 %v1863
  %2081 = vmatmul.bf16.gmra.mxu0 %v1917
  %v2082 = vpop.f32.mrf.mxu0
  %v2083 = vadd.f32 %v1735, %v2082
  %v2084 = vpop.f32.mrf.mxu0
  %v2085 = vadd.f32 %v1735, %v2084
  %2086 = vdwg.mxu0
  %2087 = vmatpush.bf16.msra.mxu0 0
  %2088 = vmatpush.bf16.msra.mxu0 0
  %2089 = vmatpush.bf16.msra.mxu0 0
  %2090 = vmatpush.bf16.msra.mxu0 0
  %2091 = vmatpush.bf16.msra.mxu0 0
  %2092 = vmatpush.bf16.msra.mxu0 0
  %2093 = vmatpush.bf16.msra.mxu0 %v1880
  %2094 = vmatpush.bf16.msra.mxu0 %v1864
  %2095 = vmatmul.bf16.gmra.mxu0 %v1917
  %v2096 = vpop.f32.mrf.mxu0
  %v2097 = vadd.f32 %v1736, %v2096
  %v2098 = vpop.f32.mrf.mxu0
  %v2099 = vadd.f32 %v1736, %v2098
  %2100 = vdwg.mxu0
  %2101 = vmatpush.bf16.msra.mxu0 0
  %2102 = vmatpush.bf16.msra.mxu0 0
  %2103 = vmatpush.bf16.msra.mxu0 0
  %2104 = vmatpush.bf16.msra.mxu0 0
  %2105 = vmatpush.bf16.msra.mxu0 0
  %2106 = vmatpush.bf16.msra.mxu0 0
  %2107 = vmatpush.bf16.msra.mxu0 %v1881
  %2108 = vmatpush.bf16.msra.mxu0 %v1865
  %2109 = vmatmul.bf16.gmra.mxu0 %v1917
  %v2110 = vpop.f32.mrf.mxu0
  %v2111 = vadd.f32 %v1737, %v2110
  %v2112 = vpop.f32.mrf.mxu0
  %v2113 = vadd.f32 %v1737, %v2112
  %2114 = vdwg.mxu0
  %2115 = vmatpush.bf16.msra.mxu0 0
  %2116 = vmatpush.bf16.msra.mxu0 0
  %2117 = vmatpush.bf16.msra.mxu0 0
  %2118 = vmatpush.bf16.msra.mxu0 0
  %2119 = vmatpush.bf16.msra.mxu0 0
  %2120 = vmatpush.bf16.msra.mxu0 0
  %2121 = vmatpush.bf16.msra.mxu0 %v1882
  %2122 = vmatpush.bf16.msra.mxu0 %v1866
  %2123 = vmatmul.bf16.gmra.mxu0 %v1917
  %v2124 = vpop.f32.mrf.mxu0
  %v2125 = vadd.f32 %v1738, %v2124
  %v2126 = vpop.f32.mrf.mxu0
  %v2127 = vadd.f32 %v1738, %v2126
  %2128 = vdwg.mxu0
  %2129 = vmatpush.bf16.msra.mxu0 0
  %2130 = vmatpush.bf16.msra.mxu0 0
  %2131 = vmatpush.bf16.msra.mxu0 0
  %2132 = vmatpush.bf16.msra.mxu0 0
  %2133 = vmatpush.bf16.msra.mxu0 0
  %2134 = vmatpush.bf16.msra.mxu0 0
  %2135 = vmatpush.bf16.msra.mxu0 %v1883
  %2136 = vmatpush.bf16.msra.mxu0 %v1867
  %2137 = vmatmul.bf16.gmra.mxu0 %v1917
  %v2138 = vpop.f32.mrf.mxu0
  %v2139 = vadd.f32 %v1739, %v2138
  %v2140 = vpop.f32.mrf.mxu0
  %v2141 = vadd.f32 %v1739, %v2140
  %2142 = vdwg.mxu0
  %v2143 = vmax.f32 %v1929, 0.0
  %v2144 = vmax.f32 %v1943, 0.0
  %v2145 = vmax.f32 %v1957, 0.0
  %v2146 = vmax.f32 %v1971, 0.0
  %v2147 = vmax.f32 %v1985, 0.0
  %v2148 = vmax.f32 %v1999, 0.0
  %v2149 = vmax.f32 %v2013, 0.0
  %v2150 = vmax.f32 %v2027, 0.0
  %v2151 = vmax.f32 %v2041, 0.0
  %v2152 = vmax.f32 %v2055, 0.0
  %v2153 = vmax.f32 %v2069, 0.0
  %v2154 = vmax.f32 %v2083, 0.0
  %v2155 = vmax.f32 %v2097, 0.0
  %v2156 = vmax.f32 %v2111, 0.0
  %v2157 = vmax.f32 %v2125, 0.0
  %v2158 = vmax.f32 %v2139, 0.0
  %v2159 = vmax.f32 %v1931, 0.0
  %v2160 = vmax.f32 %v1945, 0.0
  %v2161 = vmax.f32 %v1959, 0.0
  %v2162 = vmax.f32 %v1973, 0.0
  %v2163 = vmax.f32 %v1987, 0.0
  %v2164 = vmax.f32 %v2001, 0.0
  %v2165 = vmax.f32 %v2015, 0.0
  %v2166 = vmax.f32 %v2029, 0.0
  %v2167 = vmax.f32 %v2043, 0.0
  %v2168 = vmax.f32 %v2057, 0.0
  %v2169 = vmax.f32 %v2071, 0.0
  %v2170 = vmax.f32 %v2085, 0.0
  %v2171 = vmax.f32 %v2099, 0.0
  %v2172 = vmax.f32 %v2113, 0.0
  %v2173 = vmax.f32 %v2127, 0.0
  %v2174 = vmax.f32 %v2141, 0.0
  %v2175 = vpack.c.bf16 %v2159, %v2143
  %v2176 = vpack.c.bf16 %v2160, %v2144
  %v2177 = vpack.c.bf16 %v2161, %v2145
  %v2178 = vpack.c.bf16 %v2162, %v2146
  %v2179 = vpack.c.bf16 %v2163, %v2147
  %v2180 = vpack.c.bf16 %v2164, %v2148
  %v2181 = vpack.c.bf16 %v2165, %v2149
  %v2182 = vpack.c.bf16 %v2166, %v2150
  %v2183 = vpack.c.bf16 %v2167, %v2151
  %v2184 = vpack.c.bf16 %v2168, %v2152
  %v2185 = vpack.c.bf16 %v2169, %v2153
  %v2186 = vpack.c.bf16 %v2170, %v2154
  %v2187 = vpack.c.bf16 %v2171, %v2155
  %v2188 = vpack.c.bf16 %v2172, %v2156
  %v2189 = vpack.c.bf16 %v2173, %v2157
  %v2190 = vpack.c.bf16 %v2174, %v2158
  %v2191 = vld [vmem:[%s19] sm:$0x1]
  %v2193 = vperm.slane %v2191, 0
  %v2451 = vunpack.c.l.b16 %v1463
  %v2452 = vunpack.c.l.b16 %v1464
  %v2453 = vunpack.c.l.b16 %v1465
  %v2454 = vunpack.c.l.b16 %v1466
  %v2455 = vunpack.c.l.b16 %v1467
  %v2456 = vunpack.c.l.b16 %v1468
  %v2457 = vunpack.c.l.b16 %v1469
  %v2458 = vunpack.c.l.b16 %v1470
  %v2459 = vunpack.c.l.b16 %v1471
  %v2460 = vunpack.c.l.b16 %v1472
  %v2461 = vunpack.c.l.b16 %v1473
  %v2462 = vunpack.c.l.b16 %v1474
  %v2463 = vunpack.c.l.b16 %v1475
  %v2464 = vunpack.c.l.b16 %v1476
  %v2465 = vunpack.c.l.b16 %v1477
  %v2466 = vunpack.c.l.b16 %v1478
  %v2467 = vunpack.c.l.b16 %v1479
  %v2468 = vunpack.c.l.b16 %v1480
  %v2469 = vunpack.c.l.b16 %v1481
  %v2470 = vunpack.c.l.b16 %v1482
  %v2471 = vunpack.c.l.b16 %v1483
  %v2472 = vunpack.c.l.b16 %v1484
  %v2473 = vunpack.c.l.b16 %v1485
  %v2474 = vunpack.c.l.b16 %v1486
  %v2475 = vunpack.c.l.b16 %v1487
  %v2476 = vunpack.c.l.b16 %v1488
  %v2477 = vunpack.c.l.b16 %v1489
  %v2478 = vunpack.c.l.b16 %v1490
  %v2479 = vunpack.c.l.b16 %v1491
  %v2480 = vunpack.c.l.b16 %v1492
  %v2481 = vunpack.c.l.b16 %v1493
  %v2482 = vunpack.c.l.b16 %v1494
  %v2483 = vunpack.c.l.b16 %v1495
  %v2484 = vunpack.c.l.b16 %v1496
  %v2485 = vunpack.c.l.b16 %v1497
  %v2486 = vunpack.c.l.b16 %v1498
  %v2487 = vunpack.c.l.b16 %v1499
  %v2488 = vunpack.c.l.b16 %v1500
  %v2489 = vunpack.c.l.b16 %v1501
  %v2490 = vunpack.c.l.b16 %v1502
  %v2491 = vunpack.c.l.b16 %v1503
  %v2492 = vunpack.c.l.b16 %v1504
  %v2493 = vunpack.c.l.b16 %v1505
  %v2494 = vunpack.c.l.b16 %v1506
  %v2495 = vunpack.c.l.b16 %v1507
  %v2496 = vunpack.c.l.b16 %v1508
  %v2497 = vunpack.c.l.b16 %v1509
  %v2498 = vunpack.c.l.b16 %v1510
  %v2499 = vunpack.c.l.b16 %v1511
  %v2500 = vunpack.c.l.b16 %v1512
  %v2501 = vunpack.c.l.b16 %v1513
  %v2502 = vunpack.c.l.b16 %v1514
  %v2503 = vunpack.c.l.b16 %v1515
  %v2504 = vunpack.c.l.b16 %v1516
  %v2505 = vunpack.c.l.b16 %v1517
  %v2506 = vunpack.c.l.b16 %v1518
  %v2507 = vunpack.c.l.b16 %v1519
  %v2508 = vunpack.c.l.b16 %v1520
  %v2509 = vunpack.c.l.b16 %v1521
  %v2510 = vunpack.c.l.b16 %v1522
  %v2511 = vunpack.c.l.b16 %v1523
  %v2512 = vunpack.c.l.b16 %v1524
  %v2513 = vunpack.c.l.b16 %v1525
  %v2514 = vunpack.c.l.b16 %v1526
  %v2515 = vunpack.c.l.b16 %v1527
  %v2516 = vunpack.c.l.b16 %v1528
  %v2517 = vunpack.c.l.b16 %v1529
  %v2518 = vunpack.c.l.b16 %v1530
  %v2519 = vunpack.c.l.b16 %v1531
  %v2520 = vunpack.c.l.b16 %v1532
  %v2521 = vunpack.c.l.b16 %v1533
  %v2522 = vunpack.c.l.b16 %v1534
  %v2523 = vunpack.c.l.b16 %v1535
  %v2524 = vunpack.c.l.b16 %v1536
  %v2525 = vunpack.c.l.b16 %v1537
  %v2526 = vunpack.c.l.b16 %v1538
  %v2527 = vunpack.c.l.b16 %v1539
  %v2528 = vunpack.c.l.b16 %v1540
  %v2529 = vunpack.c.l.b16 %v1541
  %v2530 = vunpack.c.l.b16 %v1542
  %v2531 = vunpack.c.l.b16 %v1543
  %v2532 = vunpack.c.l.b16 %v1544
  %v2533 = vunpack.c.l.b16 %v1545
  %v2534 = vunpack.c.l.b16 %v1546
  %v2535 = vunpack.c.l.b16 %v1547
  %v2536 = vunpack.c.l.b16 %v1548
  %v2537 = vunpack.c.l.b16 %v1549
  %v2538 = vunpack.c.l.b16 %v1550
  %v2539 = vunpack.c.l.b16 %v1551
  %v2540 = vunpack.c.l.b16 %v1552
  %v2541 = vunpack.c.l.b16 %v1553
  %v2542 = vunpack.c.l.b16 %v1554
  %v2543 = vunpack.c.l.b16 %v1555
  %v2544 = vunpack.c.l.b16 %v1556
  %v2545 = vunpack.c.l.b16 %v1557
  %v2546 = vunpack.c.l.b16 %v1558
  %v2547 = vunpack.c.l.b16 %v1559
  %v2548 = vunpack.c.l.b16 %v1560
  %v2549 = vunpack.c.l.b16 %v1561
  %v2550 = vunpack.c.l.b16 %v1562
  %v2551 = vunpack.c.l.b16 %v1563
  %v2552 = vunpack.c.l.b16 %v1564
  %v2553 = vunpack.c.l.b16 %v1565
  %v2554 = vunpack.c.l.b16 %v1566
  %v2555 = vunpack.c.l.b16 %v1567
  %v2556 = vunpack.c.l.b16 %v1568
  %v2557 = vunpack.c.l.b16 %v1569
  %v2558 = vunpack.c.l.b16 %v1570
  %v2559 = vunpack.c.l.b16 %v1571
  %v2560 = vunpack.c.l.b16 %v1572
  %v2561 = vunpack.c.l.b16 %v1573
  %v2562 = vunpack.c.l.b16 %v1574
  %v2563 = vunpack.c.l.b16 %v1575
  %v2564 = vunpack.c.l.b16 %v1576
  %v2565 = vunpack.c.l.b16 %v1577
  %v2566 = vunpack.c.l.b16 %v1578
  %v2567 = vunpack.c.l.b16 %v1579
  %v2568 = vunpack.c.l.b16 %v1580
  %v2569 = vunpack.c.l.b16 %v1581
  %v2570 = vunpack.c.l.b16 %v1582
  %v2571 = vunpack.c.l.b16 %v1583
  %v2572 = vunpack.c.l.b16 %v1584
  %v2573 = vunpack.c.l.b16 %v1585
  %v2574 = vunpack.c.l.b16 %v1586
  %v2575 = vunpack.c.l.b16 %v1587
  %v2576 = vunpack.c.l.b16 %v1588
  %v2577 = vunpack.c.l.b16 %v1589
  %v2578 = vunpack.c.l.b16 %v1590
  %v2579 = vunpack.c.l.b16 %v1591
  %v2580 = vunpack.c.l.b16 %v1592
  %v2581 = vunpack.c.l.b16 %v1593
  %v2582 = vunpack.c.l.b16 %v1594
  %v2583 = vunpack.c.l.b16 %v1595
  %v2584 = vunpack.c.l.b16 %v1596
  %v2585 = vunpack.c.l.b16 %v1597
  %v2586 = vunpack.c.l.b16 %v1598
  %v2587 = vunpack.c.l.b16 %v1599
  %v2588 = vunpack.c.l.b16 %v1600
  %v2589 = vunpack.c.l.b16 %v1601
  %v2590 = vunpack.c.l.b16 %v1602
  %v2591 = vunpack.c.l.b16 %v1603
  %v2592 = vunpack.c.l.b16 %v1604
  %v2593 = vunpack.c.l.b16 %v1605
  %v2594 = vunpack.c.l.b16 %v1606
  %v2595 = vunpack.c.l.b16 %v1607
  %v2596 = vunpack.c.l.b16 %v1608
  %v2597 = vunpack.c.l.b16 %v1609
  %v2598 = vunpack.c.l.b16 %v1610
  %v2599 = vunpack.c.l.b16 %v1611
  %v2600 = vunpack.c.l.b16 %v1612
  %v2601 = vunpack.c.l.b16 %v1613
  %v2602 = vunpack.c.l.b16 %v1614
  %v2603 = vunpack.c.l.b16 %v1615
  %v2604 = vunpack.c.l.b16 %v1616
  %v2605 = vunpack.c.l.b16 %v1617
  %v2606 = vunpack.c.l.b16 %v1618
  %v2607 = vunpack.c.l.b16 %v1619
  %v2608 = vunpack.c.l.b16 %v1620
  %v2609 = vunpack.c.l.b16 %v1621
  %v2610 = vunpack.c.l.b16 %v1622
  %v2611 = vunpack.c.l.b16 %v1623
  %v2612 = vunpack.c.l.b16 %v1624
  %v2613 = vunpack.c.l.b16 %v1625
  %v2614 = vunpack.c.l.b16 %v1626
  %v2615 = vunpack.c.l.b16 %v1627
  %v2616 = vunpack.c.l.b16 %v1628
  %v2617 = vunpack.c.l.b16 %v1629
  %v2618 = vunpack.c.l.b16 %v1630
  %v2619 = vunpack.c.l.b16 %v1631
  %v2620 = vunpack.c.l.b16 %v1632
  %v2621 = vunpack.c.l.b16 %v1633
  %v2622 = vunpack.c.l.b16 %v1634
  %v2623 = vunpack.c.l.b16 %v1635
  %v2624 = vunpack.c.l.b16 %v1636
  %v2625 = vunpack.c.l.b16 %v1637
  %v2626 = vunpack.c.l.b16 %v1638
  %v2627 = vunpack.c.l.b16 %v1639
  %v2628 = vunpack.c.l.b16 %v1640
  %v2629 = vunpack.c.l.b16 %v1641
  %v2630 = vunpack.c.l.b16 %v1642
  %v2631 = vunpack.c.l.b16 %v1643
  %v2632 = vunpack.c.l.b16 %v1644
  %v2633 = vunpack.c.l.b16 %v1645
  %v2634 = vunpack.c.l.b16 %v1646
  %v2635 = vunpack.c.l.b16 %v1647
  %v2636 = vunpack.c.l.b16 %v1648
  %v2637 = vunpack.c.l.b16 %v1649
  %v2638 = vunpack.c.l.b16 %v1650
  %v2639 = vunpack.c.l.b16 %v1651
  %v2640 = vunpack.c.l.b16 %v1652
  %v2641 = vunpack.c.l.b16 %v1653
  %v2642 = vunpack.c.l.b16 %v1654
  %v2643 = vunpack.c.l.b16 %v1655
  %v2644 = vunpack.c.l.b16 %v1656
  %v2645 = vunpack.c.l.b16 %v1657
  %v2646 = vunpack.c.l.b16 %v1658
  %v2647 = vunpack.c.l.b16 %v1659
  %v2648 = vunpack.c.l.b16 %v1660
  %v2649 = vunpack.c.l.b16 %v1661
  %v2650 = vunpack.c.l.b16 %v1662
  %v2651 = vunpack.c.l.b16 %v1663
  %v2652 = vunpack.c.l.b16 %v1664
  %v2653 = vunpack.c.l.b16 %v1665
  %v2654 = vunpack.c.l.b16 %v1666
  %v2655 = vunpack.c.l.b16 %v1667
  %v2656 = vunpack.c.l.b16 %v1668
  %v2657 = vunpack.c.l.b16 %v1669
  %v2658 = vunpack.c.l.b16 %v1670
  %v2659 = vunpack.c.l.b16 %v1671
  %v2660 = vunpack.c.l.b16 %v1672
  %v2661 = vunpack.c.l.b16 %v1673
  %v2662 = vunpack.c.l.b16 %v1674
  %v2663 = vunpack.c.l.b16 %v1675
  %v2664 = vunpack.c.l.b16 %v1676
  %v2665 = vunpack.c.l.b16 %v1677
  %v2666 = vunpack.c.l.b16 %v1678
  %v2667 = vunpack.c.l.b16 %v1679
  %v2668 = vunpack.c.l.b16 %v1680
  %v2669 = vunpack.c.l.b16 %v1681
  %v2670 = vunpack.c.l.b16 %v1682
  %v2671 = vunpack.c.l.b16 %v1683
  %v2672 = vunpack.c.l.b16 %v1684
  %v2673 = vunpack.c.l.b16 %v1685
  %v2674 = vunpack.c.l.b16 %v1686
  %v2675 = vunpack.c.l.b16 %v1687
  %v2676 = vunpack.c.l.b16 %v1688
  %v2677 = vunpack.c.l.b16 %v1689
  %v2678 = vunpack.c.l.b16 %v1690
  %v2679 = vunpack.c.l.b16 %v1691
  %v2680 = vunpack.c.l.b16 %v1692
  %v2681 = vunpack.c.l.b16 %v1693
  %v2682 = vunpack.c.l.b16 %v1694
  %v2683 = vunpack.c.l.b16 %v1695
  %v2684 = vunpack.c.l.b16 %v1696
  %v2685 = vunpack.c.l.b16 %v1697
  %v2686 = vunpack.c.l.b16 %v1698
  %v2687 = vunpack.c.l.b16 %v1699
  %v2688 = vunpack.c.l.b16 %v1700
  %v2689 = vunpack.c.l.b16 %v1701
  %v2690 = vunpack.c.l.b16 %v1702
  %v2691 = vunpack.c.l.b16 %v1703
  %v2692 = vunpack.c.l.b16 %v1704
  %v2693 = vunpack.c.l.b16 %v1705
  %v2694 = vunpack.c.l.b16 %v1706
  %v2695 = vunpack.c.l.b16 %v1707
  %v2696 = vunpack.c.l.b16 %v1708
  %v2697 = vunpack.c.l.b16 %v1709
  %v2698 = vunpack.c.l.b16 %v1710
  %v2699 = vunpack.c.l.b16 %v1711
  %v2700 = vunpack.c.l.b16 %v1712
  %v2701 = vunpack.c.l.b16 %v1713
  %v2702 = vunpack.c.l.b16 %v1714
  %v2703 = vunpack.c.l.b16 %v1715
  %v2704 = vunpack.c.l.b16 %v1716
  %v2705 = vunpack.c.l.b16 %v1717
  %v2706 = vunpack.c.l.b16 %v1718
  %v2707 = vpack.c.b16 %v2452, %v2451
  %v2708 = vpack.c.b16 %v2454, %v2453
  %v2709 = vpack.c.b16 %v2456, %v2455
  %v2710 = vpack.c.b16 %v2458, %v2457
  %v2711 = vpack.c.b16 %v2460, %v2459
  %v2712 = vpack.c.b16 %v2462, %v2461
  %v2713 = vpack.c.b16 %v2464, %v2463
  %v2714 = vpack.c.b16 %v2466, %v2465
  %v2715 = vpack.c.b16 %v2468, %v2467
  %v2716 = vpack.c.b16 %v2470, %v2469
  %v2717 = vpack.c.b16 %v2472, %v2471
  %v2718 = vpack.c.b16 %v2474, %v2473
  %v2719 = vpack.c.b16 %v2476, %v2475
  %v2720 = vpack.c.b16 %v2478, %v2477
  %v2721 = vpack.c.b16 %v2480, %v2479
  %v2722 = vpack.c.b16 %v2482, %v2481
  %v2723 = vpack.c.b16 %v2484, %v2483
  %v2724 = vpack.c.b16 %v2486, %v2485
  %v2725 = vpack.c.b16 %v2488, %v2487
  %v2726 = vpack.c.b16 %v2490, %v2489
  %v2727 = vpack.c.b16 %v2492, %v2491
  %v2728 = vpack.c.b16 %v2494, %v2493
  %v2729 = vpack.c.b16 %v2496, %v2495
  %v2730 = vpack.c.b16 %v2498, %v2497
  %v2731 = vpack.c.b16 %v2500, %v2499
  %v2732 = vpack.c.b16 %v2502, %v2501
  %v2733 = vpack.c.b16 %v2504, %v2503
  %v2734 = vpack.c.b16 %v2506, %v2505
  %v2735 = vpack.c.b16 %v2508, %v2507
  %v2736 = vpack.c.b16 %v2510, %v2509
  %v2737 = vpack.c.b16 %v2512, %v2511
  %v2738 = vpack.c.b16 %v2514, %v2513
  %v2739 = vpack.c.b16 %v2516, %v2515
  %v2740 = vpack.c.b16 %v2518, %v2517
  %v2741 = vpack.c.b16 %v2520, %v2519
  %v2742 = vpack.c.b16 %v2522, %v2521
  %v2743 = vpack.c.b16 %v2524, %v2523
  %v2744 = vpack.c.b16 %v2526, %v2525
  %v2745 = vpack.c.b16 %v2528, %v2527
  %v2746 = vpack.c.b16 %v2530, %v2529
  %v2747 = vpack.c.b16 %v2532, %v2531
  %v2748 = vpack.c.b16 %v2534, %v2533
  %v2749 = vpack.c.b16 %v2536, %v2535
  %v2750 = vpack.c.b16 %v2538, %v2537
  %v2751 = vpack.c.b16 %v2540, %v2539
  %v2752 = vpack.c.b16 %v2542, %v2541
  %v2753 = vpack.c.b16 %v2544, %v2543
  %v2754 = vpack.c.b16 %v2546, %v2545
  %v2755 = vpack.c.b16 %v2548, %v2547
  %v2756 = vpack.c.b16 %v2550, %v2549
  %v2757 = vpack.c.b16 %v2552, %v2551
  %v2758 = vpack.c.b16 %v2554, %v2553
  %v2759 = vpack.c.b16 %v2556, %v2555
  %v2760 = vpack.c.b16 %v2558, %v2557
  %v2761 = vpack.c.b16 %v2560, %v2559
  %v2762 = vpack.c.b16 %v2562, %v2561
  %v2763 = vpack.c.b16 %v2564, %v2563
  %v2764 = vpack.c.b16 %v2566, %v2565
  %v2765 = vpack.c.b16 %v2568, %v2567
  %v2766 = vpack.c.b16 %v2570, %v2569
  %v2767 = vpack.c.b16 %v2572, %v2571
  %v2768 = vpack.c.b16 %v2574, %v2573
  %v2769 = vpack.c.b16 %v2576, %v2575
  %v2770 = vpack.c.b16 %v2578, %v2577
  %v2771 = vpack.c.b16 %v2580, %v2579
  %v2772 = vpack.c.b16 %v2582, %v2581
  %v2773 = vpack.c.b16 %v2584, %v2583
  %v2774 = vpack.c.b16 %v2586, %v2585
  %v2775 = vpack.c.b16 %v2588, %v2587
  %v2776 = vpack.c.b16 %v2590, %v2589
  %v2777 = vpack.c.b16 %v2592, %v2591
  %v2778 = vpack.c.b16 %v2594, %v2593
  %v2779 = vpack.c.b16 %v2596, %v2595
  %v2780 = vpack.c.b16 %v2598, %v2597
  %v2781 = vpack.c.b16 %v2600, %v2599
  %v2782 = vpack.c.b16 %v2602, %v2601
  %v2783 = vpack.c.b16 %v2604, %v2603
  %v2784 = vpack.c.b16 %v2606, %v2605
  %v2785 = vpack.c.b16 %v2608, %v2607
  %v2786 = vpack.c.b16 %v2610, %v2609
  %v2787 = vpack.c.b16 %v2612, %v2611
  %v2788 = vpack.c.b16 %v2614, %v2613
  %v2789 = vpack.c.b16 %v2616, %v2615
  %v2790 = vpack.c.b16 %v2618, %v2617
  %v2791 = vpack.c.b16 %v2620, %v2619
  %v2792 = vpack.c.b16 %v2622, %v2621
  %v2793 = vpack.c.b16 %v2624, %v2623
  %v2794 = vpack.c.b16 %v2626, %v2625
  %v2795 = vpack.c.b16 %v2628, %v2627
  %v2796 = vpack.c.b16 %v2630, %v2629
  %v2797 = vpack.c.b16 %v2632, %v2631
  %v2798 = vpack.c.b16 %v2634, %v2633
  %v2799 = vpack.c.b16 %v2636, %v2635
  %v2800 = vpack.c.b16 %v2638, %v2637
  %v2801 = vpack.c.b16 %v2640, %v2639
  %v2802 = vpack.c.b16 %v2642, %v2641
  %v2803 = vpack.c.b16 %v2644, %v2643
  %v2804 = vpack.c.b16 %v2646, %v2645
  %v2805 = vpack.c.b16 %v2648, %v2647
  %v2806 = vpack.c.b16 %v2650, %v2649
  %v2807 = vpack.c.b16 %v2652, %v2651
  %v2808 = vpack.c.b16 %v2654, %v2653
  %v2809 = vpack.c.b16 %v2656, %v2655
  %v2810 = vpack.c.b16 %v2658, %v2657
  %v2811 = vpack.c.b16 %v2660, %v2659
  %v2812 = vpack.c.b16 %v2662, %v2661
  %v2813 = vpack.c.b16 %v2664, %v2663
  %v2814 = vpack.c.b16 %v2666, %v2665
  %v2815 = vpack.c.b16 %v2668, %v2667
  %v2816 = vpack.c.b16 %v2670, %v2669
  %v2817 = vpack.c.b16 %v2672, %v2671
  %v2818 = vpack.c.b16 %v2674, %v2673
  %v2819 = vpack.c.b16 %v2676, %v2675
  %v2820 = vpack.c.b16 %v2678, %v2677
  %v2821 = vpack.c.b16 %v2680, %v2679
  %v2822 = vpack.c.b16 %v2682, %v2681
  %v2823 = vpack.c.b16 %v2684, %v2683
  %v2824 = vpack.c.b16 %v2686, %v2685
  %v2825 = vpack.c.b16 %v2688, %v2687
  %v2826 = vpack.c.b16 %v2690, %v2689
  %v2827 = vpack.c.b16 %v2692, %v2691
  %v2828 = vpack.c.b16 %v2694, %v2693
  %v2829 = vpack.c.b16 %v2696, %v2695
  %v2830 = vpack.c.b16 %v2698, %v2697
  %v2831 = vpack.c.b16 %v2700, %v2699
  %v2832 = vpack.c.b16 %v2702, %v2701
  %v2833 = vpack.c.b16 %v2704, %v2703
  %v2834 = vpack.c.b16 %v2706, %v2705
  %2963 = vmatpush.bf16.msra.mxu0 %v2714
  %2964 = vmatpush.bf16.msra.mxu0 %v2713
  %2965 = vmatpush.bf16.msra.mxu0 %v2712
  %2966 = vmatpush.bf16.msra.mxu0 %v2711
  %2967 = vmatpush.bf16.msra.mxu0 %v2710
  %2968 = vmatpush.bf16.msra.mxu0 %v2709
  %2969 = vmatpush.bf16.msra.mxu0 %v2708
  %2970 = vmatpush.bf16.msra.mxu0 %v2707
  %2971 = vmatmul.bf16.gmra.mxu0 %v2175
  %v2972 = vpop.f32.mrf.mxu0
  %v2973 = vadd.f32 %v2193, %v2972
  %v2974 = vpop.f32.mrf.mxu0
  %v2975 = vadd.f32 %v2193, %v2974
  %2976 = vdwg.mxu0
  %2977 = vmatpush.bf16.msra.mxu0 %v2722
  %2978 = vmatpush.bf16.msra.mxu0 %v2721
  %2979 = vmatpush.bf16.msra.mxu0 %v2720
  %2980 = vmatpush.bf16.msra.mxu0 %v2719
  %2981 = vmatpush.bf16.msra.mxu0 %v2718
  %2982 = vmatpush.bf16.msra.mxu0 %v2717
  %2983 = vmatpush.bf16.msra.mxu0 %v2716
  %2984 = vmatpush.bf16.msra.mxu0 %v2715
  %2985 = vmatmul.bf16.gmra.mxu0 %v2176
  %v2986 = vpop.f32.mrf.mxu0
  %v2987 = vadd.f32 %v2973, %v2986
  %v2988 = vpop.f32.mrf.mxu0
  %v2989 = vadd.f32 %v2975, %v2988
  %2990 = vdwg.mxu0
  %2991 = vmatpush.bf16.msra.mxu0 %v2730
  %2992 = vmatpush.bf16.msra.mxu0 %v2729
  %2993 = vmatpush.bf16.msra.mxu0 %v2728
  %2994 = vmatpush.bf16.msra.mxu0 %v2727
  %2995 = vmatpush.bf16.msra.mxu0 %v2726
  %2996 = vmatpush.bf16.msra.mxu0 %v2725
  %2997 = vmatpush.bf16.msra.mxu0 %v2724
  %2998 = vmatpush.bf16.msra.mxu0 %v2723
  %2999 = vmatmul.bf16.gmra.mxu0 %v2177
  %v3000 = vpop.f32.mrf.mxu0
  %v3001 = vadd.f32 %v2987, %v3000
  %v3002 = vpop.f32.mrf.mxu0
  %v3003 = vadd.f32 %v2989, %v3002
  %3004 = vdwg.mxu0
  %3005 = vmatpush.bf16.msra.mxu0 %v2738
  %3006 = vmatpush.bf16.msra.mxu0 %v2737
  %3007 = vmatpush.bf16.msra.mxu0 %v2736
  %3008 = vmatpush.bf16.msra.mxu0 %v2735
  %3009 = vmatpush.bf16.msra.mxu0 %v2734
  %3010 = vmatpush.bf16.msra.mxu0 %v2733
  %3011 = vmatpush.bf16.msra.mxu0 %v2732
  %3012 = vmatpush.bf16.msra.mxu0 %v2731
  %3013 = vmatmul.bf16.gmra.mxu0 %v2178
  %v3014 = vpop.f32.mrf.mxu0
  %v3015 = vadd.f32 %v3001, %v3014
  %v3016 = vpop.f32.mrf.mxu0
  %v3017 = vadd.f32 %v3003, %v3016
  %3018 = vdwg.mxu0
  %3019 = vmatpush.bf16.msra.mxu0 %v2746
  %3020 = vmatpush.bf16.msra.mxu0 %v2745
  %3021 = vmatpush.bf16.msra.mxu0 %v2744
  %3022 = vmatpush.bf16.msra.mxu0 %v2743
  %3023 = vmatpush.bf16.msra.mxu0 %v2742
  %3024 = vmatpush.bf16.msra.mxu0 %v2741
  %3025 = vmatpush.bf16.msra.mxu0 %v2740
  %3026 = vmatpush.bf16.msra.mxu0 %v2739
  %3027 = vmatmul.bf16.gmra.mxu0 %v2179
  %v3028 = vpop.f32.mrf.mxu0
  %v3029 = vadd.f32 %v3015, %v3028
  %v3030 = vpop.f32.mrf.mxu0
  %v3031 = vadd.f32 %v3017, %v3030
  %3032 = vdwg.mxu0
  %3033 = vmatpush.bf16.msra.mxu0 %v2754
  %3034 = vmatpush.bf16.msra.mxu0 %v2753
  %3035 = vmatpush.bf16.msra.mxu0 %v2752
  %3036 = vmatpush.bf16.msra.mxu0 %v2751
  %3037 = vmatpush.bf16.msra.mxu0 %v2750
  %3038 = vmatpush.bf16.msra.mxu0 %v2749
  %3039 = vmatpush.bf16.msra.mxu0 %v2748
  %3040 = vmatpush.bf16.msra.mxu0 %v2747
  %3041 = vmatmul.bf16.gmra.mxu0 %v2180
  %v3042 = vpop.f32.mrf.mxu0
  %v3043 = vadd.f32 %v3029, %v3042
  %v3044 = vpop.f32.mrf.mxu0
  %v3045 = vadd.f32 %v3031, %v3044
  %3046 = vdwg.mxu0
  %3047 = vmatpush.bf16.msra.mxu0 %v2762
  %3048 = vmatpush.bf16.msra.mxu0 %v2761
  %3049 = vmatpush.bf16.msra.mxu0 %v2760
  %3050 = vmatpush.bf16.msra.mxu0 %v2759
  %3051 = vmatpush.bf16.msra.mxu0 %v2758
  %3052 = vmatpush.bf16.msra.mxu0 %v2757
  %3053 = vmatpush.bf16.msra.mxu0 %v2756
  %3054 = vmatpush.bf16.msra.mxu0 %v2755
  %3055 = vmatmul.bf16.gmra.mxu0 %v2181
  %v3056 = vpop.f32.mrf.mxu0
  %v3057 = vadd.f32 %v3043, %v3056
  %v3058 = vpop.f32.mrf.mxu0
  %v3059 = vadd.f32 %v3045, %v3058
  %3060 = vdwg.mxu0
  %3061 = vmatpush.bf16.msra.mxu0 %v2770
  %3062 = vmatpush.bf16.msra.mxu0 %v2769
  %3063 = vmatpush.bf16.msra.mxu0 %v2768
  %3064 = vmatpush.bf16.msra.mxu0 %v2767
  %3065 = vmatpush.bf16.msra.mxu0 %v2766
  %3066 = vmatpush.bf16.msra.mxu0 %v2765
  %3067 = vmatpush.bf16.msra.mxu0 %v2764
  %3068 = vmatpush.bf16.msra.mxu0 %v2763
  %3069 = vmatmul.bf16.gmra.mxu0 %v2182
  %v3070 = vpop.f32.mrf.mxu0
  %v3071 = vadd.f32 %v3057, %v3070
  %v3072 = vpop.f32.mrf.mxu0
  %v3073 = vadd.f32 %v3059, %v3072
  %3074 = vdwg.mxu0
  %3075 = vmatpush.bf16.msra.mxu0 %v2778
  %3076 = vmatpush.bf16.msra.mxu0 %v2777
  %3077 = vmatpush.bf16.msra.mxu0 %v2776
  %3078 = vmatpush.bf16.msra.mxu0 %v2775
  %3079 = vmatpush.bf16.msra.mxu0 %v2774
  %3080 = vmatpush.bf16.msra.mxu0 %v2773
  %3081 = vmatpush.bf16.msra.mxu0 %v2772
  %3082 = vmatpush.bf16.msra.mxu0 %v2771
  %3083 = vmatmul.bf16.gmra.mxu0 %v2183
  %v3084 = vpop.f32.mrf.mxu0
  %v3085 = vadd.f32 %v3071, %v3084
  %v3086 = vpop.f32.mrf.mxu0
  %v3087 = vadd.f32 %v3073, %v3086
  %3088 = vdwg.mxu0
  %3089 = vmatpush.bf16.msra.mxu0 %v2786
  %3090 = vmatpush.bf16.msra.mxu0 %v2785
  %3091 = vmatpush.bf16.msra.mxu0 %v2784
  %3092 = vmatpush.bf16.msra.mxu0 %v2783
  %3093 = vmatpush.bf16.msra.mxu0 %v2782
  %3094 = vmatpush.bf16.msra.mxu0 %v2781
  %3095 = vmatpush.bf16.msra.mxu0 %v2780
  %3096 = vmatpush.bf16.msra.mxu0 %v2779
  %3097 = vmatmul.bf16.gmra.mxu0 %v2184
  %v3098 = vpop.f32.mrf.mxu0
  %v3099 = vadd.f32 %v3085, %v3098
  %v3100 = vpop.f32.mrf.mxu0
  %v3101 = vadd.f32 %v3087, %v3100
  %3102 = vdwg.mxu0
  %3103 = vmatpush.bf16.msra.mxu0 %v2794
  %3104 = vmatpush.bf16.msra.mxu0 %v2793
  %3105 = vmatpush.bf16.msra.mxu0 %v2792
  %3106 = vmatpush.bf16.msra.mxu0 %v2791
  %3107 = vmatpush.bf16.msra.mxu0 %v2790
  %3108 = vmatpush.bf16.msra.mxu0 %v2789
  %3109 = vmatpush.bf16.msra.mxu0 %v2788
  %3110 = vmatpush.bf16.msra.mxu0 %v2787
  %3111 = vmatmul.bf16.gmra.mxu0 %v2185
  %v3112 = vpop.f32.mrf.mxu0
  %v3113 = vadd.f32 %v3099, %v3112
  %v3114 = vpop.f32.mrf.mxu0
  %v3115 = vadd.f32 %v3101, %v3114
  %3116 = vdwg.mxu0
  %3117 = vmatpush.bf16.msra.mxu0 %v2802
  %3118 = vmatpush.bf16.msra.mxu0 %v2801
  %3119 = vmatpush.bf16.msra.mxu0 %v2800
  %3120 = vmatpush.bf16.msra.mxu0 %v2799
  %3121 = vmatpush.bf16.msra.mxu0 %v2798
  %3122 = vmatpush.bf16.msra.mxu0 %v2797
  %3123 = vmatpush.bf16.msra.mxu0 %v2796
  %3124 = vmatpush.bf16.msra.mxu0 %v2795
  %3125 = vmatmul.bf16.gmra.mxu0 %v2186
  %v3126 = vpop.f32.mrf.mxu0
  %v3127 = vadd.f32 %v3113, %v3126
  %v3128 = vpop.f32.mrf.mxu0
  %v3129 = vadd.f32 %v3115, %v3128
  %3130 = vdwg.mxu0
  %3131 = vmatpush.bf16.msra.mxu0 %v2810
  %3132 = vmatpush.bf16.msra.mxu0 %v2809
  %3133 = vmatpush.bf16.msra.mxu0 %v2808
  %3134 = vmatpush.bf16.msra.mxu0 %v2807
  %3135 = vmatpush.bf16.msra.mxu0 %v2806
  %3136 = vmatpush.bf16.msra.mxu0 %v2805
  %3137 = vmatpush.bf16.msra.mxu0 %v2804
  %3138 = vmatpush.bf16.msra.mxu0 %v2803
  %3139 = vmatmul.bf16.gmra.mxu0 %v2187
  %v3140 = vpop.f32.mrf.mxu0
  %v3141 = vadd.f32 %v3127, %v3140
  %v3142 = vpop.f32.mrf.mxu0
  %v3143 = vadd.f32 %v3129, %v3142
  %3144 = vdwg.mxu0
  %3145 = vmatpush.bf16.msra.mxu0 %v2818
  %3146 = vmatpush.bf16.msra.mxu0 %v2817
  %3147 = vmatpush.bf16.msra.mxu0 %v2816
  %3148 = vmatpush.bf16.msra.mxu0 %v2815
  %3149 = vmatpush.bf16.msra.mxu0 %v2814
  %3150 = vmatpush.bf16.msra.mxu0 %v2813
  %3151 = vmatpush.bf16.msra.mxu0 %v2812
  %3152 = vmatpush.bf16.msra.mxu0 %v2811
  %3153 = vmatmul.bf16.gmra.mxu0 %v2188
  %v3154 = vpop.f32.mrf.mxu0
  %v3155 = vadd.f32 %v3141, %v3154
  %v3156 = vpop.f32.mrf.mxu0
  %v3157 = vadd.f32 %v3143, %v3156
  %3158 = vdwg.mxu0
  %3159 = vmatpush.bf16.msra.mxu0 %v2826
  %3160 = vmatpush.bf16.msra.mxu0 %v2825
  %3161 = vmatpush.bf16.msra.mxu0 %v2824
  %3162 = vmatpush.bf16.msra.mxu0 %v2823
  %3163 = vmatpush.bf16.msra.mxu0 %v2822
  %3164 = vmatpush.bf16.msra.mxu0 %v2821
  %3165 = vmatpush.bf16.msra.mxu0 %v2820
  %3166 = vmatpush.bf16.msra.mxu0 %v2819
  %3167 = vmatmul.bf16.gmra.mxu0 %v2189
  %v3168 = vpop.f32.mrf.mxu0
  %v3169 = vadd.f32 %v3155, %v3168
  %v3170 = vpop.f32.mrf.mxu0
  %v3171 = vadd.f32 %v3157, %v3170
  %3172 = vdwg.mxu0
  %3173 = vmatpush.bf16.msra.mxu0 %v2834
  %3174 = vmatpush.bf16.msra.mxu0 %v2833
  %3175 = vmatpush.bf16.msra.mxu0 %v2832
  %3176 = vmatpush.bf16.msra.mxu0 %v2831
  %3177 = vmatpush.bf16.msra.mxu0 %v2830
  %3178 = vmatpush.bf16.msra.mxu0 %v2829
  %3179 = vmatpush.bf16.msra.mxu0 %v2828
  %3180 = vmatpush.bf16.msra.mxu0 %v2827
  %3181 = vmatmul.bf16.gmra.mxu0 %v2190
  %v3182 = vpop.f32.mrf.mxu0
  %v3183 = vadd.f32 %v3169, %v3182
  %v3184 = vpop.f32.mrf.mxu0
  %v3185 = vadd.f32 %v3171, %v3184
  %3186 = vdwg.mxu0
  %v3187 = vadd.f32 %v1421, %v3183
  %v3188 = vadd.f32 %v1422, %v3185
  %v3189 = vld [vmem:[%s25] sm:$0x1]
  %v3190 = vld [vmem:[%s27] sm:$0x1]
  %v3191 = vsel %vm873, %v3187, 0.0
  %3192 = vadd.xlane.f32.xlu0 %v3191
  %v3193 = vpop.xlane.xlu0 %3192
  %v3194 = vsel %vm873, %v3188, 0.0
  %3195 = vadd.xlane.f32.xlu0 %v3194
  %v3196 = vpop.xlane.xlu0 %3195
  %v3197 = vmul.f32 %v3193, %v1370
  %v3198 = vmul.f32 %v3196, %v1370
  %v3199 = vmul.f32 %v3187, %v3187
  %v3200 = vmul.f32 %v3188, %v3188
  %v3201 = vsel %vm873, %v3199, 0.0
  %3202 = vadd.xlane.f32.xlu0 %v3201
  %v3203 = vpop.xlane.xlu0 %3202
  %v3204 = vsel %vm873, %v3200, 0.0
  %3205 = vadd.xlane.f32.xlu0 %v3204
  %v3206 = vpop.xlane.xlu0 %3205
  %v3207 = vmul.f32 %v3203, %v1370
  %v3208 = vmul.f32 %v3206, %v1370
  %v3209 = vmul.f32 %v3197, %v3197
  %v3210 = vmul.f32 %v3198, %v3198
  %v3211 = vsub.f32 %v3207, %v3209
  %v3212 = vsub.f32 %v3208, %v3210
  %v3213 = vsub.f32 %v3187, %v3197
  %v3214 = vsub.f32 %v3188, %v3198
  %v3215 = vadd.f32 %v3211, 1e-05
  %v3216 = vadd.f32 %v3212, 1e-05
  %v3217 = vrsqrt.pop %v3215
  %v3218 = vmul.f32 %v3217, %v3215
  %v3219 = vmul.f32 %v3218, %v3217
  %v3220 = vmul.f32 0.5, %v3219
  %v3221 = vsub.f32 1.5, %v3220
  %v3222 = vmul.f32 %v3217, %v3221
  %vm3223 = vweird.f32 %v3215
  %vm3224 = vweird.f32 %v3217
  %vm3225 = vmor %vm3223, %vm3224
  %v3226 = vsel %vm3225, %v3217, %v3222
  %v3227 = vrsqrt.pop %v3216
  %v3228 = vmul.f32 %v3227, %v3216
  %v3229 = vmul.f32 %v3228, %v3227
  %v3230 = vmul.f32 0.5, %v3229
  %v3231 = vsub.f32 1.5, %v3230
  %v3232 = vmul.f32 %v3227, %v3231
  %vm3233 = vweird.f32 %v3216
  %vm3234 = vweird.f32 %v3227
  %vm3235 = vmor %vm3233, %vm3234
  %v3236 = vsel %vm3235, %v3227, %v3232
  %v3237 = vmul.f32 %v3213, %v3226
  %v3238 = vmul.f32 %v3214, %v3236
  %v3240 = vperm.slane %v3189, 0
  %v3242 = vmul.f32 %v3237, %v3240
  %v3243 = vmul.f32 %v3238, %v3240
  %v3245 = vperm.slane %v3190, 0
  %v3247 = vadd.f32 %v3242, %v3245
  %v3248 = vadd.f32 %v3243, %v3245
  %v3249 = vld [vmem:[%s29] sm:$0xff]
  %v3250 = vld [vmem:[%s29 + $0x8] sm:$0xff]
  %v3251 = vld [vmem:[%s29 + $0x10] sm:$0xff]
  %v3252 = vld [vmem:[%s29 + $0x18] sm:$0xff]
  %v3253 = vld [vmem:[%s31] sm:$0x1]
  %v3255 = vperm.slane %v3253, 0
  %v3258 = vsel %vm873, %v3247, 0
  %v3261 = vsel %vm873, %v3248, 0
  %3263 = vmatpush.msra.mxu0 0.0
  %3264 = vmatpush.msra.mxu0 0.0
  %3265 = vmatpush.msra.mxu0 0.0
  %3266 = vmatpush.msra.mxu0 0.0
  %3267 = vmatpush.msra.mxu0 0.0
  %3268 = vmatpush.msra.mxu0 0.0
  %3269 = vmatpush.msra.mxu0 0.0
  %3270 = vmatpush.msra.mxu0 0.0
  %3271 = vmatpush.msra.mxu0 0.0
  %3272 = vmatpush.msra.mxu0 0.0
  %3273 = vmatpush.msra.mxu0 0.0
  %3274 = vmatpush.msra.mxu0 0.0
  %3275 = vmatpush.msra.mxu0 %v3252
  %3276 = vmatpush.msra.mxu0 %v3251
  %3277 = vmatpush.msra.mxu0 %v3250
  %3278 = vmatpush.msra.mxu0 %v3249
  %3279 = vmatmul.f32.gmra.mxu0 %v3258
  %v3280 = vpop.f32.mrf.mxu0
  %v3281 = vadd.f32 %v3255, %v3280
  %3282 = vmatmul.f32.gmra.mxu0 %v3261
  %v3283 = vpop.f32.mrf.mxu0
  %v3284 = vadd.f32 %v3255, %v3283
  %3285 = vdwg.mxu0
  %3288 = vrot.lane.b32.xlu0 %v3281, 96
  %v3289 = vpop.permute.xlu0 %3288
  %3290 = vrot.lane.b32.xlu0 %v3284, 96
  %v3291 = vpop.permute.xlu0 %3290
  %v3292 = vsel %vm833, %v3281, 0
  %v3294 = vsel %vm833, %v3284, 0
  %v3296 = vsel %vm833, %v3289, 0
  %v3298 = vsel %vm833, %v3291, 0
  %3300 = vmatpush.xpose.msra.mxu0 0.0
  %3301 = vmatpush.xpose.msra.mxu0 0.0
  %3302 = vmatpush.xpose.msra.mxu0 0.0
  %3303 = vmatpush.xpose.msra.mxu0 0.0
  %3304 = vmatpush.xpose.msra.mxu0 0.0
  %3305 = vmatpush.xpose.msra.mxu0 0.0
  %3306 = vmatpush.xpose.msra.mxu0 0.0
  %3307 = vmatpush.xpose.msra.mxu0 0.0
  %3308 = vmatpush.xpose.msra.mxu0 0.0
  %3309 = vmatpush.xpose.msra.mxu0 0.0
  %3310 = vmatpush.xpose.msra.mxu0 0.0
  %3311 = vmatpush.xpose.msra.mxu0 0.0
  %3312 = vmatpush.xpose.msra.mxu0 0.0
  %3313 = vmatpush.xpose.msra.mxu0 0.0
  %3314 = vmatpush.xpose.msra.mxu0 %v3298
  %3315 = vmatpush.xpose.msra.mxu0 %v3296
  %3316 = vmatmul.f32.gmra.mxu0 %v3292
  %v3317 = vpop.f32.mrf.mxu0
  %v3318 = vadd.f32 0.0, %v3317
  %3319 = vmatmul.f32.gmra.mxu0 %v3294
  %v3320 = vpop.f32.mrf.mxu0
  %v3321 = vadd.f32 0.0, %v3320
  %3322 = vdwg.mxu0
  %v3323 = vsel %vm940, %v3318, -inf
  %3324 = vmax.xlane.f32.xlu0 %v3323
  %v3325 = vpop.xlane.xlu0 %3324
  %v3326 = vsel %vm940, %v3321, -inf
  %3327 = vmax.xlane.f32.xlu0 %v3326
  %v3328 = vpop.xlane.xlu0 %3327
  %v3329 = vsub.f32 %v3318, %v3325
  %v3330 = vsub.f32 %v3321, %v3328
  %v3331 = vmul.f32 %v3329, 1.442695
  %v3332 = vpow.pop %v3331
  %v3333 = vmul.f32 %v3330, 1.442695
  %v3334 = vpow.pop %v3333
  %v3335 = vsel %vm940, %v3332, 0.0
  %3336 = vadd.xlane.f32.xlu0 %v3335
  %v3337 = vpop.xlane.xlu0 %3336
  %v3338 = vsel %vm940, %v3334, 0.0
  %3339 = vadd.xlane.f32.xlu0 %v3338
  %v3340 = vpop.xlane.xlu0 %3339
  %v3341 = vrcp.pop %v3337
  %v3342 = vrcp.pop %v3340
  %v3343 = vmul.f32 %v3332, %v3341
  %v3344 = vmul.f32 %v3334, %v3342
  %3345 = vrot.lane.b32.xlu0 %v3281, 64
  %v3346 = vpop.permute.xlu0 %3345
  %3347 = vrot.lane.b32.xlu0 %v3284, 64
  %v3348 = vpop.permute.xlu0 %3347
  %v3352 = vsel %vm940, %v3343, 0
  %v3355 = vsel %vm940, %v3344, 0
  %3357 = vmatpush.msra.mxu0 0.0
  %3358 = vmatpush.msra.mxu0 0.0
  %3359 = vmatpush.msra.mxu0 0.0
  %3360 = vmatpush.msra.mxu0 0.0
  %3361 = vmatpush.msra.mxu0 0.0
  %3362 = vmatpush.msra.mxu0 0.0
  %3363 = vmatpush.msra.mxu0 0.0
  %3364 = vmatpush.msra.mxu0 0.0
  %3365 = vmatpush.msra.mxu0 0.0
  %3366 = vmatpush.msra.mxu0 0.0
  %3367 = vmatpush.msra.mxu0 0.0
  %3368 = vmatpush.msra.mxu0 0.0
  %3369 = vmatpush.msra.mxu0 0.0
  %3370 = vmatpush.msra.mxu0 0.0
  %3371 = vmatpush.msra.mxu0 %v3348
  %3372 = vmatpush.msra.mxu0 %v3346
  %3373 = vmatmul.f32.gmra.mxu0 %v3352
  %v3374 = vpop.f32.mrf.mxu0
  %v3375 = vadd.f32 0.0, %v3374
  %3376 = vmatmul.f32.gmra.mxu0 %v3355
  %v3377 = vpop.f32.mrf.mxu0
  %v3378 = vadd.f32 0.0, %v3377
  %3379 = vdwg.mxu0
  %3380 = vrot.lane.b32.xlu0 %v3281, 120
  %v3381 = vpop.permute.xlu0 %3380
  %3382 = vrot.lane.b32.xlu0 %v3284, 120
  %v3383 = vpop.permute.xlu0 %3382
  %3384 = vrot.lane.b32.xlu0 %v3281, 88
  %v3385 = vpop.permute.xlu0 %3384
  %3386 = vrot.lane.b32.xlu0 %v3284, 88
  %v3387 = vpop.permute.xlu0 %3386
  %v3388 = vsel %vm833, %v3381, 0
  %v3390 = vsel %vm833, %v3383, 0
  %v3392 = vsel %vm833, %v3385, 0
  %v3394 = vsel %vm833, %v3387, 0
  %3396 = vmatpush.xpose.msra.mxu0 0.0
  %3397 = vmatpush.xpose.msra.mxu0 0.0
  %3398 = vmatpush.xpose.msra.mxu0 0.0
  %3399 = vmatpush.xpose.msra.mxu0 0.0
  %3400 = vmatpush.xpose.msra.mxu0 0.0
  %3401 = vmatpush.xpose.msra.mxu0 0.0
  %3402 = vmatpush.xpose.msra.mxu0 0.0
  %3403 = vmatpush.xpose.msra.mxu0 0.0
  %3404 = vmatpush.xpose.msra.mxu0 0.0
  %3405 = vmatpush.xpose.msra.mxu0 0.0
  %3406 = vmatpush.xpose.msra.mxu0 0.0
  %3407 = vmatpush.xpose.msra.mxu0 0.0
  %3408 = vmatpush.xpose.msra.mxu0 0.0
  %3409 = vmatpush.xpose.msra.mxu0 0.0
  %3410 = vmatpush.xpose.msra.mxu0 %v3394
  %3411 = vmatpush.xpose.msra.mxu0 %v3392
  %3412 = vmatmul.f32.gmra.mxu0 %v3388
  %v3413 = vpop.f32.mrf.mxu0
  %v3414 = vadd.f32 0.0, %v3413
  %3415 = vmatmul.f32.gmra.mxu0 %v3390
  %v3416 = vpop.f32.mrf.mxu0
  %v3417 = vadd.f32 0.0, %v3416
  %3418 = vdwg.mxu0
  %v3419 = vsel %vm940, %v3414, -inf
  %3420 = vmax.xlane.f32.xlu0 %v3419
  %v3421 = vpop.xlane.xlu0 %3420
  %v3422 = vsel %vm940, %v3417, -inf
  %3423 = vmax.xlane.f32.xlu0 %v3422
  %v3424 = vpop.xlane.xlu0 %3423
  %v3425 = vsub.f32 %v3414, %v3421
  %v3426 = vsub.f32 %v3417, %v3424
  %v3427 = vmul.f32 %v3425, 1.442695
  %v3428 = vpow.pop %v3427
  %v3429 = vmul.f32 %v3426, 1.442695
  %v3430 = vpow.pop %v3429
  %v3431 = vsel %vm940, %v3428, 0.0
  %3432 = vadd.xlane.f32.xlu0 %v3431
  %v3433 = vpop.xlane.xlu0 %3432
  %v3434 = vsel %vm940, %v3430, 0.0
  %3435 = vadd.xlane.f32.xlu0 %v3434
  %v3436 = vpop.xlane.xlu0 %3435
  %v3437 = vrcp.pop %v3433
  %v3438 = vrcp.pop %v3436
  %v3439 = vmul.f32 %v3428, %v3437
  %v3440 = vmul.f32 %v3430, %v3438
  %3441 = vrot.lane.b32.xlu0 %v3281, 56
  %v3442 = vpop.permute.xlu0 %3441
  %3443 = vrot.lane.b32.xlu0 %v3284, 56
  %v3444 = vpop.permute.xlu0 %3443
  %v3448 = vsel %vm940, %v3439, 0
  %v3451 = vsel %vm940, %v3440, 0
  %3453 = vmatpush.msra.mxu0 0.0
  %3454 = vmatpush.msra.mxu0 0.0
  %3455 = vmatpush.msra.mxu0 0.0
  %3456 = vmatpush.msra.mxu0 0.0
  %3457 = vmatpush.msra.mxu0 0.0
  %3458 = vmatpush.msra.mxu0 0.0
  %3459 = vmatpush.msra.mxu0 0.0
  %3460 = vmatpush.msra.mxu0 0.0
  %3461 = vmatpush.msra.mxu0 0.0
  %3462 = vmatpush.msra.mxu0 0.0
  %3463 = vmatpush.msra.mxu0 0.0
  %3464 = vmatpush.msra.mxu0 0.0
  %3465 = vmatpush.msra.mxu0 0.0
  %3466 = vmatpush.msra.mxu0 0.0
  %3467 = vmatpush.msra.mxu0 %v3444
  %3468 = vmatpush.msra.mxu0 %v3442
  %3469 = vmatmul.f32.gmra.mxu0 %v3448
  %v3470 = vpop.f32.mrf.mxu0
  %v3471 = vadd.f32 0.0, %v3470
  %3472 = vmatmul.f32.gmra.mxu0 %v3451
  %v3473 = vpop.f32.mrf.mxu0
  %v3474 = vadd.f32 0.0, %v3473
  %3475 = vdwg.mxu0
  %3476 = vrot.lane.b32.xlu0 %v3281, 112
  %v3477 = vpop.permute.xlu0 %3476
  %3478 = vrot.lane.b32.xlu0 %v3284, 112
  %v3479 = vpop.permute.xlu0 %3478
  %3480 = vrot.lane.b32.xlu0 %v3281, 80
  %v3481 = vpop.permute.xlu0 %3480
  %3482 = vrot.lane.b32.xlu0 %v3284, 80
  %v3483 = vpop.permute.xlu0 %3482
  %v3484 = vsel %vm833, %v3477, 0
  %v3486 = vsel %vm833, %v3479, 0
  %v3488 = vsel %vm833, %v3481, 0
  %v3490 = vsel %vm833, %v3483, 0
  %3492 = vmatpush.xpose.msra.mxu0 0.0
  %3493 = vmatpush.xpose.msra.mxu0 0.0
  %3494 = vmatpush.xpose.msra.mxu0 0.0
  %3495 = vmatpush.xpose.msra.mxu0 0.0
  %3496 = vmatpush.xpose.msra.mxu0 0.0
  %3497 = vmatpush.xpose.msra.mxu0 0.0
  %3498 = vmatpush.xpose.msra.mxu0 0.0
  %3499 = vmatpush.xpose.msra.mxu0 0.0
  %3500 = vmatpush.xpose.msra.mxu0 0.0
  %3501 = vmatpush.xpose.msra.mxu0 0.0
  %3502 = vmatpush.xpose.msra.mxu0 0.0
  %3503 = vmatpush.xpose.msra.mxu0 0.0
  %3504 = vmatpush.xpose.msra.mxu0 0.0
  %3505 = vmatpush.xpose.msra.mxu0 0.0
  %3506 = vmatpush.xpose.msra.mxu0 %v3490
  %3507 = vmatpush.xpose.msra.mxu0 %v3488
  %3508 = vmatmul.f32.gmra.mxu0 %v3484
  %v3509 = vpop.f32.mrf.mxu0
  %v3510 = vadd.f32 0.0, %v3509
  %3511 = vmatmul.f32.gmra.mxu0 %v3486
  %v3512 = vpop.f32.mrf.mxu0
  %v3513 = vadd.f32 0.0, %v3512
  %3514 = vdwg.mxu0
  %v3515 = vsel %vm940, %v3510, -inf
  %3516 = vmax.xlane.f32.xlu0 %v3515
  %v3517 = vpop.xlane.xlu0 %3516
  %v3518 = vsel %vm940, %v3513, -inf
  %3519 = vmax.xlane.f32.xlu0 %v3518
  %v3520 = vpop.xlane.xlu0 %3519
  %v3521 = vsub.f32 %v3510, %v3517
  %v3522 = vsub.f32 %v3513, %v3520
  %v3523 = vmul.f32 %v3521, 1.442695
  %v3524 = vpow.pop %v3523
  %v3525 = vmul.f32 %v3522, 1.442695
  %v3526 = vpow.pop %v3525
  %v3527 = vsel %vm940, %v3524, 0.0
  %3528 = vadd.xlane.f32.xlu0 %v3527
  %v3529 = vpop.xlane.xlu0 %3528
  %v3530 = vsel %vm940, %v3526, 0.0
  %3531 = vadd.xlane.f32.xlu0 %v3530
  %v3532 = vpop.xlane.xlu0 %3531
  %v3533 = vrcp.pop %v3529
  %v3534 = vrcp.pop %v3532
  %v3535 = vmul.f32 %v3524, %v3533
  %v3536 = vmul.f32 %v3526, %v3534
  %3537 = vrot.lane.b32.xlu0 %v3281, 48
  %v3538 = vpop.permute.xlu0 %3537
  %3539 = vrot.lane.b32.xlu0 %v3284, 48
  %v3540 = vpop.permute.xlu0 %3539
  %v3544 = vsel %vm940, %v3535, 0
  %v3547 = vsel %vm940, %v3536, 0
  %3549 = vmatpush.msra.mxu0 0.0
  %3550 = vmatpush.msra.mxu0 0.0
  %3551 = vmatpush.msra.mxu0 0.0
  %3552 = vmatpush.msra.mxu0 0.0
  %3553 = vmatpush.msra.mxu0 0.0
  %3554 = vmatpush.msra.mxu0 0.0
  %3555 = vmatpush.msra.mxu0 0.0
  %3556 = vmatpush.msra.mxu0 0.0
  %3557 = vmatpush.msra.mxu0 0.0
  %3558 = vmatpush.msra.mxu0 0.0
  %3559 = vmatpush.msra.mxu0 0.0
  %3560 = vmatpush.msra.mxu0 0.0
  %3561 = vmatpush.msra.mxu0 0.0
  %3562 = vmatpush.msra.mxu0 0.0
  %3563 = vmatpush.msra.mxu0 %v3540
  %3564 = vmatpush.msra.mxu0 %v3538
  %3565 = vmatmul.f32.gmra.mxu0 %v3544
  %v3566 = vpop.f32.mrf.mxu0
  %v3567 = vadd.f32 0.0, %v3566
  %3568 = vmatmul.f32.gmra.mxu0 %v3547
  %v3569 = vpop.f32.mrf.mxu0
  %v3570 = vadd.f32 0.0, %v3569
  %3571 = vdwg.mxu0
  %3572 = vrot.lane.b32.xlu0 %v3281, 104
  %v3573 = vpop.permute.xlu0 %3572
  %3574 = vrot.lane.b32.xlu0 %v3284, 104
  %v3575 = vpop.permute.xlu0 %3574
  %3576 = vrot.lane.b32.xlu0 %v3281, 72
  %v3577 = vpop.permute.xlu0 %3576
  %3578 = vrot.lane.b32.xlu0 %v3284, 72
  %v3579 = vpop.permute.xlu0 %3578
  %v3580 = vsel %vm833, %v3573, 0
  %v3582 = vsel %vm833, %v3575, 0
  %v3584 = vsel %vm833, %v3577, 0
  %v3586 = vsel %vm833, %v3579, 0
  %3588 = vmatpush.xpose.msra.mxu0 0.0
  %3589 = vmatpush.xpose.msra.mxu0 0.0
  %3590 = vmatpush.xpose.msra.mxu0 0.0
  %3591 = vmatpush.xpose.msra.mxu0 0.0
  %3592 = vmatpush.xpose.msra.mxu0 0.0
  %3593 = vmatpush.xpose.msra.mxu0 0.0
  %3594 = vmatpush.xpose.msra.mxu0 0.0
  %3595 = vmatpush.xpose.msra.mxu0 0.0
  %3596 = vmatpush.xpose.msra.mxu0 0.0
  %3597 = vmatpush.xpose.msra.mxu0 0.0
  %3598 = vmatpush.xpose.msra.mxu0 0.0
  %3599 = vmatpush.xpose.msra.mxu0 0.0
  %3600 = vmatpush.xpose.msra.mxu0 0.0
  %3601 = vmatpush.xpose.msra.mxu0 0.0
  %3602 = vmatpush.xpose.msra.mxu0 %v3586
  %3603 = vmatpush.xpose.msra.mxu0 %v3584
  %3604 = vmatmul.f32.gmra.mxu0 %v3580
  %v3605 = vpop.f32.mrf.mxu0
  %v3606 = vadd.f32 0.0, %v3605
  %3607 = vmatmul.f32.gmra.mxu0 %v3582
  %v3608 = vpop.f32.mrf.mxu0
  %v3609 = vadd.f32 0.0, %v3608
  %3610 = vdwg.mxu0
  %v3611 = vsel %vm940, %v3606, -inf
  %3612 = vmax.xlane.f32.xlu0 %v3611
  %v3613 = vpop.xlane.xlu0 %3612
  %v3614 = vsel %vm940, %v3609, -inf
  %3615 = vmax.xlane.f32.xlu0 %v3614
  %v3616 = vpop.xlane.xlu0 %3615
  %v3617 = vsub.f32 %v3606, %v3613
  %v3618 = vsub.f32 %v3609, %v3616
  %v3619 = vmul.f32 %v3617, 1.442695
  %v3620 = vpow.pop %v3619
  %v3621 = vmul.f32 %v3618, 1.442695
  %v3622 = vpow.pop %v3621
  %v3623 = vsel %vm940, %v3620, 0.0
  %3624 = vadd.xlane.f32.xlu0 %v3623
  %v3625 = vpop.xlane.xlu0 %3624
  %v3626 = vsel %vm940, %v3622, 0.0
  %3627 = vadd.xlane.f32.xlu0 %v3626
  %v3628 = vpop.xlane.xlu0 %3627
  %v3629 = vrcp.pop %v3625
  %v3630 = vrcp.pop %v3628
  %v3631 = vmul.f32 %v3620, %v3629
  %v3632 = vmul.f32 %v3622, %v3630
  %3633 = vrot.lane.b32.xlu0 %v3281, 40
  %v3634 = vpop.permute.xlu0 %3633
  %3635 = vrot.lane.b32.xlu0 %v3284, 40
  %v3636 = vpop.permute.xlu0 %3635
  %v3640 = vsel %vm940, %v3631, 0
  %v3643 = vsel %vm940, %v3632, 0
  %3645 = vmatpush.msra.mxu0 0.0
  %3646 = vmatpush.msra.mxu0 0.0
  %3647 = vmatpush.msra.mxu0 0.0
  %3648 = vmatpush.msra.mxu0 0.0
  %3649 = vmatpush.msra.mxu0 0.0
  %3650 = vmatpush.msra.mxu0 0.0
  %3651 = vmatpush.msra.mxu0 0.0
  %3652 = vmatpush.msra.mxu0 0.0
  %3653 = vmatpush.msra.mxu0 0.0
  %3654 = vmatpush.msra.mxu0 0.0
  %3655 = vmatpush.msra.mxu0 0.0
  %3656 = vmatpush.msra.mxu0 0.0
  %3657 = vmatpush.msra.mxu0 0.0
  %3658 = vmatpush.msra.mxu0 0.0
  %3659 = vmatpush.msra.mxu0 %v3636
  %3660 = vmatpush.msra.mxu0 %v3634
  %3661 = vmatmul.f32.gmra.mxu0 %v3640
  %v3662 = vpop.f32.mrf.mxu0
  %v3663 = vadd.f32 0.0, %v3662
  %3664 = vmatmul.f32.gmra.mxu0 %v3643
  %v3665 = vpop.f32.mrf.mxu0
  %v3666 = vadd.f32 0.0, %v3665
  %3667 = vdwg.mxu0
  %3670 = vrot.lane.b32.xlu0 %v3471, 8
  %v3671 = vpop.permute.xlu0 %3670
  %3672 = vrot.lane.b32.xlu0 %v3474, 8
  %v3673 = vpop.permute.xlu0 %3672
  %3678 = vrot.lane.b32.xlu0 %v3567, 16
  %v3679 = vpop.permute.xlu0 %3678
  %3680 = vrot.lane.b32.xlu0 %v3570, 16
  %v3681 = vpop.permute.xlu0 %3680
  %3686 = vrot.lane.b32.xlu0 %v3663, 24
  %v3687 = vpop.permute.xlu0 %3686
  %3688 = vrot.lane.b32.xlu0 %v3666, 24
  %v3689 = vpop.permute.xlu0 %3688
  %v3692 = vsel %vm833, %v3375, %v3671
  %v3693 = vsel %vm833, %v3378, %v3673
  %v3694 = vsel %vm940, %v3692, %v3679
  %v3695 = vsel %vm940, %v3693, %v3681
  %v3696 = vsel %vm1314, %v3694, %v3687
  %v3697 = vsel %vm1314, %v3695, %v3689
  %v3698 = vld [vmem:[%s33] sm:$0xff]
  %v3699 = vld [vmem:[%s33 + $0x8] sm:$0xff]
  %v3700 = vld [vmem:[%s33 + $0x10] sm:$0xff]
  %v3701 = vld [vmem:[%s33 + $0x18] sm:$0xff]
  %v3702 = vld [vmem:[%s35] sm:$0x1]
  %v3704 = vperm.slane %v3702, 0
  %v3707 = vsel %vm873, %v3696, 0
  %v3710 = vsel %vm873, %v3697, 0
  %3712 = vmatpush.msra.mxu0 0.0
  %3713 = vmatpush.msra.mxu0 0.0
  %3714 = vmatpush.msra.mxu0 0.0
  %3715 = vmatpush.msra.mxu0 0.0
  %3716 = vmatpush.msra.mxu0 0.0
  %3717 = vmatpush.msra.mxu0 0.0
  %3718 = vmatpush.msra.mxu0 0.0
  %3719 = vmatpush.msra.mxu0 0.0
  %3720 = vmatpush.msra.mxu0 0.0
  %3721 = vmatpush.msra.mxu0 0.0
  %3722 = vmatpush.msra.mxu0 0.0
  %3723 = vmatpush.msra.mxu0 0.0
  %3724 = vmatpush.msra.mxu0 %v3701
  %3725 = vmatpush.msra.mxu0 %v3700
  %3726 = vmatpush.msra.mxu0 %v3699
  %3727 = vmatpush.msra.mxu0 %v3698
  %3728 = vmatmul.f32.gmra.mxu0 %v3707
  %v3729 = vpop.f32.mrf.mxu0
  %v3730 = vadd.f32 %v3704, %v3729
  %3731 = vmatmul.f32.gmra.mxu0 %v3710
  %v3732 = vpop.f32.mrf.mxu0
  %v3733 = vadd.f32 %v3704, %v3732
  %3734 = vdwg.mxu0
  %v3735 = vadd.f32 %v3247, %v3730
  %v3736 = vadd.f32 %v3248, %v3733
  %v3737 = vld [vmem:[%s45] sm:$0x1]
  %v3738 = vld [vmem:[%s47] sm:$0x1]
  %v3739 = vsel %vm873, %v3735, 0.0
  %3740 = vadd.xlane.f32.xlu0 %v3739
  %v3741 = vpop.xlane.xlu0 %3740
  %v3742 = vsel %vm873, %v3736, 0.0
  %3743 = vadd.xlane.f32.xlu0 %v3742
  %v3744 = vpop.xlane.xlu0 %3743
  %v3745 = vmul.f32 %v3741, %v1370
  %v3746 = vmul.f32 %v3744, %v1370
  %v3747 = vmul.f32 %v3735, %v3735
  %v3748 = vmul.f32 %v3736, %v3736
  %v3749 = vsel %vm873, %v3747, 0.0
  %3750 = vadd.xlane.f32.xlu0 %v3749
  %v3751 = vpop.xlane.xlu0 %3750
  %v3752 = vsel %vm873, %v3748, 0.0
  %3753 = vadd.xlane.f32.xlu0 %v3752
  %v3754 = vpop.xlane.xlu0 %3753
  %v3755 = vmul.f32 %v3751, %v1370
  %v3756 = vmul.f32 %v3754, %v1370
  %v3757 = vmul.f32 %v3745, %v3745
  %v3758 = vmul.f32 %v3746, %v3746
  %v3759 = vsub.f32 %v3755, %v3757
  %v3760 = vsub.f32 %v3756, %v3758
  %v3761 = vsub.f32 %v3735, %v3745
  %v3762 = vsub.f32 %v3736, %v3746
  %v3763 = vadd.f32 %v3759, 1e-05
  %v3764 = vadd.f32 %v3760, 1e-05
  %v3765 = vrsqrt.pop %v3763
  %v3766 = vmul.f32 %v3765, %v3763
  %v3767 = vmul.f32 %v3766, %v3765
  %v3768 = vmul.f32 0.5, %v3767
  %v3769 = vsub.f32 1.5, %v3768
  %v3770 = vmul.f32 %v3765, %v3769
  %vm3771 = vweird.f32 %v3763
  %vm3772 = vweird.f32 %v3765
  %vm3773 = vmor %vm3771, %vm3772
  %v3774 = vsel %vm3773, %v3765, %v3770
  %v3775 = vrsqrt.pop %v3764
  %v3776 = vmul.f32 %v3775, %v3764
  %v3777 = vmul.f32 %v3776, %v3775
  %v3778 = vmul.f32 0.5, %v3777
  %v3779 = vsub.f32 1.5, %v3778
  %v3780 = vmul.f32 %v3775, %v3779
  %vm3781 = vweird.f32 %v3764
  %vm3782 = vweird.f32 %v3775
  %vm3783 = vmor %vm3781, %vm3782
  %v3784 = vsel %vm3783, %v3775, %v3780
  %v3785 = vmul.f32 %v3761, %v3774
  %v3786 = vmul.f32 %v3762, %v3784
  %v3788 = vperm.slane %v3737, 0
  %v3790 = vmul.f32 %v3785, %v3788
  %v3791 = vmul.f32 %v3786, %v3788
  %v3793 = vperm.slane %v3738, 0
  %v3795 = vadd.f32 %v3790, %v3793
  %v3796 = vadd.f32 %v3791, %v3793
  %s3797 = sshll.u32 %s1424, 4
  %3798 = dma.done %s476, %s3797
  %s3799 = sshll.u32 %s1428, 4
  %3800 = dma.done %s557, %s3799
  %v3801 = vld [vmem:[#allocation4] sm:$0xff]
  %v3802 = vld [vmem:[#allocation4 + $0x8] sm:$0xff]
  %v3803 = vld [vmem:[#allocation4 + $0x10] sm:$0xff]
  %v3804 = vld [vmem:[#allocation4 + $0x18] sm:$0xff]
  %v3805 = vld [vmem:[#allocation4 + $0x20] sm:$0xff]
  %v3806 = vld [vmem:[#allocation4 + $0x28] sm:$0xff]
  %v3807 = vld [vmem:[#allocation4 + $0x30] sm:$0xff]
  %v3808 = vld [vmem:[#allocation4 + $0x38] sm:$0xff]
  %v3809 = vld [vmem:[#allocation4 + $0x40] sm:$0xff]
  %v3810 = vld [vmem:[#allocation4 + $0x48] sm:$0xff]
  %v3811 = vld [vmem:[#allocation4 + $0x50] sm:$0xff]
  %v3812 = vld [vmem:[#allocation4 + $0x58] sm:$0xff]
  %v3813 = vld [vmem:[#allocation4 + $0x60] sm:$0xff]
  %v3814 = vld [vmem:[#allocation4 + $0x68] sm:$0xff]
  %v3815 = vld [vmem:[#allocation4 + $0x70] sm:$0xff]
  %v3816 = vld [vmem:[#allocation4 + $0x78] sm:$0xff]
  %v3817 = vld [vmem:[#allocation4 + $0x80] sm:$0xff]
  %v3818 = vld [vmem:[#allocation4 + $0x88] sm:$0xff]
  %v3819 = vld [vmem:[#allocation4 + $0x90] sm:$0xff]
  %v3820 = vld [vmem:[#allocation4 + $0x98] sm:$0xff]
  %v3821 = vld [vmem:[#allocation4 + $0xa0] sm:$0xff]
  %v3822 = vld [vmem:[#allocation4 + $0xa8] sm:$0xff]
  %v3823 = vld [vmem:[#allocation4 + $0xb0] sm:$0xff]
  %v3824 = vld [vmem:[#allocation4 + $0xb8] sm:$0xff]
  %v3825 = vld [vmem:[#allocation4 + $0xc0] sm:$0xff]
  %v3826 = vld [vmem:[#allocation4 + $0xc8] sm:$0xff]
  %v3827 = vld [vmem:[#allocation4 + $0xd0] sm:$0xff]
  %v3828 = vld [vmem:[#allocation4 + $0xd8] sm:$0xff]
  %v3829 = vld [vmem:[#allocation4 + $0xe0] sm:$0xff]
  %v3830 = vld [vmem:[#allocation4 + $0xe8] sm:$0xff]
  %v3831 = vld [vmem:[#allocation4 + $0xf0] sm:$0xff]
  %v3832 = vld [vmem:[#allocation4 + $0xf8] sm:$0xff]
  %v3833 = vld [vmem:[#allocation5] sm:$0xf]
  %v3834 = vld [vmem:[#allocation5 + $0x4] sm:$0xf]
  %v3835 = vld [vmem:[#allocation5 + $0x8] sm:$0xf]
  %v3836 = vld [vmem:[#allocation5 + $0xc] sm:$0xf]
  %v3837 = vld [vmem:[#allocation5 + $0x10] sm:$0xf]
  %v3838 = vld [vmem:[#allocation5 + $0x14] sm:$0xf]
  %v3839 = vld [vmem:[#allocation5 + $0x18] sm:$0xf]
  %v3840 = vld [vmem:[#allocation5 + $0x1c] sm:$0xf]
  %v3841 = vld [vmem:[#allocation5 + $0x20] sm:$0xf]
  %v3842 = vld [vmem:[#allocation5 + $0x24] sm:$0xf]
  %v3843 = vld [vmem:[#allocation5 + $0x28] sm:$0xf]
  %v3844 = vld [vmem:[#allocation5 + $0x2c] sm:$0xf]
  %v3845 = vld [vmem:[#allocation5 + $0x30] sm:$0xf]
  %v3846 = vld [vmem:[#allocation5 + $0x34] sm:$0xf]
  %v3847 = vld [vmem:[#allocation5 + $0x38] sm:$0xf]
  %v3848 = vld [vmem:[#allocation5 + $0x3c] sm:$0xf]
  %v3849 = vld [vmem:[#allocation5 + $0x40] sm:$0xf]
  %v3850 = vld [vmem:[#allocation5 + $0x44] sm:$0xf]
  %v3851 = vld [vmem:[#allocation5 + $0x48] sm:$0xf]
  %v3852 = vld [vmem:[#allocation5 + $0x4c] sm:$0xf]
  %v3853 = vld [vmem:[#allocation5 + $0x50] sm:$0xf]
  %v3854 = vld [vmem:[#allocation5 + $0x54] sm:$0xf]
  %v3855 = vld [vmem:[#allocation5 + $0x58] sm:$0xf]
  %v3856 = vld [vmem:[#allocation5 + $0x5c] sm:$0xf]
  %v3857 = vld [vmem:[#allocation5 + $0x60] sm:$0xf]
  %v3858 = vld [vmem:[#allocation5 + $0x64] sm:$0xf]
  %v3859 = vld [vmem:[#allocation5 + $0x68] sm:$0xf]
  %v3860 = vld [vmem:[#allocation5 + $0x6c] sm:$0xf]
  %v3861 = vld [vmem:[#allocation5 + $0x70] sm:$0xf]
  %v3862 = vld [vmem:[#allocation5 + $0x74] sm:$0xf]
  %v3863 = vld [vmem:[#allocation5 + $0x78] sm:$0xf]
  %v3864 = vld [vmem:[#allocation5 + $0x7c] sm:$0xf]
  %v3865 = vld [vmem:[#allocation5 + $0x80] sm:$0xf]
  %v3866 = vld [vmem:[#allocation5 + $0x84] sm:$0xf]
  %v3867 = vld [vmem:[#allocation5 + $0x88] sm:$0xf]
  %v3868 = vld [vmem:[#allocation5 + $0x8c] sm:$0xf]
  %v3869 = vld [vmem:[#allocation5 + $0x90] sm:$0xf]
  %v3870 = vld [vmem:[#allocation5 + $0x94] sm:$0xf]
  %v3871 = vld [vmem:[#allocation5 + $0x98] sm:$0xf]
  %v3872 = vld [vmem:[#allocation5 + $0x9c] sm:$0xf]
  %v3873 = vld [vmem:[#allocation5 + $0xa0] sm:$0xf]
  %v3874 = vld [vmem:[#allocation5 + $0xa4] sm:$0xf]
  %v3875 = vld [vmem:[#allocation5 + $0xa8] sm:$0xf]
  %v3876 = vld [vmem:[#allocation5 + $0xac] sm:$0xf]
  %v3877 = vld [vmem:[#allocation5 + $0xb0] sm:$0xf]
  %v3878 = vld [vmem:[#allocation5 + $0xb4] sm:$0xf]
  %v3879 = vld [vmem:[#allocation5 + $0xb8] sm:$0xf]
  %v3880 = vld [vmem:[#allocation5 + $0xbc] sm:$0xf]
  %v3881 = vld [vmem:[#allocation5 + $0xc0] sm:$0xf]
  %v3882 = vld [vmem:[#allocation5 + $0xc4] sm:$0xf]
  %v3883 = vld [vmem:[#allocation5 + $0xc8] sm:$0xf]
  %v3884 = vld [vmem:[#allocation5 + $0xcc] sm:$0xf]
  %v3885 = vld [vmem:[#allocation5 + $0xd0] sm:$0xf]
  %v3886 = vld [vmem:[#allocation5 + $0xd4] sm:$0xf]
  %v3887 = vld [vmem:[#allocation5 + $0xd8] sm:$0xf]
  %v3888 = vld [vmem:[#allocation5 + $0xdc] sm:$0xf]
  %v3889 = vld [vmem:[#allocation5 + $0xe0] sm:$0xf]
  %v3890 = vld [vmem:[#allocation5 + $0xe4] sm:$0xf]
  %v3891 = vld [vmem:[#allocation5 + $0xe8] sm:$0xf]
  %v3892 = vld [vmem:[#allocation5 + $0xec] sm:$0xf]
  %v3893 = vld [vmem:[#allocation5 + $0xf0] sm:$0xf]
  %v3894 = vld [vmem:[#allocation5 + $0xf4] sm:$0xf]
  %v3895 = vld [vmem:[#allocation5 + $0xf8] sm:$0xf]
  %v3896 = vld [vmem:[#allocation5 + $0xfc] sm:$0xf]
  %v3897 = vld [vmem:[#allocation5 + $0x100] sm:$0xf]
  %v3898 = vld [vmem:[#allocation5 + $0x104] sm:$0xf]
  %v3899 = vld [vmem:[#allocation5 + $0x108] sm:$0xf]
  %v3900 = vld [vmem:[#allocation5 + $0x10c] sm:$0xf]
  %v3901 = vld [vmem:[#allocation5 + $0x110] sm:$0xf]
  %v3902 = vld [vmem:[#allocation5 + $0x114] sm:$0xf]
  %v3903 = vld [vmem:[#allocation5 + $0x118] sm:$0xf]
  %v3904 = vld [vmem:[#allocation5 + $0x11c] sm:$0xf]
  %v3905 = vld [vmem:[#allocation5 + $0x120] sm:$0xf]
  %v3906 = vld [vmem:[#allocation5 + $0x124] sm:$0xf]
  %v3907 = vld [vmem:[#allocation5 + $0x128] sm:$0xf]
  %v3908 = vld [vmem:[#allocation5 + $0x12c] sm:$0xf]
  %v3909 = vld [vmem:[#allocation5 + $0x130] sm:$0xf]
  %v3910 = vld [vmem:[#allocation5 + $0x134] sm:$0xf]
  %v3911 = vld [vmem:[#allocation5 + $0x138] sm:$0xf]
  %v3912 = vld [vmem:[#allocation5 + $0x13c] sm:$0xf]
  %v3913 = vld [vmem:[#allocation5 + $0x140] sm:$0xf]
  %v3914 = vld [vmem:[#allocation5 + $0x144] sm:$0xf]
  %v3915 = vld [vmem:[#allocation5 + $0x148] sm:$0xf]
  %v3916 = vld [vmem:[#allocation5 + $0x14c] sm:$0xf]
  %v3917 = vld [vmem:[#allocation5 + $0x150] sm:$0xf]
  %v3918 = vld [vmem:[#allocation5 + $0x154] sm:$0xf]
  %v3919 = vld [vmem:[#allocation5 + $0x158] sm:$0xf]
  %v3920 = vld [vmem:[#allocation5 + $0x15c] sm:$0xf]
  %v3921 = vld [vmem:[#allocation5 + $0x160] sm:$0xf]
  %v3922 = vld [vmem:[#allocation5 + $0x164] sm:$0xf]
  %v3923 = vld [vmem:[#allocation5 + $0x168] sm:$0xf]
  %v3924 = vld [vmem:[#allocation5 + $0x16c] sm:$0xf]
  %v3925 = vld [vmem:[#allocation5 + $0x170] sm:$0xf]
  %v3926 = vld [vmem:[#allocation5 + $0x174] sm:$0xf]
  %v3927 = vld [vmem:[#allocation5 + $0x178] sm:$0xf]
  %v3928 = vld [vmem:[#allocation5 + $0x17c] sm:$0xf]
  %v3929 = vld [vmem:[#allocation5 + $0x180] sm:$0xf]
  %v3930 = vld [vmem:[#allocation5 + $0x184] sm:$0xf]
  %v3931 = vld [vmem:[#allocation5 + $0x188] sm:$0xf]
  %v3932 = vld [vmem:[#allocation5 + $0x18c] sm:$0xf]
  %v3933 = vld [vmem:[#allocation5 + $0x190] sm:$0xf]
  %v3934 = vld [vmem:[#allocation5 + $0x194] sm:$0xf]
  %v3935 = vld [vmem:[#allocation5 + $0x198] sm:$0xf]
  %v3936 = vld [vmem:[#allocation5 + $0x19c] sm:$0xf]
  %v3937 = vld [vmem:[#allocation5 + $0x1a0] sm:$0xf]
  %v3938 = vld [vmem:[#allocation5 + $0x1a4] sm:$0xf]
  %v3939 = vld [vmem:[#allocation5 + $0x1a8] sm:$0xf]
  %v3940 = vld [vmem:[#allocation5 + $0x1ac] sm:$0xf]
  %v3941 = vld [vmem:[#allocation5 + $0x1b0] sm:$0xf]
  %v3942 = vld [vmem:[#allocation5 + $0x1b4] sm:$0xf]
  %v3943 = vld [vmem:[#allocation5 + $0x1b8] sm:$0xf]
  %v3944 = vld [vmem:[#allocation5 + $0x1bc] sm:$0xf]
  %v3945 = vld [vmem:[#allocation5 + $0x1c0] sm:$0xf]
  %v3946 = vld [vmem:[#allocation5 + $0x1c4] sm:$0xf]
  %v3947 = vld [vmem:[#allocation5 + $0x1c8] sm:$0xf]
  %v3948 = vld [vmem:[#allocation5 + $0x1cc] sm:$0xf]
  %v3949 = vld [vmem:[#allocation5 + $0x1d0] sm:$0xf]
  %v3950 = vld [vmem:[#allocation5 + $0x1d4] sm:$0xf]
  %v3951 = vld [vmem:[#allocation5 + $0x1d8] sm:$0xf]
  %v3952 = vld [vmem:[#allocation5 + $0x1dc] sm:$0xf]
  %v3953 = vld [vmem:[#allocation5 + $0x1e0] sm:$0xf]
  %v3954 = vld [vmem:[#allocation5 + $0x1e4] sm:$0xf]
  %v3955 = vld [vmem:[#allocation5 + $0x1e8] sm:$0xf]
  %v3956 = vld [vmem:[#allocation5 + $0x1ec] sm:$0xf]
  %v3957 = vld [vmem:[#allocation5 + $0x1f0] sm:$0xf]
  %v3958 = vld [vmem:[#allocation5 + $0x1f4] sm:$0xf]
  %v3959 = vld [vmem:[#allocation5 + $0x1f8] sm:$0xf]
  %v3960 = vld [vmem:[#allocation5 + $0x1fc] sm:$0xf]
  %v3961 = vld [vmem:[#allocation5 + $0x200] sm:$0xf]
  %v3962 = vld [vmem:[#allocation5 + $0x204] sm:$0xf]
  %v3963 = vld [vmem:[#allocation5 + $0x208] sm:$0xf]
  %v3964 = vld [vmem:[#allocation5 + $0x20c] sm:$0xf]
  %v3965 = vld [vmem:[#allocation5 + $0x210] sm:$0xf]
  %v3966 = vld [vmem:[#allocation5 + $0x214] sm:$0xf]
  %v3967 = vld [vmem:[#allocation5 + $0x218] sm:$0xf]
  %v3968 = vld [vmem:[#allocation5 + $0x21c] sm:$0xf]
  %v3969 = vld [vmem:[#allocation5 + $0x220] sm:$0xf]
  %v3970 = vld [vmem:[#allocation5 + $0x224] sm:$0xf]
  %v3971 = vld [vmem:[#allocation5 + $0x228] sm:$0xf]
  %v3972 = vld [vmem:[#allocation5 + $0x22c] sm:$0xf]
  %v3973 = vld [vmem:[#allocation5 + $0x230] sm:$0xf]
  %v3974 = vld [vmem:[#allocation5 + $0x234] sm:$0xf]
  %v3975 = vld [vmem:[#allocation5 + $0x238] sm:$0xf]
  %v3976 = vld [vmem:[#allocation5 + $0x23c] sm:$0xf]
  %v3977 = vld [vmem:[#allocation5 + $0x240] sm:$0xf]
  %v3978 = vld [vmem:[#allocation5 + $0x244] sm:$0xf]
  %v3979 = vld [vmem:[#allocation5 + $0x248] sm:$0xf]
  %v3980 = vld [vmem:[#allocation5 + $0x24c] sm:$0xf]
  %v3981 = vld [vmem:[#allocation5 + $0x250] sm:$0xf]
  %v3982 = vld [vmem:[#allocation5 + $0x254] sm:$0xf]
  %v3983 = vld [vmem:[#allocation5 + $0x258] sm:$0xf]
  %v3984 = vld [vmem:[#allocation5 + $0x25c] sm:$0xf]
  %v3985 = vld [vmem:[#allocation5 + $0x260] sm:$0xf]
  %v3986 = vld [vmem:[#allocation5 + $0x264] sm:$0xf]
  %v3987 = vld [vmem:[#allocation5 + $0x268] sm:$0xf]
  %v3988 = vld [vmem:[#allocation5 + $0x26c] sm:$0xf]
  %v3989 = vld [vmem:[#allocation5 + $0x270] sm:$0xf]
  %v3990 = vld [vmem:[#allocation5 + $0x274] sm:$0xf]
  %v3991 = vld [vmem:[#allocation5 + $0x278] sm:$0xf]
  %v3992 = vld [vmem:[#allocation5 + $0x27c] sm:$0xf]
  %v3993 = vld [vmem:[#allocation5 + $0x280] sm:$0xf]
  %v3994 = vld [vmem:[#allocation5 + $0x284] sm:$0xf]
  %v3995 = vld [vmem:[#allocation5 + $0x288] sm:$0xf]
  %v3996 = vld [vmem:[#allocation5 + $0x28c] sm:$0xf]
  %v3997 = vld [vmem:[#allocation5 + $0x290] sm:$0xf]
  %v3998 = vld [vmem:[#allocation5 + $0x294] sm:$0xf]
  %v3999 = vld [vmem:[#allocation5 + $0x298] sm:$0xf]
  %v4000 = vld [vmem:[#allocation5 + $0x29c] sm:$0xf]
  %v4001 = vld [vmem:[#allocation5 + $0x2a0] sm:$0xf]
  %v4002 = vld [vmem:[#allocation5 + $0x2a4] sm:$0xf]
  %v4003 = vld [vmem:[#allocation5 + $0x2a8] sm:$0xf]
  %v4004 = vld [vmem:[#allocation5 + $0x2ac] sm:$0xf]
  %v4005 = vld [vmem:[#allocation5 + $0x2b0] sm:$0xf]
  %v4006 = vld [vmem:[#allocation5 + $0x2b4] sm:$0xf]
  %v4007 = vld [vmem:[#allocation5 + $0x2b8] sm:$0xf]
  %v4008 = vld [vmem:[#allocation5 + $0x2bc] sm:$0xf]
  %v4009 = vld [vmem:[#allocation5 + $0x2c0] sm:$0xf]
  %v4010 = vld [vmem:[#allocation5 + $0x2c4] sm:$0xf]
  %v4011 = vld [vmem:[#allocation5 + $0x2c8] sm:$0xf]
  %v4012 = vld [vmem:[#allocation5 + $0x2cc] sm:$0xf]
  %v4013 = vld [vmem:[#allocation5 + $0x2d0] sm:$0xf]
  %v4014 = vld [vmem:[#allocation5 + $0x2d4] sm:$0xf]
  %v4015 = vld [vmem:[#allocation5 + $0x2d8] sm:$0xf]
  %v4016 = vld [vmem:[#allocation5 + $0x2dc] sm:$0xf]
  %v4017 = vld [vmem:[#allocation5 + $0x2e0] sm:$0xf]
  %v4018 = vld [vmem:[#allocation5 + $0x2e4] sm:$0xf]
  %v4019 = vld [vmem:[#allocation5 + $0x2e8] sm:$0xf]
  %v4020 = vld [vmem:[#allocation5 + $0x2ec] sm:$0xf]
  %v4021 = vld [vmem:[#allocation5 + $0x2f0] sm:$0xf]
  %v4022 = vld [vmem:[#allocation5 + $0x2f4] sm:$0xf]
  %v4023 = vld [vmem:[#allocation5 + $0x2f8] sm:$0xf]
  %v4024 = vld [vmem:[#allocation5 + $0x2fc] sm:$0xf]
  %v4025 = vld [vmem:[#allocation5 + $0x300] sm:$0xf]
  %v4026 = vld [vmem:[#allocation5 + $0x304] sm:$0xf]
  %v4027 = vld [vmem:[#allocation5 + $0x308] sm:$0xf]
  %v4028 = vld [vmem:[#allocation5 + $0x30c] sm:$0xf]
  %v4029 = vld [vmem:[#allocation5 + $0x310] sm:$0xf]
  %v4030 = vld [vmem:[#allocation5 + $0x314] sm:$0xf]
  %v4031 = vld [vmem:[#allocation5 + $0x318] sm:$0xf]
  %v4032 = vld [vmem:[#allocation5 + $0x31c] sm:$0xf]
  %v4033 = vld [vmem:[#allocation5 + $0x320] sm:$0xf]
  %v4034 = vld [vmem:[#allocation5 + $0x324] sm:$0xf]
  %v4035 = vld [vmem:[#allocation5 + $0x328] sm:$0xf]
  %v4036 = vld [vmem:[#allocation5 + $0x32c] sm:$0xf]
  %v4037 = vld [vmem:[#allocation5 + $0x330] sm:$0xf]
  %v4038 = vld [vmem:[#allocation5 + $0x334] sm:$0xf]
  %v4039 = vld [vmem:[#allocation5 + $0x338] sm:$0xf]
  %v4040 = vld [vmem:[#allocation5 + $0x33c] sm:$0xf]
  %v4041 = vld [vmem:[#allocation5 + $0x340] sm:$0xf]
  %v4042 = vld [vmem:[#allocation5 + $0x344] sm:$0xf]
  %v4043 = vld [vmem:[#allocation5 + $0x348] sm:$0xf]
  %v4044 = vld [vmem:[#allocation5 + $0x34c] sm:$0xf]
  %v4045 = vld [vmem:[#allocation5 + $0x350] sm:$0xf]
  %v4046 = vld [vmem:[#allocation5 + $0x354] sm:$0xf]
  %v4047 = vld [vmem:[#allocation5 + $0x358] sm:$0xf]
  %v4048 = vld [vmem:[#allocation5 + $0x35c] sm:$0xf]
  %v4049 = vld [vmem:[#allocation5 + $0x360] sm:$0xf]
  %v4050 = vld [vmem:[#allocation5 + $0x364] sm:$0xf]
  %v4051 = vld [vmem:[#allocation5 + $0x368] sm:$0xf]
  %v4052 = vld [vmem:[#allocation5 + $0x36c] sm:$0xf]
  %v4053 = vld [vmem:[#allocation5 + $0x370] sm:$0xf]
  %v4054 = vld [vmem:[#allocation5 + $0x374] sm:$0xf]
  %v4055 = vld [vmem:[#allocation5 + $0x378] sm:$0xf]
  %v4056 = vld [vmem:[#allocation5 + $0x37c] sm:$0xf]
  %v4057 = vld [vmem:[#allocation5 + $0x380] sm:$0xf]
  %v4058 = vld [vmem:[#allocation5 + $0x384] sm:$0xf]
  %v4059 = vld [vmem:[#allocation5 + $0x388] sm:$0xf]
  %v4060 = vld [vmem:[#allocation5 + $0x38c] sm:$0xf]
  %v4061 = vld [vmem:[#allocation5 + $0x390] sm:$0xf]
  %v4062 = vld [vmem:[#allocation5 + $0x394] sm:$0xf]
  %v4063 = vld [vmem:[#allocation5 + $0x398] sm:$0xf]
  %v4064 = vld [vmem:[#allocation5 + $0x39c] sm:$0xf]
  %v4065 = vld [vmem:[#allocation5 + $0x3a0] sm:$0xf]
  %v4066 = vld [vmem:[#allocation5 + $0x3a4] sm:$0xf]
  %v4067 = vld [vmem:[#allocation5 + $0x3a8] sm:$0xf]
  %v4068 = vld [vmem:[#allocation5 + $0x3ac] sm:$0xf]
  %v4069 = vld [vmem:[#allocation5 + $0x3b0] sm:$0xf]
  %v4070 = vld [vmem:[#allocation5 + $0x3b4] sm:$0xf]
  %v4071 = vld [vmem:[#allocation5 + $0x3b8] sm:$0xf]
  %v4072 = vld [vmem:[#allocation5 + $0x3bc] sm:$0xf]
  %v4073 = vld [vmem:[#allocation5 + $0x3c0] sm:$0xf]
  %v4074 = vld [vmem:[#allocation5 + $0x3c4] sm:$0xf]
  %v4075 = vld [vmem:[#allocation5 + $0x3c8] sm:$0xf]
  %v4076 = vld [vmem:[#allocation5 + $0x3cc] sm:$0xf]
  %v4077 = vld [vmem:[#allocation5 + $0x3d0] sm:$0xf]
  %v4078 = vld [vmem:[#allocation5 + $0x3d4] sm:$0xf]
  %v4079 = vld [vmem:[#allocation5 + $0x3d8] sm:$0xf]
  %v4080 = vld [vmem:[#allocation5 + $0x3dc] sm:$0xf]
  %v4081 = vld [vmem:[#allocation5 + $0x3e0] sm:$0xf]
  %v4082 = vld [vmem:[#allocation5 + $0x3e4] sm:$0xf]
  %v4083 = vld [vmem:[#allocation5 + $0x3e8] sm:$0xf]
  %v4084 = vld [vmem:[#allocation5 + $0x3ec] sm:$0xf]
  %v4085 = vld [vmem:[#allocation5 + $0x3f0] sm:$0xf]
  %v4086 = vld [vmem:[#allocation5 + $0x3f4] sm:$0xf]
  %v4087 = vld [vmem:[#allocation5 + $0x3f8] sm:$0xf]
  %v4088 = vld [vmem:[#allocation5 + $0x3fc] sm:$0xf]
  %v4089 = vpack.c.bf16 %v3796, %v3795
  %v4090 = vld [vmem:[%s41] sm:$0xff]
  %v4091 = vld [vmem:[%s41 + $0x8] sm:$0xff]
  %v4094 = vperm.slane %v4090, 0
  %v4095 = vperm.slane %v4090, 1
  %v4096 = vperm.slane %v4090, 2
  %v4097 = vperm.slane %v4090, 3
  %v4098 = vperm.slane %v4090, 4
  %v4099 = vperm.slane %v4090, 5
  %v4100 = vperm.slane %v4090, 6
  %v4101 = vperm.slane %v4090, 7
  %v4102 = vperm.slane %v4091, 0
  %v4103 = vperm.slane %v4091, 1
  %v4104 = vperm.slane %v4091, 2
  %v4105 = vperm.slane %v4091, 3
  %v4106 = vperm.slane %v4091, 4
  %v4107 = vperm.slane %v4091, 5
  %v4108 = vperm.slane %v4091, 6
  %v4109 = vperm.slane %v4091, 7
  %v4158 = vunpack.c.l.b16 %v3801
  %v4159 = vunpack.c.h.b16 %v3801
  %v4160 = vunpack.c.l.b16 %v3802
  %v4161 = vunpack.c.h.b16 %v3802
  %v4162 = vunpack.c.l.b16 %v3803
  %v4163 = vunpack.c.h.b16 %v3803
  %v4164 = vunpack.c.l.b16 %v3804
  %v4165 = vunpack.c.h.b16 %v3804
  %v4166 = vunpack.c.l.b16 %v3805
  %v4167 = vunpack.c.h.b16 %v3805
  %v4168 = vunpack.c.l.b16 %v3806
  %v4169 = vunpack.c.h.b16 %v3806
  %v4170 = vunpack.c.l.b16 %v3807
  %v4171 = vunpack.c.h.b16 %v3807
  %v4172 = vunpack.c.l.b16 %v3808
  %v4173 = vunpack.c.h.b16 %v3808
  %v4174 = vunpack.c.l.b16 %v3809
  %v4175 = vunpack.c.h.b16 %v3809
  %v4176 = vunpack.c.l.b16 %v3810
  %v4177 = vunpack.c.h.b16 %v3810
  %v4178 = vunpack.c.l.b16 %v3811
  %v4179 = vunpack.c.h.b16 %v3811
  %v4180 = vunpack.c.l.b16 %v3812
  %v4181 = vunpack.c.h.b16 %v3812
  %v4182 = vunpack.c.l.b16 %v3813
  %v4183 = vunpack.c.h.b16 %v3813
  %v4184 = vunpack.c.l.b16 %v3814
  %v4185 = vunpack.c.h.b16 %v3814
  %v4186 = vunpack.c.l.b16 %v3815
  %v4187 = vunpack.c.h.b16 %v3815
  %v4188 = vunpack.c.l.b16 %v3816
  %v4189 = vunpack.c.h.b16 %v3816
  %v4190 = vunpack.c.l.b16 %v3817
  %v4191 = vunpack.c.h.b16 %v3817
  %v4192 = vunpack.c.l.b16 %v3818
  %v4193 = vunpack.c.h.b16 %v3818
  %v4194 = vunpack.c.l.b16 %v3819
  %v4195 = vunpack.c.h.b16 %v3819
  %v4196 = vunpack.c.l.b16 %v3820
  %v4197 = vunpack.c.h.b16 %v3820
  %v4198 = vunpack.c.l.b16 %v3821
  %v4199 = vunpack.c.h.b16 %v3821
  %v4200 = vunpack.c.l.b16 %v3822
  %v4201 = vunpack.c.h.b16 %v3822
  %v4202 = vunpack.c.l.b16 %v3823
  %v4203 = vunpack.c.h.b16 %v3823
  %v4204 = vunpack.c.l.b16 %v3824
  %v4205 = vunpack.c.h.b16 %v3824
  %v4206 = vunpack.c.l.b16 %v3825
  %v4207 = vunpack.c.h.b16 %v3825
  %v4208 = vunpack.c.l.b16 %v3826
  %v4209 = vunpack.c.h.b16 %v3826
  %v4210 = vunpack.c.l.b16 %v3827
  %v4211 = vunpack.c.h.b16 %v3827
  %v4212 = vunpack.c.l.b16 %v3828
  %v4213 = vunpack.c.h.b16 %v3828
  %v4214 = vunpack.c.l.b16 %v3829
  %v4215 = vunpack.c.h.b16 %v3829
  %v4216 = vunpack.c.l.b16 %v3830
  %v4217 = vunpack.c.h.b16 %v3830
  %v4218 = vunpack.c.l.b16 %v3831
  %v4219 = vunpack.c.h.b16 %v3831
  %v4220 = vunpack.c.l.b16 %v3832
  %v4221 = vunpack.c.h.b16 %v3832
  %v4222 = vpack.c.b16 %v4174, %v4158
  %v4223 = vpack.c.b16 %v4175, %v4159
  %v4224 = vpack.c.b16 %v4176, %v4160
  %v4225 = vpack.c.b16 %v4177, %v4161
  %v4226 = vpack.c.b16 %v4178, %v4162
  %v4227 = vpack.c.b16 %v4179, %v4163
  %v4228 = vpack.c.b16 %v4180, %v4164
  %v4229 = vpack.c.b16 %v4181, %v4165
  %v4230 = vpack.c.b16 %v4182, %v4166
  %v4231 = vpack.c.b16 %v4183, %v4167
  %v4232 = vpack.c.b16 %v4184, %v4168
  %v4233 = vpack.c.b16 %v4185, %v4169
  %v4234 = vpack.c.b16 %v4186, %v4170
  %v4235 = vpack.c.b16 %v4187, %v4171
  %v4236 = vpack.c.b16 %v4188, %v4172
  %v4237 = vpack.c.b16 %v4189, %v4173
  %v4238 = vpack.c.b16 %v4206, %v4190
  %v4239 = vpack.c.b16 %v4207, %v4191
  %v4240 = vpack.c.b16 %v4208, %v4192
  %v4241 = vpack.c.b16 %v4209, %v4193
  %v4242 = vpack.c.b16 %v4210, %v4194
  %v4243 = vpack.c.b16 %v4211, %v4195
  %v4244 = vpack.c.b16 %v4212, %v4196
  %v4245 = vpack.c.b16 %v4213, %v4197
  %v4246 = vpack.c.b16 %v4214, %v4198
  %v4247 = vpack.c.b16 %v4215, %v4199
  %v4248 = vpack.c.b16 %v4216, %v4200
  %v4249 = vpack.c.b16 %v4217, %v4201
  %v4250 = vpack.c.b16 %v4218, %v4202
  %v4251 = vpack.c.b16 %v4219, %v4203
  %v4252 = vpack.c.b16 %v4220, %v4204
  %v4253 = vpack.c.b16 %v4221, %v4205
  %v4287 = vsel %vm873, %v4089, 0
  %4289 = vmatpush.bf16.msra.mxu0 0
  %4290 = vmatpush.bf16.msra.mxu0 0
  %4291 = vmatpush.bf16.msra.mxu0 0
  %4292 = vmatpush.bf16.msra.mxu0 0
  %4293 = vmatpush.bf16.msra.mxu0 0
  %4294 = vmatpush.bf16.msra.mxu0 0
  %4295 = vmatpush.bf16.msra.mxu0 %v4238
  %4296 = vmatpush.bf16.msra.mxu0 %v4222
  %4297 = vmatmul.bf16.gmra.mxu0 %v4287
  %v4298 = vpop.f32.mrf.mxu0
  %v4299 = vadd.f32 %v4094, %v4298
  %v4300 = vpop.f32.mrf.mxu0
  %v4301 = vadd.f32 %v4094, %v4300
  %4302 = vdwg.mxu0
  %4303 = vmatpush.bf16.msra.mxu0 0
  %4304 = vmatpush.bf16.msra.mxu0 0
  %4305 = vmatpush.bf16.msra.mxu0 0
  %4306 = vmatpush.bf16.msra.mxu0 0
  %4307 = vmatpush.bf16.msra.mxu0 0
  %4308 = vmatpush.bf16.msra.mxu0 0
  %4309 = vmatpush.bf16.msra.mxu0 %v4239
  %4310 = vmatpush.bf16.msra.mxu0 %v4223
  %4311 = vmatmul.bf16.gmra.mxu0 %v4287
  %v4312 = vpop.f32.mrf.mxu0
  %v4313 = vadd.f32 %v4095, %v4312
  %v4314 = vpop.f32.mrf.mxu0
  %v4315 = vadd.f32 %v4095, %v4314
  %4316 = vdwg.mxu0
  %4317 = vmatpush.bf16.msra.mxu0 0
  %4318 = vmatpush.bf16.msra.mxu0 0
  %4319 = vmatpush.bf16.msra.mxu0 0
  %4320 = vmatpush.bf16.msra.mxu0 0
  %4321 = vmatpush.bf16.msra.mxu0 0
  %4322 = vmatpush.bf16.msra.mxu0 0
  %4323 = vmatpush.bf16.msra.mxu0 %v4240
  %4324 = vmatpush.bf16.msra.mxu0 %v4224
  %4325 = vmatmul.bf16.gmra.mxu0 %v4287
  %v4326 = vpop.f32.mrf.mxu0
  %v4327 = vadd.f32 %v4096, %v4326
  %v4328 = vpop.f32.mrf.mxu0
  %v4329 = vadd.f32 %v4096, %v4328
  %4330 = vdwg.mxu0
  %4331 = vmatpush.bf16.msra.mxu0 0
  %4332 = vmatpush.bf16.msra.mxu0 0
  %4333 = vmatpush.bf16.msra.mxu0 0
  %4334 = vmatpush.bf16.msra.mxu0 0
  %4335 = vmatpush.bf16.msra.mxu0 0
  %4336 = vmatpush.bf16.msra.mxu0 0
  %4337 = vmatpush.bf16.msra.mxu0 %v4241
  %4338 = vmatpush.bf16.msra.mxu0 %v4225
  %4339 = vmatmul.bf16.gmra.mxu0 %v4287
  %v4340 = vpop.f32.mrf.mxu0
  %v4341 = vadd.f32 %v4097, %v4340
  %v4342 = vpop.f32.mrf.mxu0
  %v4343 = vadd.f32 %v4097, %v4342
  %4344 = vdwg.mxu0
  %4345 = vmatpush.bf16.msra.mxu0 0
  %4346 = vmatpush.bf16.msra.mxu0 0
  %4347 = vmatpush.bf16.msra.mxu0 0
  %4348 = vmatpush.bf16.msra.mxu0 0
  %4349 = vmatpush.bf16.msra.mxu0 0
  %4350 = vmatpush.bf16.msra.mxu0 0
  %4351 = vmatpush.bf16.msra.mxu0 %v4242
  %4352 = vmatpush.bf16.msra.mxu0 %v4226
  %4353 = vmatmul.bf16.gmra.mxu0 %v4287
  %v4354 = vpop.f32.mrf.mxu0
  %v4355 = vadd.f32 %v4098, %v4354
  %v4356 = vpop.f32.mrf.mxu0
  %v4357 = vadd.f32 %v4098, %v4356
  %4358 = vdwg.mxu0
  %4359 = vmatpush.bf16.msra.mxu0 0
  %4360 = vmatpush.bf16.msra.mxu0 0
  %4361 = vmatpush.bf16.msra.mxu0 0
  %4362 = vmatpush.bf16.msra.mxu0 0
  %4363 = vmatpush.bf16.msra.mxu0 0
  %4364 = vmatpush.bf16.msra.mxu0 0
  %4365 = vmatpush.bf16.msra.mxu0 %v4243
  %4366 = vmatpush.bf16.msra.mxu0 %v4227
  %4367 = vmatmul.bf16.gmra.mxu0 %v4287
  %v4368 = vpop.f32.mrf.mxu0
  %v4369 = vadd.f32 %v4099, %v4368
  %v4370 = vpop.f32.mrf.mxu0
  %v4371 = vadd.f32 %v4099, %v4370
  %4372 = vdwg.mxu0
  %4373 = vmatpush.bf16.msra.mxu0 0
  %4374 = vmatpush.bf16.msra.mxu0 0
  %4375 = vmatpush.bf16.msra.mxu0 0
  %4376 = vmatpush.bf16.msra.mxu0 0
  %4377 = vmatpush.bf16.msra.mxu0 0
  %4378 = vmatpush.bf16.msra.mxu0 0
  %4379 = vmatpush.bf16.msra.mxu0 %v4244
  %4380 = vmatpush.bf16.msra.mxu0 %v4228
  %4381 = vmatmul.bf16.gmra.mxu0 %v4287
  %v4382 = vpop.f32.mrf.mxu0
  %v4383 = vadd.f32 %v4100, %v4382
  %v4384 = vpop.f32.mrf.mxu0
  %v4385 = vadd.f32 %v4100, %v4384
  %4386 = vdwg.mxu0
  %4387 = vmatpush.bf16.msra.mxu0 0
  %4388 = vmatpush.bf16.msra.mxu0 0
  %4389 = vmatpush.bf16.msra.mxu0 0
  %4390 = vmatpush.bf16.msra.mxu0 0
  %4391 = vmatpush.bf16.msra.mxu0 0
  %4392 = vmatpush.bf16.msra.mxu0 0
  %4393 = vmatpush.bf16.msra.mxu0 %v4245
  %4394 = vmatpush.bf16.msra.mxu0 %v4229
  %4395 = vmatmul.bf16.gmra.mxu0 %v4287
  %v4396 = vpop.f32.mrf.mxu0
  %v4397 = vadd.f32 %v4101, %v4396
  %v4398 = vpop.f32.mrf.mxu0
  %v4399 = vadd.f32 %v4101, %v4398
  %4400 = vdwg.mxu0
  %4401 = vmatpush.bf16.msra.mxu0 0
  %4402 = vmatpush.bf16.msra.mxu0 0
  %4403 = vmatpush.bf16.msra.mxu0 0
  %4404 = vmatpush.bf16.msra.mxu0 0
  %4405 = vmatpush.bf16.msra.mxu0 0
  %4406 = vmatpush.bf16.msra.mxu0 0
  %4407 = vmatpush.bf16.msra.mxu0 %v4246
  %4408 = vmatpush.bf16.msra.mxu0 %v4230
  %4409 = vmatmul.bf16.gmra.mxu0 %v4287
  %v4410 = vpop.f32.mrf.mxu0
  %v4411 = vadd.f32 %v4102, %v4410
  %v4412 = vpop.f32.mrf.mxu0
  %v4413 = vadd.f32 %v4102, %v4412
  %4414 = vdwg.mxu0
  %4415 = vmatpush.bf16.msra.mxu0 0
  %4416 = vmatpush.bf16.msra.mxu0 0
  %4417 = vmatpush.bf16.msra.mxu0 0
  %4418 = vmatpush.bf16.msra.mxu0 0
  %4419 = vmatpush.bf16.msra.mxu0 0
  %4420 = vmatpush.bf16.msra.mxu0 0
  %4421 = vmatpush.bf16.msra.mxu0 %v4247
  %4422 = vmatpush.bf16.msra.mxu0 %v4231
  %4423 = vmatmul.bf16.gmra.mxu0 %v4287
  %v4424 = vpop.f32.mrf.mxu0
  %v4425 = vadd.f32 %v4103, %v4424
  %v4426 = vpop.f32.mrf.mxu0
  %v4427 = vadd.f32 %v4103, %v4426
  %4428 = vdwg.mxu0
  %4429 = vmatpush.bf16.msra.mxu0 0
  %4430 = vmatpush.bf16.msra.mxu0 0
  %4431 = vmatpush.bf16.msra.mxu0 0
  %4432 = vmatpush.bf16.msra.mxu0 0
  %4433 = vmatpush.bf16.msra.mxu0 0
  %4434 = vmatpush.bf16.msra.mxu0 0
  %4435 = vmatpush.bf16.msra.mxu0 %v4248
  %4436 = vmatpush.bf16.msra.mxu0 %v4232
  %4437 = vmatmul.bf16.gmra.mxu0 %v4287
  %v4438 = vpop.f32.mrf.mxu0
  %v4439 = vadd.f32 %v4104, %v4438
  %v4440 = vpop.f32.mrf.mxu0
  %v4441 = vadd.f32 %v4104, %v4440
  %4442 = vdwg.mxu0
  %4443 = vmatpush.bf16.msra.mxu0 0
  %4444 = vmatpush.bf16.msra.mxu0 0
  %4445 = vmatpush.bf16.msra.mxu0 0
  %4446 = vmatpush.bf16.msra.mxu0 0
  %4447 = vmatpush.bf16.msra.mxu0 0
  %4448 = vmatpush.bf16.msra.mxu0 0
  %4449 = vmatpush.bf16.msra.mxu0 %v4249
  %4450 = vmatpush.bf16.msra.mxu0 %v4233
  %4451 = vmatmul.bf16.gmra.mxu0 %v4287
  %v4452 = vpop.f32.mrf.mxu0
  %v4453 = vadd.f32 %v4105, %v4452
  %v4454 = vpop.f32.mrf.mxu0
  %v4455 = vadd.f32 %v4105, %v4454
  %4456 = vdwg.mxu0
  %4457 = vmatpush.bf16.msra.mxu0 0
  %4458 = vmatpush.bf16.msra.mxu0 0
  %4459 = vmatpush.bf16.msra.mxu0 0
  %4460 = vmatpush.bf16.msra.mxu0 0
  %4461 = vmatpush.bf16.msra.mxu0 0
  %4462 = vmatpush.bf16.msra.mxu0 0
  %4463 = vmatpush.bf16.msra.mxu0 %v4250
  %4464 = vmatpush.bf16.msra.mxu0 %v4234
  %4465 = vmatmul.bf16.gmra.mxu0 %v4287
  %v4466 = vpop.f32.mrf.mxu0
  %v4467 = vadd.f32 %v4106, %v4466
  %v4468 = vpop.f32.mrf.mxu0
  %v4469 = vadd.f32 %v4106, %v4468
  %4470 = vdwg.mxu0
  %4471 = vmatpush.bf16.msra.mxu0 0
  %4472 = vmatpush.bf16.msra.mxu0 0
  %4473 = vmatpush.bf16.msra.mxu0 0
  %4474 = vmatpush.bf16.msra.mxu0 0
  %4475 = vmatpush.bf16.msra.mxu0 0
  %4476 = vmatpush.bf16.msra.mxu0 0
  %4477 = vmatpush.bf16.msra.mxu0 %v4251
  %4478 = vmatpush.bf16.msra.mxu0 %v4235
  %4479 = vmatmul.bf16.gmra.mxu0 %v4287
  %v4480 = vpop.f32.mrf.mxu0
  %v4481 = vadd.f32 %v4107, %v4480
  %v4482 = vpop.f32.mrf.mxu0
  %v4483 = vadd.f32 %v4107, %v4482
  %4484 = vdwg.mxu0
  %4485 = vmatpush.bf16.msra.mxu0 0
  %4486 = vmatpush.bf16.msra.mxu0 0
  %4487 = vmatpush.bf16.msra.mxu0 0
  %4488 = vmatpush.bf16.msra.mxu0 0
  %4489 = vmatpush.bf16.msra.mxu0 0
  %4490 = vmatpush.bf16.msra.mxu0 0
  %4491 = vmatpush.bf16.msra.mxu0 %v4252
  %4492 = vmatpush.bf16.msra.mxu0 %v4236
  %4493 = vmatmul.bf16.gmra.mxu0 %v4287
  %v4494 = vpop.f32.mrf.mxu0
  %v4495 = vadd.f32 %v4108, %v4494
  %v4496 = vpop.f32.mrf.mxu0
  %v4497 = vadd.f32 %v4108, %v4496
  %4498 = vdwg.mxu0
  %4499 = vmatpush.bf16.msra.mxu0 0
  %4500 = vmatpush.bf16.msra.mxu0 0
  %4501 = vmatpush.bf16.msra.mxu0 0
  %4502 = vmatpush.bf16.msra.mxu0 0
  %4503 = vmatpush.bf16.msra.mxu0 0
  %4504 = vmatpush.bf16.msra.mxu0 0
  %4505 = vmatpush.bf16.msra.mxu0 %v4253
  %4506 = vmatpush.bf16.msra.mxu0 %v4237
  %4507 = vmatmul.bf16.gmra.mxu0 %v4287
  %v4508 = vpop.f32.mrf.mxu0
  %v4509 = vadd.f32 %v4109, %v4508
  %v4510 = vpop.f32.mrf.mxu0
  %v4511 = vadd.f32 %v4109, %v4510
  %4512 = vdwg.mxu0
  %v4513 = vmax.f32 %v4299, 0.0
  %v4514 = vmax.f32 %v4313, 0.0
  %v4515 = vmax.f32 %v4327, 0.0
  %v4516 = vmax.f32 %v4341, 0.0
  %v4517 = vmax.f32 %v4355, 0.0
  %v4518 = vmax.f32 %v4369, 0.0
  %v4519 = vmax.f32 %v4383, 0.0
  %v4520 = vmax.f32 %v4397, 0.0
  %v4521 = vmax.f32 %v4411, 0.0
  %v4522 = vmax.f32 %v4425, 0.0
  %v4523 = vmax.f32 %v4439, 0.0
  %v4524 = vmax.f32 %v4453, 0.0
  %v4525 = vmax.f32 %v4467, 0.0
  %v4526 = vmax.f32 %v4481, 0.0
  %v4527 = vmax.f32 %v4495, 0.0
  %v4528 = vmax.f32 %v4509, 0.0
  %v4529 = vmax.f32 %v4301, 0.0
  %v4530 = vmax.f32 %v4315, 0.0
  %v4531 = vmax.f32 %v4329, 0.0
  %v4532 = vmax.f32 %v4343, 0.0
  %v4533 = vmax.f32 %v4357, 0.0
  %v4534 = vmax.f32 %v4371, 0.0
  %v4535 = vmax.f32 %v4385, 0.0
  %v4536 = vmax.f32 %v4399, 0.0
  %v4537 = vmax.f32 %v4413, 0.0
  %v4538 = vmax.f32 %v4427, 0.0
  %v4539 = vmax.f32 %v4441, 0.0
  %v4540 = vmax.f32 %v4455, 0.0
  %v4541 = vmax.f32 %v4469, 0.0
  %v4542 = vmax.f32 %v4483, 0.0
  %v4543 = vmax.f32 %v4497, 0.0
  %v4544 = vmax.f32 %v4511, 0.0
  %v4545 = vpack.c.bf16 %v4529, %v4513
  %v4546 = vpack.c.bf16 %v4530, %v4514
  %v4547 = vpack.c.bf16 %v4531, %v4515
  %v4548 = vpack.c.bf16 %v4532, %v4516
  %v4549 = vpack.c.bf16 %v4533, %v4517
  %v4550 = vpack.c.bf16 %v4534, %v4518
  %v4551 = vpack.c.bf16 %v4535, %v4519
  %v4552 = vpack.c.bf16 %v4536, %v4520
  %v4553 = vpack.c.bf16 %v4537, %v4521
  %v4554 = vpack.c.bf16 %v4538, %v4522
  %v4555 = vpack.c.bf16 %v4539, %v4523
  %v4556 = vpack.c.bf16 %v4540, %v4524
  %v4557 = vpack.c.bf16 %v4541, %v4525
  %v4558 = vpack.c.bf16 %v4542, %v4526
  %v4559 = vpack.c.bf16 %v4543, %v4527
  %v4560 = vpack.c.bf16 %v4544, %v4528
  %v4561 = vld [vmem:[%s43] sm:$0x1]
  %v4563 = vperm.slane %v4561, 0
  %v4821 = vunpack.c.l.b16 %v3833
  %v4822 = vunpack.c.l.b16 %v3834
  %v4823 = vunpack.c.l.b16 %v3835
  %v4824 = vunpack.c.l.b16 %v3836
  %v4825 = vunpack.c.l.b16 %v3837
  %v4826 = vunpack.c.l.b16 %v3838
  %v4827 = vunpack.c.l.b16 %v3839
  %v4828 = vunpack.c.l.b16 %v3840
  %v4829 = vunpack.c.l.b16 %v3841
  %v4830 = vunpack.c.l.b16 %v3842
  %v4831 = vunpack.c.l.b16 %v3843
  %v4832 = vunpack.c.l.b16 %v3844
  %v4833 = vunpack.c.l.b16 %v3845
  %v4834 = vunpack.c.l.b16 %v3846
  %v4835 = vunpack.c.l.b16 %v3847
  %v4836 = vunpack.c.l.b16 %v3848
  %v4837 = vunpack.c.l.b16 %v3849
  %v4838 = vunpack.c.l.b16 %v3850
  %v4839 = vunpack.c.l.b16 %v3851
  %v4840 = vunpack.c.l.b16 %v3852
  %v4841 = vunpack.c.l.b16 %v3853
  %v4842 = vunpack.c.l.b16 %v3854
  %v4843 = vunpack.c.l.b16 %v3855
  %v4844 = vunpack.c.l.b16 %v3856
  %v4845 = vunpack.c.l.b16 %v3857
  %v4846 = vunpack.c.l.b16 %v3858
  %v4847 = vunpack.c.l.b16 %v3859
  %v4848 = vunpack.c.l.b16 %v3860
  %v4849 = vunpack.c.l.b16 %v3861
  %v4850 = vunpack.c.l.b16 %v3862
  %v4851 = vunpack.c.l.b16 %v3863
  %v4852 = vunpack.c.l.b16 %v3864
  %v4853 = vunpack.c.l.b16 %v3865
  %v4854 = vunpack.c.l.b16 %v3866
  %v4855 = vunpack.c.l.b16 %v3867
  %v4856 = vunpack.c.l.b16 %v3868
  %v4857 = vunpack.c.l.b16 %v3869
  %v4858 = vunpack.c.l.b16 %v3870
  %v4859 = vunpack.c.l.b16 %v3871
  %v4860 = vunpack.c.l.b16 %v3872
  %v4861 = vunpack.c.l.b16 %v3873
  %v4862 = vunpack.c.l.b16 %v3874
  %v4863 = vunpack.c.l.b16 %v3875
  %v4864 = vunpack.c.l.b16 %v3876
  %v4865 = vunpack.c.l.b16 %v3877
  %v4866 = vunpack.c.l.b16 %v3878
  %v4867 = vunpack.c.l.b16 %v3879
  %v4868 = vunpack.c.l.b16 %v3880
  %v4869 = vunpack.c.l.b16 %v3881
  %v4870 = vunpack.c.l.b16 %v3882
  %v4871 = vunpack.c.l.b16 %v3883
  %v4872 = vunpack.c.l.b16 %v3884
  %v4873 = vunpack.c.l.b16 %v3885
  %v4874 = vunpack.c.l.b16 %v3886
  %v4875 = vunpack.c.l.b16 %v3887
  %v4876 = vunpack.c.l.b16 %v3888
  %v4877 = vunpack.c.l.b16 %v3889
  %v4878 = vunpack.c.l.b16 %v3890
  %v4879 = vunpack.c.l.b16 %v3891
  %v4880 = vunpack.c.l.b16 %v3892
  %v4881 = vunpack.c.l.b16 %v3893
  %v4882 = vunpack.c.l.b16 %v3894
  %v4883 = vunpack.c.l.b16 %v3895
  %v4884 = vunpack.c.l.b16 %v3896
  %v4885 = vunpack.c.l.b16 %v3897
  %v4886 = vunpack.c.l.b16 %v3898
  %v4887 = vunpack.c.l.b16 %v3899
  %v4888 = vunpack.c.l.b16 %v3900
  %v4889 = vunpack.c.l.b16 %v3901
  %v4890 = vunpack.c.l.b16 %v3902
  %v4891 = vunpack.c.l.b16 %v3903
  %v4892 = vunpack.c.l.b16 %v3904
  %v4893 = vunpack.c.l.b16 %v3905
  %v4894 = vunpack.c.l.b16 %v3906
  %v4895 = vunpack.c.l.b16 %v3907
  %v4896 = vunpack.c.l.b16 %v3908
  %v4897 = vunpack.c.l.b16 %v3909
  %v4898 = vunpack.c.l.b16 %v3910
  %v4899 = vunpack.c.l.b16 %v3911
  %v4900 = vunpack.c.l.b16 %v3912
  %v4901 = vunpack.c.l.b16 %v3913
  %v4902 = vunpack.c.l.b16 %v3914
  %v4903 = vunpack.c.l.b16 %v3915
  %v4904 = vunpack.c.l.b16 %v3916
  %v4905 = vunpack.c.l.b16 %v3917
  %v4906 = vunpack.c.l.b16 %v3918
  %v4907 = vunpack.c.l.b16 %v3919
  %v4908 = vunpack.c.l.b16 %v3920
  %v4909 = vunpack.c.l.b16 %v3921
  %v4910 = vunpack.c.l.b16 %v3922
  %v4911 = vunpack.c.l.b16 %v3923
  %v4912 = vunpack.c.l.b16 %v3924
  %v4913 = vunpack.c.l.b16 %v3925
  %v4914 = vunpack.c.l.b16 %v3926
  %v4915 = vunpack.c.l.b16 %v3927
  %v4916 = vunpack.c.l.b16 %v3928
  %v4917 = vunpack.c.l.b16 %v3929
  %v4918 = vunpack.c.l.b16 %v3930
  %v4919 = vunpack.c.l.b16 %v3931
  %v4920 = vunpack.c.l.b16 %v3932
  %v4921 = vunpack.c.l.b16 %v3933
  %v4922 = vunpack.c.l.b16 %v3934
  %v4923 = vunpack.c.l.b16 %v3935
  %v4924 = vunpack.c.l.b16 %v3936
  %v4925 = vunpack.c.l.b16 %v3937
  %v4926 = vunpack.c.l.b16 %v3938
  %v4927 = vunpack.c.l.b16 %v3939
  %v4928 = vunpack.c.l.b16 %v3940
  %v4929 = vunpack.c.l.b16 %v3941
  %v4930 = vunpack.c.l.b16 %v3942
  %v4931 = vunpack.c.l.b16 %v3943
  %v4932 = vunpack.c.l.b16 %v3944
  %v4933 = vunpack.c.l.b16 %v3945
  %v4934 = vunpack.c.l.b16 %v3946
  %v4935 = vunpack.c.l.b16 %v3947
  %v4936 = vunpack.c.l.b16 %v3948
  %v4937 = vunpack.c.l.b16 %v3949
  %v4938 = vunpack.c.l.b16 %v3950
  %v4939 = vunpack.c.l.b16 %v3951
  %v4940 = vunpack.c.l.b16 %v3952
  %v4941 = vunpack.c.l.b16 %v3953
  %v4942 = vunpack.c.l.b16 %v3954
  %v4943 = vunpack.c.l.b16 %v3955
  %v4944 = vunpack.c.l.b16 %v3956
  %v4945 = vunpack.c.l.b16 %v3957
  %v4946 = vunpack.c.l.b16 %v3958
  %v4947 = vunpack.c.l.b16 %v3959
  %v4948 = vunpack.c.l.b16 %v3960
  %v4949 = vunpack.c.l.b16 %v3961
  %v4950 = vunpack.c.l.b16 %v3962
  %v4951 = vunpack.c.l.b16 %v3963
  %v4952 = vunpack.c.l.b16 %v3964
  %v4953 = vunpack.c.l.b16 %v3965
  %v4954 = vunpack.c.l.b16 %v3966
  %v4955 = vunpack.c.l.b16 %v3967
  %v4956 = vunpack.c.l.b16 %v3968
  %v4957 = vunpack.c.l.b16 %v3969
  %v4958 = vunpack.c.l.b16 %v3970
  %v4959 = vunpack.c.l.b16 %v3971
  %v4960 = vunpack.c.l.b16 %v3972
  %v4961 = vunpack.c.l.b16 %v3973
  %v4962 = vunpack.c.l.b16 %v3974
  %v4963 = vunpack.c.l.b16 %v3975
  %v4964 = vunpack.c.l.b16 %v3976
  %v4965 = vunpack.c.l.b16 %v3977
  %v4966 = vunpack.c.l.b16 %v3978
  %v4967 = vunpack.c.l.b16 %v3979
  %v4968 = vunpack.c.l.b16 %v3980
  %v4969 = vunpack.c.l.b16 %v3981
  %v4970 = vunpack.c.l.b16 %v3982
  %v4971 = vunpack.c.l.b16 %v3983
  %v4972 = vunpack.c.l.b16 %v3984
  %v4973 = vunpack.c.l.b16 %v3985
  %v4974 = vunpack.c.l.b16 %v3986
  %v4975 = vunpack.c.l.b16 %v3987
  %v4976 = vunpack.c.l.b16 %v3988
  %v4977 = vunpack.c.l.b16 %v3989
  %v4978 = vunpack.c.l.b16 %v3990
  %v4979 = vunpack.c.l.b16 %v3991
  %v4980 = vunpack.c.l.b16 %v3992
  %v4981 = vunpack.c.l.b16 %v3993
  %v4982 = vunpack.c.l.b16 %v3994
  %v4983 = vunpack.c.l.b16 %v3995
  %v4984 = vunpack.c.l.b16 %v3996
  %v4985 = vunpack.c.l.b16 %v3997
  %v4986 = vunpack.c.l.b16 %v3998
  %v4987 = vunpack.c.l.b16 %v3999
  %v4988 = vunpack.c.l.b16 %v4000
  %v4989 = vunpack.c.l.b16 %v4001
  %v4990 = vunpack.c.l.b16 %v4002
  %v4991 = vunpack.c.l.b16 %v4003
  %v4992 = vunpack.c.l.b16 %v4004
  %v4993 = vunpack.c.l.b16 %v4005
  %v4994 = vunpack.c.l.b16 %v4006
  %v4995 = vunpack.c.l.b16 %v4007
  %v4996 = vunpack.c.l.b16 %v4008
  %v4997 = vunpack.c.l.b16 %v4009
  %v4998 = vunpack.c.l.b16 %v4010
  %v4999 = vunpack.c.l.b16 %v4011
  %v5000 = vunpack.c.l.b16 %v4012
  %v5001 = vunpack.c.l.b16 %v4013
  %v5002 = vunpack.c.l.b16 %v4014
  %v5003 = vunpack.c.l.b16 %v4015
  %v5004 = vunpack.c.l.b16 %v4016
  %v5005 = vunpack.c.l.b16 %v4017
  %v5006 = vunpack.c.l.b16 %v4018
  %v5007 = vunpack.c.l.b16 %v4019
  %v5008 = vunpack.c.l.b16 %v4020
  %v5009 = vunpack.c.l.b16 %v4021
  %v5010 = vunpack.c.l.b16 %v4022
  %v5011 = vunpack.c.l.b16 %v4023
  %v5012 = vunpack.c.l.b16 %v4024
  %v5013 = vunpack.c.l.b16 %v4025
  %v5014 = vunpack.c.l.b16 %v4026
  %v5015 = vunpack.c.l.b16 %v4027
  %v5016 = vunpack.c.l.b16 %v4028
  %v5017 = vunpack.c.l.b16 %v4029
  %v5018 = vunpack.c.l.b16 %v4030
  %v5019 = vunpack.c.l.b16 %v4031
  %v5020 = vunpack.c.l.b16 %v4032
  %v5021 = vunpack.c.l.b16 %v4033
  %v5022 = vunpack.c.l.b16 %v4034
  %v5023 = vunpack.c.l.b16 %v4035
  %v5024 = vunpack.c.l.b16 %v4036
  %v5025 = vunpack.c.l.b16 %v4037
  %v5026 = vunpack.c.l.b16 %v4038
  %v5027 = vunpack.c.l.b16 %v4039
  %v5028 = vunpack.c.l.b16 %v4040
  %v5029 = vunpack.c.l.b16 %v4041
  %v5030 = vunpack.c.l.b16 %v4042
  %v5031 = vunpack.c.l.b16 %v4043
  %v5032 = vunpack.c.l.b16 %v4044
  %v5033 = vunpack.c.l.b16 %v4045
  %v5034 = vunpack.c.l.b16 %v4046
  %v5035 = vunpack.c.l.b16 %v4047
  %v5036 = vunpack.c.l.b16 %v4048
  %v5037 = vunpack.c.l.b16 %v4049
  %v5038 = vunpack.c.l.b16 %v4050
  %v5039 = vunpack.c.l.b16 %v4051
  %v5040 = vunpack.c.l.b16 %v4052
  %v5041 = vunpack.c.l.b16 %v4053
  %v5042 = vunpack.c.l.b16 %v4054
  %v5043 = vunpack.c.l.b16 %v4055
  %v5044 = vunpack.c.l.b16 %v4056
  %v5045 = vunpack.c.l.b16 %v4057
  %v5046 = vunpack.c.l.b16 %v4058
  %v5047 = vunpack.c.l.b16 %v4059
  %v5048 = vunpack.c.l.b16 %v4060
  %v5049 = vunpack.c.l.b16 %v4061
  %v5050 = vunpack.c.l.b16 %v4062
  %v5051 = vunpack.c.l.b16 %v4063
  %v5052 = vunpack.c.l.b16 %v4064
  %v5053 = vunpack.c.l.b16 %v4065
  %v5054 = vunpack.c.l.b16 %v4066
  %v5055 = vunpack.c.l.b16 %v4067
  %v5056 = vunpack.c.l.b16 %v4068
  %v5057 = vunpack.c.l.b16 %v4069
  %v5058 = vunpack.c.l.b16 %v4070
  %v5059 = vunpack.c.l.b16 %v4071
  %v5060 = vunpack.c.l.b16 %v4072
  %v5061 = vunpack.c.l.b16 %v4073
  %v5062 = vunpack.c.l.b16 %v4074
  %v5063 = vunpack.c.l.b16 %v4075
  %v5064 = vunpack.c.l.b16 %v4076
  %v5065 = vunpack.c.l.b16 %v4077
  %v5066 = vunpack.c.l.b16 %v4078
  %v5067 = vunpack.c.l.b16 %v4079
  %v5068 = vunpack.c.l.b16 %v4080
  %v5069 = vunpack.c.l.b16 %v4081
  %v5070 = vunpack.c.l.b16 %v4082
  %v5071 = vunpack.c.l.b16 %v4083
  %v5072 = vunpack.c.l.b16 %v4084
  %v5073 = vunpack.c.l.b16 %v4085
  %v5074 = vunpack.c.l.b16 %v4086
  %v5075 = vunpack.c.l.b16 %v4087
  %v5076 = vunpack.c.l.b16 %v4088
  %v5077 = vpack.c.b16 %v4822, %v4821
  %v5078 = vpack.c.b16 %v4824, %v4823
  %v5079 = vpack.c.b16 %v4826, %v4825
  %v5080 = vpack.c.b16 %v4828, %v4827
  %v5081 = vpack.c.b16 %v4830, %v4829
  %v5082 = vpack.c.b16 %v4832, %v4831
  %v5083 = vpack.c.b16 %v4834, %v4833
  %v5084 = vpack.c.b16 %v4836, %v4835
  %v5085 = vpack.c.b16 %v4838, %v4837
  %v5086 = vpack.c.b16 %v4840, %v4839
  %v5087 = vpack.c.b16 %v4842, %v4841
  %v5088 = vpack.c.b16 %v4844, %v4843
  %v5089 = vpack.c.b16 %v4846, %v4845
  %v5090 = vpack.c.b16 %v4848, %v4847
  %v5091 = vpack.c.b16 %v4850, %v4849
  %v5092 = vpack.c.b16 %v4852, %v4851
  %v5093 = vpack.c.b16 %v4854, %v4853
  %v5094 = vpack.c.b16 %v4856, %v4855
  %v5095 = vpack.c.b16 %v4858, %v4857
  %v5096 = vpack.c.b16 %v4860, %v4859
  %v5097 = vpack.c.b16 %v4862, %v4861
  %v5098 = vpack.c.b16 %v4864, %v4863
  %v5099 = vpack.c.b16 %v4866, %v4865
  %v5100 = vpack.c.b16 %v4868, %v4867
  %v5101 = vpack.c.b16 %v4870, %v4869
  %v5102 = vpack.c.b16 %v4872, %v4871
  %v5103 = vpack.c.b16 %v4874, %v4873
  %v5104 = vpack.c.b16 %v4876, %v4875
  %v5105 = vpack.c.b16 %v4878, %v4877
  %v5106 = vpack.c.b16 %v4880, %v4879
  %v5107 = vpack.c.b16 %v4882, %v4881
  %v5108 = vpack.c.b16 %v4884, %v4883
  %v5109 = vpack.c.b16 %v4886, %v4885
  %v5110 = vpack.c.b16 %v4888, %v4887
  %v5111 = vpack.c.b16 %v4890, %v4889
  %v5112 = vpack.c.b16 %v4892, %v4891
  %v5113 = vpack.c.b16 %v4894, %v4893
  %v5114 = vpack.c.b16 %v4896, %v4895
  %v5115 = vpack.c.b16 %v4898, %v4897
  %v5116 = vpack.c.b16 %v4900, %v4899
  %v5117 = vpack.c.b16 %v4902, %v4901
  %v5118 = vpack.c.b16 %v4904, %v4903
  %v5119 = vpack.c.b16 %v4906, %v4905
  %v5120 = vpack.c.b16 %v4908, %v4907
  %v5121 = vpack.c.b16 %v4910, %v4909
  %v5122 = vpack.c.b16 %v4912, %v4911
  %v5123 = vpack.c.b16 %v4914, %v4913
  %v5124 = vpack.c.b16 %v4916, %v4915
  %v5125 = vpack.c.b16 %v4918, %v4917
  %v5126 = vpack.c.b16 %v4920, %v4919
  %v5127 = vpack.c.b16 %v4922, %v4921
  %v5128 = vpack.c.b16 %v4924, %v4923
  %v5129 = vpack.c.b16 %v4926, %v4925
  %v5130 = vpack.c.b16 %v4928, %v4927
  %v5131 = vpack.c.b16 %v4930, %v4929
  %v5132 = vpack.c.b16 %v4932, %v4931
  %v5133 = vpack.c.b16 %v4934, %v4933
  %v5134 = vpack.c.b16 %v4936, %v4935
  %v5135 = vpack.c.b16 %v4938, %v4937
  %v5136 = vpack.c.b16 %v4940, %v4939
  %v5137 = vpack.c.b16 %v4942, %v4941
  %v5138 = vpack.c.b16 %v4944, %v4943
  %v5139 = vpack.c.b16 %v4946, %v4945
  %v5140 = vpack.c.b16 %v4948, %v4947
  %v5141 = vpack.c.b16 %v4950, %v4949
  %v5142 = vpack.c.b16 %v4952, %v4951
  %v5143 = vpack.c.b16 %v4954, %v4953
  %v5144 = vpack.c.b16 %v4956, %v4955
  %v5145 = vpack.c.b16 %v4958, %v4957
  %v5146 = vpack.c.b16 %v4960, %v4959
  %v5147 = vpack.c.b16 %v4962, %v4961
  %v5148 = vpack.c.b16 %v4964, %v4963
  %v5149 = vpack.c.b16 %v4966, %v4965
  %v5150 = vpack.c.b16 %v4968, %v4967
  %v5151 = vpack.c.b16 %v4970, %v4969
  %v5152 = vpack.c.b16 %v4972, %v4971
  %v5153 = vpack.c.b16 %v4974, %v4973
  %v5154 = vpack.c.b16 %v4976, %v4975
  %v5155 = vpack.c.b16 %v4978, %v4977
  %v5156 = vpack.c.b16 %v4980, %v4979
  %v5157 = vpack.c.b16 %v4982, %v4981
  %v5158 = vpack.c.b16 %v4984, %v4983
  %v5159 = vpack.c.b16 %v4986, %v4985
  %v5160 = vpack.c.b16 %v4988, %v4987
  %v5161 = vpack.c.b16 %v4990, %v4989
  %v5162 = vpack.c.b16 %v4992, %v4991
  %v5163 = vpack.c.b16 %v4994, %v4993
  %v5164 = vpack.c.b16 %v4996, %v4995
  %v5165 = vpack.c.b16 %v4998, %v4997
  %v5166 = vpack.c.b16 %v5000, %v4999
  %v5167 = vpack.c.b16 %v5002, %v5001
  %v5168 = vpack.c.b16 %v5004, %v5003
  %v5169 = vpack.c.b16 %v5006, %v5005
  %v5170 = vpack.c.b16 %v5008, %v5007
  %v5171 = vpack.c.b16 %v5010, %v5009
  %v5172 = vpack.c.b16 %v5012, %v5011
  %v5173 = vpack.c.b16 %v5014, %v5013
  %v5174 = vpack.c.b16 %v5016, %v5015
  %v5175 = vpack.c.b16 %v5018, %v5017
  %v5176 = vpack.c.b16 %v5020, %v5019
  %v5177 = vpack.c.b16 %v5022, %v5021
  %v5178 = vpack.c.b16 %v5024, %v5023
  %v5179 = vpack.c.b16 %v5026, %v5025
  %v5180 = vpack.c.b16 %v5028, %v5027
  %v5181 = vpack.c.b16 %v5030, %v5029
  %v5182 = vpack.c.b16 %v5032, %v5031
  %v5183 = vpack.c.b16 %v5034, %v5033
  %v5184 = vpack.c.b16 %v5036, %v5035
  %v5185 = vpack.c.b16 %v5038, %v5037
  %v5186 = vpack.c.b16 %v5040, %v5039
  %v5187 = vpack.c.b16 %v5042, %v5041
  %v5188 = vpack.c.b16 %v5044, %v5043
  %v5189 = vpack.c.b16 %v5046, %v5045
  %v5190 = vpack.c.b16 %v5048, %v5047
  %v5191 = vpack.c.b16 %v5050, %v5049
  %v5192 = vpack.c.b16 %v5052, %v5051
  %v5193 = vpack.c.b16 %v5054, %v5053
  %v5194 = vpack.c.b16 %v5056, %v5055
  %v5195 = vpack.c.b16 %v5058, %v5057
  %v5196 = vpack.c.b16 %v5060, %v5059
  %v5197 = vpack.c.b16 %v5062, %v5061
  %v5198 = vpack.c.b16 %v5064, %v5063
  %v5199 = vpack.c.b16 %v5066, %v5065
  %v5200 = vpack.c.b16 %v5068, %v5067
  %v5201 = vpack.c.b16 %v5070, %v5069
  %v5202 = vpack.c.b16 %v5072, %v5071
  %v5203 = vpack.c.b16 %v5074, %v5073
  %v5204 = vpack.c.b16 %v5076, %v5075
  %5333 = vmatpush.bf16.msra.mxu0 %v5084
  %5334 = vmatpush.bf16.msra.mxu0 %v5083
  %5335 = vmatpush.bf16.msra.mxu0 %v5082
  %5336 = vmatpush.bf16.msra.mxu0 %v5081
  %5337 = vmatpush.bf16.msra.mxu0 %v5080
  %5338 = vmatpush.bf16.msra.mxu0 %v5079
  %5339 = vmatpush.bf16.msra.mxu0 %v5078
  %5340 = vmatpush.bf16.msra.mxu0 %v5077
  %5341 = vmatmul.bf16.gmra.mxu0 %v4545
  %v5342 = vpop.f32.mrf.mxu0
  %v5343 = vadd.f32 %v4563, %v5342
  %v5344 = vpop.f32.mrf.mxu0
  %v5345 = vadd.f32 %v4563, %v5344
  %5346 = vdwg.mxu0
  %5347 = vmatpush.bf16.msra.mxu0 %v5092
  %5348 = vmatpush.bf16.msra.mxu0 %v5091
  %5349 = vmatpush.bf16.msra.mxu0 %v5090
  %5350 = vmatpush.bf16.msra.mxu0 %v5089
  %5351 = vmatpush.bf16.msra.mxu0 %v5088
  %5352 = vmatpush.bf16.msra.mxu0 %v5087
  %5353 = vmatpush.bf16.msra.mxu0 %v5086
  %5354 = vmatpush.bf16.msra.mxu0 %v5085
  %5355 = vmatmul.bf16.gmra.mxu0 %v4546
  %v5356 = vpop.f32.mrf.mxu0
  %v5357 = vadd.f32 %v5343, %v5356
  %v5358 = vpop.f32.mrf.mxu0
  %v5359 = vadd.f32 %v5345, %v5358
  %5360 = vdwg.mxu0
  %5361 = vmatpush.bf16.msra.mxu0 %v5100
  %5362 = vmatpush.bf16.msra.mxu0 %v5099
  %5363 = vmatpush.bf16.msra.mxu0 %v5098
  %5364 = vmatpush.bf16.msra.mxu0 %v5097
  %5365 = vmatpush.bf16.msra.mxu0 %v5096
  %5366 = vmatpush.bf16.msra.mxu0 %v5095
  %5367 = vmatpush.bf16.msra.mxu0 %v5094
  %5368 = vmatpush.bf16.msra.mxu0 %v5093
  %5369 = vmatmul.bf16.gmra.mxu0 %v4547
  %v5370 = vpop.f32.mrf.mxu0
  %v5371 = vadd.f32 %v5357, %v5370
  %v5372 = vpop.f32.mrf.mxu0
  %v5373 = vadd.f32 %v5359, %v5372
  %5374 = vdwg.mxu0
  %5375 = vmatpush.bf16.msra.mxu0 %v5108
  %5376 = vmatpush.bf16.msra.mxu0 %v5107
  %5377 = vmatpush.bf16.msra.mxu0 %v5106
  %5378 = vmatpush.bf16.msra.mxu0 %v5105
  %5379 = vmatpush.bf16.msra.mxu0 %v5104
  %5380 = vmatpush.bf16.msra.mxu0 %v5103
  %5381 = vmatpush.bf16.msra.mxu0 %v5102
  %5382 = vmatpush.bf16.msra.mxu0 %v5101
  %5383 = vmatmul.bf16.gmra.mxu0 %v4548
  %v5384 = vpop.f32.mrf.mxu0
  %v5385 = vadd.f32 %v5371, %v5384
  %v5386 = vpop.f32.mrf.mxu0
  %v5387 = vadd.f32 %v5373, %v5386
  %5388 = vdwg.mxu0
  %5389 = vmatpush.bf16.msra.mxu0 %v5116
  %5390 = vmatpush.bf16.msra.mxu0 %v5115
  %5391 = vmatpush.bf16.msra.mxu0 %v5114
  %5392 = vmatpush.bf16.msra.mxu0 %v5113
  %5393 = vmatpush.bf16.msra.mxu0 %v5112
  %5394 = vmatpush.bf16.msra.mxu0 %v5111
  %5395 = vmatpush.bf16.msra.mxu0 %v5110
  %5396 = vmatpush.bf16.msra.mxu0 %v5109
  %5397 = vmatmul.bf16.gmra.mxu0 %v4549
  %v5398 = vpop.f32.mrf.mxu0
  %v5399 = vadd.f32 %v5385, %v5398
  %v5400 = vpop.f32.mrf.mxu0
  %v5401 = vadd.f32 %v5387, %v5400
  %5402 = vdwg.mxu0
  %5403 = vmatpush.bf16.msra.mxu0 %v5124
  %5404 = vmatpush.bf16.msra.mxu0 %v5123
  %5405 = vmatpush.bf16.msra.mxu0 %v5122
  %5406 = vmatpush.bf16.msra.mxu0 %v5121
  %5407 = vmatpush.bf16.msra.mxu0 %v5120
  %5408 = vmatpush.bf16.msra.mxu0 %v5119
  %5409 = vmatpush.bf16.msra.mxu0 %v5118
  %5410 = vmatpush.bf16.msra.mxu0 %v5117
  %5411 = vmatmul.bf16.gmra.mxu0 %v4550
  %v5412 = vpop.f32.mrf.mxu0
  %v5413 = vadd.f32 %v5399, %v5412
  %v5414 = vpop.f32.mrf.mxu0
  %v5415 = vadd.f32 %v5401, %v5414
  %5416 = vdwg.mxu0
  %5417 = vmatpush.bf16.msra.mxu0 %v5132
  %5418 = vmatpush.bf16.msra.mxu0 %v5131
  %5419 = vmatpush.bf16.msra.mxu0 %v5130
  %5420 = vmatpush.bf16.msra.mxu0 %v5129
  %5421 = vmatpush.bf16.msra.mxu0 %v5128
  %5422 = vmatpush.bf16.msra.mxu0 %v5127
  %5423 = vmatpush.bf16.msra.mxu0 %v5126
  %5424 = vmatpush.bf16.msra.mxu0 %v5125
  %5425 = vmatmul.bf16.gmra.mxu0 %v4551
  %v5426 = vpop.f32.mrf.mxu0
  %v5427 = vadd.f32 %v5413, %v5426
  %v5428 = vpop.f32.mrf.mxu0
  %v5429 = vadd.f32 %v5415, %v5428
  %5430 = vdwg.mxu0
  %5431 = vmatpush.bf16.msra.mxu0 %v5140
  %5432 = vmatpush.bf16.msra.mxu0 %v5139
  %5433 = vmatpush.bf16.msra.mxu0 %v5138
  %5434 = vmatpush.bf16.msra.mxu0 %v5137
  %5435 = vmatpush.bf16.msra.mxu0 %v5136
  %5436 = vmatpush.bf16.msra.mxu0 %v5135
  %5437 = vmatpush.bf16.msra.mxu0 %v5134
  %5438 = vmatpush.bf16.msra.mxu0 %v5133
  %5439 = vmatmul.bf16.gmra.mxu0 %v4552
  %v5440 = vpop.f32.mrf.mxu0
  %v5441 = vadd.f32 %v5427, %v5440
  %v5442 = vpop.f32.mrf.mxu0
  %v5443 = vadd.f32 %v5429, %v5442
  %5444 = vdwg.mxu0
  %5445 = vmatpush.bf16.msra.mxu0 %v5148
  %5446 = vmatpush.bf16.msra.mxu0 %v5147
  %5447 = vmatpush.bf16.msra.mxu0 %v5146
  %5448 = vmatpush.bf16.msra.mxu0 %v5145
  %5449 = vmatpush.bf16.msra.mxu0 %v5144
  %5450 = vmatpush.bf16.msra.mxu0 %v5143
  %5451 = vmatpush.bf16.msra.mxu0 %v5142
  %5452 = vmatpush.bf16.msra.mxu0 %v5141
  %5453 = vmatmul.bf16.gmra.mxu0 %v4553
  %v5454 = vpop.f32.mrf.mxu0
  %v5455 = vadd.f32 %v5441, %v5454
  %v5456 = vpop.f32.mrf.mxu0
  %v5457 = vadd.f32 %v5443, %v5456
  %5458 = vdwg.mxu0
  %5459 = vmatpush.bf16.msra.mxu0 %v5156
  %5460 = vmatpush.bf16.msra.mxu0 %v5155
  %5461 = vmatpush.bf16.msra.mxu0 %v5154
  %5462 = vmatpush.bf16.msra.mxu0 %v5153
  %5463 = vmatpush.bf16.msra.mxu0 %v5152
  %5464 = vmatpush.bf16.msra.mxu0 %v5151
  %5465 = vmatpush.bf16.msra.mxu0 %v5150
  %5466 = vmatpush.bf16.msra.mxu0 %v5149
  %5467 = vmatmul.bf16.gmra.mxu0 %v4554
  %v5468 = vpop.f32.mrf.mxu0
  %v5469 = vadd.f32 %v5455, %v5468
  %v5470 = vpop.f32.mrf.mxu0
  %v5471 = vadd.f32 %v5457, %v5470
  %5472 = vdwg.mxu0
  %5473 = vmatpush.bf16.msra.mxu0 %v5164
  %5474 = vmatpush.bf16.msra.mxu0 %v5163
  %5475 = vmatpush.bf16.msra.mxu0 %v5162
  %5476 = vmatpush.bf16.msra.mxu0 %v5161
  %5477 = vmatpush.bf16.msra.mxu0 %v5160
  %5478 = vmatpush.bf16.msra.mxu0 %v5159
  %5479 = vmatpush.bf16.msra.mxu0 %v5158
  %5480 = vmatpush.bf16.msra.mxu0 %v5157
  %5481 = vmatmul.bf16.gmra.mxu0 %v4555
  %v5482 = vpop.f32.mrf.mxu0
  %v5483 = vadd.f32 %v5469, %v5482
  %v5484 = vpop.f32.mrf.mxu0
  %v5485 = vadd.f32 %v5471, %v5484
  %5486 = vdwg.mxu0
  %5487 = vmatpush.bf16.msra.mxu0 %v5172
  %5488 = vmatpush.bf16.msra.mxu0 %v5171
  %5489 = vmatpush.bf16.msra.mxu0 %v5170
  %5490 = vmatpush.bf16.msra.mxu0 %v5169
  %5491 = vmatpush.bf16.msra.mxu0 %v5168
  %5492 = vmatpush.bf16.msra.mxu0 %v5167
  %5493 = vmatpush.bf16.msra.mxu0 %v5166
  %5494 = vmatpush.bf16.msra.mxu0 %v5165
  %5495 = vmatmul.bf16.gmra.mxu0 %v4556
  %v5496 = vpop.f32.mrf.mxu0
  %v5497 = vadd.f32 %v5483, %v5496
  %v5498 = vpop.f32.mrf.mxu0
  %v5499 = vadd.f32 %v5485, %v5498
  %5500 = vdwg.mxu0
  %5501 = vmatpush.bf16.msra.mxu0 %v5180
  %5502 = vmatpush.bf16.msra.mxu0 %v5179
  %5503 = vmatpush.bf16.msra.mxu0 %v5178
  %5504 = vmatpush.bf16.msra.mxu0 %v5177
  %5505 = vmatpush.bf16.msra.mxu0 %v5176
  %5506 = vmatpush.bf16.msra.mxu0 %v5175
  %5507 = vmatpush.bf16.msra.mxu0 %v5174
  %5508 = vmatpush.bf16.msra.mxu0 %v5173
  %5509 = vmatmul.bf16.gmra.mxu0 %v4557
  %v5510 = vpop.f32.mrf.mxu0
  %v5511 = vadd.f32 %v5497, %v5510
  %v5512 = vpop.f32.mrf.mxu0
  %v5513 = vadd.f32 %v5499, %v5512
  %5514 = vdwg.mxu0
  %5515 = vmatpush.bf16.msra.mxu0 %v5188
  %5516 = vmatpush.bf16.msra.mxu0 %v5187
  %5517 = vmatpush.bf16.msra.mxu0 %v5186
  %5518 = vmatpush.bf16.msra.mxu0 %v5185
  %5519 = vmatpush.bf16.msra.mxu0 %v5184
  %5520 = vmatpush.bf16.msra.mxu0 %v5183
  %5521 = vmatpush.bf16.msra.mxu0 %v5182
  %5522 = vmatpush.bf16.msra.mxu0 %v5181
  %5523 = vmatmul.bf16.gmra.mxu0 %v4558
  %v5524 = vpop.f32.mrf.mxu0
  %v5525 = vadd.f32 %v5511, %v5524
  %v5526 = vpop.f32.mrf.mxu0
  %v5527 = vadd.f32 %v5513, %v5526
  %5528 = vdwg.mxu0
  %5529 = vmatpush.bf16.msra.mxu0 %v5196
  %5530 = vmatpush.bf16.msra.mxu0 %v5195
  %5531 = vmatpush.bf16.msra.mxu0 %v5194
  %5532 = vmatpush.bf16.msra.mxu0 %v5193
  %5533 = vmatpush.bf16.msra.mxu0 %v5192
  %5534 = vmatpush.bf16.msra.mxu0 %v5191
  %5535 = vmatpush.bf16.msra.mxu0 %v5190
  %5536 = vmatpush.bf16.msra.mxu0 %v5189
  %5537 = vmatmul.bf16.gmra.mxu0 %v4559
  %v5538 = vpop.f32.mrf.mxu0
  %v5539 = vadd.f32 %v5525, %v5538
  %v5540 = vpop.f32.mrf.mxu0
  %v5541 = vadd.f32 %v5527, %v5540
  %5542 = vdwg.mxu0
  %5543 = vmatpush.bf16.msra.mxu0 %v5204
  %5544 = vmatpush.bf16.msra.mxu0 %v5203
  %5545 = vmatpush.bf16.msra.mxu0 %v5202
  %5546 = vmatpush.bf16.msra.mxu0 %v5201
  %5547 = vmatpush.bf16.msra.mxu0 %v5200
  %5548 = vmatpush.bf16.msra.mxu0 %v5199
  %5549 = vmatpush.bf16.msra.mxu0 %v5198
  %5550 = vmatpush.bf16.msra.mxu0 %v5197
  %5551 = vmatmul.bf16.gmra.mxu0 %v4560
  %v5552 = vpop.f32.mrf.mxu0
  %v5553 = vadd.f32 %v5539, %v5552
  %v5554 = vpop.f32.mrf.mxu0
  %v5555 = vadd.f32 %v5541, %v5554
  %5556 = vdwg.mxu0
  %v5557 = vadd.f32 %v3795, %v5553
  %v5558 = vadd.f32 %v3796, %v5555
  %v5559 = vld [vmem:[%s49] sm:$0x1]
  %v5560 = vld [vmem:[%s51] sm:$0x1]
  %v5561 = vsel %vm873, %v5557, 0.0
  %5562 = vadd.xlane.f32.xlu0 %v5561
  %v5563 = vpop.xlane.xlu0 %5562
  %v5564 = vsel %vm873, %v5558, 0.0
  %5565 = vadd.xlane.f32.xlu0 %v5564
  %v5566 = vpop.xlane.xlu0 %5565
  %v5567 = vmul.f32 %v5563, %v1370
  %v5568 = vmul.f32 %v5566, %v1370
  %v5569 = vmul.f32 %v5557, %v5557
  %v5570 = vmul.f32 %v5558, %v5558
  %v5571 = vsel %vm873, %v5569, 0.0
  %5572 = vadd.xlane.f32.xlu0 %v5571
  %v5573 = vpop.xlane.xlu0 %5572
  %v5574 = vsel %vm873, %v5570, 0.0
  %5575 = vadd.xlane.f32.xlu0 %v5574
  %v5576 = vpop.xlane.xlu0 %5575
  %v5577 = vmul.f32 %v5573, %v1370
  %v5578 = vmul.f32 %v5576, %v1370
  %v5579 = vmul.f32 %v5567, %v5567
  %v5580 = vmul.f32 %v5568, %v5568
  %v5581 = vsub.f32 %v5577, %v5579
  %v5582 = vsub.f32 %v5578, %v5580
  %v5583 = vsub.f32 %v5557, %v5567
  %v5584 = vsub.f32 %v5558, %v5568
  %v5585 = vadd.f32 %v5581, 1e-05
  %v5586 = vadd.f32 %v5582, 1e-05
  %v5587 = vrsqrt.pop %v5585
  %v5588 = vmul.f32 %v5587, %v5585
  %v5589 = vmul.f32 %v5588, %v5587
  %v5590 = vmul.f32 0.5, %v5589
  %v5591 = vsub.f32 1.5, %v5590
  %v5592 = vmul.f32 %v5587, %v5591
  %vm5593 = vweird.f32 %v5585
  %vm5594 = vweird.f32 %v5587
  %vm5595 = vmor %vm5593, %vm5594
  %v5596 = vsel %vm5595, %v5587, %v5592
  %v5597 = vrsqrt.pop %v5586
  %v5598 = vmul.f32 %v5597, %v5586
  %v5599 = vmul.f32 %v5598, %v5597
  %v5600 = vmul.f32 0.5, %v5599
  %v5601 = vsub.f32 1.5, %v5600
  %v5602 = vmul.f32 %v5597, %v5601
  %vm5603 = vweird.f32 %v5586
  %vm5604 = vweird.f32 %v5597
  %vm5605 = vmor %vm5603, %vm5604
  %v5606 = vsel %vm5605, %v5597, %v5602
  %v5607 = vmul.f32 %v5583, %v5596
  %v5608 = vmul.f32 %v5584, %v5606
  %v5610 = vperm.slane %v5559, 0
  %v5612 = vmul.f32 %v5607, %v5610
  %v5613 = vmul.f32 %v5608, %v5610
  %v5615 = vperm.slane %v5560, 0
  %v5617 = vadd.f32 %v5612, %v5615
  %v5618 = vadd.f32 %v5613, %v5615
  %v5619 = vld [vmem:[%s53] sm:$0xff]
  %v5620 = vld [vmem:[%s53 + $0x8] sm:$0xff]
  %v5621 = vld [vmem:[%s53 + $0x10] sm:$0xff]
  %v5622 = vld [vmem:[%s53 + $0x18] sm:$0xff]
  %v5623 = vld [vmem:[%s57] sm:$0xff]
  %v5624 = vld [vmem:[%s57 + $0x8] sm:$0xff]
  %v5625 = vld [vmem:[%s57 + $0x10] sm:$0xff]
  %v5626 = vld [vmem:[%s57 + $0x18] sm:$0xff]
  %v5627 = vld [vmem:[%s55] sm:$0xff]
  %v5628 = vld [vmem:[%s55 + $0x8] sm:$0xff]
  %v5629 = vld [vmem:[%s55 + $0x10] sm:$0xff]
  %v5630 = vld [vmem:[%s55 + $0x18] sm:$0xff]
  %v5631 = vld [vmem:[%s59] sm:$0xff]
  %v5632 = vld [vmem:[%s59 + $0x8] sm:$0xff]
  %v5633 = vld [vmem:[%s59 + $0x10] sm:$0xff]
  %v5634 = vld [vmem:[%s59 + $0x18] sm:$0xff]
  %v5635 = vld [vmem:[%s61] sm:$0xff]
  %v5636 = vld [vmem:[%s61 + $0x8] sm:$0xff]
  %v5637 = vld [vmem:[%s61 + $0x10] sm:$0xff]
  %v5638 = vld [vmem:[%s61 + $0x18] sm:$0xff]
  %v5640 = vsel %vm873, %v5617, 0
  %v5643 = vsel %vm873, %v5618, 0
  %5645 = vmatpush.msra.mxu0 0.0
  %5646 = vmatpush.msra.mxu0 0.0
  %5647 = vmatpush.msra.mxu0 0.0
  %5648 = vmatpush.msra.mxu0 0.0
  %5649 = vmatpush.msra.mxu0 0.0
  %5650 = vmatpush.msra.mxu0 0.0
  %5651 = vmatpush.msra.mxu0 0.0
  %5652 = vmatpush.msra.mxu0 0.0
  %5653 = vmatpush.msra.mxu0 0.0
  %5654 = vmatpush.msra.mxu0 0.0
  %5655 = vmatpush.msra.mxu0 0.0
  %5656 = vmatpush.msra.mxu0 0.0
  %5657 = vmatpush.msra.mxu0 %v5622
  %5658 = vmatpush.msra.mxu0 %v5621
  %5659 = vmatpush.msra.mxu0 %v5620
  %5660 = vmatpush.msra.mxu0 %v5619
  %5661 = vmatmul.f32.gmra.mxu0 %v5640
  %v5662 = vpop.f32.mrf.mxu0
  %v5663 = vadd.f32 0.0, %v5662
  %5664 = vmatmul.f32.gmra.mxu0 %v5643
  %v5665 = vpop.f32.mrf.mxu0
  %v5666 = vadd.f32 0.0, %v5665
  %5667 = vdwg.mxu0
  %v5669 = vsel %vm873, 0.0, 0
  %5671 = vmatpush.msra.mxu0 0.0
  %5672 = vmatpush.msra.mxu0 0.0
  %5673 = vmatpush.msra.mxu0 0.0
  %5674 = vmatpush.msra.mxu0 0.0
  %5675 = vmatpush.msra.mxu0 0.0
  %5676 = vmatpush.msra.mxu0 0.0
  %5677 = vmatpush.msra.mxu0 0.0
  %5678 = vmatpush.msra.mxu0 0.0
  %5679 = vmatpush.msra.mxu0 0.0
  %5680 = vmatpush.msra.mxu0 0.0
  %5681 = vmatpush.msra.mxu0 0.0
  %5682 = vmatpush.msra.mxu0 0.0
  %5683 = vmatpush.msra.mxu0 %v5630
  %5684 = vmatpush.msra.mxu0 %v5629
  %5685 = vmatpush.msra.mxu0 %v5628
  %5686 = vmatpush.msra.mxu0 %v5627
  %5687 = vmatmul.f32.gmra.mxu0 %v5669
  %v5688 = vpop.f32.mrf.mxu0
  %v5689 = vadd.f32 0.0, %v5688
  %5690 = vdwg.mxu0
  %v5692 = vrot.slane %v5689, 1
  %v5695 = vadd.f32 %v5663, %v5689
  %v5696 = vadd.f32 %v5666, %v5692
  %v5697 = vxor.u32 %v5695, 2147483648
  %v5698 = vxor.u32 %v5696, 2147483648
  %v5699 = vmul.f32 %v5697, 1.442695
  %v5700 = vpow.pop %v5699
  %v5701 = vmul.f32 %v5698, 1.442695
  %v5702 = vpow.pop %v5701
  %v5703 = vadd.f32 %v5700, 1.0
  %v5704 = vadd.f32 %v5702, 1.0
  %v5705 = vrcp.pop %v5703
  %v5706 = vmul.f32 %v5703, %v5705
  %v5707 = vsub.f32 1.0, %v5706
  %v5708 = vmul.f32 %v5705, %v5707
  %v5709 = vadd.f32 %v5705, %v5708
  %vm5710 = vweird.f32 %v5703
  %vm5711 = vweird.f32 %v5705
  %vm5712 = vmor %vm5710, %vm5711
  %v5713 = vsel %vm5712, %v5705, %v5709
  %v5714 = vand.u32 2147483647, %v5703
  %vm5715 = vcmp.eq.f32.partialorder %v5714, 8.507059e+37
  %v5716 = vand.u32 %v5703, 2147483648
  %v5717 = vor.u32 1.1754944e-38, %v5716
  %v5718 = vsel %vm5715, %v5717, %v5713
  %v5719 = vmul.f32 1.0, %v5718
  %v5720 = vrcp.pop %v5704
  %v5721 = vmul.f32 %v5704, %v5720
  %v5722 = vsub.f32 1.0, %v5721
  %v5723 = vmul.f32 %v5720, %v5722
  %v5724 = vadd.f32 %v5720, %v5723
  %vm5725 = vweird.f32 %v5704
  %vm5726 = vweird.f32 %v5720
  %vm5727 = vmor %vm5725, %vm5726
  %v5728 = vsel %vm5727, %v5720, %v5724
  %v5729 = vand.u32 2147483647, %v5704
  %vm5730 = vcmp.eq.f32.partialorder %v5729, 8.507059e+37
  %v5731 = vand.u32 %v5704, 2147483648
  %v5732 = vor.u32 1.1754944e-38, %v5731
  %v5733 = vsel %vm5730, %v5732, %v5728
  %v5734 = vmul.f32 1.0, %v5733
  %v5735 = vtanh.pop %v5695
  %v5736 = vtanh.pop %v5696
  %v5737 = vmul.f32 %v5719, 0.0
  %v5738 = vmul.f32 %v5734, 0.0
  %5741 = vrot.lane.b32.xlu0 %v5735, 32
  %v5742 = vpop.permute.xlu0 %5741
  %5743 = vrot.lane.b32.xlu0 %v5736, 32
  %v5744 = vpop.permute.xlu0 %5743
  %v5747 = vmul.f32 %v5719, %v5742
  %v5748 = vmul.f32 %v5734, %v5744
  %5751 = vrot.lane.b32.xlu0 %v5747, 32
  %v5752 = vpop.permute.xlu0 %5751
  %5753 = vrot.lane.b32.xlu0 %v5748, 32
  %v5754 = vpop.permute.xlu0 %5753
  %v5757 = vadd.f32 %v5737, %v5752
  %v5758 = vadd.f32 %v5738, %v5754
  %v5759 = vtanh.pop %v5757
  %v5760 = vtanh.pop %v5758
  %5763 = vrot.lane.b32.xlu0 %v5759, 32
  %v5764 = vpop.permute.xlu0 %5763
  %5765 = vrot.lane.b32.xlu0 %v5760, 32
  %v5766 = vpop.permute.xlu0 %5765
  %v5769 = vmul.f32 %v5719, %v5764
  %v5770 = vmul.f32 %v5734, %v5766
  %5771 = vmatpush.msra.mxu0 0.0
  %5772 = vmatpush.msra.mxu0 0.0
  %5773 = vmatpush.msra.mxu0 0.0
  %5774 = vmatpush.msra.mxu0 0.0
  %5775 = vmatpush.msra.mxu0 0.0
  %5776 = vmatpush.msra.mxu0 0.0
  %5777 = vmatpush.msra.mxu0 0.0
  %5778 = vmatpush.msra.mxu0 0.0
  %5779 = vmatpush.msra.mxu0 0.0
  %5780 = vmatpush.msra.mxu0 0.0
  %5781 = vmatpush.msra.mxu0 0.0
  %5782 = vmatpush.msra.mxu0 0.0
  %5783 = vmatpush.msra.mxu0 %v5634
  %5784 = vmatpush.msra.mxu0 %v5633
  %5785 = vmatpush.msra.mxu0 %v5632
  %5786 = vmatpush.msra.mxu0 %v5631
  %5787 = vmatmul.f32.gmra.mxu0 %v5669
  %v5788 = vpop.f32.mrf.mxu0
  %v5789 = vadd.f32 0.0, %v5788
  %5790 = vdwg.mxu0
  %v5793 = vrot.slane %v5770, 7
  %vm5794 = vcmask 1041409
  %v5795 = vsel %vm5794, %v5793, %v5769
  %5796 = vrot.lane.b32.xlu0 %v5795, 64
  %v5797 = vpop.permute.xlu0 %5796
  %v5798 = vsel %vm873, %v5797, 0
  %5800 = vmatpush.msra.mxu0 0.0
  %5801 = vmatpush.msra.mxu0 0.0
  %5802 = vmatpush.msra.mxu0 0.0
  %5803 = vmatpush.msra.mxu0 0.0
  %5804 = vmatpush.msra.mxu0 0.0
  %5805 = vmatpush.msra.mxu0 0.0
  %5806 = vmatpush.msra.mxu0 0.0
  %5807 = vmatpush.msra.mxu0 0.0
  %5808 = vmatpush.msra.mxu0 0.0
  %5809 = vmatpush.msra.mxu0 0.0
  %5810 = vmatpush.msra.mxu0 0.0
  %5811 = vmatpush.msra.mxu0 0.0
  %5812 = vmatpush.msra.mxu0 %v5626
  %5813 = vmatpush.msra.mxu0 %v5625
  %5814 = vmatpush.msra.mxu0 %v5624
  %5815 = vmatpush.msra.mxu0 %v5623
  %5816 = vmatmul.f32.gmra.mxu0 %v5798
  %v5817 = vpop.f32.mrf.mxu0
  %v5818 = vadd.f32 %v5789, %v5817
  %5819 = vdwg.mxu0
  %v5820 = vxor.u32 %v5818, 2147483648
  %v5821 = vmul.f32 %v5820, 1.442695
  %v5822 = vpow.pop %v5821
  %v5823 = vadd.f32 %v5822, 1.0
  %v5824 = vrcp.pop %v5823
  %v5825 = vmul.f32 %v5823, %v5824
  %v5826 = vsub.f32 1.0, %v5825
  %v5827 = vmul.f32 %v5824, %v5826
  %v5828 = vadd.f32 %v5824, %v5827
  %vm5829 = vweird.f32 %v5823
  %vm5830 = vweird.f32 %v5824
  %vm5831 = vmor %vm5829, %vm5830
  %v5832 = vsel %vm5831, %v5824, %v5828
  %v5833 = vand.u32 2147483647, %v5823
  %vm5834 = vcmp.eq.f32.partialorder %v5833, 8.507059e+37
  %v5835 = vand.u32 %v5823, 2147483648
  %v5836 = vor.u32 1.1754944e-38, %v5835
  %v5837 = vsel %vm5834, %v5836, %v5832
  %v5838 = vmul.f32 1.0, %v5837
  %v5839 = vtanh.pop %v5818
  %v5840 = vmul.f32 %v5838, 0.0
  %5842 = vrot.lane.b32.xlu0 %v5839, 32
  %v5843 = vpop.permute.xlu0 %5842
  %v5845 = vmul.f32 %v5838, %v5843
  %5847 = vrot.lane.b32.xlu0 %v5845, 32
  %v5848 = vpop.permute.xlu0 %5847
  %v5850 = vadd.f32 %v5840, %v5848
  %v5851 = vtanh.pop %v5850
  %5853 = vrot.lane.b32.xlu0 %v5851, 32
  %v5854 = vpop.permute.xlu0 %5853
  %v5856 = vmul.f32 %v5838, %v5854
  %5858 = vrot.lane.b32.xlu0 %v5856, 64
  %v5859 = vpop.permute.xlu0 %5858
  %v5860 = vsel %vm873, %v5859, 0
  %5862 = vmatpush.msra.mxu0 0.0
  %5863 = vmatpush.msra.mxu0 0.0
  %5864 = vmatpush.msra.mxu0 0.0
  %5865 = vmatpush.msra.mxu0 0.0
  %5866 = vmatpush.msra.mxu0 0.0
  %5867 = vmatpush.msra.mxu0 0.0
  %5868 = vmatpush.msra.mxu0 0.0
  %5869 = vmatpush.msra.mxu0 0.0
  %5870 = vmatpush.msra.mxu0 0.0
  %5871 = vmatpush.msra.mxu0 0.0
  %5872 = vmatpush.msra.mxu0 0.0
  %5873 = vmatpush.msra.mxu0 0.0
  %5874 = vmatpush.msra.mxu0 %v5638
  %5875 = vmatpush.msra.mxu0 %v5637
  %5876 = vmatpush.msra.mxu0 %v5636
  %5877 = vmatpush.msra.mxu0 %v5635
  %5878 = vmatmul.f32.gmra.mxu0 %v5860
  %v5879 = vpop.f32.mrf.mxu0
  %v5880 = vadd.f32 0.0, %v5879
  %5881 = vdwg.mxu0
  %v5883 = vrot.slane %v5880, 1
  %vm5885 = vcmask 24576
  %5886 = vst.msk [vmem:[%s63] sm:$0x1] %vm5885, %v5880
  %5887 = vst.msk [vmem:[%s63 + $0x8] sm:$0x1] %vm5885, %v5883
  %5888 = vmatpush.msra.mxu0 0.0
  %5889 = vmatpush.msra.mxu0 0.0
  %5890 = vmatpush.msra.mxu0 0.0
  %5891 = vmatpush.msra.mxu0 0.0
  %5892 = vmatpush.msra.mxu0 0.0
  %5893 = vmatpush.msra.mxu0 0.0
  %5894 = vmatpush.msra.mxu0 0.0
  %5895 = vmatpush.msra.mxu0 0.0
  %5896 = vmatpush.msra.mxu0 0.0
  %5897 = vmatpush.msra.mxu0 0.0
  %5898 = vmatpush.msra.mxu0 0.0
  %5899 = vmatpush.msra.mxu0 0.0
  %5900 = vmatpush.msra.mxu0 %v5630
  %5901 = vmatpush.msra.mxu0 %v5629
  %5902 = vmatpush.msra.mxu0 %v5628
  %5903 = vmatpush.msra.mxu0 %v5627
  %5904 = vmatmul.f32.gmra.mxu0 %v5798
  %v5905 = vpop.f32.mrf.mxu0
  %v5906 = vadd.f32 0.0, %v5905
  %5907 = vdwg.mxu0
  %v5909 = vrot.slane %v5906, 7
  %v5912 = vadd.f32 %v5663, %v5909
  %v5913 = vadd.f32 %v5666, %v5906
  %v5914 = vxor.u32 %v5912, 2147483648
  %v5915 = vxor.u32 %v5913, 2147483648
  %v5916 = vmul.f32 %v5914, 1.442695
  %v5917 = vpow.pop %v5916
  %v5918 = vmul.f32 %v5915, 1.442695
  %v5919 = vpow.pop %v5918
  %v5920 = vadd.f32 %v5917, 1.0
  %v5921 = vadd.f32 %v5919, 1.0
  %v5922 = vrcp.pop %v5920
  %v5923 = vmul.f32 %v5920, %v5922
  %v5924 = vsub.f32 1.0, %v5923
  %v5925 = vmul.f32 %v5922, %v5924
  %v5926 = vadd.f32 %v5922, %v5925
  %vm5927 = vweird.f32 %v5920
  %vm5928 = vweird.f32 %v5922
  %vm5929 = vmor %vm5927, %vm5928
  %v5930 = vsel %vm5929, %v5922, %v5926
  %v5931 = vand.u32 2147483647, %v5920
  %vm5932 = vcmp.eq.f32.partialorder %v5931, 8.507059e+37
  %v5933 = vand.u32 %v5920, 2147483648
  %v5934 = vor.u32 1.1754944e-38, %v5933
  %v5935 = vsel %vm5932, %v5934, %v5930
  %v5936 = vmul.f32 1.0, %v5935
  %v5937 = vrcp.pop %v5921
  %v5938 = vmul.f32 %v5921, %v5937
  %v5939 = vsub.f32 1.0, %v5938
  %v5940 = vmul.f32 %v5937, %v5939
  %v5941 = vadd.f32 %v5937, %v5940
  %vm5942 = vweird.f32 %v5921
  %vm5943 = vweird.f32 %v5937
  %vm5944 = vmor %vm5942, %vm5943
  %v5945 = vsel %vm5944, %v5937, %v5941
  %v5946 = vand.u32 2147483647, %v5921
  %vm5947 = vcmp.eq.f32.partialorder %v5946, 8.507059e+37
  %v5948 = vand.u32 %v5921, 2147483648
  %v5949 = vor.u32 1.1754944e-38, %v5948
  %v5950 = vsel %vm5947, %v5949, %v5945
  %v5951 = vmul.f32 1.0, %v5950
  %v5952 = vtanh.pop %v5912
  %v5953 = vtanh.pop %v5913
  %v5956 = vrot.slane %v5757, 7
  %v5957 = vrot.slane %v5758, 7
  %v5960 = vmul.f32 %v5936, %v5956
  %v5961 = vmul.f32 %v5951, %v5957
  %5964 = vrot.lane.b32.xlu0 %v5952, 32
  %v5965 = vpop.permute.xlu0 %5964
  %5966 = vrot.lane.b32.xlu0 %v5953, 32
  %v5967 = vpop.permute.xlu0 %5966
  %v5970 = vmul.f32 %v5936, %v5965
  %v5971 = vmul.f32 %v5951, %v5967
  %5974 = vrot.lane.b32.xlu0 %v5970, 32
  %v5975 = vpop.permute.xlu0 %5974
  %5976 = vrot.lane.b32.xlu0 %v5971, 32
  %v5977 = vpop.permute.xlu0 %5976
  %v5980 = vadd.f32 %v5960, %v5975
  %v5981 = vadd.f32 %v5961, %v5977
  %v5982 = vtanh.pop %v5980
  %v5983 = vtanh.pop %v5981
  %5986 = vrot.lane.b32.xlu0 %v5982, 32
  %v5987 = vpop.permute.xlu0 %5986
  %5988 = vrot.lane.b32.xlu0 %v5983, 32
  %v5989 = vpop.permute.xlu0 %5988
  %v5992 = vmul.f32 %v5936, %v5987
  %v5993 = vmul.f32 %v5951, %v5989
  %5994 = vmatpush.msra.mxu0 0.0
  %5995 = vmatpush.msra.mxu0 0.0
  %5996 = vmatpush.msra.mxu0 0.0
  %5997 = vmatpush.msra.mxu0 0.0
  %5998 = vmatpush.msra.mxu0 0.0
  %5999 = vmatpush.msra.mxu0 0.0
  %6000 = vmatpush.msra.mxu0 0.0
  %6001 = vmatpush.msra.mxu0 0.0
  %6002 = vmatpush.msra.mxu0 0.0
  %6003 = vmatpush.msra.mxu0 0.0
  %6004 = vmatpush.msra.mxu0 0.0
  %6005 = vmatpush.msra.mxu0 0.0
  %6006 = vmatpush.msra.mxu0 %v5634
  %6007 = vmatpush.msra.mxu0 %v5633
  %6008 = vmatpush.msra.mxu0 %v5632
  %6009 = vmatpush.msra.mxu0 %v5631
  %6010 = vmatmul.f32.gmra.mxu0 %v5860
  %v6011 = vpop.f32.mrf.mxu0
  %v6012 = vadd.f32 0.0, %v6011
  %6013 = vdwg.mxu0
  %v6016 = vrot.slane %v5992, 1
  %v6017 = vsel %vm5794, %v5993, %v6016
  %6018 = vrot.lane.b32.xlu0 %v6017, 64
  %v6019 = vpop.permute.xlu0 %6018
  %v6020 = vsel %vm873, %v6019, 0
  %6022 = vmatpush.msra.mxu0 0.0
  %6023 = vmatpush.msra.mxu0 0.0
  %6024 = vmatpush.msra.mxu0 0.0
  %6025 = vmatpush.msra.mxu0 0.0
  %6026 = vmatpush.msra.mxu0 0.0
  %6027 = vmatpush.msra.mxu0 0.0
  %6028 = vmatpush.msra.mxu0 0.0
  %6029 = vmatpush.msra.mxu0 0.0
  %6030 = vmatpush.msra.mxu0 0.0
  %6031 = vmatpush.msra.mxu0 0.0
  %6032 = vmatpush.msra.mxu0 0.0
  %6033 = vmatpush.msra.mxu0 0.0
  %6034 = vmatpush.msra.mxu0 %v5626
  %6035 = vmatpush.msra.mxu0 %v5625
  %6036 = vmatpush.msra.mxu0 %v5624
  %6037 = vmatpush.msra.mxu0 %v5623
  %6038 = vmatmul.f32.gmra.mxu0 %v6020
  %v6039 = vpop.f32.mrf.mxu0
  %v6040 = vadd.f32 %v6012, %v6039
  %6041 = vdwg.mxu0
  %v6042 = vxor.u32 %v6040, 2147483648
  %v6043 = vmul.f32 %v6042, 1.442695
  %v6044 = vpow.pop %v6043
  %v6045 = vadd.f32 %v6044, 1.0
  %v6046 = vrcp.pop %v6045
  %v6047 = vmul.f32 %v6045, %v6046
  %v6048 = vsub.f32 1.0, %v6047
  %v6049 = vmul.f32 %v6046, %v6048
  %v6050 = vadd.f32 %v6046, %v6049
  %vm6051 = vweird.f32 %v6045
  %vm6052 = vweird.f32 %v6046
  %vm6053 = vmor %vm6051, %vm6052
  %v6054 = vsel %vm6053, %v6046, %v6050
  %v6055 = vand.u32 2147483647, %v6045
  %vm6056 = vcmp.eq.f32.partialorder %v6055, 8.507059e+37
  %v6057 = vand.u32 %v6045, 2147483648
  %v6058 = vor.u32 1.1754944e-38, %v6057
  %v6059 = vsel %vm6056, %v6058, %v6054
  %v6060 = vmul.f32 1.0, %v6059
  %v6061 = vtanh.pop %v6040
  %v6062 = vmul.f32 %v6060, %v5850
  %6064 = vrot.lane.b32.xlu0 %v6061, 32
  %v6065 = vpop.permute.xlu0 %6064
  %v6067 = vmul.f32 %v6060, %v6065
  %6069 = vrot.lane.b32.xlu0 %v6067, 32
  %v6070 = vpop.permute.xlu0 %6069
  %v6072 = vadd.f32 %v6062, %v6070
  %v6073 = vtanh.pop %v6072
  %6075 = vrot.lane.b32.xlu0 %v6073, 32
  %v6076 = vpop.permute.xlu0 %6075
  %v6078 = vmul.f32 %v6060, %v6076
  %6080 = vrot.lane.b32.xlu0 %v6078, 64
  %v6081 = vpop.permute.xlu0 %6080
  %v6082 = vsel %vm873, %v6081, 0
  %6084 = vmatpush.msra.mxu0 0.0
  %6085 = vmatpush.msra.mxu0 0.0
  %6086 = vmatpush.msra.mxu0 0.0
  %6087 = vmatpush.msra.mxu0 0.0
  %6088 = vmatpush.msra.mxu0 0.0
  %6089 = vmatpush.msra.mxu0 0.0
  %6090 = vmatpush.msra.mxu0 0.0
  %6091 = vmatpush.msra.mxu0 0.0
  %6092 = vmatpush.msra.mxu0 0.0
  %6093 = vmatpush.msra.mxu0 0.0
  %6094 = vmatpush.msra.mxu0 0.0
  %6095 = vmatpush.msra.mxu0 0.0
  %6096 = vmatpush.msra.mxu0 %v5638
  %6097 = vmatpush.msra.mxu0 %v5637
  %6098 = vmatpush.msra.mxu0 %v5636
  %6099 = vmatpush.msra.mxu0 %v5635
  %6100 = vmatmul.f32.gmra.mxu0 %v6082
  %v6101 = vpop.f32.mrf.mxu0
  %v6102 = vadd.f32 0.0, %v6101
  %6103 = vdwg.mxu0
  %v6105 = vrot.slane %v6102, 1
  %6107 = vst.msk [vmem:[%s63 + $0x1] sm:$0x1] %vm5885, %v6102
  %6108 = vst.msk [vmem:[%s63 + $0x9] sm:$0x1] %vm5885, %v6105
  %6109 = vmatpush.msra.mxu0 0.0
  %6110 = vmatpush.msra.mxu0 0.0
  %6111 = vmatpush.msra.mxu0 0.0
  %6112 = vmatpush.msra.mxu0 0.0
  %6113 = vmatpush.msra.mxu0 0.0
  %6114 = vmatpush.msra.mxu0 0.0
  %6115 = vmatpush.msra.mxu0 0.0
  %6116 = vmatpush.msra.mxu0 0.0
  %6117 = vmatpush.msra.mxu0 0.0
  %6118 = vmatpush.msra.mxu0 0.0
  %6119 = vmatpush.msra.mxu0 0.0
  %6120 = vmatpush.msra.mxu0 0.0
  %6121 = vmatpush.msra.mxu0 %v5630
  %6122 = vmatpush.msra.mxu0 %v5629
  %6123 = vmatpush.msra.mxu0 %v5628
  %6124 = vmatpush.msra.mxu0 %v5627
  %6125 = vmatmul.f32.gmra.mxu0 %v6020
  %v6126 = vpop.f32.mrf.mxu0
  %v6127 = vadd.f32 0.0, %v6126
  %6128 = vdwg.mxu0
  %v6130 = vrot.slane %v6127, 6
  %v6131 = vrot.slane %v6127, 7
  %v6134 = vadd.f32 %v5663, %v6130
  %v6135 = vadd.f32 %v5666, %v6131
  %v6136 = vxor.u32 %v6134, 2147483648
  %v6137 = vxor.u32 %v6135, 2147483648
  %v6138 = vmul.f32 %v6136, 1.442695
  %v6139 = vpow.pop %v6138
  %v6140 = vmul.f32 %v6137, 1.442695
  %v6141 = vpow.pop %v6140
  %v6142 = vadd.f32 %v6139, 1.0
  %v6143 = vadd.f32 %v6141, 1.0
  %v6144 = vrcp.pop %v6142
  %v6145 = vmul.f32 %v6142, %v6144
  %v6146 = vsub.f32 1.0, %v6145
  %v6147 = vmul.f32 %v6144, %v6146
  %v6148 = vadd.f32 %v6144, %v6147
  %vm6149 = vweird.f32 %v6142
  %vm6150 = vweird.f32 %v6144
  %vm6151 = vmor %vm6149, %vm6150
  %v6152 = vsel %vm6151, %v6144, %v6148
  %v6153 = vand.u32 2147483647, %v6142
  %vm6154 = vcmp.eq.f32.partialorder %v6153, 8.507059e+37
  %v6155 = vand.u32 %v6142, 2147483648
  %v6156 = vor.u32 1.1754944e-38, %v6155
  %v6157 = vsel %vm6154, %v6156, %v6152
  %v6158 = vmul.f32 1.0, %v6157
  %v6159 = vrcp.pop %v6143
  %v6160 = vmul.f32 %v6143, %v6159
  %v6161 = vsub.f32 1.0, %v6160
  %v6162 = vmul.f32 %v6159, %v6161
  %v6163 = vadd.f32 %v6159, %v6162
  %vm6164 = vweird.f32 %v6143
  %vm6165 = vweird.f32 %v6159
  %vm6166 = vmor %vm6164, %vm6165
  %v6167 = vsel %vm6166, %v6159, %v6163
  %v6168 = vand.u32 2147483647, %v6143
  %vm6169 = vcmp.eq.f32.partialorder %v6168, 8.507059e+37
  %v6170 = vand.u32 %v6143, 2147483648
  %v6171 = vor.u32 1.1754944e-38, %v6170
  %v6172 = vsel %vm6169, %v6171, %v6167
  %v6173 = vmul.f32 1.0, %v6172
  %v6174 = vtanh.pop %v6134
  %v6175 = vtanh.pop %v6135
  %v6178 = vrot.slane %v5980, 7
  %v6179 = vrot.slane %v5981, 7
  %v6182 = vmul.f32 %v6158, %v6178
  %v6183 = vmul.f32 %v6173, %v6179
  %6186 = vrot.lane.b32.xlu0 %v6174, 32
  %v6187 = vpop.permute.xlu0 %6186
  %6188 = vrot.lane.b32.xlu0 %v6175, 32
  %v6189 = vpop.permute.xlu0 %6188
  %v6192 = vmul.f32 %v6158, %v6187
  %v6193 = vmul.f32 %v6173, %v6189
  %6196 = vrot.lane.b32.xlu0 %v6192, 32
  %v6197 = vpop.permute.xlu0 %6196
  %6198 = vrot.lane.b32.xlu0 %v6193, 32
  %v6199 = vpop.permute.xlu0 %6198
  %v6202 = vadd.f32 %v6182, %v6197
  %v6203 = vadd.f32 %v6183, %v6199
  %v6204 = vtanh.pop %v6202
  %v6205 = vtanh.pop %v6203
  %6208 = vrot.lane.b32.xlu0 %v6204, 32
  %v6209 = vpop.permute.xlu0 %6208
  %6210 = vrot.lane.b32.xlu0 %v6205, 32
  %v6211 = vpop.permute.xlu0 %6210
  %v6214 = vmul.f32 %v6158, %v6209
  %v6215 = vmul.f32 %v6173, %v6211
  %6216 = vmatpush.msra.mxu0 0.0
  %6217 = vmatpush.msra.mxu0 0.0
  %6218 = vmatpush.msra.mxu0 0.0
  %6219 = vmatpush.msra.mxu0 0.0
  %6220 = vmatpush.msra.mxu0 0.0
  %6221 = vmatpush.msra.mxu0 0.0
  %6222 = vmatpush.msra.mxu0 0.0
  %6223 = vmatpush.msra.mxu0 0.0
  %6224 = vmatpush.msra.mxu0 0.0
  %6225 = vmatpush.msra.mxu0 0.0
  %6226 = vmatpush.msra.mxu0 0.0
  %6227 = vmatpush.msra.mxu0 0.0
  %6228 = vmatpush.msra.mxu0 %v5634
  %6229 = vmatpush.msra.mxu0 %v5633
  %6230 = vmatpush.msra.mxu0 %v5632
  %6231 = vmatpush.msra.mxu0 %v5631
  %6232 = vmatmul.f32.gmra.mxu0 %v6082
  %v6233 = vpop.f32.mrf.mxu0
  %v6234 = vadd.f32 0.0, %v6233
  %6235 = vdwg.mxu0
  %v6238 = vrot.slane %v6214, 2
  %v6239 = vrot.slane %v6215, 1
  %v6240 = vsel %vm5794, %v6239, %v6238
  %6241 = vrot.lane.b32.xlu0 %v6240, 64
  %v6242 = vpop.permute.xlu0 %6241
  %v6243 = vsel %vm873, %v6242, 0
  %6245 = vmatpush.msra.mxu0 0.0
  %6246 = vmatpush.msra.mxu0 0.0
  %6247 = vmatpush.msra.mxu0 0.0
  %6248 = vmatpush.msra.mxu0 0.0
  %6249 = vmatpush.msra.mxu0 0.0
  %6250 = vmatpush.msra.mxu0 0.0
  %6251 = vmatpush.msra.mxu0 0.0
  %6252 = vmatpush.msra.mxu0 0.0
  %6253 = vmatpush.msra.mxu0 0.0
  %6254 = vmatpush.msra.mxu0 0.0
  %6255 = vmatpush.msra.mxu0 0.0
  %6256 = vmatpush.msra.mxu0 0.0
  %6257 = vmatpush.msra.mxu0 %v5626
  %6258 = vmatpush.msra.mxu0 %v5625
  %6259 = vmatpush.msra.mxu0 %v5624
  %6260 = vmatpush.msra.mxu0 %v5623
  %6261 = vmatmul.f32.gmra.mxu0 %v6243
  %v6262 = vpop.f32.mrf.mxu0
  %v6263 = vadd.f32 %v6234, %v6262
  %6264 = vdwg.mxu0
  %v6265 = vxor.u32 %v6263, 2147483648
  %v6266 = vmul.f32 %v6265, 1.442695
  %v6267 = vpow.pop %v6266
  %v6268 = vadd.f32 %v6267, 1.0
  %v6269 = vrcp.pop %v6268
  %v6270 = vmul.f32 %v6268, %v6269
  %v6271 = vsub.f32 1.0, %v6270
  %v6272 = vmul.f32 %v6269, %v6271
  %v6273 = vadd.f32 %v6269, %v6272
  %vm6274 = vweird.f32 %v6268
  %vm6275 = vweird.f32 %v6269
  %vm6276 = vmor %vm6274, %vm6275
  %v6277 = vsel %vm6276, %v6269, %v6273
  %v6278 = vand.u32 2147483647, %v6268
  %vm6279 = vcmp.eq.f32.partialorder %v6278, 8.507059e+37
  %v6280 = vand.u32 %v6268, 2147483648
  %v6281 = vor.u32 1.1754944e-38, %v6280
  %v6282 = vsel %vm6279, %v6281, %v6277
  %v6283 = vmul.f32 1.0, %v6282
  %v6284 = vtanh.pop %v6263
  %v6285 = vmul.f32 %v6283, %v6072
  %6287 = vrot.lane.b32.xlu0 %v6284, 32
  %v6288 = vpop.permute.xlu0 %6287
  %v6290 = vmul.f32 %v6283, %v6288
  %6292 = vrot.lane.b32.xlu0 %v6290, 32
  %v6293 = vpop.permute.xlu0 %6292
  %v6295 = vadd.f32 %v6285, %v6293
  %v6296 = vtanh.pop %v6295
  %6298 = vrot.lane.b32.xlu0 %v6296, 32
  %v6299 = vpop.permute.xlu0 %6298
  %v6301 = vmul.f32 %v6283, %v6299
  %6303 = vrot.lane.b32.xlu0 %v6301, 64
  %v6304 = vpop.permute.xlu0 %6303
  %v6305 = vsel %vm873, %v6304, 0
  %6307 = vmatpush.msra.mxu0 0.0
  %6308 = vmatpush.msra.mxu0 0.0
  %6309 = vmatpush.msra.mxu0 0.0
  %6310 = vmatpush.msra.mxu0 0.0
  %6311 = vmatpush.msra.mxu0 0.0
  %6312 = vmatpush.msra.mxu0 0.0
  %6313 = vmatpush.msra.mxu0 0.0
  %6314 = vmatpush.msra.mxu0 0.0
  %6315 = vmatpush.msra.mxu0 0.0
  %6316 = vmatpush.msra.mxu0 0.0
  %6317 = vmatpush.msra.mxu0 0.0
  %6318 = vmatpush.msra.mxu0 0.0
  %6319 = vmatpush.msra.mxu0 %v5638
  %6320 = vmatpush.msra.mxu0 %v5637
  %6321 = vmatpush.msra.mxu0 %v5636
  %6322 = vmatpush.msra.mxu0 %v5635
  %6323 = vmatmul.f32.gmra.mxu0 %v6305
  %v6324 = vpop.f32.mrf.mxu0
  %v6325 = vadd.f32 0.0, %v6324
  %6326 = vdwg.mxu0
  %v6328 = vrot.slane %v6325, 1
  %6330 = vst.msk [vmem:[%s63 + $0x2] sm:$0x1] %vm5885, %v6325
  %6331 = vst.msk [vmem:[%s63 + $0xa] sm:$0x1] %vm5885, %v6328
  %6332 = vmatpush.msra.mxu0 0.0
  %6333 = vmatpush.msra.mxu0 0.0
  %6334 = vmatpush.msra.mxu0 0.0
  %6335 = vmatpush.msra.mxu0 0.0
  %6336 = vmatpush.msra.mxu0 0.0
  %6337 = vmatpush.msra.mxu0 0.0
  %6338 = vmatpush.msra.mxu0 0.0
  %6339 = vmatpush.msra.mxu0 0.0
  %6340 = vmatpush.msra.mxu0 0.0
  %6341 = vmatpush.msra.mxu0 0.0
  %6342 = vmatpush.msra.mxu0 0.0
  %6343 = vmatpush.msra.mxu0 0.0
  %6344 = vmatpush.msra.mxu0 %v5630
  %6345 = vmatpush.msra.mxu0 %v5629
  %6346 = vmatpush.msra.mxu0 %v5628
  %6347 = vmatpush.msra.mxu0 %v5627
  %6348 = vmatmul.f32.gmra.mxu0 %v6243
  %v6349 = vpop.f32.mrf.mxu0
  %v6350 = vadd.f32 0.0, %v6349
  %6351 = vdwg.mxu0
  %v6353 = vrot.slane %v6350, 5
  %v6354 = vrot.slane %v6350, 6
  %v6357 = vadd.f32 %v5663, %v6353
  %v6358 = vadd.f32 %v5666, %v6354
  %v6359 = vxor.u32 %v6357, 2147483648
  %v6360 = vxor.u32 %v6358, 2147483648
  %v6361 = vmul.f32 %v6359, 1.442695
  %v6362 = vpow.pop %v6361
  %v6363 = vmul.f32 %v6360, 1.442695
  %v6364 = vpow.pop %v6363
  %v6365 = vadd.f32 %v6362, 1.0
  %v6366 = vadd.f32 %v6364, 1.0
  %v6367 = vrcp.pop %v6365
  %v6368 = vmul.f32 %v6365, %v6367
  %v6369 = vsub.f32 1.0, %v6368
  %v6370 = vmul.f32 %v6367, %v6369
  %v6371 = vadd.f32 %v6367, %v6370
  %vm6372 = vweird.f32 %v6365
  %vm6373 = vweird.f32 %v6367
  %vm6374 = vmor %vm6372, %vm6373
  %v6375 = vsel %vm6374, %v6367, %v6371
  %v6376 = vand.u32 2147483647, %v6365
  %vm6377 = vcmp.eq.f32.partialorder %v6376, 8.507059e+37
  %v6378 = vand.u32 %v6365, 2147483648
  %v6379 = vor.u32 1.1754944e-38, %v6378
  %v6380 = vsel %vm6377, %v6379, %v6375
  %v6381 = vmul.f32 1.0, %v6380
  %v6382 = vrcp.pop %v6366
  %v6383 = vmul.f32 %v6366, %v6382
  %v6384 = vsub.f32 1.0, %v6383
  %v6385 = vmul.f32 %v6382, %v6384
  %v6386 = vadd.f32 %v6382, %v6385
  %vm6387 = vweird.f32 %v6366
  %vm6388 = vweird.f32 %v6382
  %vm6389 = vmor %vm6387, %vm6388
  %v6390 = vsel %vm6389, %v6382, %v6386
  %v6391 = vand.u32 2147483647, %v6366
  %vm6392 = vcmp.eq.f32.partialorder %v6391, 8.507059e+37
  %v6393 = vand.u32 %v6366, 2147483648
  %v6394 = vor.u32 1.1754944e-38, %v6393
  %v6395 = vsel %vm6392, %v6394, %v6390
  %v6396 = vmul.f32 1.0, %v6395
  %v6397 = vtanh.pop %v6357
  %v6398 = vtanh.pop %v6358
  %v6401 = vrot.slane %v6202, 7
  %v6402 = vrot.slane %v6203, 7
  %v6405 = vmul.f32 %v6381, %v6401
  %v6406 = vmul.f32 %v6396, %v6402
  %6409 = vrot.lane.b32.xlu0 %v6397, 32
  %v6410 = vpop.permute.xlu0 %6409
  %6411 = vrot.lane.b32.xlu0 %v6398, 32
  %v6412 = vpop.permute.xlu0 %6411
  %v6415 = vmul.f32 %v6381, %v6410
  %v6416 = vmul.f32 %v6396, %v6412
  %6419 = vrot.lane.b32.xlu0 %v6415, 32
  %v6420 = vpop.permute.xlu0 %6419
  %6421 = vrot.lane.b32.xlu0 %v6416, 32
  %v6422 = vpop.permute.xlu0 %6421
  %v6425 = vadd.f32 %v6405, %v6420
  %v6426 = vadd.f32 %v6406, %v6422
  %v6427 = vtanh.pop %v6425
  %v6428 = vtanh.pop %v6426
  %6431 = vrot.lane.b32.xlu0 %v6427, 32
  %v6432 = vpop.permute.xlu0 %6431
  %6433 = vrot.lane.b32.xlu0 %v6428, 32
  %v6434 = vpop.permute.xlu0 %6433
  %v6437 = vmul.f32 %v6381, %v6432
  %v6438 = vmul.f32 %v6396, %v6434
  %6439 = vmatpush.msra.mxu0 0.0
  %6440 = vmatpush.msra.mxu0 0.0
  %6441 = vmatpush.msra.mxu0 0.0
  %6442 = vmatpush.msra.mxu0 0.0
  %6443 = vmatpush.msra.mxu0 0.0
  %6444 = vmatpush.msra.mxu0 0.0
  %6445 = vmatpush.msra.mxu0 0.0
  %6446 = vmatpush.msra.mxu0 0.0
  %6447 = vmatpush.msra.mxu0 0.0
  %6448 = vmatpush.msra.mxu0 0.0
  %6449 = vmatpush.msra.mxu0 0.0
  %6450 = vmatpush.msra.mxu0 0.0
  %6451 = vmatpush.msra.mxu0 %v5634
  %6452 = vmatpush.msra.mxu0 %v5633
  %6453 = vmatpush.msra.mxu0 %v5632
  %6454 = vmatpush.msra.mxu0 %v5631
  %6455 = vmatmul.f32.gmra.mxu0 %v6305
  %v6456 = vpop.f32.mrf.mxu0
  %v6457 = vadd.f32 0.0, %v6456
  %6458 = vdwg.mxu0
  %v6461 = vrot.slane %v6437, 3
  %v6462 = vrot.slane %v6438, 2
  %v6463 = vsel %vm5794, %v6462, %v6461
  %6464 = vrot.lane.b32.xlu0 %v6463, 64
  %v6465 = vpop.permute.xlu0 %6464
  %v6466 = vsel %vm873, %v6465, 0
  %6468 = vmatpush.msra.mxu0 0.0
  %6469 = vmatpush.msra.mxu0 0.0
  %6470 = vmatpush.msra.mxu0 0.0
  %6471 = vmatpush.msra.mxu0 0.0
  %6472 = vmatpush.msra.mxu0 0.0
  %6473 = vmatpush.msra.mxu0 0.0
  %6474 = vmatpush.msra.mxu0 0.0
  %6475 = vmatpush.msra.mxu0 0.0
  %6476 = vmatpush.msra.mxu0 0.0
  %6477 = vmatpush.msra.mxu0 0.0
  %6478 = vmatpush.msra.mxu0 0.0
  %6479 = vmatpush.msra.mxu0 0.0
  %6480 = vmatpush.msra.mxu0 %v5626
  %6481 = vmatpush.msra.mxu0 %v5625
  %6482 = vmatpush.msra.mxu0 %v5624
  %6483 = vmatpush.msra.mxu0 %v5623
  %6484 = vmatmul.f32.gmra.mxu0 %v6466
  %v6485 = vpop.f32.mrf.mxu0
  %v6486 = vadd.f32 %v6457, %v6485
  %6487 = vdwg.mxu0
  %v6488 = vxor.u32 %v6486, 2147483648
  %v6489 = vmul.f32 %v6488, 1.442695
  %v6490 = vpow.pop %v6489
  %v6491 = vadd.f32 %v6490, 1.0
  %v6492 = vrcp.pop %v6491
  %v6493 = vmul.f32 %v6491, %v6492
  %v6494 = vsub.f32 1.0, %v6493
  %v6495 = vmul.f32 %v6492, %v6494
  %v6496 = vadd.f32 %v6492, %v6495
  %vm6497 = vweird.f32 %v6491
  %vm6498 = vweird.f32 %v6492
  %vm6499 = vmor %vm6497, %vm6498
  %v6500 = vsel %vm6499, %v6492, %v6496
  %v6501 = vand.u32 2147483647, %v6491
  %vm6502 = vcmp.eq.f32.partialorder %v6501, 8.507059e+37
  %v6503 = vand.u32 %v6491, 2147483648
  %v6504 = vor.u32 1.1754944e-38, %v6503
  %v6505 = vsel %vm6502, %v6504, %v6500
  %v6506 = vmul.f32 1.0, %v6505
  %v6507 = vtanh.pop %v6486
  %v6508 = vmul.f32 %v6506, %v6295
  %6510 = vrot.lane.b32.xlu0 %v6507, 32
  %v6511 = vpop.permute.xlu0 %6510
  %v6513 = vmul.f32 %v6506, %v6511
  %6515 = vrot.lane.b32.xlu0 %v6513, 32
  %v6516 = vpop.permute.xlu0 %6515
  %v6518 = vadd.f32 %v6508, %v6516
  %v6519 = vtanh.pop %v6518
  %6521 = vrot.lane.b32.xlu0 %v6519, 32
  %v6522 = vpop.permute.xlu0 %6521
  %v6524 = vmul.f32 %v6506, %v6522
  %6526 = vrot.lane.b32.xlu0 %v6524, 64
  %v6527 = vpop.permute.xlu0 %6526
  %v6528 = vsel %vm873, %v6527, 0
  %6530 = vmatpush.msra.mxu0 0.0
  %6531 = vmatpush.msra.mxu0 0.0
  %6532 = vmatpush.msra.mxu0 0.0
  %6533 = vmatpush.msra.mxu0 0.0
  %6534 = vmatpush.msra.mxu0 0.0
  %6535 = vmatpush.msra.mxu0 0.0
  %6536 = vmatpush.msra.mxu0 0.0
  %6537 = vmatpush.msra.mxu0 0.0
  %6538 = vmatpush.msra.mxu0 0.0
  %6539 = vmatpush.msra.mxu0 0.0
  %6540 = vmatpush.msra.mxu0 0.0
  %6541 = vmatpush.msra.mxu0 0.0
  %6542 = vmatpush.msra.mxu0 %v5638
  %6543 = vmatpush.msra.mxu0 %v5637
  %6544 = vmatpush.msra.mxu0 %v5636
  %6545 = vmatpush.msra.mxu0 %v5635
  %6546 = vmatmul.f32.gmra.mxu0 %v6528
  %v6547 = vpop.f32.mrf.mxu0
  %v6548 = vadd.f32 0.0, %v6547
  %6549 = vdwg.mxu0
  %v6551 = vrot.slane %v6548, 1
  %6553 = vst.msk [vmem:[%s63 + $0x3] sm:$0x1] %vm5885, %v6548
  %6554 = vst.msk [vmem:[%s63 + $0xb] sm:$0x1] %vm5885, %v6551
  %6555 = vmatpush.msra.mxu0 0.0
  %6556 = vmatpush.msra.mxu0 0.0
  %6557 = vmatpush.msra.mxu0 0.0
  %6558 = vmatpush.msra.mxu0 0.0
  %6559 = vmatpush.msra.mxu0 0.0
  %6560 = vmatpush.msra.mxu0 0.0
  %6561 = vmatpush.msra.mxu0 0.0
  %6562 = vmatpush.msra.mxu0 0.0
  %6563 = vmatpush.msra.mxu0 0.0
  %6564 = vmatpush.msra.mxu0 0.0
  %6565 = vmatpush.msra.mxu0 0.0
  %6566 = vmatpush.msra.mxu0 0.0
  %6567 = vmatpush.msra.mxu0 %v5630
  %6568 = vmatpush.msra.mxu0 %v5629
  %6569 = vmatpush.msra.mxu0 %v5628
  %6570 = vmatpush.msra.mxu0 %v5627
  %6571 = vmatmul.f32.gmra.mxu0 %v6466
  %v6572 = vpop.f32.mrf.mxu0
  %v6573 = vadd.f32 0.0, %v6572
  %6574 = vdwg.mxu0
  %v6576 = vrot.slane %v6573, 4
  %v6577 = vrot.slane %v6573, 5
  %v6580 = vadd.f32 %v5663, %v6576
  %v6581 = vadd.f32 %v5666, %v6577
  %v6582 = vxor.u32 %v6580, 2147483648
  %v6583 = vxor.u32 %v6581, 2147483648
  %v6584 = vmul.f32 %v6582, 1.442695
  %v6585 = vpow.pop %v6584
  %v6586 = vmul.f32 %v6583, 1.442695
  %v6587 = vpow.pop %v6586
  %v6588 = vadd.f32 %v6585, 1.0
  %v6589 = vadd.f32 %v6587, 1.0
  %v6590 = vrcp.pop %v6588
  %v6591 = vmul.f32 %v6588, %v6590
  %v6592 = vsub.f32 1.0, %v6591
  %v6593 = vmul.f32 %v6590, %v6592
  %v6594 = vadd.f32 %v6590, %v6593
  %vm6595 = vweird.f32 %v6588
  %vm6596 = vweird.f32 %v6590
  %vm6597 = vmor %vm6595, %vm6596
  %v6598 = vsel %vm6597, %v6590, %v6594
  %v6599 = vand.u32 2147483647, %v6588
  %vm6600 = vcmp.eq.f32.partialorder %v6599, 8.507059e+37
  %v6601 = vand.u32 %v6588, 2147483648
  %v6602 = vor.u32 1.1754944e-38, %v6601
  %v6603 = vsel %vm6600, %v6602, %v6598
  %v6604 = vmul.f32 1.0, %v6603
  %v6605 = vrcp.pop %v6589
  %v6606 = vmul.f32 %v6589, %v6605
  %v6607 = vsub.f32 1.0, %v6606
  %v6608 = vmul.f32 %v6605, %v6607
  %v6609 = vadd.f32 %v6605, %v6608
  %vm6610 = vweird.f32 %v6589
  %vm6611 = vweird.f32 %v6605
  %vm6612 = vmor %vm6610, %vm6611
  %v6613 = vsel %vm6612, %v6605, %v6609
  %v6614 = vand.u32 2147483647, %v6589
  %vm6615 = vcmp.eq.f32.partialorder %v6614, 8.507059e+37
  %v6616 = vand.u32 %v6589, 2147483648
  %v6617 = vor.u32 1.1754944e-38, %v6616
  %v6618 = vsel %vm6615, %v6617, %v6613
  %v6619 = vmul.f32 1.0, %v6618
  %v6620 = vtanh.pop %v6580
  %v6621 = vtanh.pop %v6581
  %v6624 = vrot.slane %v6425, 7
  %v6625 = vrot.slane %v6426, 7
  %v6628 = vmul.f32 %v6604, %v6624
  %v6629 = vmul.f32 %v6619, %v6625
  %6632 = vrot.lane.b32.xlu0 %v6620, 32
  %v6633 = vpop.permute.xlu0 %6632
  %6634 = vrot.lane.b32.xlu0 %v6621, 32
  %v6635 = vpop.permute.xlu0 %6634
  %v6638 = vmul.f32 %v6604, %v6633
  %v6639 = vmul.f32 %v6619, %v6635
  %6642 = vrot.lane.b32.xlu0 %v6638, 32
  %v6643 = vpop.permute.xlu0 %6642
  %6644 = vrot.lane.b32.xlu0 %v6639, 32
  %v6645 = vpop.permute.xlu0 %6644
  %v6648 = vadd.f32 %v6628, %v6643
  %v6649 = vadd.f32 %v6629, %v6645
  %v6650 = vtanh.pop %v6648
  %v6651 = vtanh.pop %v6649
  %6654 = vrot.lane.b32.xlu0 %v6650, 32
  %v6655 = vpop.permute.xlu0 %6654
  %6656 = vrot.lane.b32.xlu0 %v6651, 32
  %v6657 = vpop.permute.xlu0 %6656
  %v6660 = vmul.f32 %v6604, %v6655
  %v6661 = vmul.f32 %v6619, %v6657
  %6662 = vmatpush.msra.mxu0 0.0
  %6663 = vmatpush.msra.mxu0 0.0
  %6664 = vmatpush.msra.mxu0 0.0
  %6665 = vmatpush.msra.mxu0 0.0
  %6666 = vmatpush.msra.mxu0 0.0
  %6667 = vmatpush.msra.mxu0 0.0
  %6668 = vmatpush.msra.mxu0 0.0
  %6669 = vmatpush.msra.mxu0 0.0
  %6670 = vmatpush.msra.mxu0 0.0
  %6671 = vmatpush.msra.mxu0 0.0
  %6672 = vmatpush.msra.mxu0 0.0
  %6673 = vmatpush.msra.mxu0 0.0
  %6674 = vmatpush.msra.mxu0 %v5634
  %6675 = vmatpush.msra.mxu0 %v5633
  %6676 = vmatpush.msra.mxu0 %v5632
  %6677 = vmatpush.msra.mxu0 %v5631
  %6678 = vmatmul.f32.gmra.mxu0 %v6528
  %v6679 = vpop.f32.mrf.mxu0
  %v6680 = vadd.f32 0.0, %v6679
  %6681 = vdwg.mxu0
  %v6684 = vrot.slane %v6660, 4
  %v6685 = vrot.slane %v6661, 3
  %v6686 = vsel %vm5794, %v6685, %v6684
  %6687 = vrot.lane.b32.xlu0 %v6686, 64
  %v6688 = vpop.permute.xlu0 %6687
  %v6689 = vsel %vm873, %v6688, 0
  %6691 = vmatpush.msra.mxu0 0.0
  %6692 = vmatpush.msra.mxu0 0.0
  %6693 = vmatpush.msra.mxu0 0.0
  %6694 = vmatpush.msra.mxu0 0.0
  %6695 = vmatpush.msra.mxu0 0.0
  %6696 = vmatpush.msra.mxu0 0.0
  %6697 = vmatpush.msra.mxu0 0.0
  %6698 = vmatpush.msra.mxu0 0.0
  %6699 = vmatpush.msra.mxu0 0.0
  %6700 = vmatpush.msra.mxu0 0.0
  %6701 = vmatpush.msra.mxu0 0.0
  %6702 = vmatpush.msra.mxu0 0.0
  %6703 = vmatpush.msra.mxu0 %v5626
  %6704 = vmatpush.msra.mxu0 %v5625
  %6705 = vmatpush.msra.mxu0 %v5624
  %6706 = vmatpush.msra.mxu0 %v5623
  %6707 = vmatmul.f32.gmra.mxu0 %v6689
  %v6708 = vpop.f32.mrf.mxu0
  %v6709 = vadd.f32 %v6680, %v6708
  %6710 = vdwg.mxu0
  %v6711 = vxor.u32 %v6709, 2147483648
  %v6712 = vmul.f32 %v6711, 1.442695
  %v6713 = vpow.pop %v6712
  %v6714 = vadd.f32 %v6713, 1.0
  %v6715 = vrcp.pop %v6714
  %v6716 = vmul.f32 %v6714, %v6715
  %v6717 = vsub.f32 1.0, %v6716
  %v6718 = vmul.f32 %v6715, %v6717
  %v6719 = vadd.f32 %v6715, %v6718
  %vm6720 = vweird.f32 %v6714
  %vm6721 = vweird.f32 %v6715
  %vm6722 = vmor %vm6720, %vm6721
  %v6723 = vsel %vm6722, %v6715, %v6719
  %v6724 = vand.u32 2147483647, %v6714
  %vm6725 = vcmp.eq.f32.partialorder %v6724, 8.507059e+37
  %v6726 = vand.u32 %v6714, 2147483648
  %v6727 = vor.u32 1.1754944e-38, %v6726
  %v6728 = vsel %vm6725, %v6727, %v6723
  %v6729 = vmul.f32 1.0, %v6728
  %v6730 = vtanh.pop %v6709
  %v6731 = vmul.f32 %v6729, %v6518
  %6733 = vrot.lane.b32.xlu0 %v6730, 32
  %v6734 = vpop.permute.xlu0 %6733
  %v6736 = vmul.f32 %v6729, %v6734
  %6738 = vrot.lane.b32.xlu0 %v6736, 32
  %v6739 = vpop.permute.xlu0 %6738
  %v6741 = vadd.f32 %v6731, %v6739
  %v6742 = vtanh.pop %v6741
  %6744 = vrot.lane.b32.xlu0 %v6742, 32
  %v6745 = vpop.permute.xlu0 %6744
  %v6747 = vmul.f32 %v6729, %v6745
  %6749 = vrot.lane.b32.xlu0 %v6747, 64
  %v6750 = vpop.permute.xlu0 %6749
  %v6751 = vsel %vm873, %v6750, 0
  %6753 = vmatpush.msra.mxu0 0.0
  %6754 = vmatpush.msra.mxu0 0.0
  %6755 = vmatpush.msra.mxu0 0.0
  %6756 = vmatpush.msra.mxu0 0.0
  %6757 = vmatpush.msra.mxu0 0.0
  %6758 = vmatpush.msra.mxu0 0.0
  %6759 = vmatpush.msra.mxu0 0.0
  %6760 = vmatpush.msra.mxu0 0.0
  %6761 = vmatpush.msra.mxu0 0.0
  %6762 = vmatpush.msra.mxu0 0.0
  %6763 = vmatpush.msra.mxu0 0.0
  %6764 = vmatpush.msra.mxu0 0.0
  %6765 = vmatpush.msra.mxu0 %v5638
  %6766 = vmatpush.msra.mxu0 %v5637
  %6767 = vmatpush.msra.mxu0 %v5636
  %6768 = vmatpush.msra.mxu0 %v5635
  %6769 = vmatmul.f32.gmra.mxu0 %v6751
  %v6770 = vpop.f32.mrf.mxu0
  %v6771 = vadd.f32 0.0, %v6770
  %6772 = vdwg.mxu0
  %v6774 = vrot.slane %v6771, 1
  %6776 = vst.msk [vmem:[%s63 + $0x4] sm:$0x1] %vm5885, %v6771
  %6777 = vst.msk [vmem:[%s63 + $0xc] sm:$0x1] %vm5885, %v6774
  %6778 = vmatpush.msra.mxu0 0.0
  %6779 = vmatpush.msra.mxu0 0.0
  %6780 = vmatpush.msra.mxu0 0.0
  %6781 = vmatpush.msra.mxu0 0.0
  %6782 = vmatpush.msra.mxu0 0.0
  %6783 = vmatpush.msra.mxu0 0.0
  %6784 = vmatpush.msra.mxu0 0.0
  %6785 = vmatpush.msra.mxu0 0.0
  %6786 = vmatpush.msra.mxu0 0.0
  %6787 = vmatpush.msra.mxu0 0.0
  %6788 = vmatpush.msra.mxu0 0.0
  %6789 = vmatpush.msra.mxu0 0.0
  %6790 = vmatpush.msra.mxu0 %v5630
  %6791 = vmatpush.msra.mxu0 %v5629
  %6792 = vmatpush.msra.mxu0 %v5628
  %6793 = vmatpush.msra.mxu0 %v5627
  %6794 = vmatmul.f32.gmra.mxu0 %v6689
  %v6795 = vpop.f32.mrf.mxu0
  %v6796 = vadd.f32 0.0, %v6795
  %6797 = vdwg.mxu0
  %v6799 = vrot.slane %v6796, 3
  %v6800 = vrot.slane %v6796, 4
  %v6803 = vadd.f32 %v5663, %v6799
  %v6804 = vadd.f32 %v5666, %v6800
  %v6805 = vxor.u32 %v6803, 2147483648
  %v6806 = vxor.u32 %v6804, 2147483648
  %v6807 = vmul.f32 %v6805, 1.442695
  %v6808 = vpow.pop %v6807
  %v6809 = vmul.f32 %v6806, 1.442695
  %v6810 = vpow.pop %v6809
  %v6811 = vadd.f32 %v6808, 1.0
  %v6812 = vadd.f32 %v6810, 1.0
  %v6813 = vrcp.pop %v6811
  %v6814 = vmul.f32 %v6811, %v6813
  %v6815 = vsub.f32 1.0, %v6814
  %v6816 = vmul.f32 %v6813, %v6815
  %v6817 = vadd.f32 %v6813, %v6816
  %vm6818 = vweird.f32 %v6811
  %vm6819 = vweird.f32 %v6813
  %vm6820 = vmor %vm6818, %vm6819
  %v6821 = vsel %vm6820, %v6813, %v6817
  %v6822 = vand.u32 2147483647, %v6811
  %vm6823 = vcmp.eq.f32.partialorder %v6822, 8.507059e+37
  %v6824 = vand.u32 %v6811, 2147483648
  %v6825 = vor.u32 1.1754944e-38, %v6824
  %v6826 = vsel %vm6823, %v6825, %v6821
  %v6827 = vmul.f32 1.0, %v6826
  %v6828 = vrcp.pop %v6812
  %v6829 = vmul.f32 %v6812, %v6828
  %v6830 = vsub.f32 1.0, %v6829
  %v6831 = vmul.f32 %v6828, %v6830
  %v6832 = vadd.f32 %v6828, %v6831
  %vm6833 = vweird.f32 %v6812
  %vm6834 = vweird.f32 %v6828
  %vm6835 = vmor %vm6833, %vm6834
  %v6836 = vsel %vm6835, %v6828, %v6832
  %v6837 = vand.u32 2147483647, %v6812
  %vm6838 = vcmp.eq.f32.partialorder %v6837, 8.507059e+37
  %v6839 = vand.u32 %v6812, 2147483648
  %v6840 = vor.u32 1.1754944e-38, %v6839
  %v6841 = vsel %vm6838, %v6840, %v6836
  %v6842 = vmul.f32 1.0, %v6841
  %v6843 = vtanh.pop %v6803
  %v6844 = vtanh.pop %v6804
  %v6847 = vrot.slane %v6648, 7
  %v6848 = vrot.slane %v6649, 7
  %v6851 = vmul.f32 %v6827, %v6847
  %v6852 = vmul.f32 %v6842, %v6848
  %6855 = vrot.lane.b32.xlu0 %v6843, 32
  %v6856 = vpop.permute.xlu0 %6855
  %6857 = vrot.lane.b32.xlu0 %v6844, 32
  %v6858 = vpop.permute.xlu0 %6857
  %v6861 = vmul.f32 %v6827, %v6856
  %v6862 = vmul.f32 %v6842, %v6858
  %6865 = vrot.lane.b32.xlu0 %v6861, 32
  %v6866 = vpop.permute.xlu0 %6865
  %6867 = vrot.lane.b32.xlu0 %v6862, 32
  %v6868 = vpop.permute.xlu0 %6867
  %v6871 = vadd.f32 %v6851, %v6866
  %v6872 = vadd.f32 %v6852, %v6868
  %v6873 = vtanh.pop %v6871
  %v6874 = vtanh.pop %v6872
  %6877 = vrot.lane.b32.xlu0 %v6873, 32
  %v6878 = vpop.permute.xlu0 %6877
  %6879 = vrot.lane.b32.xlu0 %v6874, 32
  %v6880 = vpop.permute.xlu0 %6879
  %v6883 = vmul.f32 %v6827, %v6878
  %v6884 = vmul.f32 %v6842, %v6880
  %6885 = vmatpush.msra.mxu0 0.0
  %6886 = vmatpush.msra.mxu0 0.0
  %6887 = vmatpush.msra.mxu0 0.0
  %6888 = vmatpush.msra.mxu0 0.0
  %6889 = vmatpush.msra.mxu0 0.0
  %6890 = vmatpush.msra.mxu0 0.0
  %6891 = vmatpush.msra.mxu0 0.0
  %6892 = vmatpush.msra.mxu0 0.0
  %6893 = vmatpush.msra.mxu0 0.0
  %6894 = vmatpush.msra.mxu0 0.0
  %6895 = vmatpush.msra.mxu0 0.0
  %6896 = vmatpush.msra.mxu0 0.0
  %6897 = vmatpush.msra.mxu0 %v5634
  %6898 = vmatpush.msra.mxu0 %v5633
  %6899 = vmatpush.msra.mxu0 %v5632
  %6900 = vmatpush.msra.mxu0 %v5631
  %6901 = vmatmul.f32.gmra.mxu0 %v6751
  %v6902 = vpop.f32.mrf.mxu0
  %v6903 = vadd.f32 0.0, %v6902
  %6904 = vdwg.mxu0
  %v6907 = vrot.slane %v6883, 5
  %v6908 = vrot.slane %v6884, 4
  %v6909 = vsel %vm5794, %v6908, %v6907
  %6910 = vrot.lane.b32.xlu0 %v6909, 64
  %v6911 = vpop.permute.xlu0 %6910
  %v6912 = vsel %vm873, %v6911, 0
  %6914 = vmatpush.msra.mxu0 0.0
  %6915 = vmatpush.msra.mxu0 0.0
  %6916 = vmatpush.msra.mxu0 0.0
  %6917 = vmatpush.msra.mxu0 0.0
  %6918 = vmatpush.msra.mxu0 0.0
  %6919 = vmatpush.msra.mxu0 0.0
  %6920 = vmatpush.msra.mxu0 0.0
  %6921 = vmatpush.msra.mxu0 0.0
  %6922 = vmatpush.msra.mxu0 0.0
  %6923 = vmatpush.msra.mxu0 0.0
  %6924 = vmatpush.msra.mxu0 0.0
  %6925 = vmatpush.msra.mxu0 0.0
  %6926 = vmatpush.msra.mxu0 %v5626
  %6927 = vmatpush.msra.mxu0 %v5625
  %6928 = vmatpush.msra.mxu0 %v5624
  %6929 = vmatpush.msra.mxu0 %v5623
  %6930 = vmatmul.f32.gmra.mxu0 %v6912
  %v6931 = vpop.f32.mrf.mxu0
  %v6932 = vadd.f32 %v6903, %v6931
  %6933 = vdwg.mxu0
  %v6934 = vxor.u32 %v6932, 2147483648
  %v6935 = vmul.f32 %v6934, 1.442695
  %v6936 = vpow.pop %v6935
  %v6937 = vadd.f32 %v6936, 1.0
  %v6938 = vrcp.pop %v6937
  %v6939 = vmul.f32 %v6937, %v6938
  %v6940 = vsub.f32 1.0, %v6939
  %v6941 = vmul.f32 %v6938, %v6940
  %v6942 = vadd.f32 %v6938, %v6941
  %vm6943 = vweird.f32 %v6937
  %vm6944 = vweird.f32 %v6938
  %vm6945 = vmor %vm6943, %vm6944
  %v6946 = vsel %vm6945, %v6938, %v6942
  %v6947 = vand.u32 2147483647, %v6937
  %vm6948 = vcmp.eq.f32.partialorder %v6947, 8.507059e+37
  %v6949 = vand.u32 %v6937, 2147483648
  %v6950 = vor.u32 1.1754944e-38, %v6949
  %v6951 = vsel %vm6948, %v6950, %v6946
  %v6952 = vmul.f32 1.0, %v6951
  %v6953 = vtanh.pop %v6932
  %v6954 = vmul.f32 %v6952, %v6741
  %6956 = vrot.lane.b32.xlu0 %v6953, 32
  %v6957 = vpop.permute.xlu0 %6956
  %v6959 = vmul.f32 %v6952, %v6957
  %6961 = vrot.lane.b32.xlu0 %v6959, 32
  %v6962 = vpop.permute.xlu0 %6961
  %v6964 = vadd.f32 %v6954, %v6962
  %v6965 = vtanh.pop %v6964
  %6967 = vrot.lane.b32.xlu0 %v6965, 32
  %v6968 = vpop.permute.xlu0 %6967
  %v6970 = vmul.f32 %v6952, %v6968
  %6972 = vrot.lane.b32.xlu0 %v6970, 64
  %v6973 = vpop.permute.xlu0 %6972
  %v6974 = vsel %vm873, %v6973, 0
  %6976 = vmatpush.msra.mxu0 0.0
  %6977 = vmatpush.msra.mxu0 0.0
  %6978 = vmatpush.msra.mxu0 0.0
  %6979 = vmatpush.msra.mxu0 0.0
  %6980 = vmatpush.msra.mxu0 0.0
  %6981 = vmatpush.msra.mxu0 0.0
  %6982 = vmatpush.msra.mxu0 0.0
  %6983 = vmatpush.msra.mxu0 0.0
  %6984 = vmatpush.msra.mxu0 0.0
  %6985 = vmatpush.msra.mxu0 0.0
  %6986 = vmatpush.msra.mxu0 0.0
  %6987 = vmatpush.msra.mxu0 0.0
  %6988 = vmatpush.msra.mxu0 %v5638
  %6989 = vmatpush.msra.mxu0 %v5637
  %6990 = vmatpush.msra.mxu0 %v5636
  %6991 = vmatpush.msra.mxu0 %v5635
  %6992 = vmatmul.f32.gmra.mxu0 %v6974
  %v6993 = vpop.f32.mrf.mxu0
  %v6994 = vadd.f32 0.0, %v6993
  %6995 = vdwg.mxu0
  %v6997 = vrot.slane %v6994, 1
  %6999 = vst.msk [vmem:[%s63 + $0x5] sm:$0x1] %vm5885, %v6994
  %7000 = vst.msk [vmem:[%s63 + $0xd] sm:$0x1] %vm5885, %v6997
  %7001 = vmatpush.msra.mxu0 0.0
  %7002 = vmatpush.msra.mxu0 0.0
  %7003 = vmatpush.msra.mxu0 0.0
  %7004 = vmatpush.msra.mxu0 0.0
  %7005 = vmatpush.msra.mxu0 0.0
  %7006 = vmatpush.msra.mxu0 0.0
  %7007 = vmatpush.msra.mxu0 0.0
  %7008 = vmatpush.msra.mxu0 0.0
  %7009 = vmatpush.msra.mxu0 0.0
  %7010 = vmatpush.msra.mxu0 0.0
  %7011 = vmatpush.msra.mxu0 0.0
  %7012 = vmatpush.msra.mxu0 0.0
  %7013 = vmatpush.msra.mxu0 %v5630
  %7014 = vmatpush.msra.mxu0 %v5629
  %7015 = vmatpush.msra.mxu0 %v5628
  %7016 = vmatpush.msra.mxu0 %v5627
  %7017 = vmatmul.f32.gmra.mxu0 %v6912
  %v7018 = vpop.f32.mrf.mxu0
  %v7019 = vadd.f32 0.0, %v7018
  %7020 = vdwg.mxu0
  %v7022 = vrot.slane %v7019, 2
  %v7023 = vrot.slane %v7019, 3
  %v7026 = vadd.f32 %v5663, %v7022
  %v7027 = vadd.f32 %v5666, %v7023
  %v7028 = vxor.u32 %v7026, 2147483648
  %v7029 = vxor.u32 %v7027, 2147483648
  %v7030 = vmul.f32 %v7028, 1.442695
  %v7031 = vpow.pop %v7030
  %v7032 = vmul.f32 %v7029, 1.442695
  %v7033 = vpow.pop %v7032
  %v7034 = vadd.f32 %v7031, 1.0
  %v7035 = vadd.f32 %v7033, 1.0
  %v7036 = vrcp.pop %v7034
  %v7037 = vmul.f32 %v7034, %v7036
  %v7038 = vsub.f32 1.0, %v7037
  %v7039 = vmul.f32 %v7036, %v7038
  %v7040 = vadd.f32 %v7036, %v7039
  %vm7041 = vweird.f32 %v7034
  %vm7042 = vweird.f32 %v7036
  %vm7043 = vmor %vm7041, %vm7042
  %v7044 = vsel %vm7043, %v7036, %v7040
  %v7045 = vand.u32 2147483647, %v7034
  %vm7046 = vcmp.eq.f32.partialorder %v7045, 8.507059e+37
  %v7047 = vand.u32 %v7034, 2147483648
  %v7048 = vor.u32 1.1754944e-38, %v7047
  %v7049 = vsel %vm7046, %v7048, %v7044
  %v7050 = vmul.f32 1.0, %v7049
  %v7051 = vrcp.pop %v7035
  %v7052 = vmul.f32 %v7035, %v7051
  %v7053 = vsub.f32 1.0, %v7052
  %v7054 = vmul.f32 %v7051, %v7053
  %v7055 = vadd.f32 %v7051, %v7054
  %vm7056 = vweird.f32 %v7035
  %vm7057 = vweird.f32 %v7051
  %vm7058 = vmor %vm7056, %vm7057
  %v7059 = vsel %vm7058, %v7051, %v7055
  %v7060 = vand.u32 2147483647, %v7035
  %vm7061 = vcmp.eq.f32.partialorder %v7060, 8.507059e+37
  %v7062 = vand.u32 %v7035, 2147483648
  %v7063 = vor.u32 1.1754944e-38, %v7062
  %v7064 = vsel %vm7061, %v7063, %v7059
  %v7065 = vmul.f32 1.0, %v7064
  %v7066 = vtanh.pop %v7026
  %v7067 = vtanh.pop %v7027
  %v7070 = vrot.slane %v6871, 7
  %v7071 = vrot.slane %v6872, 7
  %v7074 = vmul.f32 %v7050, %v7070
  %v7075 = vmul.f32 %v7065, %v7071
  %7078 = vrot.lane.b32.xlu0 %v7066, 32
  %v7079 = vpop.permute.xlu0 %7078
  %7080 = vrot.lane.b32.xlu0 %v7067, 32
  %v7081 = vpop.permute.xlu0 %7080
  %v7084 = vmul.f32 %v7050, %v7079
  %v7085 = vmul.f32 %v7065, %v7081
  %7088 = vrot.lane.b32.xlu0 %v7084, 32
  %v7089 = vpop.permute.xlu0 %7088
  %7090 = vrot.lane.b32.xlu0 %v7085, 32
  %v7091 = vpop.permute.xlu0 %7090
  %v7094 = vadd.f32 %v7074, %v7089
  %v7095 = vadd.f32 %v7075, %v7091
  %v7096 = vtanh.pop %v7094
  %v7097 = vtanh.pop %v7095
  %7100 = vrot.lane.b32.xlu0 %v7096, 32
  %v7101 = vpop.permute.xlu0 %7100
  %7102 = vrot.lane.b32.xlu0 %v7097, 32
  %v7103 = vpop.permute.xlu0 %7102
  %v7106 = vmul.f32 %v7050, %v7101
  %v7107 = vmul.f32 %v7065, %v7103
  %7108 = vmatpush.msra.mxu0 0.0
  %7109 = vmatpush.msra.mxu0 0.0
  %7110 = vmatpush.msra.mxu0 0.0
  %7111 = vmatpush.msra.mxu0 0.0
  %7112 = vmatpush.msra.mxu0 0.0
  %7113 = vmatpush.msra.mxu0 0.0
  %7114 = vmatpush.msra.mxu0 0.0
  %7115 = vmatpush.msra.mxu0 0.0
  %7116 = vmatpush.msra.mxu0 0.0
  %7117 = vmatpush.msra.mxu0 0.0
  %7118 = vmatpush.msra.mxu0 0.0
  %7119 = vmatpush.msra.mxu0 0.0
  %7120 = vmatpush.msra.mxu0 %v5634
  %7121 = vmatpush.msra.mxu0 %v5633
  %7122 = vmatpush.msra.mxu0 %v5632
  %7123 = vmatpush.msra.mxu0 %v5631
  %7124 = vmatmul.f32.gmra.mxu0 %v6974
  %v7125 = vpop.f32.mrf.mxu0
  %v7126 = vadd.f32 0.0, %v7125
  %7127 = vdwg.mxu0
  %v7130 = vrot.slane %v7106, 6
  %v7131 = vrot.slane %v7107, 5
  %v7132 = vsel %vm5794, %v7131, %v7130
  %7133 = vrot.lane.b32.xlu0 %v7132, 64
  %v7134 = vpop.permute.xlu0 %7133
  %v7135 = vsel %vm873, %v7134, 0
  %7137 = vmatpush.msra.mxu0 0.0
  %7138 = vmatpush.msra.mxu0 0.0
  %7139 = vmatpush.msra.mxu0 0.0
  %7140 = vmatpush.msra.mxu0 0.0
  %7141 = vmatpush.msra.mxu0 0.0
  %7142 = vmatpush.msra.mxu0 0.0
  %7143 = vmatpush.msra.mxu0 0.0
  %7144 = vmatpush.msra.mxu0 0.0
  %7145 = vmatpush.msra.mxu0 0.0
  %7146 = vmatpush.msra.mxu0 0.0
  %7147 = vmatpush.msra.mxu0 0.0
  %7148 = vmatpush.msra.mxu0 0.0
  %7149 = vmatpush.msra.mxu0 %v5626
  %7150 = vmatpush.msra.mxu0 %v5625
  %7151 = vmatpush.msra.mxu0 %v5624
  %7152 = vmatpush.msra.mxu0 %v5623
  %7153 = vmatmul.f32.gmra.mxu0 %v7135
  %v7154 = vpop.f32.mrf.mxu0
  %v7155 = vadd.f32 %v7126, %v7154
  %7156 = vdwg.mxu0
  %v7157 = vxor.u32 %v7155, 2147483648
  %v7158 = vmul.f32 %v7157, 1.442695
  %v7159 = vpow.pop %v7158
  %v7160 = vadd.f32 %v7159, 1.0
  %v7161 = vrcp.pop %v7160
  %v7162 = vmul.f32 %v7160, %v7161
  %v7163 = vsub.f32 1.0, %v7162
  %v7164 = vmul.f32 %v7161, %v7163
  %v7165 = vadd.f32 %v7161, %v7164
  %vm7166 = vweird.f32 %v7160
  %vm7167 = vweird.f32 %v7161
  %vm7168 = vmor %vm7166, %vm7167
  %v7169 = vsel %vm7168, %v7161, %v7165
  %v7170 = vand.u32 2147483647, %v7160
  %vm7171 = vcmp.eq.f32.partialorder %v7170, 8.507059e+37
  %v7172 = vand.u32 %v7160, 2147483648
  %v7173 = vor.u32 1.1754944e-38, %v7172
  %v7174 = vsel %vm7171, %v7173, %v7169
  %v7175 = vmul.f32 1.0, %v7174
  %v7176 = vtanh.pop %v7155
  %v7177 = vmul.f32 %v7175, %v6964
  %7179 = vrot.lane.b32.xlu0 %v7176, 32
  %v7180 = vpop.permute.xlu0 %7179
  %v7182 = vmul.f32 %v7175, %v7180
  %7184 = vrot.lane.b32.xlu0 %v7182, 32
  %v7185 = vpop.permute.xlu0 %7184
  %v7187 = vadd.f32 %v7177, %v7185
  %v7188 = vtanh.pop %v7187
  %7190 = vrot.lane.b32.xlu0 %v7188, 32
  %v7191 = vpop.permute.xlu0 %7190
  %v7193 = vmul.f32 %v7175, %v7191
  %7195 = vrot.lane.b32.xlu0 %v7193, 64
  %v7196 = vpop.permute.xlu0 %7195
  %v7197 = vsel %vm873, %v7196, 0
  %7199 = vmatpush.msra.mxu0 0.0
  %7200 = vmatpush.msra.mxu0 0.0
  %7201 = vmatpush.msra.mxu0 0.0
  %7202 = vmatpush.msra.mxu0 0.0
  %7203 = vmatpush.msra.mxu0 0.0
  %7204 = vmatpush.msra.mxu0 0.0
  %7205 = vmatpush.msra.mxu0 0.0
  %7206 = vmatpush.msra.mxu0 0.0
  %7207 = vmatpush.msra.mxu0 0.0
  %7208 = vmatpush.msra.mxu0 0.0
  %7209 = vmatpush.msra.mxu0 0.0
  %7210 = vmatpush.msra.mxu0 0.0
  %7211 = vmatpush.msra.mxu0 %v5638
  %7212 = vmatpush.msra.mxu0 %v5637
  %7213 = vmatpush.msra.mxu0 %v5636
  %7214 = vmatpush.msra.mxu0 %v5635
  %7215 = vmatmul.f32.gmra.mxu0 %v7197
  %v7216 = vpop.f32.mrf.mxu0
  %v7217 = vadd.f32 0.0, %v7216
  %7218 = vdwg.mxu0
  %v7220 = vrot.slane %v7217, 1
  %7222 = vst.msk [vmem:[%s63 + $0x6] sm:$0x1] %vm5885, %v7217
  %7223 = vst.msk [vmem:[%s63 + $0xe] sm:$0x1] %vm5885, %v7220
  %7224 = vmatpush.msra.mxu0 0.0
  %7225 = vmatpush.msra.mxu0 0.0
  %7226 = vmatpush.msra.mxu0 0.0
  %7227 = vmatpush.msra.mxu0 0.0
  %7228 = vmatpush.msra.mxu0 0.0
  %7229 = vmatpush.msra.mxu0 0.0
  %7230 = vmatpush.msra.mxu0 0.0
  %7231 = vmatpush.msra.mxu0 0.0
  %7232 = vmatpush.msra.mxu0 0.0
  %7233 = vmatpush.msra.mxu0 0.0
  %7234 = vmatpush.msra.mxu0 0.0
  %7235 = vmatpush.msra.mxu0 0.0
  %7236 = vmatpush.msra.mxu0 %v5630
  %7237 = vmatpush.msra.mxu0 %v5629
  %7238 = vmatpush.msra.mxu0 %v5628
  %7239 = vmatpush.msra.mxu0 %v5627
  %7240 = vmatmul.f32.gmra.mxu0 %v7135
  %v7241 = vpop.f32.mrf.mxu0
  %v7242 = vadd.f32 0.0, %v7241
  %7243 = vdwg.mxu0
  %v7245 = vrot.slane %v7242, 1
  %v7246 = vrot.slane %v7242, 2
  %v7249 = vadd.f32 %v5663, %v7245
  %v7250 = vadd.f32 %v5666, %v7246
  %v7251 = vxor.u32 %v7249, 2147483648
  %v7252 = vxor.u32 %v7250, 2147483648
  %v7253 = vmul.f32 %v7251, 1.442695
  %v7254 = vpow.pop %v7253
  %v7255 = vmul.f32 %v7252, 1.442695
  %v7256 = vpow.pop %v7255
  %v7257 = vadd.f32 %v7254, 1.0
  %v7258 = vadd.f32 %v7256, 1.0
  %v7259 = vrcp.pop %v7257
  %v7260 = vmul.f32 %v7257, %v7259
  %v7261 = vsub.f32 1.0, %v7260
  %v7262 = vmul.f32 %v7259, %v7261
  %v7263 = vadd.f32 %v7259, %v7262
  %vm7264 = vweird.f32 %v7257
  %vm7265 = vweird.f32 %v7259
  %vm7266 = vmor %vm7264, %vm7265
  %v7267 = vsel %vm7266, %v7259, %v7263
  %v7268 = vand.u32 2147483647, %v7257
  %vm7269 = vcmp.eq.f32.partialorder %v7268, 8.507059e+37
  %v7270 = vand.u32 %v7257, 2147483648
  %v7271 = vor.u32 1.1754944e-38, %v7270
  %v7272 = vsel %vm7269, %v7271, %v7267
  %v7273 = vmul.f32 1.0, %v7272
  %v7274 = vrcp.pop %v7258
  %v7275 = vmul.f32 %v7258, %v7274
  %v7276 = vsub.f32 1.0, %v7275
  %v7277 = vmul.f32 %v7274, %v7276
  %v7278 = vadd.f32 %v7274, %v7277
  %vm7279 = vweird.f32 %v7258
  %vm7280 = vweird.f32 %v7274
  %vm7281 = vmor %vm7279, %vm7280
  %v7282 = vsel %vm7281, %v7274, %v7278
  %v7283 = vand.u32 2147483647, %v7258
  %vm7284 = vcmp.eq.f32.partialorder %v7283, 8.507059e+37
  %v7285 = vand.u32 %v7258, 2147483648
  %v7286 = vor.u32 1.1754944e-38, %v7285
  %v7287 = vsel %vm7284, %v7286, %v7282
  %v7288 = vmul.f32 1.0, %v7287
  %v7289 = vtanh.pop %v7249
  %v7290 = vtanh.pop %v7250
  %v7293 = vrot.slane %v7094, 7
  %v7294 = vrot.slane %v7095, 7
  %v7297 = vmul.f32 %v7273, %v7293
  %v7298 = vmul.f32 %v7288, %v7294
  %7301 = vrot.lane.b32.xlu0 %v7289, 32
  %v7302 = vpop.permute.xlu0 %7301
  %7303 = vrot.lane.b32.xlu0 %v7290, 32
  %v7304 = vpop.permute.xlu0 %7303
  %v7307 = vmul.f32 %v7273, %v7302
  %v7308 = vmul.f32 %v7288, %v7304
  %7311 = vrot.lane.b32.xlu0 %v7307, 32
  %v7312 = vpop.permute.xlu0 %7311
  %7313 = vrot.lane.b32.xlu0 %v7308, 32
  %v7314 = vpop.permute.xlu0 %7313
  %v7317 = vadd.f32 %v7297, %v7312
  %v7318 = vadd.f32 %v7298, %v7314
  %v7319 = vtanh.pop %v7317
  %v7320 = vtanh.pop %v7318
  %7323 = vrot.lane.b32.xlu0 %v7319, 32
  %v7324 = vpop.permute.xlu0 %7323
  %7325 = vrot.lane.b32.xlu0 %v7320, 32
  %v7326 = vpop.permute.xlu0 %7325
  %v7329 = vmul.f32 %v7273, %v7324
  %v7330 = vmul.f32 %v7288, %v7326
  %7331 = vmatpush.msra.mxu0 0.0
  %7332 = vmatpush.msra.mxu0 0.0
  %7333 = vmatpush.msra.mxu0 0.0
  %7334 = vmatpush.msra.mxu0 0.0
  %7335 = vmatpush.msra.mxu0 0.0
  %7336 = vmatpush.msra.mxu0 0.0
  %7337 = vmatpush.msra.mxu0 0.0
  %7338 = vmatpush.msra.mxu0 0.0
  %7339 = vmatpush.msra.mxu0 0.0
  %7340 = vmatpush.msra.mxu0 0.0
  %7341 = vmatpush.msra.mxu0 0.0
  %7342 = vmatpush.msra.mxu0 0.0
  %7343 = vmatpush.msra.mxu0 %v5634
  %7344 = vmatpush.msra.mxu0 %v5633
  %7345 = vmatpush.msra.mxu0 %v5632
  %7346 = vmatpush.msra.mxu0 %v5631
  %7347 = vmatmul.f32.gmra.mxu0 %v7197
  %v7348 = vpop.f32.mrf.mxu0
  %v7349 = vadd.f32 0.0, %v7348
  %7350 = vdwg.mxu0
  %v7353 = vrot.slane %v7329, 7
  %v7354 = vrot.slane %v7330, 6
  %v7355 = vsel %vm5794, %v7354, %v7353
  %7356 = vrot.lane.b32.xlu0 %v7355, 64
  %v7357 = vpop.permute.xlu0 %7356
  %v7358 = vsel %vm873, %v7357, 0
  %7360 = vmatpush.msra.mxu0 0.0
  %7361 = vmatpush.msra.mxu0 0.0
  %7362 = vmatpush.msra.mxu0 0.0
  %7363 = vmatpush.msra.mxu0 0.0
  %7364 = vmatpush.msra.mxu0 0.0
  %7365 = vmatpush.msra.mxu0 0.0
  %7366 = vmatpush.msra.mxu0 0.0
  %7367 = vmatpush.msra.mxu0 0.0
  %7368 = vmatpush.msra.mxu0 0.0
  %7369 = vmatpush.msra.mxu0 0.0
  %7370 = vmatpush.msra.mxu0 0.0
  %7371 = vmatpush.msra.mxu0 0.0
  %7372 = vmatpush.msra.mxu0 %v5626
  %7373 = vmatpush.msra.mxu0 %v5625
  %7374 = vmatpush.msra.mxu0 %v5624
  %7375 = vmatpush.msra.mxu0 %v5623
  %7376 = vmatmul.f32.gmra.mxu0 %v7358
  %v7377 = vpop.f32.mrf.mxu0
  %v7378 = vadd.f32 %v7349, %v7377
  %7379 = vdwg.mxu0
  %v7380 = vxor.u32 %v7378, 2147483648
  %v7381 = vmul.f32 %v7380, 1.442695
  %v7382 = vpow.pop %v7381
  %v7383 = vadd.f32 %v7382, 1.0
  %v7384 = vrcp.pop %v7383
  %v7385 = vmul.f32 %v7383, %v7384
  %v7386 = vsub.f32 1.0, %v7385
  %v7387 = vmul.f32 %v7384, %v7386
  %v7388 = vadd.f32 %v7384, %v7387
  %vm7389 = vweird.f32 %v7383
  %vm7390 = vweird.f32 %v7384
  %vm7391 = vmor %vm7389, %vm7390
  %v7392 = vsel %vm7391, %v7384, %v7388
  %v7393 = vand.u32 2147483647, %v7383
  %vm7394 = vcmp.eq.f32.partialorder %v7393, 8.507059e+37
  %v7395 = vand.u32 %v7383, 2147483648
  %v7396 = vor.u32 1.1754944e-38, %v7395
  %v7397 = vsel %vm7394, %v7396, %v7392
  %v7398 = vmul.f32 1.0, %v7397
  %v7399 = vtanh.pop %v7378
  %v7400 = vmul.f32 %v7398, %v7187
  %7402 = vrot.lane.b32.xlu0 %v7399, 32
  %v7403 = vpop.permute.xlu0 %7402
  %v7405 = vmul.f32 %v7398, %v7403
  %7407 = vrot.lane.b32.xlu0 %v7405, 32
  %v7408 = vpop.permute.xlu0 %7407
  %v7410 = vadd.f32 %v7400, %v7408
  %v7411 = vtanh.pop %v7410
  %7413 = vrot.lane.b32.xlu0 %v7411, 32
  %v7414 = vpop.permute.xlu0 %7413
  %v7416 = vmul.f32 %v7398, %v7414
  %7418 = vrot.lane.b32.xlu0 %v7416, 64
  %v7419 = vpop.permute.xlu0 %7418
  %v7420 = vsel %vm873, %v7419, 0
  %7422 = vmatpush.msra.mxu0 0.0
  %7423 = vmatpush.msra.mxu0 0.0
  %7424 = vmatpush.msra.mxu0 0.0
  %7425 = vmatpush.msra.mxu0 0.0
  %7426 = vmatpush.msra.mxu0 0.0
  %7427 = vmatpush.msra.mxu0 0.0
  %7428 = vmatpush.msra.mxu0 0.0
  %7429 = vmatpush.msra.mxu0 0.0
  %7430 = vmatpush.msra.mxu0 0.0
  %7431 = vmatpush.msra.mxu0 0.0
  %7432 = vmatpush.msra.mxu0 0.0
  %7433 = vmatpush.msra.mxu0 0.0
  %7434 = vmatpush.msra.mxu0 %v5638
  %7435 = vmatpush.msra.mxu0 %v5637
  %7436 = vmatpush.msra.mxu0 %v5636
  %7437 = vmatpush.msra.mxu0 %v5635
  %7438 = vmatmul.f32.gmra.mxu0 %v7420
  %v7439 = vpop.f32.mrf.mxu0
  %v7440 = vadd.f32 0.0, %v7439
  %7441 = vdwg.mxu0
  %v7443 = vrot.slane %v7440, 1
  %7445 = vst.msk [vmem:[%s63 + $0x7] sm:$0x1] %vm5885, %v7440
  %7446 = vst.msk [vmem:[%s63 + $0xf] sm:$0x1] %vm5885, %v7443
  // Predicated region
  $region186: #{_lambda_.1} parent=0 // pred_check
    _
  $region187: #{_lambda_.1} parent=0 // pred_check_branch
    %7448 = sbr.rel (0) target = $region189
  $region188: #{_lambda_.1} parent=0 // pred_region
    _
  $region189: #{_lambda_.1} parent=0 // pred_fallthru
    _
  // Predicated region
  $region190: #{_lambda_.1} parent=0 // pred_check
    _
  $region191: #{_lambda_.1} parent=0 // pred_check_branch
    %7450 = sbr.rel (0) target = $region193
  $region192: #{_lambda_.1} parent=0 // pred_region
    _
  $region193: #{_lambda_.1} parent=0 // pred_fallthru
    _
  %7451 = vsyncmov [#allocation6]
  %s7452 = vpop.sfrf %7451
  %p7453 = scmp.eq.s32.totalorder %s7452, 0
  %p7454 = pneg %p7453
  %7456 = shalt.err (%p7454)
  %s7457 = scalar_lea.sflag [#allocation6], 1
  %7458 = vsyncmov %s7457
  %s7459 = vpop.sfrf %7458
  %p7460 = scmp.eq.s32.totalorder %s7459, 0
  %p7461 = pneg %p7460
  %7463 = shalt.err (%p7461)
  %s7464 = scalar_lea.sflag [#allocation6], 2
  %7465 = vsyncmov %s7464
  %s7466 = vpop.sfrf %7465
  %p7467 = scmp.eq.s32.totalorder %s7466, 0
  %p7468 = pneg %p7467
  %7470 = shalt.err (%p7468)
  %s7471 = scalar_lea.sflag [#allocation6], 3
  %7472 = vsyncmov %s7471
  %s7473 = vpop.sfrf %7472
  %p7474 = scmp.eq.s32.totalorder %s7473, 0
  %p7475 = pneg %p7474
  %7477 = shalt.err (%p7475)

</llo_original>
